<compile_context>
chip_gen: v6e
topology: v6e:2x2x1
jax: 0.10.0
libtpu: 0.0.40
codegen_flags: <defaults>
</compile_context>

<pallas_src>
import numpy as np
import jax
import jax.numpy as jnp
from jax.experimental import pallas as pl
from jax.experimental.pallas import tpu as pltpu

LRELU_SLOPE = 0.01  # torch.nn.LeakyReLU default negative_slope
LANE = 128


def _lrelu(x):
    return jnp.where(x >= 0, x, LRELU_SLOPE * x)


def _dot(a, w, use_bf16):
    if use_bf16:
        a = a.astype(jnp.bfloat16)
        w = w.astype(jnp.bfloat16)
    return jnp.dot(a, w, preferred_element_type=jnp.float32)


def _roundup(x, m):
    return ((x + m - 1) // m) * m


# ---------------------------------------------------------------------------
# Fused whole-flow kernel
# ---------------------------------------------------------------------------
def _make_fused_kernel(n_emb_params, n_flows, depth, hp, cp, use_bf16):
    # hp: lane-padded fused (s|t) hidden width; cp: lane-padded channel width
    def kernel(*refs):
        out_h_ref, out_ld_ref = refs[-2], refs[-1]
        idx = 0
        x_ref = refs[idx]; idx += 1
        c_ref = refs[idx]; idx += 1
        ldc_ref = refs[idx]; idx += 1                       # (1,1) ActNorm logdet const
        emb_params = refs[idx:idx + n_emb_params]; idx += n_emb_params
        Wp_ref = refs[idx]; bp_ref = refs[idx + 1]; idx += 2  # wide emb projection

        blocks = []
        for _ in range(n_flows):
            loc_ref = refs[idx]; scale_ref = refs[idx + 1]; idx += 2
            halves = []
            for _ in range(2):
                W0_ref = refs[idx]; idx += 1
                mids = []
                for _ in range(depth):
                    mids.append((refs[idx], refs[idx + 1])); idx += 2
                Wl_ref = refs[idx]; bl_ref = refs[idx + 1]; idx += 2
                halves.append((W0_ref, mids, Wl_ref, bl_ref))
            blocks.append((loc_ref, scale_ref, halves))

        h = x_ref[...]                      # (TB, C), VMEM-resident for whole pass
        TB, C = h.shape

        # ---- condition embedder MLP (Linear -> LeakyReLU chain, no final act) ----
        emb = c_ref[...]
        n_layers = n_emb_params // 2
        for l in range(n_layers):
            emb = _dot(emb, emb_params[2 * l][...], use_bf16) + emb_params[2 * l + 1][...]
            if l < n_layers - 1:
                emb = _lrelu(emb)

        # ---- one wide matmul: emb contribution (+ fused first-layer biases)
        #      for all n_flows*2 coupling halves; hp-wide (128-aligned) chunks ----
        emb_proj = _dot(emb, Wp_ref[...], use_bf16) + bp_ref[...]   # (TB, n_flows*2*hp)

        # running logdet, seeded with the data-independent ActNorm contribution
        logdet = jnp.zeros((TB, 1), jnp.float32) + ldc_ref[...]

        chunk = 0
        for k in range(n_flows):
            loc_ref, scale_ref, halves = blocks[k]
            # ActNorm (loc/scale columns already shuffle-folded into stored order)
            h = scale_ref[...] * (h + loc_ref[...])
            # activation = "none" (IgnoreLeakyRelu): identity, zero logdet
            for i in range(2):
                W0_ref, mids, Wl_ref, bl_ref = halves[i]
                # fused (s|t) first layer: xa rows scattered to full width, emb
                # contribution precomputed above (vreg-aligned slice)
                z = _dot(h, W0_ref[...], use_bf16) \
                    + emb_proj[:, chunk * hp:(chunk + 1) * hp]
                chunk += 1
                z = _lrelu(z)
                for (Wm_ref, bm_ref) in mids:                 # block-diag hidden layers
                    z = _lrelu(_dot(z, Wm_ref[...], use_bf16) + bm_ref[...])
                raw = _dot(z, Wl_ref[...], use_bf16) + bl_ref[...]   # (TB, 2*cp)
                # s/t scattered to full channel width (zeros on the kept half,
                # tanh(0)=0 and exp(0)=1 keep it unchanged); both slices start
                # on a vreg boundary -> no cross-lane rotation.
                s_full = jnp.tanh(raw[:, :C])
                t_full = raw[:, cp:cp + C]
                h = h * jnp.exp(s_full) + t_full
                logdet = logdet + jnp.sum(s_full, axis=1, keepdims=True)
            # Shuffle: folded into the next block's parameters -> zero runtime cost

        out_h_ref[...] = h
        out_ld_ref[...] = logdet

    return kernel


# ---------------------------------------------------------------------------
# Deterministic "raw" (PyTorch-shaped) parameter initialization
# ---------------------------------------------------------------------------
def _init_linear(key, din, dout):
    k1, k2 = jax.random.split(key)
    W = jax.random.normal(k1, (din, dout), jnp.float32) * (1.0 / np.sqrt(din))
    b = jax.random.normal(k2, (1, dout), jnp.float32) * 0.01
    return [W, b]


def _init_mlp(key, din, hidden, dout, depth):
    # BasicFullyConnectedNet: Linear(din,h), [Linear(h,h)]*depth, Linear(h,dout)
    dims = [din] + [hidden] * (depth + 1) + [dout]
    params = []
    for i in range(len(dims) - 1):
        key, sub = jax.random.split(key)
        params += _init_linear(sub, dims[i], dims[i + 1])
    return params


def init_flow_params(key, zdim, cond_dim, emb_dim, hidden_dim, hidden_depth,
                     embedder_depth, n_flows):
    half = zdim // 2
    key, ek = jax.random.split(key)
    params = {
        "embedder": _init_mlp(ek, cond_dim, emb_dim, emb_dim, embedder_depth),
        "blocks": [],
    }
    for _ in range(n_flows):
        key, k_loc, k_scale, k_perm = jax.random.split(key, 4)
        blk = {
            "loc": jax.random.normal(k_loc, (1, zdim), jnp.float32) * 0.05,
            "scale": 1.0 + jax.random.normal(k_scale, (1, zdim), jnp.float32) * 0.05,
            "perm": jax.random.permutation(k_perm, zdim),
            "s": [],
            "t": [],
        }
        for _ in range(2):  # two coupling halves
            key, ks, kt = jax.random.split(key, 3)
            blk["s"].append(_init_mlp(ks, half + emb_dim, hidden_dim, half, hidden_depth))
            blk["t"].append(_init_mlp(kt, half + emb_dim, hidden_dim, half, hidden_depth))
        params["blocks"].append(blk)
    return params


# ---------------------------------------------------------------------------
# Parameter preparation: fuse s/t MLPs, fold Shuffle + half-swap into weights,
# split off the emb contribution, lane-pad the fused hidden / output widths,
# precompute the ActNorm logdet constant. Done once at prep time (host/numpy).
# ---------------------------------------------------------------------------
def prepare_fused_params(raw):
    emb_params = [np.asarray(p, np.float32) for p in raw["embedder"]]
    blocks = raw["blocks"]
    n_flows = len(blocks)
    C = int(blocks[0]["loc"].shape[1])
    half = C // 2
    s0 = blocks[0]["s"][0]
    H = int(s0[0].shape[1])
    depth = len(s0) // 2 - 2
    H2 = 2 * H                      # fused (s|t) hidden width
    HP = _roundup(H2, LANE)         # lane-padded hidden width (vreg-aligned slices)
    CP = _roundup(C, LANE)          # lane-padded channel width for the (s|t) output

    pos = np.arange(C)                                        # logical -> stored column
    L = np.concatenate([np.arange(half, C), np.arange(half)])  # the in-block half swap

    Wp_cols, bp_cols, blocks_out = [], [], []
    ld_const = 0.0
    for blk in blocks:
        loc = np.asarray(blk["loc"], np.float32)[0]
        scale = np.asarray(blk["scale"], np.float32)[0]
        perm = np.asarray(blk["perm"])
        ld_const += float(np.sum(np.log(np.abs(scale))))

        loc_st = np.empty(C, np.float32); loc_st[pos] = loc
        scale_st = np.empty(C, np.float32); scale_st[pos] = scale

        halves_out = []
        for i in range(2):
            s_p = [np.asarray(p, np.float32) for p in blk["s"][i]]
            t_p = [np.asarray(p, np.float32) for p in blk["t"][i]]
            if i == 0:
                A, Bc = pos[:half], pos[half:]   # conditioning cols / updated cols
            else:
                A, Bc = pos[half:], pos[:half]   # half swap folded in

            # fused (s|t) first layer, split into xa-part and emb-part, padded to HP
            W0f = np.concatenate([s_p[0], t_p[0]], axis=1)       # (half+emb, H2)
            b0f = np.concatenate([s_p[1], t_p[1]], axis=1)       # (1, H2)
            emb_dim = W0f.shape[0] - half
            W0_full = np.zeros((C, HP), np.float32)
            W0_full[A, :H2] = W0f[:half]                         # scatter xa rows
            Wp = np.zeros((emb_dim, HP), np.float32)
            Wp[:, :H2] = W0f[half:]                              # emb rows -> wide matmul
            bp = np.zeros((1, HP), np.float32)
            bp[:, :H2] = b0f
            Wp_cols.append(Wp)
            bp_cols.append(bp)

            # block-diagonal hidden layers, padded to (HP, HP)
            mids = []
            for l in range(1, depth + 1):
                Wm = np.zeros((HP, HP), np.float32)
                Wm[:H, :H] = s_p[2 * l]
                Wm[H:H2, H:H2] = t_p[2 * l]
                bm = np.zeros((1, HP), np.float32)
                bm[0, :H] = s_p[2 * l + 1][0]
                bm[0, H:H2] = t_p[2 * l + 1][0]
                mids.append((jnp.asarray(Wm), jnp.asarray(bm)))

            # last layer scattered to full channel width: [s_full | pad | t_full | pad]
            lidx = depth + 1
            Wl = np.zeros((HP, 2 * CP), np.float32)
            bl = np.zeros((1, 2 * CP), np.float32)
            Wl[:H, Bc] = s_p[2 * lidx]
            bl[0, Bc] = s_p[2 * lidx + 1][0]
            Wl[H:H2, CP + Bc] = t_p[2 * lidx]
            bl[0, CP + Bc] = t_p[2 * lidx + 1][0]

            halves_out.append({"W0": jnp.asarray(W0_full), "mid": mids,
                               "Wl": jnp.asarray(Wl), "bl": jnp.asarray(bl)})

        blocks_out.append({"loc": jnp.asarray(loc_st[None, :]),
                           "scale": jnp.asarray(scale_st[None, :]),
                           "halves": halves_out})
        # fold this block's trailing half-swap + shuffle into the next block
        pos = pos[L[perm]]

    return {
        "embedder": [jnp.asarray(p) for p in emb_params],
        "emb_proj_W": jnp.asarray(np.concatenate(Wp_cols, axis=1)),
        "emb_proj_b": jnp.asarray(np.concatenate(bp_cols, axis=1)),
        "blocks": blocks_out,
        "ld_const": jnp.asarray([[ld_const]], np.float32),
        "out_perm": pos,   # final stored->logical gather, applied once to zz
        "meta": {"n_flows": n_flows, "depth": depth, "hp": HP, "cp": CP,
                 "n_emb_params": len(emb_params)},
    }


def _flatten_prep(prep):
    flat = list(prep["embedder"]) + [prep["emb_proj_W"], prep["emb_proj_b"]]
    for blk in prep["blocks"]:
        flat += [blk["loc"], blk["scale"]]
        for hv in blk["halves"]:
            flat.append(hv["W0"])
            for (Wm, bm) in hv["mid"]:
                flat += [Wm, bm]
            flat += [hv["Wl"], hv["bl"]]
    return flat


# ---------------------------------------------------------------------------
# Forward pass: zz, logdet = flow(x, c)   (single fused pallas_call)
# ---------------------------------------------------------------------------
def net2net_flow_forward(x4, c, prep, use_bf16=False, batch_tile=512):
    meta = prep["meta"]
    B, C = x4.shape[0], x4.shape[1]
    h0 = x4.reshape(B, C).astype(jnp.float32)
    c2 = c.astype(jnp.float32)
    flat = _flatten_prep(prep)

    kernel = _make_fused_kernel(meta["n_emb_params"], meta["n_flows"],
                                meta["depth"], meta["hp"], meta["cp"], use_bf16)

    # Batch tiling: "parallel" so multi-TC chips (v7x megacore) split the batch.
    # Tiny demo batches use one full-extent tile.
    TB = B if B <= batch_tile else batch_tile
    if B % TB != 0:
        TB = B
    grid = (B // TB,)

    tiled = lambda shape: pl.BlockSpec((TB, shape[1]), lambda b: (b, 0))
    const = lambda arr: pl.BlockSpec(arr.shape, lambda b: (0, 0))

    in_specs = ([tiled(h0.shape), tiled(c2.shape), const(prep["ld_const"])]
                + [const(p) for p in flat])
    out_specs = (pl.BlockSpec((TB, C), lambda b: (b, 0)),
                 pl.BlockSpec((TB, 1), lambda b: (b, 0)))

    h_out, ld_out = pl.pallas_call(
        kernel,
        grid=grid,
        out_shape=(jax.ShapeDtypeStruct((B, C), jnp.float32),
                   jax.ShapeDtypeStruct((B, 1), jnp.float32)),
        in_specs=in_specs,
        out_specs=out_specs,
        compiler_params=pltpu.CompilerParams(dimension_semantics=("parallel",)),
    )(h0, c2, prep["ld_const"], *flat)

    # single tiny channel gather (all shuffles composed), then back to NCHW
    zz = h_out[:, prep["out_perm"]].reshape(B, C, 1, 1)
    return zz, ld_out[:, 0]


# ---------------------------------------------------------------------------
# Pure-JAX reference on the RAW (unfolded) parameters — validates both the
# kernel math and the parameter folding.
# ---------------------------------------------------------------------------
def _mlp_body(h, params, final_act):
    n_layers = len(params) // 2
    for l in range(n_layers):
        h = jnp.dot(h, params[2 * l], preferred_element_type=jnp.float32) + params[2 * l + 1]
        if l < n_layers - 1:
            h = _lrelu(h)
    if final_act == "tanh":
        h = jnp.tanh(h)
    return h


def reference_forward(x4, c, params):
    B, C = x4.shape[0], x4.shape[1]
    h = x4.reshape(B, C)
    emb = _mlp_body(c, params["embedder"], "none")
    logdet = jnp.zeros((B,), jnp.float32)
    half = C // 2
    for blk in params["blocks"]:
        scale, loc = blk["scale"], blk["loc"]
        h = scale * (h + loc)
        logdet = logdet + jnp.sum(jnp.log(jnp.abs(scale))) * jnp.ones((B,), jnp.float32)
        for i in range(2):
            if i % 2 != 0:
                h = jnp.concatenate([h[:, half:], h[:, :half]], axis=1)
            xa, xb = h[:, :half], h[:, half:]
            ci = jnp.concatenate([xa, emb], axis=1)
            s = _mlp_body(ci, blk["s"][i], "tanh")
            t = _mlp_body(ci, blk["t"][i], "none")
            h = jnp.concatenate([xa, xb * jnp.exp(s) + t], axis=1)
            logdet = logdet + jnp.sum(s, axis=1)
        h = h[:, blk["perm"]]
    return h.reshape(B, C, 1, 1), logdet


if __name__ == "__main__":
    B = 2          # batch
    ZDIM = 16      # scVI latent dim (flow in_channels)
    COND_DIM = 16  # GenotypeVAE latent dim
    EMB_DIM = 16   # condition embedding dim
    HIDDEN = 32    # coupling MLP hidden dim
    DEPTH = 2      # coupling MLP hidden depth
    EMB_DEPTH = 2  # embedder hidden depth
    N_FLOWS = 4

    key = jax.random.PRNGKey(0)
    k_x, k_c, k_p = jax.random.split(key, 3)
    # x: scVI latent unsqueezed to NCHW (B, C, 1, 1), as in shared_step/train
    x = jax.random.normal(k_x, (B, ZDIM, 1, 1), jnp.float32)
    # c: GenotypeVAE latent condition
    c = jax.random.normal(k_c, (B, COND_DIM), jnp.float32)

    params = init_flow_params(k_p, ZDIM, COND_DIM, EMB_DIM, HIDDEN, DEPTH,
                              EMB_DEPTH, N_FLOWS)
    prep = prepare_fused_params(params)

    zz, logdet = net2net_flow_forward(x, c, prep)
    zz = jax.block_until_ready(zz)
    logdet = jax.block_until_ready(logdet)

    assert zz.shape == (B, ZDIM, 1, 1)
    assert logdet.shape == (B,)

    zz_ref, logdet_ref = reference_forward(x, c, params)
    np.testing.assert_allclose(np.asarray(zz), np.asarray(zz_ref), rtol=2e-3, atol=2e-3)
    np.testing.assert_allclose(np.asarray(logdet), np.asarray(logdet_ref), rtol=2e-3, atol=2e-3)

    print("KERNEL_OK")
</pallas_src>

<mosaic_0001>
module attributes {stable_mosaic.version = 11 : i64} {
  func.func @kernel(%arg0: i32, %arg1: memref<2x16xf32, #tpu.memory_space<vmem>>, %arg2: memref<2x16xf32, #tpu.memory_space<vmem>>, %arg3: memref<1x1xf32, #tpu.memory_space<vmem>>, %arg4: memref<16x16xf32, #tpu.memory_space<vmem>>, %arg5: memref<1x16xf32, #tpu.memory_space<vmem>>, %arg6: memref<16x16xf32, #tpu.memory_space<vmem>>, %arg7: memref<1x16xf32, #tpu.memory_space<vmem>>, %arg8: memref<16x16xf32, #tpu.memory_space<vmem>>, %arg9: memref<1x16xf32, #tpu.memory_space<vmem>>, %arg10: memref<16x16xf32, #tpu.memory_space<vmem>>, %arg11: memref<1x16xf32, #tpu.memory_space<vmem>>, %arg12: memref<16x1024xf32, #tpu.memory_space<vmem>>, %arg13: memref<1x1024xf32, #tpu.memory_space<vmem>>, %arg14: memref<1x16xf32, #tpu.memory_space<vmem>>, %arg15: memref<1x16xf32, #tpu.memory_space<vmem>>, %arg16: memref<16x128xf32, #tpu.memory_space<vmem>>, %arg17: memref<128x128xf32, #tpu.memory_space<vmem>>, %arg18: memref<1x128xf32, #tpu.memory_space<vmem>>, %arg19: memref<128x128xf32, #tpu.memory_space<vmem>>, %arg20: memref<1x128xf32, #tpu.memory_space<vmem>>, %arg21: memref<128x256xf32, #tpu.memory_space<vmem>>, %arg22: memref<1x256xf32, #tpu.memory_space<vmem>>, %arg23: memref<16x128xf32, #tpu.memory_space<vmem>>, %arg24: memref<128x128xf32, #tpu.memory_space<vmem>>, %arg25: memref<1x128xf32, #tpu.memory_space<vmem>>, %arg26: memref<128x128xf32, #tpu.memory_space<vmem>>, %arg27: memref<1x128xf32, #tpu.memory_space<vmem>>, %arg28: memref<128x256xf32, #tpu.memory_space<vmem>>, %arg29: memref<1x256xf32, #tpu.memory_space<vmem>>, %arg30: memref<1x16xf32, #tpu.memory_space<vmem>>, %arg31: memref<1x16xf32, #tpu.memory_space<vmem>>, %arg32: memref<16x128xf32, #tpu.memory_space<vmem>>, %arg33: memref<128x128xf32, #tpu.memory_space<vmem>>, %arg34: memref<1x128xf32, #tpu.memory_space<vmem>>, %arg35: memref<128x128xf32, #tpu.memory_space<vmem>>, %arg36: memref<1x128xf32, #tpu.memory_space<vmem>>, %arg37: memref<128x256xf32, #tpu.memory_space<vmem>>, %arg38: memref<1x256xf32, #tpu.memory_space<vmem>>, %arg39: memref<16x128xf32, #tpu.memory_space<vmem>>, %arg40: memref<128x128xf32, #tpu.memory_space<vmem>>, %arg41: memref<1x128xf32, #tpu.memory_space<vmem>>, %arg42: memref<128x128xf32, #tpu.memory_space<vmem>>, %arg43: memref<1x128xf32, #tpu.memory_space<vmem>>, %arg44: memref<128x256xf32, #tpu.memory_space<vmem>>, %arg45: memref<1x256xf32, #tpu.memory_space<vmem>>, %arg46: memref<1x16xf32, #tpu.memory_space<vmem>>, %arg47: memref<1x16xf32, #tpu.memory_space<vmem>>, %arg48: memref<16x128xf32, #tpu.memory_space<vmem>>, %arg49: memref<128x128xf32, #tpu.memory_space<vmem>>, %arg50: memref<1x128xf32, #tpu.memory_space<vmem>>, %arg51: memref<128x128xf32, #tpu.memory_space<vmem>>, %arg52: memref<1x128xf32, #tpu.memory_space<vmem>>, %arg53: memref<128x256xf32, #tpu.memory_space<vmem>>, %arg54: memref<1x256xf32, #tpu.memory_space<vmem>>, %arg55: memref<16x128xf32, #tpu.memory_space<vmem>>, %arg56: memref<128x128xf32, #tpu.memory_space<vmem>>, %arg57: memref<1x128xf32, #tpu.memory_space<vmem>>, %arg58: memref<128x128xf32, #tpu.memory_space<vmem>>, %arg59: memref<1x128xf32, #tpu.memory_space<vmem>>, %arg60: memref<128x256xf32, #tpu.memory_space<vmem>>, %arg61: memref<1x256xf32, #tpu.memory_space<vmem>>, %arg62: memref<1x16xf32, #tpu.memory_space<vmem>>, %arg63: memref<1x16xf32, #tpu.memory_space<vmem>>, %arg64: memref<16x128xf32, #tpu.memory_space<vmem>>, %arg65: memref<128x128xf32, #tpu.memory_space<vmem>>, %arg66: memref<1x128xf32, #tpu.memory_space<vmem>>, %arg67: memref<128x128xf32, #tpu.memory_space<vmem>>, %arg68: memref<1x128xf32, #tpu.memory_space<vmem>>, %arg69: memref<128x256xf32, #tpu.memory_space<vmem>>, %arg70: memref<1x256xf32, #tpu.memory_space<vmem>>, %arg71: memref<16x128xf32, #tpu.memory_space<vmem>>, %arg72: memref<128x128xf32, #tpu.memory_space<vmem>>, %arg73: memref<1x128xf32, #tpu.memory_space<vmem>>, %arg74: memref<128x128xf32, #tpu.memory_space<vmem>>, %arg75: memref<1x128xf32, #tpu.memory_space<vmem>>, %arg76: memref<128x256xf32, #tpu.memory_space<vmem>>, %arg77: memref<1x256xf32, #tpu.memory_space<vmem>>, %arg78: memref<2x16xf32, #tpu.memory_space<vmem>>, %arg79: memref<2x1xf32, #tpu.memory_space<vmem>>) attributes {dimension_semantics = [#tpu.dimension_semantics<parallel>], iteration_bounds = array<i64: 1>, scalar_prefetch = 0 : i64, scratch_operands = 0 : i64, tpu.core_type = #tpu.core_type<tc>, window_params = [{transform_indices = @transform_0, window_bounds = array<i64: 2, 16>}, {transform_indices = @transform_1, window_bounds = array<i64: 2, 16>}, {pipeline_mode = #tpu.pipeline_mode<synchronous>, transform_indices = @transform_2, window_bounds = array<i64: 1, 1>}, {pipeline_mode = #tpu.pipeline_mode<synchronous>, transform_indices = @transform_3, window_bounds = array<i64: 16, 16>}, {pipeline_mode = #tpu.pipeline_mode<synchronous>, transform_indices = @transform_4, window_bounds = array<i64: 1, 16>}, {pipeline_mode = #tpu.pipeline_mode<synchronous>, transform_indices = @transform_5, window_bounds = array<i64: 16, 16>}, {pipeline_mode = #tpu.pipeline_mode<synchronous>, transform_indices = @transform_6, window_bounds = array<i64: 1, 16>}, {pipeline_mode = #tpu.pipeline_mode<synchronous>, transform_indices = @transform_7, window_bounds = array<i64: 16, 16>}, {pipeline_mode = #tpu.pipeline_mode<synchronous>, transform_indices = @transform_8, window_bounds = array<i64: 1, 16>}, {pipeline_mode = #tpu.pipeline_mode<synchronous>, transform_indices = @transform_9, window_bounds = array<i64: 16, 16>}, {pipeline_mode = #tpu.pipeline_mode<synchronous>, transform_indices = @transform_10, window_bounds = array<i64: 1, 16>}, {pipeline_mode = #tpu.pipeline_mode<synchronous>, transform_indices = @transform_11, window_bounds = array<i64: 16, 1024>}, {pipeline_mode = #tpu.pipeline_mode<synchronous>, transform_indices = @transform_12, window_bounds = array<i64: 1, 1024>}, {pipeline_mode = #tpu.pipeline_mode<synchronous>, transform_indices = @transform_13, window_bounds = array<i64: 1, 16>}, {pipeline_mode = #tpu.pipeline_mode<synchronous>, transform_indices = @transform_14, window_bounds = array<i64: 1, 16>}, {pipeline_mode = #tpu.pipeline_mode<synchronous>, transform_indices = @transform_15, window_bounds = array<i64: 16, 128>}, {pipeline_mode = #tpu.pipeline_mode<synchronous>, transform_indices = @transform_16, window_bounds = array<i64: 128, 128>}, {pipeline_mode = #tpu.pipeline_mode<synchronous>, transform_indices = @transform_17, window_bounds = array<i64: 1, 128>}, {pipeline_mode = #tpu.pipeline_mode<synchronous>, transform_indices = @transform_18, window_bounds = array<i64: 128, 128>}, {pipeline_mode = #tpu.pipeline_mode<synchronous>, transform_indices = @transform_19, window_bounds = array<i64: 1, 128>}, {pipeline_mode = #tpu.pipeline_mode<synchronous>, transform_indices = @transform_20, window_bounds = array<i64: 128, 256>}, {pipeline_mode = #tpu.pipeline_mode<synchronous>, transform_indices = @transform_21, window_bounds = array<i64: 1, 256>}, {pipeline_mode = #tpu.pipeline_mode<synchronous>, transform_indices = @transform_22, window_bounds = array<i64: 16, 128>}, {pipeline_mode = #tpu.pipeline_mode<synchronous>, transform_indices = @transform_23, window_bounds = array<i64: 128, 128>}, {pipeline_mode = #tpu.pipeline_mode<synchronous>, transform_indices = @transform_24, window_bounds = array<i64: 1, 128>}, {pipeline_mode = #tpu.pipeline_mode<synchronous>, transform_indices = @transform_25, window_bounds = array<i64: 128, 128>}, {pipeline_mode = #tpu.pipeline_mode<synchronous>, transform_indices = @transform_26, window_bounds = array<i64: 1, 128>}, {pipeline_mode = #tpu.pipeline_mode<synchronous>, transform_indices = @transform_27, window_bounds = array<i64: 128, 256>}, {pipeline_mode = #tpu.pipeline_mode<synchronous>, transform_indices = @transform_28, window_bounds = array<i64: 1, 256>}, {pipeline_mode = #tpu.pipeline_mode<synchronous>, transform_indices = @transform_29, window_bounds = array<i64: 1, 16>}, {pipeline_mode = #tpu.pipeline_mode<synchronous>, transform_indices = @transform_30, window_bounds = array<i64: 1, 16>}, {pipeline_mode = #tpu.pipeline_mode<synchronous>, transform_indices = @transform_31, window_bounds = array<i64: 16, 128>}, {pipeline_mode = #tpu.pipeline_mode<synchronous>, transform_indices = @transform_32, window_bounds = array<i64: 128, 128>}, {pipeline_mode = #tpu.pipeline_mode<synchronous>, transform_indices = @transform_33, window_bounds = array<i64: 1, 128>}, {pipeline_mode = #tpu.pipeline_mode<synchronous>, transform_indices = @transform_34, window_bounds = array<i64: 128, 128>}, {pipeline_mode = #tpu.pipeline_mode<synchronous>, transform_indices = @transform_35, window_bounds = array<i64: 1, 128>}, {pipeline_mode = #tpu.pipeline_mode<synchronous>, transform_indices = @transform_36, window_bounds = array<i64: 128, 256>}, {pipeline_mode = #tpu.pipeline_mode<synchronous>, transform_indices = @transform_37, window_bounds = array<i64: 1, 256>}, {pipeline_mode = #tpu.pipeline_mode<synchronous>, transform_indices = @transform_38, window_bounds = array<i64: 16, 128>}, {pipeline_mode = #tpu.pipeline_mode<synchronous>, transform_indices = @transform_39, window_bounds = array<i64: 128, 128>}, {pipeline_mode = #tpu.pipeline_mode<synchronous>, transform_indices = @transform_40, window_bounds = array<i64: 1, 128>}, {pipeline_mode = #tpu.pipeline_mode<synchronous>, transform_indices = @transform_41, window_bounds = array<i64: 128, 128>}, {pipeline_mode = #tpu.pipeline_mode<synchronous>, transform_indices = @transform_42, window_bounds = array<i64: 1, 128>}, {pipeline_mode = #tpu.pipeline_mode<synchronous>, transform_indices = @transform_43, window_bounds = array<i64: 128, 256>}, {pipeline_mode = #tpu.pipeline_mode<synchronous>, transform_indices = @transform_44, window_bounds = array<i64: 1, 256>}, {pipeline_mode = #tpu.pipeline_mode<synchronous>, transform_indices = @transform_45, window_bounds = array<i64: 1, 16>}, {pipeline_mode = #tpu.pipeline_mode<synchronous>, transform_indices = @transform_46, window_bounds = array<i64: 1, 16>}, {pipeline_mode = #tpu.pipeline_mode<synchronous>, transform_indices = @transform_47, window_bounds = array<i64: 16, 128>}, {pipeline_mode = #tpu.pipeline_mode<synchronous>, transform_indices = @transform_48, window_bounds = array<i64: 128, 128>}, {pipeline_mode = #tpu.pipeline_mode<synchronous>, transform_indices = @transform_49, window_bounds = array<i64: 1, 128>}, {pipeline_mode = #tpu.pipeline_mode<synchronous>, transform_indices = @transform_50, window_bounds = array<i64: 128, 128>}, {pipeline_mode = #tpu.pipeline_mode<synchronous>, transform_indices = @transform_51, window_bounds = array<i64: 1, 128>}, {pipeline_mode = #tpu.pipeline_mode<synchronous>, transform_indices = @transform_52, window_bounds = array<i64: 128, 256>}, {pipeline_mode = #tpu.pipeline_mode<synchronous>, transform_indices = @transform_53, window_bounds = array<i64: 1, 256>}, {pipeline_mode = #tpu.pipeline_mode<synchronous>, transform_indices = @transform_54, window_bounds = array<i64: 16, 128>}, {pipeline_mode = #tpu.pipeline_mode<synchronous>, transform_indices = @transform_55, window_bounds = array<i64: 128, 128>}, {pipeline_mode = #tpu.pipeline_mode<synchronous>, transform_indices = @transform_56, window_bounds = array<i64: 1, 128>}, {pipeline_mode = #tpu.pipeline_mode<synchronous>, transform_indices = @transform_57, window_bounds = array<i64: 128, 128>}, {pipeline_mode = #tpu.pipeline_mode<synchronous>, transform_indices = @transform_58, window_bounds = array<i64: 1, 128>}, {pipeline_mode = #tpu.pipeline_mode<synchronous>, transform_indices = @transform_59, window_bounds = array<i64: 128, 256>}, {pipeline_mode = #tpu.pipeline_mode<synchronous>, transform_indices = @transform_60, window_bounds = array<i64: 1, 256>}, {pipeline_mode = #tpu.pipeline_mode<synchronous>, transform_indices = @transform_61, window_bounds = array<i64: 1, 16>}, {pipeline_mode = #tpu.pipeline_mode<synchronous>, transform_indices = @transform_62, window_bounds = array<i64: 1, 16>}, {pipeline_mode = #tpu.pipeline_mode<synchronous>, transform_indices = @transform_63, window_bounds = array<i64: 16, 128>}, {pipeline_mode = #tpu.pipeline_mode<synchronous>, transform_indices = @transform_64, window_bounds = array<i64: 128, 128>}, {pipeline_mode = #tpu.pipeline_mode<synchronous>, transform_indices = @transform_65, window_bounds = array<i64: 1, 128>}, {pipeline_mode = #tpu.pipeline_mode<synchronous>, transform_indices = @transform_66, window_bounds = array<i64: 128, 128>}, {pipeline_mode = #tpu.pipeline_mode<synchronous>, transform_indices = @transform_67, window_bounds = array<i64: 1, 128>}, {pipeline_mode = #tpu.pipeline_mode<synchronous>, transform_indices = @transform_68, window_bounds = array<i64: 128, 256>}, {pipeline_mode = #tpu.pipeline_mode<synchronous>, transform_indices = @transform_69, window_bounds = array<i64: 1, 256>}, {pipeline_mode = #tpu.pipeline_mode<synchronous>, transform_indices = @transform_70, window_bounds = array<i64: 16, 128>}, {pipeline_mode = #tpu.pipeline_mode<synchronous>, transform_indices = @transform_71, window_bounds = array<i64: 128, 128>}, {pipeline_mode = #tpu.pipeline_mode<synchronous>, transform_indices = @transform_72, window_bounds = array<i64: 1, 128>}, {pipeline_mode = #tpu.pipeline_mode<synchronous>, transform_indices = @transform_73, window_bounds = array<i64: 128, 128>}, {pipeline_mode = #tpu.pipeline_mode<synchronous>, transform_indices = @transform_74, window_bounds = array<i64: 1, 128>}, {pipeline_mode = #tpu.pipeline_mode<synchronous>, transform_indices = @transform_75, window_bounds = array<i64: 128, 256>}, {pipeline_mode = #tpu.pipeline_mode<synchronous>, transform_indices = @transform_76, window_bounds = array<i64: 1, 256>}, {transform_indices = @transform_77, window_bounds = array<i64: 2, 16>}, {transform_indices = @transform_78, window_bounds = array<i64: 2, 1>}]} {
    %c0 = arith.constant 0 : index
    %c0_0 = arith.constant 0 : index
    %0 = vector.load %arg1[%c0, %c0_0] : memref<2x16xf32, #tpu.memory_space<vmem>>, vector<2x16xf32>
    %c0_1 = arith.constant 0 : index
    %c0_2 = arith.constant 0 : index
    %1 = vector.load %arg2[%c0_1, %c0_2] : memref<2x16xf32, #tpu.memory_space<vmem>>, vector<2x16xf32>
    %c0_3 = arith.constant 0 : index
    %c0_4 = arith.constant 0 : index
    %2 = vector.load %arg4[%c0_3, %c0_4] : memref<16x16xf32, #tpu.memory_space<vmem>>, vector<16x16xf32>
    %cst = arith.constant dense<0.000000e+00> : vector<2x16xf32>
    %3 = tpu.matmul %1, %2, %cst {dimension_numbers = #tpu.dot_dimension_numbers<[1], [0], [0], [1], [0, 0, 1, 1], [], []>} : vector<2x16xf32>, vector<16x16xf32>, vector<2x16xf32> -> vector<2x16xf32>
    %c0_5 = arith.constant 0 : index
    %c0_6 = arith.constant 0 : index
    %4 = vector.load %arg5[%c0_5, %c0_6] : memref<1x16xf32, #tpu.memory_space<vmem>>, vector<1x16xf32>
    %5 = vector.broadcast %4 : vector<1x16xf32> to vector<2x16xf32>
    %6 = arith.addf %3, %5 : vector<2x16xf32>
    %cst_7 = arith.constant 0.000000e+00 : f32
    %7 = vector.broadcast %cst_7 : f32 to vector<2x16xf32>
    %8 = arith.cmpf oge, %6, %7 : vector<2x16xf32>
    %cst_8 = arith.constant 0.00999999977 : f32
    %9 = vector.broadcast %cst_8 : f32 to vector<2x16xf32>
    %10 = arith.mulf %9, %6 : vector<2x16xf32>
    %11 = arith.select %8, %6, %10 : vector<2x16xi1>, vector<2x16xf32>
    %c0_9 = arith.constant 0 : index
    %c0_10 = arith.constant 0 : index
    %12 = vector.load %arg6[%c0_9, %c0_10] : memref<16x16xf32, #tpu.memory_space<vmem>>, vector<16x16xf32>
    %cst_11 = arith.constant dense<0.000000e+00> : vector<2x16xf32>
    %13 = tpu.matmul %11, %12, %cst_11 {dimension_numbers = #tpu.dot_dimension_numbers<[1], [0], [0], [1], [0, 0, 1, 1], [], []>} : vector<2x16xf32>, vector<16x16xf32>, vector<2x16xf32> -> vector<2x16xf32>
    %c0_12 = arith.constant 0 : index
    %c0_13 = arith.constant 0 : index
    %14 = vector.load %arg7[%c0_12, %c0_13] : memref<1x16xf32, #tpu.memory_space<vmem>>, vector<1x16xf32>
    %15 = vector.broadcast %14 : vector<1x16xf32> to vector<2x16xf32>
    %16 = arith.addf %13, %15 : vector<2x16xf32>
    %cst_14 = arith.constant 0.000000e+00 : f32
    %17 = vector.broadcast %cst_14 : f32 to vector<2x16xf32>
    %18 = arith.cmpf oge, %16, %17 : vector<2x16xf32>
    %cst_15 = arith.constant 0.00999999977 : f32
    %19 = vector.broadcast %cst_15 : f32 to vector<2x16xf32>
    %20 = arith.mulf %19, %16 : vector<2x16xf32>
    %21 = arith.select %18, %16, %20 : vector<2x16xi1>, vector<2x16xf32>
    %c0_16 = arith.constant 0 : index
    %c0_17 = arith.constant 0 : index
    %22 = vector.load %arg8[%c0_16, %c0_17] : memref<16x16xf32, #tpu.memory_space<vmem>>, vector<16x16xf32>
    %cst_18 = arith.constant dense<0.000000e+00> : vector<2x16xf32>
    %23 = tpu.matmul %21, %22, %cst_18 {dimension_numbers = #tpu.dot_dimension_numbers<[1], [0], [0], [1], [0, 0, 1, 1], [], []>} : vector<2x16xf32>, vector<16x16xf32>, vector<2x16xf32> -> vector<2x16xf32>
    %c0_19 = arith.constant 0 : index
    %c0_20 = arith.constant 0 : index
    %24 = vector.load %arg9[%c0_19, %c0_20] : memref<1x16xf32, #tpu.memory_space<vmem>>, vector<1x16xf32>
    %25 = vector.broadcast %24 : vector<1x16xf32> to vector<2x16xf32>
    %26 = arith.addf %23, %25 : vector<2x16xf32>
    %cst_21 = arith.constant 0.000000e+00 : f32
    %27 = vector.broadcast %cst_21 : f32 to vector<2x16xf32>
    %28 = arith.cmpf oge, %26, %27 : vector<2x16xf32>
    %cst_22 = arith.constant 0.00999999977 : f32
    %29 = vector.broadcast %cst_22 : f32 to vector<2x16xf32>
    %30 = arith.mulf %29, %26 : vector<2x16xf32>
    %31 = arith.select %28, %26, %30 : vector<2x16xi1>, vector<2x16xf32>
    %c0_23 = arith.constant 0 : index
    %c0_24 = arith.constant 0 : index
    %32 = vector.load %arg10[%c0_23, %c0_24] : memref<16x16xf32, #tpu.memory_space<vmem>>, vector<16x16xf32>
    %cst_25 = arith.constant dense<0.000000e+00> : vector<2x16xf32>
    %33 = tpu.matmul %31, %32, %cst_25 {dimension_numbers = #tpu.dot_dimension_numbers<[1], [0], [0], [1], [0, 0, 1, 1], [], []>} : vector<2x16xf32>, vector<16x16xf32>, vector<2x16xf32> -> vector<2x16xf32>
    %c0_26 = arith.constant 0 : index
    %c0_27 = arith.constant 0 : index
    %34 = vector.load %arg11[%c0_26, %c0_27] : memref<1x16xf32, #tpu.memory_space<vmem>>, vector<1x16xf32>
    %35 = vector.broadcast %34 : vector<1x16xf32> to vector<2x16xf32>
    %36 = arith.addf %33, %35 : vector<2x16xf32>
    %c0_28 = arith.constant 0 : index
    %c0_29 = arith.constant 0 : index
    %37 = vector.load %arg12[%c0_28, %c0_29] : memref<16x1024xf32, #tpu.memory_space<vmem>>, vector<16x1024xf32>
    %cst_30 = arith.constant dense<0.000000e+00> : vector<2x1024xf32>
    %38 = tpu.matmul %36, %37, %cst_30 {dimension_numbers = #tpu.dot_dimension_numbers<[1], [0], [0], [1], [0, 0, 1, 1], [], []>} : vector<2x16xf32>, vector<16x1024xf32>, vector<2x1024xf32> -> vector<2x1024xf32>
    %c0_31 = arith.constant 0 : index
    %c0_32 = arith.constant 0 : index
    %39 = vector.load %arg13[%c0_31, %c0_32] : memref<1x1024xf32, #tpu.memory_space<vmem>>, vector<1x1024xf32>
    %40 = vector.broadcast %39 : vector<1x1024xf32> to vector<2x1024xf32>
    %41 = arith.addf %38, %40 : vector<2x1024xf32>
    %cst_33 = arith.constant 0.000000e+00 : f32
    %42 = vector.broadcast %cst_33 : f32 to vector<2x1xf32>
    %c0_34 = arith.constant 0 : index
    %c0_35 = arith.constant 0 : index
    %43 = vector.load %arg3[%c0_34, %c0_35] : memref<1x1xf32, #tpu.memory_space<vmem>>, vector<1x1xf32>
    %44 = vector.broadcast %43 : vector<1x1xf32> to vector<2x1xf32>
    %45 = arith.addf %42, %44 : vector<2x1xf32>
    %c0_36 = arith.constant 0 : index
    %c0_37 = arith.constant 0 : index
    %46 = vector.load %arg15[%c0_36, %c0_37] : memref<1x16xf32, #tpu.memory_space<vmem>>, vector<1x16xf32>
    %c0_38 = arith.constant 0 : index
    %c0_39 = arith.constant 0 : index
    %47 = vector.load %arg14[%c0_38, %c0_39] : memref<1x16xf32, #tpu.memory_space<vmem>>, vector<1x16xf32>
    %48 = vector.broadcast %47 : vector<1x16xf32> to vector<2x16xf32>
    %49 = arith.addf %0, %48 : vector<2x16xf32>
    %50 = vector.broadcast %46 : vector<1x16xf32> to vector<2x16xf32>
    %51 = arith.mulf %50, %49 : vector<2x16xf32>
    %c0_40 = arith.constant 0 : index
    %c0_41 = arith.constant 0 : index
    %52 = vector.load %arg16[%c0_40, %c0_41] : memref<16x128xf32, #tpu.memory_space<vmem>>, vector<16x128xf32>
    %cst_42 = arith.constant dense<0.000000e+00> : vector<2x128xf32>
    %53 = tpu.matmul %51, %52, %cst_42 {dimension_numbers = #tpu.dot_dimension_numbers<[1], [0], [0], [1], [0, 0, 1, 1], [], []>} : vector<2x16xf32>, vector<16x128xf32>, vector<2x128xf32> -> vector<2x128xf32>
    %54 = vector.extract_strided_slice %41 {offsets = [0, 0], sizes = [2, 128], strides = [1, 1]} : vector<2x1024xf32> to vector<2x128xf32>
    %55 = arith.addf %53, %54 : vector<2x128xf32>
    %cst_43 = arith.constant 0.000000e+00 : f32
    %56 = vector.broadcast %cst_43 : f32 to vector<2x128xf32>
    %57 = arith.cmpf oge, %55, %56 : vector<2x128xf32>
    %cst_44 = arith.constant 0.00999999977 : f32
    %58 = vector.broadcast %cst_44 : f32 to vector<2x128xf32>
    %59 = arith.mulf %58, %55 : vector<2x128xf32>
    %60 = arith.select %57, %55, %59 : vector<2x128xi1>, vector<2x128xf32>
    %c0_45 = arith.constant 0 : index
    %c0_46 = arith.constant 0 : index
    %61 = vector.load %arg17[%c0_45, %c0_46] : memref<128x128xf32, #tpu.memory_space<vmem>>, vector<128x128xf32>
    %cst_47 = arith.constant dense<0.000000e+00> : vector<2x128xf32>
    %62 = tpu.matmul %60, %61, %cst_47 {dimension_numbers = #tpu.dot_dimension_numbers<[1], [0], [0], [1], [0, 0, 1, 1], [], []>} : vector<2x128xf32>, vector<128x128xf32>, vector<2x128xf32> -> vector<2x128xf32>
    %c0_48 = arith.constant 0 : index
    %c0_49 = arith.constant 0 : index
    %63 = vector.load %arg18[%c0_48, %c0_49] : memref<1x128xf32, #tpu.memory_space<vmem>>, vector<1x128xf32>
    %64 = vector.broadcast %63 : vector<1x128xf32> to vector<2x128xf32>
    %65 = arith.addf %62, %64 : vector<2x128xf32>
    %cst_50 = arith.constant 0.000000e+00 : f32
    %66 = vector.broadcast %cst_50 : f32 to vector<2x128xf32>
    %67 = arith.cmpf oge, %65, %66 : vector<2x128xf32>
    %cst_51 = arith.constant 0.00999999977 : f32
    %68 = vector.broadcast %cst_51 : f32 to vector<2x128xf32>
    %69 = arith.mulf %68, %65 : vector<2x128xf32>
    %70 = arith.select %67, %65, %69 : vector<2x128xi1>, vector<2x128xf32>
    %c0_52 = arith.constant 0 : index
    %c0_53 = arith.constant 0 : index
    %71 = vector.load %arg19[%c0_52, %c0_53] : memref<128x128xf32, #tpu.memory_space<vmem>>, vector<128x128xf32>
    %cst_54 = arith.constant dense<0.000000e+00> : vector<2x128xf32>
    %72 = tpu.matmul %70, %71, %cst_54 {dimension_numbers = #tpu.dot_dimension_numbers<[1], [0], [0], [1], [0, 0, 1, 1], [], []>} : vector<2x128xf32>, vector<128x128xf32>, vector<2x128xf32> -> vector<2x128xf32>
    %c0_55 = arith.constant 0 : index
    %c0_56 = arith.constant 0 : index
    %73 = vector.load %arg20[%c0_55, %c0_56] : memref<1x128xf32, #tpu.memory_space<vmem>>, vector<1x128xf32>
    %74 = vector.broadcast %73 : vector<1x128xf32> to vector<2x128xf32>
    %75 = arith.addf %72, %74 : vector<2x128xf32>
    %cst_57 = arith.constant 0.000000e+00 : f32
    %76 = vector.broadcast %cst_57 : f32 to vector<2x128xf32>
    %77 = arith.cmpf oge, %75, %76 : vector<2x128xf32>
    %cst_58 = arith.constant 0.00999999977 : f32
    %78 = vector.broadcast %cst_58 : f32 to vector<2x128xf32>
    %79 = arith.mulf %78, %75 : vector<2x128xf32>
    %80 = arith.select %77, %75, %79 : vector<2x128xi1>, vector<2x128xf32>
    %c0_59 = arith.constant 0 : index
    %c0_60 = arith.constant 0 : index
    %81 = vector.load %arg21[%c0_59, %c0_60] : memref<128x256xf32, #tpu.memory_space<vmem>>, vector<128x256xf32>
    %cst_61 = arith.constant dense<0.000000e+00> : vector<2x256xf32>
    %82 = tpu.matmul %80, %81, %cst_61 {dimension_numbers = #tpu.dot_dimension_numbers<[1], [0], [0], [1], [0, 0, 1, 1], [], []>} : vector<2x128xf32>, vector<128x256xf32>, vector<2x256xf32> -> vector<2x256xf32>
    %c0_62 = arith.constant 0 : index
    %c0_63 = arith.constant 0 : index
    %83 = vector.load %arg22[%c0_62, %c0_63] : memref<1x256xf32, #tpu.memory_space<vmem>>, vector<1x256xf32>
    %84 = vector.broadcast %83 : vector<1x256xf32> to vector<2x256xf32>
    %85 = arith.addf %82, %84 : vector<2x256xf32>
    %86 = vector.extract_strided_slice %85 {offsets = [0, 0], sizes = [2, 16], strides = [1, 1]} : vector<2x256xf32> to vector<2x16xf32>
    %87 = math.tanh %86 : vector<2x16xf32>
    %88 = vector.extract_strided_slice %85 {offsets = [0, 128], sizes = [2, 16], strides = [1, 1]} : vector<2x256xf32> to vector<2x16xf32>
    %89 = math.exp %87 : vector<2x16xf32>
    %90 = arith.mulf %51, %89 : vector<2x16xf32>
    %91 = arith.addf %90, %88 : vector<2x16xf32>
    %cst_64 = arith.constant dense<0.000000e+00> : vector<2xf32>
    %92 = vector.multi_reduction <add>, %87, %cst_64 [1] : vector<2x16xf32> to vector<2xf32>
    %93 = vector.shape_cast %92 : vector<2xf32> to vector<2x1xf32>
    %94 = arith.addf %45, %93 : vector<2x1xf32>
    %c0_65 = arith.constant 0 : index
    %c0_66 = arith.constant 0 : index
    %95 = vector.load %arg23[%c0_65, %c0_66] : memref<16x128xf32, #tpu.memory_space<vmem>>, vector<16x128xf32>
    %cst_67 = arith.constant dense<0.000000e+00> : vector<2x128xf32>
    %96 = tpu.matmul %91, %95, %cst_67 {dimension_numbers = #tpu.dot_dimension_numbers<[1], [0], [0], [1], [0, 0, 1, 1], [], []>} : vector<2x16xf32>, vector<16x128xf32>, vector<2x128xf32> -> vector<2x128xf32>
    %97 = vector.extract_strided_slice %41 {offsets = [0, 128], sizes = [2, 128], strides = [1, 1]} : vector<2x1024xf32> to vector<2x128xf32>
    %98 = arith.addf %96, %97 : vector<2x128xf32>
    %cst_68 = arith.constant 0.000000e+00 : f32
    %99 = vector.broadcast %cst_68 : f32 to vector<2x128xf32>
    %100 = arith.cmpf oge, %98, %99 : vector<2x128xf32>
    %cst_69 = arith.constant 0.00999999977 : f32
    %101 = vector.broadcast %cst_69 : f32 to vector<2x128xf32>
    %102 = arith.mulf %101, %98 : vector<2x128xf32>
    %103 = arith.select %100, %98, %102 : vector<2x128xi1>, vector<2x128xf32>
    %c0_70 = arith.constant 0 : index
    %c0_71 = arith.constant 0 : index
    %104 = vector.load %arg24[%c0_70, %c0_71] : memref<128x128xf32, #tpu.memory_space<vmem>>, vector<128x128xf32>
    %cst_72 = arith.constant dense<0.000000e+00> : vector<2x128xf32>
    %105 = tpu.matmul %103, %104, %cst_72 {dimension_numbers = #tpu.dot_dimension_numbers<[1], [0], [0], [1], [0, 0, 1, 1], [], []>} : vector<2x128xf32>, vector<128x128xf32>, vector<2x128xf32> -> vector<2x128xf32>
    %c0_73 = arith.constant 0 : index
    %c0_74 = arith.constant 0 : index
    %106 = vector.load %arg25[%c0_73, %c0_74] : memref<1x128xf32, #tpu.memory_space<vmem>>, vector<1x128xf32>
    %107 = vector.broadcast %106 : vector<1x128xf32> to vector<2x128xf32>
    %108 = arith.addf %105, %107 : vector<2x128xf32>
    %cst_75 = arith.constant 0.000000e+00 : f32
    %109 = vector.broadcast %cst_75 : f32 to vector<2x128xf32>
    %110 = arith.cmpf oge, %108, %109 : vector<2x128xf32>
    %cst_76 = arith.constant 0.00999999977 : f32
    %111 = vector.broadcast %cst_76 : f32 to vector<2x128xf32>
    %112 = arith.mulf %111, %108 : vector<2x128xf32>
    %113 = arith.select %110, %108, %112 : vector<2x128xi1>, vector<2x128xf32>
    %c0_77 = arith.constant 0 : index
    %c0_78 = arith.constant 0 : index
    %114 = vector.load %arg26[%c0_77, %c0_78] : memref<128x128xf32, #tpu.memory_space<vmem>>, vector<128x128xf32>
    %cst_79 = arith.constant dense<0.000000e+00> : vector<2x128xf32>
    %115 = tpu.matmul %113, %114, %cst_79 {dimension_numbers = #tpu.dot_dimension_numbers<[1], [0], [0], [1], [0, 0, 1, 1], [], []>} : vector<2x128xf32>, vector<128x128xf32>, vector<2x128xf32> -> vector<2x128xf32>
    %c0_80 = arith.constant 0 : index
    %c0_81 = arith.constant 0 : index
    %116 = vector.load %arg27[%c0_80, %c0_81] : memref<1x128xf32, #tpu.memory_space<vmem>>, vector<1x128xf32>
    %117 = vector.broadcast %116 : vector<1x128xf32> to vector<2x128xf32>
    %118 = arith.addf %115, %117 : vector<2x128xf32>
    %cst_82 = arith.constant 0.000000e+00 : f32
    %119 = vector.broadcast %cst_82 : f32 to vector<2x128xf32>
    %120 = arith.cmpf oge, %118, %119 : vector<2x128xf32>
    %cst_83 = arith.constant 0.00999999977 : f32
    %121 = vector.broadcast %cst_83 : f32 to vector<2x128xf32>
    %122 = arith.mulf %121, %118 : vector<2x128xf32>
    %123 = arith.select %120, %118, %122 : vector<2x128xi1>, vector<2x128xf32>
    %c0_84 = arith.constant 0 : index
    %c0_85 = arith.constant 0 : index
    %124 = vector.load %arg28[%c0_84, %c0_85] : memref<128x256xf32, #tpu.memory_space<vmem>>, vector<128x256xf32>
    %cst_86 = arith.constant dense<0.000000e+00> : vector<2x256xf32>
    %125 = tpu.matmul %123, %124, %cst_86 {dimension_numbers = #tpu.dot_dimension_numbers<[1], [0], [0], [1], [0, 0, 1, 1], [], []>} : vector<2x128xf32>, vector<128x256xf32>, vector<2x256xf32> -> vector<2x256xf32>
    %c0_87 = arith.constant 0 : index
    %c0_88 = arith.constant 0 : index
    %126 = vector.load %arg29[%c0_87, %c0_88] : memref<1x256xf32, #tpu.memory_space<vmem>>, vector<1x256xf32>
    %127 = vector.broadcast %126 : vector<1x256xf32> to vector<2x256xf32>
    %128 = arith.addf %125, %127 : vector<2x256xf32>
    %129 = vector.extract_strided_slice %128 {offsets = [0, 0], sizes = [2, 16], strides = [1, 1]} : vector<2x256xf32> to vector<2x16xf32>
    %130 = math.tanh %129 : vector<2x16xf32>
    %131 = vector.extract_strided_slice %128 {offsets = [0, 128], sizes = [2, 16], strides = [1, 1]} : vector<2x256xf32> to vector<2x16xf32>
    %132 = math.exp %130 : vector<2x16xf32>
    %133 = arith.mulf %91, %132 : vector<2x16xf32>
    %134 = arith.addf %133, %131 : vector<2x16xf32>
    %cst_89 = arith.constant dense<0.000000e+00> : vector<2xf32>
    %135 = vector.multi_reduction <add>, %130, %cst_89 [1] : vector<2x16xf32> to vector<2xf32>
    %136 = vector.shape_cast %135 : vector<2xf32> to vector<2x1xf32>
    %137 = arith.addf %94, %136 : vector<2x1xf32>
    %c0_90 = arith.constant 0 : index
    %c0_91 = arith.constant 0 : index
    %138 = vector.load %arg31[%c0_90, %c0_91] : memref<1x16xf32, #tpu.memory_space<vmem>>, vector<1x16xf32>
    %c0_92 = arith.constant 0 : index
    %c0_93 = arith.constant 0 : index
    %139 = vector.load %arg30[%c0_92, %c0_93] : memref<1x16xf32, #tpu.memory_space<vmem>>, vector<1x16xf32>
    %140 = vector.broadcast %139 : vector<1x16xf32> to vector<2x16xf32>
    %141 = arith.addf %134, %140 : vector<2x16xf32>
    %142 = vector.broadcast %138 : vector<1x16xf32> to vector<2x16xf32>
    %143 = arith.mulf %142, %141 : vector<2x16xf32>
    %c0_94 = arith.constant 0 : index
    %c0_95 = arith.constant 0 : index
    %144 = vector.load %arg32[%c0_94, %c0_95] : memref<16x128xf32, #tpu.memory_space<vmem>>, vector<16x128xf32>
    %cst_96 = arith.constant dense<0.000000e+00> : vector<2x128xf32>
    %145 = tpu.matmul %143, %144, %cst_96 {dimension_numbers = #tpu.dot_dimension_numbers<[1], [0], [0], [1], [0, 0, 1, 1], [], []>} : vector<2x16xf32>, vector<16x128xf32>, vector<2x128xf32> -> vector<2x128xf32>
    %146 = vector.extract_strided_slice %41 {offsets = [0, 256], sizes = [2, 128], strides = [1, 1]} : vector<2x1024xf32> to vector<2x128xf32>
    %147 = arith.addf %145, %146 : vector<2x128xf32>
    %cst_97 = arith.constant 0.000000e+00 : f32
    %148 = vector.broadcast %cst_97 : f32 to vector<2x128xf32>
    %149 = arith.cmpf oge, %147, %148 : vector<2x128xf32>
    %cst_98 = arith.constant 0.00999999977 : f32
    %150 = vector.broadcast %cst_98 : f32 to vector<2x128xf32>
    %151 = arith.mulf %150, %147 : vector<2x128xf32>
    %152 = arith.select %149, %147, %151 : vector<2x128xi1>, vector<2x128xf32>
    %c0_99 = arith.constant 0 : index
    %c0_100 = arith.constant 0 : index
    %153 = vector.load %arg33[%c0_99, %c0_100] : memref<128x128xf32, #tpu.memory_space<vmem>>, vector<128x128xf32>
    %cst_101 = arith.constant dense<0.000000e+00> : vector<2x128xf32>
    %154 = tpu.matmul %152, %153, %cst_101 {dimension_numbers = #tpu.dot_dimension_numbers<[1], [0], [0], [1], [0, 0, 1, 1], [], []>} : vector<2x128xf32>, vector<128x128xf32>, vector<2x128xf32> -> vector<2x128xf32>
    %c0_102 = arith.constant 0 : index
    %c0_103 = arith.constant 0 : index
    %155 = vector.load %arg34[%c0_102, %c0_103] : memref<1x128xf32, #tpu.memory_space<vmem>>, vector<1x128xf32>
    %156 = vector.broadcast %155 : vector<1x128xf32> to vector<2x128xf32>
    %157 = arith.addf %154, %156 : vector<2x128xf32>
    %cst_104 = arith.constant 0.000000e+00 : f32
    %158 = vector.broadcast %cst_104 : f32 to vector<2x128xf32>
    %159 = arith.cmpf oge, %157, %158 : vector<2x128xf32>
    %cst_105 = arith.constant 0.00999999977 : f32
    %160 = vector.broadcast %cst_105 : f32 to vector<2x128xf32>
    %161 = arith.mulf %160, %157 : vector<2x128xf32>
    %162 = arith.select %159, %157, %161 : vector<2x128xi1>, vector<2x128xf32>
    %c0_106 = arith.constant 0 : index
    %c0_107 = arith.constant 0 : index
    %163 = vector.load %arg35[%c0_106, %c0_107] : memref<128x128xf32, #tpu.memory_space<vmem>>, vector<128x128xf32>
    %cst_108 = arith.constant dense<0.000000e+00> : vector<2x128xf32>
    %164 = tpu.matmul %162, %163, %cst_108 {dimension_numbers = #tpu.dot_dimension_numbers<[1], [0], [0], [1], [0, 0, 1, 1], [], []>} : vector<2x128xf32>, vector<128x128xf32>, vector<2x128xf32> -> vector<2x128xf32>
    %c0_109 = arith.constant 0 : index
    %c0_110 = arith.constant 0 : index
    %165 = vector.load %arg36[%c0_109, %c0_110] : memref<1x128xf32, #tpu.memory_space<vmem>>, vector<1x128xf32>
    %166 = vector.broadcast %165 : vector<1x128xf32> to vector<2x128xf32>
    %167 = arith.addf %164, %166 : vector<2x128xf32>
    %cst_111 = arith.constant 0.000000e+00 : f32
    %168 = vector.broadcast %cst_111 : f32 to vector<2x128xf32>
    %169 = arith.cmpf oge, %167, %168 : vector<2x128xf32>
    %cst_112 = arith.constant 0.00999999977 : f32
    %170 = vector.broadcast %cst_112 : f32 to vector<2x128xf32>
    %171 = arith.mulf %170, %167 : vector<2x128xf32>
    %172 = arith.select %169, %167, %171 : vector<2x128xi1>, vector<2x128xf32>
    %c0_113 = arith.constant 0 : index
    %c0_114 = arith.constant 0 : index
    %173 = vector.load %arg37[%c0_113, %c0_114] : memref<128x256xf32, #tpu.memory_space<vmem>>, vector<128x256xf32>
    %cst_115 = arith.constant dense<0.000000e+00> : vector<2x256xf32>
    %174 = tpu.matmul %172, %173, %cst_115 {dimension_numbers = #tpu.dot_dimension_numbers<[1], [0], [0], [1], [0, 0, 1, 1], [], []>} : vector<2x128xf32>, vector<128x256xf32>, vector<2x256xf32> -> vector<2x256xf32>
    %c0_116 = arith.constant 0 : index
    %c0_117 = arith.constant 0 : index
    %175 = vector.load %arg38[%c0_116, %c0_117] : memref<1x256xf32, #tpu.memory_space<vmem>>, vector<1x256xf32>
    %176 = vector.broadcast %175 : vector<1x256xf32> to vector<2x256xf32>
    %177 = arith.addf %174, %176 : vector<2x256xf32>
    %178 = vector.extract_strided_slice %177 {offsets = [0, 0], sizes = [2, 16], strides = [1, 1]} : vector<2x256xf32> to vector<2x16xf32>
    %179 = math.tanh %178 : vector<2x16xf32>
    %180 = vector.extract_strided_slice %177 {offsets = [0, 128], sizes = [2, 16], strides = [1, 1]} : vector<2x256xf32> to vector<2x16xf32>
    %181 = math.exp %179 : vector<2x16xf32>
    %182 = arith.mulf %143, %181 : vector<2x16xf32>
    %183 = arith.addf %182, %180 : vector<2x16xf32>
    %cst_118 = arith.constant dense<0.000000e+00> : vector<2xf32>
    %184 = vector.multi_reduction <add>, %179, %cst_118 [1] : vector<2x16xf32> to vector<2xf32>
    %185 = vector.shape_cast %184 : vector<2xf32> to vector<2x1xf32>
    %186 = arith.addf %137, %185 : vector<2x1xf32>
    %c0_119 = arith.constant 0 : index
    %c0_120 = arith.constant 0 : index
    %187 = vector.load %arg39[%c0_119, %c0_120] : memref<16x128xf32, #tpu.memory_space<vmem>>, vector<16x128xf32>
    %cst_121 = arith.constant dense<0.000000e+00> : vector<2x128xf32>
    %188 = tpu.matmul %183, %187, %cst_121 {dimension_numbers = #tpu.dot_dimension_numbers<[1], [0], [0], [1], [0, 0, 1, 1], [], []>} : vector<2x16xf32>, vector<16x128xf32>, vector<2x128xf32> -> vector<2x128xf32>
    %189 = vector.extract_strided_slice %41 {offsets = [0, 384], sizes = [2, 128], strides = [1, 1]} : vector<2x1024xf32> to vector<2x128xf32>
    %190 = arith.addf %188, %189 : vector<2x128xf32>
    %cst_122 = arith.constant 0.000000e+00 : f32
    %191 = vector.broadcast %cst_122 : f32 to vector<2x128xf32>
    %192 = arith.cmpf oge, %190, %191 : vector<2x128xf32>
    %cst_123 = arith.constant 0.00999999977 : f32
    %193 = vector.broadcast %cst_123 : f32 to vector<2x128xf32>
    %194 = arith.mulf %193, %190 : vector<2x128xf32>
    %195 = arith.select %192, %190, %194 : vector<2x128xi1>, vector<2x128xf32>
    %c0_124 = arith.constant 0 : index
    %c0_125 = arith.constant 0 : index
    %196 = vector.load %arg40[%c0_124, %c0_125] : memref<128x128xf32, #tpu.memory_space<vmem>>, vector<128x128xf32>
    %cst_126 = arith.constant dense<0.000000e+00> : vector<2x128xf32>
    %197 = tpu.matmul %195, %196, %cst_126 {dimension_numbers = #tpu.dot_dimension_numbers<[1], [0], [0], [1], [0, 0, 1, 1], [], []>} : vector<2x128xf32>, vector<128x128xf32>, vector<2x128xf32> -> vector<2x128xf32>
    %c0_127 = arith.constant 0 : index
    %c0_128 = arith.constant 0 : index
    %198 = vector.load %arg41[%c0_127, %c0_128] : memref<1x128xf32, #tpu.memory_space<vmem>>, vector<1x128xf32>
    %199 = vector.broadcast %198 : vector<1x128xf32> to vector<2x128xf32>
    %200 = arith.addf %197, %199 : vector<2x128xf32>
    %cst_129 = arith.constant 0.000000e+00 : f32
    %201 = vector.broadcast %cst_129 : f32 to vector<2x128xf32>
    %202 = arith.cmpf oge, %200, %201 : vector<2x128xf32>
    %cst_130 = arith.constant 0.00999999977 : f32
    %203 = vector.broadcast %cst_130 : f32 to vector<2x128xf32>
    %204 = arith.mulf %203, %200 : vector<2x128xf32>
    %205 = arith.select %202, %200, %204 : vector<2x128xi1>, vector<2x128xf32>
    %c0_131 = arith.constant 0 : index
    %c0_132 = arith.constant 0 : index
    %206 = vector.load %arg42[%c0_131, %c0_132] : memref<128x128xf32, #tpu.memory_space<vmem>>, vector<128x128xf32>
    %cst_133 = arith.constant dense<0.000000e+00> : vector<2x128xf32>
    %207 = tpu.matmul %205, %206, %cst_133 {dimension_numbers = #tpu.dot_dimension_numbers<[1], [0], [0], [1], [0, 0, 1, 1], [], []>} : vector<2x128xf32>, vector<128x128xf32>, vector<2x128xf32> -> vector<2x128xf32>
    %c0_134 = arith.constant 0 : index
    %c0_135 = arith.constant 0 : index
    %208 = vector.load %arg43[%c0_134, %c0_135] : memref<1x128xf32, #tpu.memory_space<vmem>>, vector<1x128xf32>
    %209 = vector.broadcast %208 : vector<1x128xf32> to vector<2x128xf32>
    %210 = arith.addf %207, %209 : vector<2x128xf32>
    %cst_136 = arith.constant 0.000000e+00 : f32
    %211 = vector.broadcast %cst_136 : f32 to vector<2x128xf32>
    %212 = arith.cmpf oge, %210, %211 : vector<2x128xf32>
    %cst_137 = arith.constant 0.00999999977 : f32
    %213 = vector.broadcast %cst_137 : f32 to vector<2x128xf32>
    %214 = arith.mulf %213, %210 : vector<2x128xf32>
    %215 = arith.select %212, %210, %214 : vector<2x128xi1>, vector<2x128xf32>
    %c0_138 = arith.constant 0 : index
    %c0_139 = arith.constant 0 : index
    %216 = vector.load %arg44[%c0_138, %c0_139] : memref<128x256xf32, #tpu.memory_space<vmem>>, vector<128x256xf32>
    %cst_140 = arith.constant dense<0.000000e+00> : vector<2x256xf32>
    %217 = tpu.matmul %215, %216, %cst_140 {dimension_numbers = #tpu.dot_dimension_numbers<[1], [0], [0], [1], [0, 0, 1, 1], [], []>} : vector<2x128xf32>, vector<128x256xf32>, vector<2x256xf32> -> vector<2x256xf32>
    %c0_141 = arith.constant 0 : index
    %c0_142 = arith.constant 0 : index
    %218 = vector.load %arg45[%c0_141, %c0_142] : memref<1x256xf32, #tpu.memory_space<vmem>>, vector<1x256xf32>
    %219 = vector.broadcast %218 : vector<1x256xf32> to vector<2x256xf32>
    %220 = arith.addf %217, %219 : vector<2x256xf32>
    %221 = vector.extract_strided_slice %220 {offsets = [0, 0], sizes = [2, 16], strides = [1, 1]} : vector<2x256xf32> to vector<2x16xf32>
    %222 = math.tanh %221 : vector<2x16xf32>
    %223 = vector.extract_strided_slice %220 {offsets = [0, 128], sizes = [2, 16], strides = [1, 1]} : vector<2x256xf32> to vector<2x16xf32>
    %224 = math.exp %222 : vector<2x16xf32>
    %225 = arith.mulf %183, %224 : vector<2x16xf32>
    %226 = arith.addf %225, %223 : vector<2x16xf32>
    %cst_143 = arith.constant dense<0.000000e+00> : vector<2xf32>
    %227 = vector.multi_reduction <add>, %222, %cst_143 [1] : vector<2x16xf32> to vector<2xf32>
    %228 = vector.shape_cast %227 : vector<2xf32> to vector<2x1xf32>
    %229 = arith.addf %186, %228 : vector<2x1xf32>
    %c0_144 = arith.constant 0 : index
    %c0_145 = arith.constant 0 : index
    %230 = vector.load %arg47[%c0_144, %c0_145] : memref<1x16xf32, #tpu.memory_space<vmem>>, vector<1x16xf32>
    %c0_146 = arith.constant 0 : index
    %c0_147 = arith.constant 0 : index
    %231 = vector.load %arg46[%c0_146, %c0_147] : memref<1x16xf32, #tpu.memory_space<vmem>>, vector<1x16xf32>
    %232 = vector.broadcast %231 : vector<1x16xf32> to vector<2x16xf32>
    %233 = arith.addf %226, %232 : vector<2x16xf32>
    %234 = vector.broadcast %230 : vector<1x16xf32> to vector<2x16xf32>
    %235 = arith.mulf %234, %233 : vector<2x16xf32>
    %c0_148 = arith.constant 0 : index
    %c0_149 = arith.constant 0 : index
    %236 = vector.load %arg48[%c0_148, %c0_149] : memref<16x128xf32, #tpu.memory_space<vmem>>, vector<16x128xf32>
    %cst_150 = arith.constant dense<0.000000e+00> : vector<2x128xf32>
    %237 = tpu.matmul %235, %236, %cst_150 {dimension_numbers = #tpu.dot_dimension_numbers<[1], [0], [0], [1], [0, 0, 1, 1], [], []>} : vector<2x16xf32>, vector<16x128xf32>, vector<2x128xf32> -> vector<2x128xf32>
    %238 = vector.extract_strided_slice %41 {offsets = [0, 512], sizes = [2, 128], strides = [1, 1]} : vector<2x1024xf32> to vector<2x128xf32>
    %239 = arith.addf %237, %238 : vector<2x128xf32>
    %cst_151 = arith.constant 0.000000e+00 : f32
    %240 = vector.broadcast %cst_151 : f32 to vector<2x128xf32>
    %241 = arith.cmpf oge, %239, %240 : vector<2x128xf32>
    %cst_152 = arith.constant 0.00999999977 : f32
    %242 = vector.broadcast %cst_152 : f32 to vector<2x128xf32>
    %243 = arith.mulf %242, %239 : vector<2x128xf32>
    %244 = arith.select %241, %239, %243 : vector<2x128xi1>, vector<2x128xf32>
    %c0_153 = arith.constant 0 : index
    %c0_154 = arith.constant 0 : index
    %245 = vector.load %arg49[%c0_153, %c0_154] : memref<128x128xf32, #tpu.memory_space<vmem>>, vector<128x128xf32>
    %cst_155 = arith.constant dense<0.000000e+00> : vector<2x128xf32>
    %246 = tpu.matmul %244, %245, %cst_155 {dimension_numbers = #tpu.dot_dimension_numbers<[1], [0], [0], [1], [0, 0, 1, 1], [], []>} : vector<2x128xf32>, vector<128x128xf32>, vector<2x128xf32> -> vector<2x128xf32>
    %c0_156 = arith.constant 0 : index
    %c0_157 = arith.constant 0 : index
    %247 = vector.load %arg50[%c0_156, %c0_157] : memref<1x128xf32, #tpu.memory_space<vmem>>, vector<1x128xf32>
    %248 = vector.broadcast %247 : vector<1x128xf32> to vector<2x128xf32>
    %249 = arith.addf %246, %248 : vector<2x128xf32>
    %cst_158 = arith.constant 0.000000e+00 : f32
    %250 = vector.broadcast %cst_158 : f32 to vector<2x128xf32>
    %251 = arith.cmpf oge, %249, %250 : vector<2x128xf32>
    %cst_159 = arith.constant 0.00999999977 : f32
    %252 = vector.broadcast %cst_159 : f32 to vector<2x128xf32>
    %253 = arith.mulf %252, %249 : vector<2x128xf32>
    %254 = arith.select %251, %249, %253 : vector<2x128xi1>, vector<2x128xf32>
    %c0_160 = arith.constant 0 : index
    %c0_161 = arith.constant 0 : index
    %255 = vector.load %arg51[%c0_160, %c0_161] : memref<128x128xf32, #tpu.memory_space<vmem>>, vector<128x128xf32>
    %cst_162 = arith.constant dense<0.000000e+00> : vector<2x128xf32>
    %256 = tpu.matmul %254, %255, %cst_162 {dimension_numbers = #tpu.dot_dimension_numbers<[1], [0], [0], [1], [0, 0, 1, 1], [], []>} : vector<2x128xf32>, vector<128x128xf32>, vector<2x128xf32> -> vector<2x128xf32>
    %c0_163 = arith.constant 0 : index
    %c0_164 = arith.constant 0 : index
    %257 = vector.load %arg52[%c0_163, %c0_164] : memref<1x128xf32, #tpu.memory_space<vmem>>, vector<1x128xf32>
    %258 = vector.broadcast %257 : vector<1x128xf32> to vector<2x128xf32>
    %259 = arith.addf %256, %258 : vector<2x128xf32>
    %cst_165 = arith.constant 0.000000e+00 : f32
    %260 = vector.broadcast %cst_165 : f32 to vector<2x128xf32>
    %261 = arith.cmpf oge, %259, %260 : vector<2x128xf32>
    %cst_166 = arith.constant 0.00999999977 : f32
    %262 = vector.broadcast %cst_166 : f32 to vector<2x128xf32>
    %263 = arith.mulf %262, %259 : vector<2x128xf32>
    %264 = arith.select %261, %259, %263 : vector<2x128xi1>, vector<2x128xf32>
    %c0_167 = arith.constant 0 : index
    %c0_168 = arith.constant 0 : index
    %265 = vector.load %arg53[%c0_167, %c0_168] : memref<128x256xf32, #tpu.memory_space<vmem>>, vector<128x256xf32>
    %cst_169 = arith.constant dense<0.000000e+00> : vector<2x256xf32>
    %266 = tpu.matmul %264, %265, %cst_169 {dimension_numbers = #tpu.dot_dimension_numbers<[1], [0], [0], [1], [0, 0, 1, 1], [], []>} : vector<2x128xf32>, vector<128x256xf32>, vector<2x256xf32> -> vector<2x256xf32>
    %c0_170 = arith.constant 0 : index
    %c0_171 = arith.constant 0 : index
    %267 = vector.load %arg54[%c0_170, %c0_171] : memref<1x256xf32, #tpu.memory_space<vmem>>, vector<1x256xf32>
    %268 = vector.broadcast %267 : vector<1x256xf32> to vector<2x256xf32>
    %269 = arith.addf %266, %268 : vector<2x256xf32>
    %270 = vector.extract_strided_slice %269 {offsets = [0, 0], sizes = [2, 16], strides = [1, 1]} : vector<2x256xf32> to vector<2x16xf32>
    %271 = math.tanh %270 : vector<2x16xf32>
    %272 = vector.extract_strided_slice %269 {offsets = [0, 128], sizes = [2, 16], strides = [1, 1]} : vector<2x256xf32> to vector<2x16xf32>
    %273 = math.exp %271 : vector<2x16xf32>
    %274 = arith.mulf %235, %273 : vector<2x16xf32>
    %275 = arith.addf %274, %272 : vector<2x16xf32>
    %cst_172 = arith.constant dense<0.000000e+00> : vector<2xf32>
    %276 = vector.multi_reduction <add>, %271, %cst_172 [1] : vector<2x16xf32> to vector<2xf32>
    %277 = vector.shape_cast %276 : vector<2xf32> to vector<2x1xf32>
    %278 = arith.addf %229, %277 : vector<2x1xf32>
    %c0_173 = arith.constant 0 : index
    %c0_174 = arith.constant 0 : index
    %279 = vector.load %arg55[%c0_173, %c0_174] : memref<16x128xf32, #tpu.memory_space<vmem>>, vector<16x128xf32>
    %cst_175 = arith.constant dense<0.000000e+00> : vector<2x128xf32>
    %280 = tpu.matmul %275, %279, %cst_175 {dimension_numbers = #tpu.dot_dimension_numbers<[1], [0], [0], [1], [0, 0, 1, 1], [], []>} : vector<2x16xf32>, vector<16x128xf32>, vector<2x128xf32> -> vector<2x128xf32>
    %281 = vector.extract_strided_slice %41 {offsets = [0, 640], sizes = [2, 128], strides = [1, 1]} : vector<2x1024xf32> to vector<2x128xf32>
    %282 = arith.addf %280, %281 : vector<2x128xf32>
    %cst_176 = arith.constant 0.000000e+00 : f32
    %283 = vector.broadcast %cst_176 : f32 to vector<2x128xf32>
    %284 = arith.cmpf oge, %282, %283 : vector<2x128xf32>
    %cst_177 = arith.constant 0.00999999977 : f32
    %285 = vector.broadcast %cst_177 : f32 to vector<2x128xf32>
    %286 = arith.mulf %285, %282 : vector<2x128xf32>
    %287 = arith.select %284, %282, %286 : vector<2x128xi1>, vector<2x128xf32>
    %c0_178 = arith.constant 0 : index
    %c0_179 = arith.constant 0 : index
    %288 = vector.load %arg56[%c0_178, %c0_179] : memref<128x128xf32, #tpu.memory_space<vmem>>, vector<128x128xf32>
    %cst_180 = arith.constant dense<0.000000e+00> : vector<2x128xf32>
    %289 = tpu.matmul %287, %288, %cst_180 {dimension_numbers = #tpu.dot_dimension_numbers<[1], [0], [0], [1], [0, 0, 1, 1], [], []>} : vector<2x128xf32>, vector<128x128xf32>, vector<2x128xf32> -> vector<2x128xf32>
    %c0_181 = arith.constant 0 : index
    %c0_182 = arith.constant 0 : index
    %290 = vector.load %arg57[%c0_181, %c0_182] : memref<1x128xf32, #tpu.memory_space<vmem>>, vector<1x128xf32>
    %291 = vector.broadcast %290 : vector<1x128xf32> to vector<2x128xf32>
    %292 = arith.addf %289, %291 : vector<2x128xf32>
    %cst_183 = arith.constant 0.000000e+00 : f32
    %293 = vector.broadcast %cst_183 : f32 to vector<2x128xf32>
    %294 = arith.cmpf oge, %292, %293 : vector<2x128xf32>
    %cst_184 = arith.constant 0.00999999977 : f32
    %295 = vector.broadcast %cst_184 : f32 to vector<2x128xf32>
    %296 = arith.mulf %295, %292 : vector<2x128xf32>
    %297 = arith.select %294, %292, %296 : vector<2x128xi1>, vector<2x128xf32>
    %c0_185 = arith.constant 0 : index
    %c0_186 = arith.constant 0 : index
    %298 = vector.load %arg58[%c0_185, %c0_186] : memref<128x128xf32, #tpu.memory_space<vmem>>, vector<128x128xf32>
    %cst_187 = arith.constant dense<0.000000e+00> : vector<2x128xf32>
    %299 = tpu.matmul %297, %298, %cst_187 {dimension_numbers = #tpu.dot_dimension_numbers<[1], [0], [0], [1], [0, 0, 1, 1], [], []>} : vector<2x128xf32>, vector<128x128xf32>, vector<2x128xf32> -> vector<2x128xf32>
    %c0_188 = arith.constant 0 : index
    %c0_189 = arith.constant 0 : index
    %300 = vector.load %arg59[%c0_188, %c0_189] : memref<1x128xf32, #tpu.memory_space<vmem>>, vector<1x128xf32>
    %301 = vector.broadcast %300 : vector<1x128xf32> to vector<2x128xf32>
    %302 = arith.addf %299, %301 : vector<2x128xf32>
    %cst_190 = arith.constant 0.000000e+00 : f32
    %303 = vector.broadcast %cst_190 : f32 to vector<2x128xf32>
    %304 = arith.cmpf oge, %302, %303 : vector<2x128xf32>
    %cst_191 = arith.constant 0.00999999977 : f32
    %305 = vector.broadcast %cst_191 : f32 to vector<2x128xf32>
    %306 = arith.mulf %305, %302 : vector<2x128xf32>
    %307 = arith.select %304, %302, %306 : vector<2x128xi1>, vector<2x128xf32>
    %c0_192 = arith.constant 0 : index
    %c0_193 = arith.constant 0 : index
    %308 = vector.load %arg60[%c0_192, %c0_193] : memref<128x256xf32, #tpu.memory_space<vmem>>, vector<128x256xf32>
    %cst_194 = arith.constant dense<0.000000e+00> : vector<2x256xf32>
    %309 = tpu.matmul %307, %308, %cst_194 {dimension_numbers = #tpu.dot_dimension_numbers<[1], [0], [0], [1], [0, 0, 1, 1], [], []>} : vector<2x128xf32>, vector<128x256xf32>, vector<2x256xf32> -> vector<2x256xf32>
    %c0_195 = arith.constant 0 : index
    %c0_196 = arith.constant 0 : index
    %310 = vector.load %arg61[%c0_195, %c0_196] : memref<1x256xf32, #tpu.memory_space<vmem>>, vector<1x256xf32>
    %311 = vector.broadcast %310 : vector<1x256xf32> to vector<2x256xf32>
    %312 = arith.addf %309, %311 : vector<2x256xf32>
    %313 = vector.extract_strided_slice %312 {offsets = [0, 0], sizes = [2, 16], strides = [1, 1]} : vector<2x256xf32> to vector<2x16xf32>
    %314 = math.tanh %313 : vector<2x16xf32>
    %315 = vector.extract_strided_slice %312 {offsets = [0, 128], sizes = [2, 16], strides = [1, 1]} : vector<2x256xf32> to vector<2x16xf32>
    %316 = math.exp %314 : vector<2x16xf32>
    %317 = arith.mulf %275, %316 : vector<2x16xf32>
    %318 = arith.addf %317, %315 : vector<2x16xf32>
    %cst_197 = arith.constant dense<0.000000e+00> : vector<2xf32>
    %319 = vector.multi_reduction <add>, %314, %cst_197 [1] : vector<2x16xf32> to vector<2xf32>
    %320 = vector.shape_cast %319 : vector<2xf32> to vector<2x1xf32>
    %321 = arith.addf %278, %320 : vector<2x1xf32>
    %c0_198 = arith.constant 0 : index
    %c0_199 = arith.constant 0 : index
    %322 = vector.load %arg63[%c0_198, %c0_199] : memref<1x16xf32, #tpu.memory_space<vmem>>, vector<1x16xf32>
    %c0_200 = arith.constant 0 : index
    %c0_201 = arith.constant 0 : index
    %323 = vector.load %arg62[%c0_200, %c0_201] : memref<1x16xf32, #tpu.memory_space<vmem>>, vector<1x16xf32>
    %324 = vector.broadcast %323 : vector<1x16xf32> to vector<2x16xf32>
    %325 = arith.addf %318, %324 : vector<2x16xf32>
    %326 = vector.broadcast %322 : vector<1x16xf32> to vector<2x16xf32>
    %327 = arith.mulf %326, %325 : vector<2x16xf32>
    %c0_202 = arith.constant 0 : index
    %c0_203 = arith.constant 0 : index
    %328 = vector.load %arg64[%c0_202, %c0_203] : memref<16x128xf32, #tpu.memory_space<vmem>>, vector<16x128xf32>
    %cst_204 = arith.constant dense<0.000000e+00> : vector<2x128xf32>
    %329 = tpu.matmul %327, %328, %cst_204 {dimension_numbers = #tpu.dot_dimension_numbers<[1], [0], [0], [1], [0, 0, 1, 1], [], []>} : vector<2x16xf32>, vector<16x128xf32>, vector<2x128xf32> -> vector<2x128xf32>
    %330 = vector.extract_strided_slice %41 {offsets = [0, 768], sizes = [2, 128], strides = [1, 1]} : vector<2x1024xf32> to vector<2x128xf32>
    %331 = arith.addf %329, %330 : vector<2x128xf32>
    %cst_205 = arith.constant 0.000000e+00 : f32
    %332 = vector.broadcast %cst_205 : f32 to vector<2x128xf32>
    %333 = arith.cmpf oge, %331, %332 : vector<2x128xf32>
    %cst_206 = arith.constant 0.00999999977 : f32
    %334 = vector.broadcast %cst_206 : f32 to vector<2x128xf32>
    %335 = arith.mulf %334, %331 : vector<2x128xf32>
    %336 = arith.select %333, %331, %335 : vector<2x128xi1>, vector<2x128xf32>
    %c0_207 = arith.constant 0 : index
    %c0_208 = arith.constant 0 : index
    %337 = vector.load %arg65[%c0_207, %c0_208] : memref<128x128xf32, #tpu.memory_space<vmem>>, vector<128x128xf32>
    %cst_209 = arith.constant dense<0.000000e+00> : vector<2x128xf32>
    %338 = tpu.matmul %336, %337, %cst_209 {dimension_numbers = #tpu.dot_dimension_numbers<[1], [0], [0], [1], [0, 0, 1, 1], [], []>} : vector<2x128xf32>, vector<128x128xf32>, vector<2x128xf32> -> vector<2x128xf32>
    %c0_210 = arith.constant 0 : index
    %c0_211 = arith.constant 0 : index
    %339 = vector.load %arg66[%c0_210, %c0_211] : memref<1x128xf32, #tpu.memory_space<vmem>>, vector<1x128xf32>
    %340 = vector.broadcast %339 : vector<1x128xf32> to vector<2x128xf32>
    %341 = arith.addf %338, %340 : vector<2x128xf32>
    %cst_212 = arith.constant 0.000000e+00 : f32
    %342 = vector.broadcast %cst_212 : f32 to vector<2x128xf32>
    %343 = arith.cmpf oge, %341, %342 : vector<2x128xf32>
    %cst_213 = arith.constant 0.00999999977 : f32
    %344 = vector.broadcast %cst_213 : f32 to vector<2x128xf32>
    %345 = arith.mulf %344, %341 : vector<2x128xf32>
    %346 = arith.select %343, %341, %345 : vector<2x128xi1>, vector<2x128xf32>
    %c0_214 = arith.constant 0 : index
    %c0_215 = arith.constant 0 : index
    %347 = vector.load %arg67[%c0_214, %c0_215] : memref<128x128xf32, #tpu.memory_space<vmem>>, vector<128x128xf32>
    %cst_216 = arith.constant dense<0.000000e+00> : vector<2x128xf32>
    %348 = tpu.matmul %346, %347, %cst_216 {dimension_numbers = #tpu.dot_dimension_numbers<[1], [0], [0], [1], [0, 0, 1, 1], [], []>} : vector<2x128xf32>, vector<128x128xf32>, vector<2x128xf32> -> vector<2x128xf32>
    %c0_217 = arith.constant 0 : index
    %c0_218 = arith.constant 0 : index
    %349 = vector.load %arg68[%c0_217, %c0_218] : memref<1x128xf32, #tpu.memory_space<vmem>>, vector<1x128xf32>
    %350 = vector.broadcast %349 : vector<1x128xf32> to vector<2x128xf32>
    %351 = arith.addf %348, %350 : vector<2x128xf32>
    %cst_219 = arith.constant 0.000000e+00 : f32
    %352 = vector.broadcast %cst_219 : f32 to vector<2x128xf32>
    %353 = arith.cmpf oge, %351, %352 : vector<2x128xf32>
    %cst_220 = arith.constant 0.00999999977 : f32
    %354 = vector.broadcast %cst_220 : f32 to vector<2x128xf32>
    %355 = arith.mulf %354, %351 : vector<2x128xf32>
    %356 = arith.select %353, %351, %355 : vector<2x128xi1>, vector<2x128xf32>
    %c0_221 = arith.constant 0 : index
    %c0_222 = arith.constant 0 : index
    %357 = vector.load %arg69[%c0_221, %c0_222] : memref<128x256xf32, #tpu.memory_space<vmem>>, vector<128x256xf32>
    %cst_223 = arith.constant dense<0.000000e+00> : vector<2x256xf32>
    %358 = tpu.matmul %356, %357, %cst_223 {dimension_numbers = #tpu.dot_dimension_numbers<[1], [0], [0], [1], [0, 0, 1, 1], [], []>} : vector<2x128xf32>, vector<128x256xf32>, vector<2x256xf32> -> vector<2x256xf32>
    %c0_224 = arith.constant 0 : index
    %c0_225 = arith.constant 0 : index
    %359 = vector.load %arg70[%c0_224, %c0_225] : memref<1x256xf32, #tpu.memory_space<vmem>>, vector<1x256xf32>
    %360 = vector.broadcast %359 : vector<1x256xf32> to vector<2x256xf32>
    %361 = arith.addf %358, %360 : vector<2x256xf32>
    %362 = vector.extract_strided_slice %361 {offsets = [0, 0], sizes = [2, 16], strides = [1, 1]} : vector<2x256xf32> to vector<2x16xf32>
    %363 = math.tanh %362 : vector<2x16xf32>
    %364 = vector.extract_strided_slice %361 {offsets = [0, 128], sizes = [2, 16], strides = [1, 1]} : vector<2x256xf32> to vector<2x16xf32>
    %365 = math.exp %363 : vector<2x16xf32>
    %366 = arith.mulf %327, %365 : vector<2x16xf32>
    %367 = arith.addf %366, %364 : vector<2x16xf32>
    %cst_226 = arith.constant dense<0.000000e+00> : vector<2xf32>
    %368 = vector.multi_reduction <add>, %363, %cst_226 [1] : vector<2x16xf32> to vector<2xf32>
    %369 = vector.shape_cast %368 : vector<2xf32> to vector<2x1xf32>
    %370 = arith.addf %321, %369 : vector<2x1xf32>
    %c0_227 = arith.constant 0 : index
    %c0_228 = arith.constant 0 : index
    %371 = vector.load %arg71[%c0_227, %c0_228] : memref<16x128xf32, #tpu.memory_space<vmem>>, vector<16x128xf32>
    %cst_229 = arith.constant dense<0.000000e+00> : vector<2x128xf32>
    %372 = tpu.matmul %367, %371, %cst_229 {dimension_numbers = #tpu.dot_dimension_numbers<[1], [0], [0], [1], [0, 0, 1, 1], [], []>} : vector<2x16xf32>, vector<16x128xf32>, vector<2x128xf32> -> vector<2x128xf32>
    %373 = vector.extract_strided_slice %41 {offsets = [0, 896], sizes = [2, 128], strides = [1, 1]} : vector<2x1024xf32> to vector<2x128xf32>
    %374 = arith.addf %372, %373 : vector<2x128xf32>
    %cst_230 = arith.constant 0.000000e+00 : f32
    %375 = vector.broadcast %cst_230 : f32 to vector<2x128xf32>
    %376 = arith.cmpf oge, %374, %375 : vector<2x128xf32>
    %cst_231 = arith.constant 0.00999999977 : f32
    %377 = vector.broadcast %cst_231 : f32 to vector<2x128xf32>
    %378 = arith.mulf %377, %374 : vector<2x128xf32>
    %379 = arith.select %376, %374, %378 : vector<2x128xi1>, vector<2x128xf32>
    %c0_232 = arith.constant 0 : index
    %c0_233 = arith.constant 0 : index
    %380 = vector.load %arg72[%c0_232, %c0_233] : memref<128x128xf32, #tpu.memory_space<vmem>>, vector<128x128xf32>
    %cst_234 = arith.constant dense<0.000000e+00> : vector<2x128xf32>
    %381 = tpu.matmul %379, %380, %cst_234 {dimension_numbers = #tpu.dot_dimension_numbers<[1], [0], [0], [1], [0, 0, 1, 1], [], []>} : vector<2x128xf32>, vector<128x128xf32>, vector<2x128xf32> -> vector<2x128xf32>
    %c0_235 = arith.constant 0 : index
    %c0_236 = arith.constant 0 : index
    %382 = vector.load %arg73[%c0_235, %c0_236] : memref<1x128xf32, #tpu.memory_space<vmem>>, vector<1x128xf32>
    %383 = vector.broadcast %382 : vector<1x128xf32> to vector<2x128xf32>
    %384 = arith.addf %381, %383 : vector<2x128xf32>
    %cst_237 = arith.constant 0.000000e+00 : f32
    %385 = vector.broadcast %cst_237 : f32 to vector<2x128xf32>
    %386 = arith.cmpf oge, %384, %385 : vector<2x128xf32>
    %cst_238 = arith.constant 0.00999999977 : f32
    %387 = vector.broadcast %cst_238 : f32 to vector<2x128xf32>
    %388 = arith.mulf %387, %384 : vector<2x128xf32>
    %389 = arith.select %386, %384, %388 : vector<2x128xi1>, vector<2x128xf32>
    %c0_239 = arith.constant 0 : index
    %c0_240 = arith.constant 0 : index
    %390 = vector.load %arg74[%c0_239, %c0_240] : memref<128x128xf32, #tpu.memory_space<vmem>>, vector<128x128xf32>
    %cst_241 = arith.constant dense<0.000000e+00> : vector<2x128xf32>
    %391 = tpu.matmul %389, %390, %cst_241 {dimension_numbers = #tpu.dot_dimension_numbers<[1], [0], [0], [1], [0, 0, 1, 1], [], []>} : vector<2x128xf32>, vector<128x128xf32>, vector<2x128xf32> -> vector<2x128xf32>
    %c0_242 = arith.constant 0 : index
    %c0_243 = arith.constant 0 : index
    %392 = vector.load %arg75[%c0_242, %c0_243] : memref<1x128xf32, #tpu.memory_space<vmem>>, vector<1x128xf32>
    %393 = vector.broadcast %392 : vector<1x128xf32> to vector<2x128xf32>
    %394 = arith.addf %391, %393 : vector<2x128xf32>
    %cst_244 = arith.constant 0.000000e+00 : f32
    %395 = vector.broadcast %cst_244 : f32 to vector<2x128xf32>
    %396 = arith.cmpf oge, %394, %395 : vector<2x128xf32>
    %cst_245 = arith.constant 0.00999999977 : f32
    %397 = vector.broadcast %cst_245 : f32 to vector<2x128xf32>
    %398 = arith.mulf %397, %394 : vector<2x128xf32>
    %399 = arith.select %396, %394, %398 : vector<2x128xi1>, vector<2x128xf32>
    %c0_246 = arith.constant 0 : index
    %c0_247 = arith.constant 0 : index
    %400 = vector.load %arg76[%c0_246, %c0_247] : memref<128x256xf32, #tpu.memory_space<vmem>>, vector<128x256xf32>
    %cst_248 = arith.constant dense<0.000000e+00> : vector<2x256xf32>
    %401 = tpu.matmul %399, %400, %cst_248 {dimension_numbers = #tpu.dot_dimension_numbers<[1], [0], [0], [1], [0, 0, 1, 1], [], []>} : vector<2x128xf32>, vector<128x256xf32>, vector<2x256xf32> -> vector<2x256xf32>
    %c0_249 = arith.constant 0 : index
    %c0_250 = arith.constant 0 : index
    %402 = vector.load %arg77[%c0_249, %c0_250] : memref<1x256xf32, #tpu.memory_space<vmem>>, vector<1x256xf32>
    %403 = vector.broadcast %402 : vector<1x256xf32> to vector<2x256xf32>
    %404 = arith.addf %401, %403 : vector<2x256xf32>
    %405 = vector.extract_strided_slice %404 {offsets = [0, 0], sizes = [2, 16], strides = [1, 1]} : vector<2x256xf32> to vector<2x16xf32>
    %406 = math.tanh %405 : vector<2x16xf32>
    %407 = vector.extract_strided_slice %404 {offsets = [0, 128], sizes = [2, 16], strides = [1, 1]} : vector<2x256xf32> to vector<2x16xf32>
    %408 = math.exp %406 : vector<2x16xf32>
    %409 = arith.mulf %367, %408 : vector<2x16xf32>
    %410 = arith.addf %409, %407 : vector<2x16xf32>
    %cst_251 = arith.constant dense<0.000000e+00> : vector<2xf32>
    %411 = vector.multi_reduction <add>, %406, %cst_251 [1] : vector<2x16xf32> to vector<2xf32>
    %412 = vector.shape_cast %411 : vector<2xf32> to vector<2x1xf32>
    %413 = arith.addf %370, %412 : vector<2x1xf32>
    %c0_252 = arith.constant 0 : index
    %c0_253 = arith.constant 0 : index
    %414 = vector.load %arg78[%c0_252, %c0_253] : memref<2x16xf32, #tpu.memory_space<vmem>>, vector<2x16xf32>
    tpu.vector_store %arg78[%c0_252, %c0_253], %410 {strides = array<i32>} : memref<2x16xf32, #tpu.memory_space<vmem>>, vector<2x16xf32>,
    %c0_254 = arith.constant 0 : index
    %c0_255 = arith.constant 0 : index
    %415 = vector.load %arg79[%c0_254, %c0_255] : memref<2x1xf32, #tpu.memory_space<vmem>>, vector<2x1xf32>
    tpu.vector_store %arg79[%c0_254, %c0_255], %413 {strides = array<i32>} : memref<2x1xf32, #tpu.memory_space<vmem>>, vector<2x1xf32>,
    return
  }
  func.func @transform_0(%arg0: i32) -> (i32, i32) {
    %c0_i32 = arith.constant 0 : i32
    %c0_i32_0 = arith.constant 0 : i32
    return %arg0, %c0_i32 : i32, i32
  }
  func.func @transform_1(%arg0: i32) -> (i32, i32) {
    %c0_i32 = arith.constant 0 : i32
    %c0_i32_0 = arith.constant 0 : i32
    return %arg0, %c0_i32 : i32, i32
  }
  func.func @transform_2(%arg0: i32) -> (i32, i32) {
    %c0_i32 = arith.constant 0 : i32
    %c0_i32_0 = arith.constant 0 : i32
    %c0_i32_1 = arith.constant 0 : i32
    return %c0_i32, %c0_i32_0 : i32, i32
  }
  func.func @transform_3(%arg0: i32) -> (i32, i32) {
    %c0_i32 = arith.constant 0 : i32
    %c0_i32_0 = arith.constant 0 : i32
    %c0_i32_1 = arith.constant 0 : i32
    return %c0_i32, %c0_i32_0 : i32, i32
  }
  func.func @transform_4(%arg0: i32) -> (i32, i32) {
    %c0_i32 = arith.constant 0 : i32
    %c0_i32_0 = arith.constant 0 : i32
    %c0_i32_1 = arith.constant 0 : i32
    return %c0_i32, %c0_i32_0 : i32, i32
  }
  func.func @transform_5(%arg0: i32) -> (i32, i32) {
    %c0_i32 = arith.constant 0 : i32
    %c0_i32_0 = arith.constant 0 : i32
    %c0_i32_1 = arith.constant 0 : i32
    return %c0_i32, %c0_i32_0 : i32, i32
  }
  func.func @transform_6(%arg0: i32) -> (i32, i32) {
    %c0_i32 = arith.constant 0 : i32
    %c0_i32_0 = arith.constant 0 : i32
    %c0_i32_1 = arith.constant 0 : i32
    return %c0_i32, %c0_i32_0 : i32, i32
  }
  func.func @transform_7(%arg0: i32) -> (i32, i32) {
    %c0_i32 = arith.constant 0 : i32
    %c0_i32_0 = arith.constant 0 : i32
    %c0_i32_1 = arith.constant 0 : i32
    return %c0_i32, %c0_i32_0 : i32, i32
  }
  func.func @transform_8(%arg0: i32) -> (i32, i32) {
    %c0_i32 = arith.constant 0 : i32
    %c0_i32_0 = arith.constant 0 : i32
    %c0_i32_1 = arith.constant 0 : i32
    return %c0_i32, %c0_i32_0 : i32, i32
  }
  func.func @transform_9(%arg0: i32) -> (i32, i32) {
    %c0_i32 = arith.constant 0 : i32
    %c0_i32_0 = arith.constant 0 : i32
    %c0_i32_1 = arith.constant 0 : i32
    return %c0_i32, %c0_i32_0 : i32, i32
  }
  func.func @transform_10(%arg0: i32) -> (i32, i32) {
    %c0_i32 = arith.constant 0 : i32
    %c0_i32_0 = arith.constant 0 : i32
    %c0_i32_1 = arith.constant 0 : i32
    return %c0_i32, %c0_i32_0 : i32, i32
  }
  func.func @transform_11(%arg0: i32) -> (i32, i32) {
    %c0_i32 = arith.constant 0 : i32
    %c0_i32_0 = arith.constant 0 : i32
    %c0_i32_1 = arith.constant 0 : i32
    return %c0_i32, %c0_i32_0 : i32, i32
  }
  func.func @transform_12(%arg0: i32) -> (i32, i32) {
    %c0_i32 = arith.constant 0 : i32
    %c0_i32_0 = arith.constant 0 : i32
    %c0_i32_1 = arith.constant 0 : i32
    return %c0_i32, %c0_i32_0 : i32, i32
  }
  func.func @transform_13(%arg0: i32) -> (i32, i32) {
    %c0_i32 = arith.constant 0 : i32
    %c0_i32_0 = arith.constant 0 : i32
    %c0_i32_1 = arith.constant 0 : i32
    return %c0_i32, %c0_i32_0 : i32, i32
  }
  func.func @transform_14(%arg0: i32) -> (i32, i32) {
    %c0_i32 = arith.constant 0 : i32
    %c0_i32_0 = arith.constant 0 : i32
    %c0_i32_1 = arith.constant 0 : i32
    return %c0_i32, %c0_i32_0 : i32, i32
  }
  func.func @transform_15(%arg0: i32) -> (i32, i32) {
    %c0_i32 = arith.constant 0 : i32
    %c0_i32_0 = arith.constant 0 : i32
    %c0_i32_1 = arith.constant 0 : i32
    return %c0_i32, %c0_i32_0 : i32, i32
  }
  func.func @transform_16(%arg0: i32) -> (i32, i32) {
    %c0_i32 = arith.constant 0 : i32
    %c0_i32_0 = arith.constant 0 : i32
    %c0_i32_1 = arith.constant 0 : i32
    return %c0_i32, %c0_i32_0 : i32, i32
  }
  func.func @transform_17(%arg0: i32) -> (i32, i32) {
    %c0_i32 = arith.constant 0 : i32
    %c0_i32_0 = arith.constant 0 : i32
    %c0_i32_1 = arith.constant 0 : i32
    return %c0_i32, %c0_i32_0 : i32, i32
  }
  func.func @transform_18(%arg0: i32) -> (i32, i32) {
    %c0_i32 = arith.constant 0 : i32
    %c0_i32_0 = arith.constant 0 : i32
    %c0_i32_1 = arith.constant 0 : i32
    return %c0_i32, %c0_i32_0 : i32, i32
  }
  func.func @transform_19(%arg0: i32) -> (i32, i32) {
    %c0_i32 = arith.constant 0 : i32
    %c0_i32_0 = arith.constant 0 : i32
    %c0_i32_1 = arith.constant 0 : i32
    return %c0_i32, %c0_i32_0 : i32, i32
  }
  func.func @transform_20(%arg0: i32) -> (i32, i32) {
    %c0_i32 = arith.constant 0 : i32
    %c0_i32_0 = arith.constant 0 : i32
    %c0_i32_1 = arith.constant 0 : i32
    return %c0_i32, %c0_i32_0 : i32, i32
  }
  func.func @transform_21(%arg0: i32) -> (i32, i32) {
    %c0_i32 = arith.constant 0 : i32
    %c0_i32_0 = arith.constant 0 : i32
    %c0_i32_1 = arith.constant 0 : i32
    return %c0_i32, %c0_i32_0 : i32, i32
  }
  func.func @transform_22(%arg0: i32) -> (i32, i32) {
    %c0_i32 = arith.constant 0 : i32
    %c0_i32_0 = arith.constant 0 : i32
    %c0_i32_1 = arith.constant 0 : i32
    return %c0_i32, %c0_i32_0 : i32, i32
  }
  func.func @transform_23(%arg0: i32) -> (i32, i32) {
    %c0_i32 = arith.constant 0 : i32
    %c0_i32_0 = arith.constant 0 : i32
    %c0_i32_1 = arith.constant 0 : i32
    return %c0_i32, %c0_i32_0 : i32, i32
  }
  func.func @transform_24(%arg0: i32) -> (i32, i32) {
    %c0_i32 = arith.constant 0 : i32
    %c0_i32_0 = arith.constant 0 : i32
    %c0_i32_1 = arith.constant 0 : i32
    return %c0_i32, %c0_i32_0 : i32, i32
  }
  func.func @transform_25(%arg0: i32) -> (i32, i32) {
    %c0_i32 = arith.constant 0 : i32
    %c0_i32_0 = arith.constant 0 : i32
    %c0_i32_1 = arith.constant 0 : i32
    return %c0_i32, %c0_i32_0 : i32, i32
  }
  func.func @transform_26(%arg0: i32) -> (i32, i32) {
    %c0_i32 = arith.constant 0 : i32
    %c0_i32_0 = arith.constant 0 : i32
    %c0_i32_1 = arith.constant 0 : i32
    return %c0_i32, %c0_i32_0 : i32, i32
  }
  func.func @transform_27(%arg0: i32) -> (i32, i32) {
    %c0_i32 = arith.constant 0 : i32
    %c0_i32_0 = arith.constant 0 : i32
    %c0_i32_1 = arith.constant 0 : i32
    return %c0_i32, %c0_i32_0 : i32, i32
  }
  func.func @transform_28(%arg0: i32) -> (i32, i32) {
    %c0_i32 = arith.constant 0 : i32
    %c0_i32_0 = arith.constant 0 : i32
    %c0_i32_1 = arith.constant 0 : i32
    return %c0_i32, %c0_i32_0 : i32, i32
  }
  func.func @transform_29(%arg0: i32) -> (i32, i32) {
    %c0_i32 = arith.constant 0 : i32
    %c0_i32_0 = arith.constant 0 : i32
    %c0_i32_1 = arith.constant 0 : i32
    return %c0_i32, %c0_i32_0 : i32, i32
  }
  func.func @transform_30(%arg0: i32) -> (i32, i32) {
    %c0_i32 = arith.constant 0 : i32
    %c0_i32_0 = arith.constant 0 : i32
    %c0_i32_1 = arith.constant 0 : i32
    return %c0_i32, %c0_i32_0 : i32, i32
  }
  func.func @transform_31(%arg0: i32) -> (i32, i32) {
    %c0_i32 = arith.constant 0 : i32
    %c0_i32_0 = arith.constant 0 : i32
    %c0_i32_1 = arith.constant 0 : i32
    return %c0_i32, %c0_i32_0 : i32, i32
  }
  func.func @transform_32(%arg0: i32) -> (i32, i32) {
    %c0_i32 = arith.constant 0 : i32
    %c0_i32_0 = arith.constant 0 : i32
    %c0_i32_1 = arith.constant 0 : i32
    return %c0_i32, %c0_i32_0 : i32, i32
  }
  func.func @transform_33(%arg0: i32) -> (i32, i32) {
    %c0_i32 = arith.constant 0 : i32
    %c0_i32_0 = arith.constant 0 : i32
    %c0_i32_1 = arith.constant 0 : i32
    return %c0_i32, %c0_i32_0 : i32, i32
  }
  func.func @transform_34(%arg0: i32) -> (i32, i32) {
    %c0_i32 = arith.constant 0 : i32
    %c0_i32_0 = arith.constant 0 : i32
    %c0_i32_1 = arith.constant 0 : i32
    return %c0_i32, %c0_i32_0 : i32, i32
  }
  func.func @transform_35(%arg0: i32) -> (i32, i32) {
    %c0_i32 = arith.constant 0 : i32
    %c0_i32_0 = arith.constant 0 : i32
    %c0_i32_1 = arith.constant 0 : i32
    return %c0_i32, %c0_i32_0 : i32, i32
  }
  func.func @transform_36(%arg0: i32) -> (i32, i32) {
    %c0_i32 = arith.constant 0 : i32
    %c0_i32_0 = arith.constant 0 : i32
    %c0_i32_1 = arith.constant 0 : i32
    return %c0_i32, %c0_i32_0 : i32, i32
  }
  func.func @transform_37(%arg0: i32) -> (i32, i32) {
    %c0_i32 = arith.constant 0 : i32
    %c0_i32_0 = arith.constant 0 : i32
    %c0_i32_1 = arith.constant 0 : i32
    return %c0_i32, %c0_i32_0 : i32, i32
  }
  func.func @transform_38(%arg0: i32) -> (i32, i32) {
    %c0_i32 = arith.constant 0 : i32
    %c0_i32_0 = arith.constant 0 : i32
    %c0_i32_1 = arith.constant 0 : i32
    return %c0_i32, %c0_i32_0 : i32, i32
  }
  func.func @transform_39(%arg0: i32) -> (i32, i32) {
    %c0_i32 = arith.constant 0 : i32
    %c0_i32_0 = arith.constant 0 : i32
    %c0_i32_1 = arith.constant 0 : i32
    return %c0_i32, %c0_i32_0 : i32, i32
  }
  func.func @transform_40(%arg0: i32) -> (i32, i32) {
    %c0_i32 = arith.constant 0 : i32
    %c0_i32_0 = arith.constant 0 : i32
    %c0_i32_1 = arith.constant 0 : i32
    return %c0_i32, %c0_i32_0 : i32, i32
  }
  func.func @transform_41(%arg0: i32) -> (i32, i32) {
    %c0_i32 = arith.constant 0 : i32
    %c0_i32_0 = arith.constant 0 : i32
    %c0_i32_1 = arith.constant 0 : i32
    return %c0_i32, %c0_i32_0 : i32, i32
  }
  func.func @transform_42(%arg0: i32) -> (i32, i32) {
    %c0_i32 = arith.constant 0 : i32
    %c0_i32_0 = arith.constant 0 : i32
    %c0_i32_1 = arith.constant 0 : i32
    return %c0_i32, %c0_i32_0 : i32, i32
  }
  func.func @transform_43(%arg0: i32) -> (i32, i32) {
    %c0_i32 = arith.constant 0 : i32
    %c0_i32_0 = arith.constant 0 : i32
    %c0_i32_1 = arith.constant 0 : i32
    return %c0_i32, %c0_i32_0 : i32, i32
  }
  func.func @transform_44(%arg0: i32) -> (i32, i32) {
    %c0_i32 = arith.constant 0 : i32
    %c0_i32_0 = arith.constant 0 : i32
    %c0_i32_1 = arith.constant 0 : i32
    return %c0_i32, %c0_i32_0 : i32, i32
  }
  func.func @transform_45(%arg0: i32) -> (i32, i32) {
    %c0_i32 = arith.constant 0 : i32
    %c0_i32_0 = arith.constant 0 : i32
    %c0_i32_1 = arith.constant 0 : i32
    return %c0_i32, %c0_i32_0 : i32, i32
  }
  func.func @transform_46(%arg0: i32) -> (i32, i32) {
    %c0_i32 = arith.constant 0 : i32
    %c0_i32_0 = arith.constant 0 : i32
    %c0_i32_1 = arith.constant 0 : i32
    return %c0_i32, %c0_i32_0 : i32, i32
  }
  func.func @transform_47(%arg0: i32) -> (i32, i32) {
    %c0_i32 = arith.constant 0 : i32
    %c0_i32_0 = arith.constant 0 : i32
    %c0_i32_1 = arith.constant 0 : i32
    return %c0_i32, %c0_i32_0 : i32, i32
  }
  func.func @transform_48(%arg0: i32) -> (i32, i32) {
    %c0_i32 = arith.constant 0 : i32
    %c0_i32_0 = arith.constant 0 : i32
    %c0_i32_1 = arith.constant 0 : i32
    return %c0_i32, %c0_i32_0 : i32, i32
  }
  func.func @transform_49(%arg0: i32) -> (i32, i32) {
    %c0_i32 = arith.constant 0 : i32
    %c0_i32_0 = arith.constant 0 : i32
    %c0_i32_1 = arith.constant 0 : i32
    return %c0_i32, %c0_i32_0 : i32, i32
  }
  func.func @transform_50(%arg0: i32) -> (i32, i32) {
    %c0_i32 = arith.constant 0 : i32
    %c0_i32_0 = arith.constant 0 : i32
    %c0_i32_1 = arith.constant 0 : i32
    return %c0_i32, %c0_i32_0 : i32, i32
  }
  func.func @transform_51(%arg0: i32) -> (i32, i32) {
    %c0_i32 = arith.constant 0 : i32
    %c0_i32_0 = arith.constant 0 : i32
    %c0_i32_1 = arith.constant 0 : i32
    return %c0_i32, %c0_i32_0 : i32, i32
  }
  func.func @transform_52(%arg0: i32) -> (i32, i32) {
    %c0_i32 = arith.constant 0 : i32
    %c0_i32_0 = arith.constant 0 : i32
    %c0_i32_1 = arith.constant 0 : i32
    return %c0_i32, %c0_i32_0 : i32, i32
  }
  func.func @transform_53(%arg0: i32) -> (i32, i32) {
    %c0_i32 = arith.constant 0 : i32
    %c0_i32_0 = arith.constant 0 : i32
    %c0_i32_1 = arith.constant 0 : i32
    return %c0_i32, %c0_i32_0 : i32, i32
  }
  func.func @transform_54(%arg0: i32) -> (i32, i32) {
    %c0_i32 = arith.constant 0 : i32
    %c0_i32_0 = arith.constant 0 : i32
    %c0_i32_1 = arith.constant 0 : i32
    return %c0_i32, %c0_i32_0 : i32, i32
  }
  func.func @transform_55(%arg0: i32) -> (i32, i32) {
    %c0_i32 = arith.constant 0 : i32
    %c0_i32_0 = arith.constant 0 : i32
    %c0_i32_1 = arith.constant 0 : i32
    return %c0_i32, %c0_i32_0 : i32, i32
  }
  func.func @transform_56(%arg0: i32) -> (i32, i32) {
    %c0_i32 = arith.constant 0 : i32
    %c0_i32_0 = arith.constant 0 : i32
    %c0_i32_1 = arith.constant 0 : i32
    return %c0_i32, %c0_i32_0 : i32, i32
  }
  func.func @transform_57(%arg0: i32) -> (i32, i32) {
    %c0_i32 = arith.constant 0 : i32
    %c0_i32_0 = arith.constant 0 : i32
    %c0_i32_1 = arith.constant 0 : i32
    return %c0_i32, %c0_i32_0 : i32, i32
  }
  func.func @transform_58(%arg0: i32) -> (i32, i32) {
    %c0_i32 = arith.constant 0 : i32
    %c0_i32_0 = arith.constant 0 : i32
    %c0_i32_1 = arith.constant 0 : i32
    return %c0_i32, %c0_i32_0 : i32, i32
  }
  func.func @transform_59(%arg0: i32) -> (i32, i32) {
    %c0_i32 = arith.constant 0 : i32
    %c0_i32_0 = arith.constant 0 : i32
    %c0_i32_1 = arith.constant 0 : i32
    return %c0_i32, %c0_i32_0 : i32, i32
  }
  func.func @transform_60(%arg0: i32) -> (i32, i32) {
    %c0_i32 = arith.constant 0 : i32
    %c0_i32_0 = arith.constant 0 : i32
    %c0_i32_1 = arith.constant 0 : i32
    return %c0_i32, %c0_i32_0 : i32, i32
  }
  func.func @transform_61(%arg0: i32) -> (i32, i32) {
    %c0_i32 = arith.constant 0 : i32
    %c0_i32_0 = arith.constant 0 : i32
    %c0_i32_1 = arith.constant 0 : i32
    return %c0_i32, %c0_i32_0 : i32, i32
  }
  func.func @transform_62(%arg0: i32) -> (i32, i32) {
    %c0_i32 = arith.constant 0 : i32
    %c0_i32_0 = arith.constant 0 : i32
    %c0_i32_1 = arith.constant 0 : i32
    return %c0_i32, %c0_i32_0 : i32, i32
  }
  func.func @transform_63(%arg0: i32) -> (i32, i32) {
    %c0_i32 = arith.constant 0 : i32
    %c0_i32_0 = arith.constant 0 : i32
    %c0_i32_1 = arith.constant 0 : i32
    return %c0_i32, %c0_i32_0 : i32, i32
  }
  func.func @transform_64(%arg0: i32) -> (i32, i32) {
    %c0_i32 = arith.constant 0 : i32
    %c0_i32_0 = arith.constant 0 : i32
    %c0_i32_1 = arith.constant 0 : i32
    return %c0_i32, %c0_i32_0 : i32, i32
  }
  func.func @transform_65(%arg0: i32) -> (i32, i32) {
    %c0_i32 = arith.constant 0 : i32
    %c0_i32_0 = arith.constant 0 : i32
    %c0_i32_1 = arith.constant 0 : i32
    return %c0_i32, %c0_i32_0 : i32, i32
  }
  func.func @transform_66(%arg0: i32) -> (i32, i32) {
    %c0_i32 = arith.constant 0 : i32
    %c0_i32_0 = arith.constant 0 : i32
    %c0_i32_1 = arith.constant 0 : i32
    return %c0_i32, %c0_i32_0 : i32, i32
  }
  func.func @transform_67(%arg0: i32) -> (i32, i32) {
    %c0_i32 = arith.constant 0 : i32
    %c0_i32_0 = arith.constant 0 : i32
    %c0_i32_1 = arith.constant 0 : i32
    return %c0_i32, %c0_i32_0 : i32, i32
  }
  func.func @transform_68(%arg0: i32) -> (i32, i32) {
    %c0_i32 = arith.constant 0 : i32
    %c0_i32_0 = arith.constant 0 : i32
    %c0_i32_1 = arith.constant 0 : i32
    return %c0_i32, %c0_i32_0 : i32, i32
  }
  func.func @transform_69(%arg0: i32) -> (i32, i32) {
    %c0_i32 = arith.constant 0 : i32
    %c0_i32_0 = arith.constant 0 : i32
    %c0_i32_1 = arith.constant 0 : i32
    return %c0_i32, %c0_i32_0 : i32, i32
  }
  func.func @transform_70(%arg0: i32) -> (i32, i32) {
    %c0_i32 = arith.constant 0 : i32
    %c0_i32_0 = arith.constant 0 : i32
    %c0_i32_1 = arith.constant 0 : i32
    return %c0_i32, %c0_i32_0 : i32, i32
  }
  func.func @transform_71(%arg0: i32) -> (i32, i32) {
    %c0_i32 = arith.constant 0 : i32
    %c0_i32_0 = arith.constant 0 : i32
    %c0_i32_1 = arith.constant 0 : i32
    return %c0_i32, %c0_i32_0 : i32, i32
  }
  func.func @transform_72(%arg0: i32) -> (i32, i32) {
    %c0_i32 = arith.constant 0 : i32
    %c0_i32_0 = arith.constant 0 : i32
    %c0_i32_1 = arith.constant 0 : i32
    return %c0_i32, %c0_i32_0 : i32, i32
  }
  func.func @transform_73(%arg0: i32) -> (i32, i32) {
    %c0_i32 = arith.constant 0 : i32
    %c0_i32_0 = arith.constant 0 : i32
    %c0_i32_1 = arith.constant 0 : i32
    return %c0_i32, %c0_i32_0 : i32, i32
  }
  func.func @transform_74(%arg0: i32) -> (i32, i32) {
    %c0_i32 = arith.constant 0 : i32
    %c0_i32_0 = arith.constant 0 : i32
    %c0_i32_1 = arith.constant 0 : i32
    return %c0_i32, %c0_i32_0 : i32, i32
  }
  func.func @transform_75(%arg0: i32) -> (i32, i32) {
    %c0_i32 = arith.constant 0 : i32
    %c0_i32_0 = arith.constant 0 : i32
    %c0_i32_1 = arith.constant 0 : i32
    return %c0_i32, %c0_i32_0 : i32, i32
  }
  func.func @transform_76(%arg0: i32) -> (i32, i32) {
    %c0_i32 = arith.constant 0 : i32
    %c0_i32_0 = arith.constant 0 : i32
    %c0_i32_1 = arith.constant 0 : i32
    return %c0_i32, %c0_i32_0 : i32, i32
  }
  func.func @transform_77(%arg0: i32) -> (i32, i32) {
    %c0_i32 = arith.constant 0 : i32
    %c0_i32_0 = arith.constant 0 : i32
    return %arg0, %c0_i32 : i32, i32
  }
  func.func @transform_78(%arg0: i32) -> (i32, i32) {
    %c0_i32 = arith.constant 0 : i32
    %c0_i32_0 = arith.constant 0 : i32
    return %arg0, %c0_i32 : i32, i32
  }
}

</mosaic_0001>

<llo_original>
// kernel: tpu_custom_call.1
$region0: #{tpu_custom_call.1}
  #allocation0 [shape = 'u32[]', space=smem, size = 0x4, offset = 0x4, fixed_abs, tag = 'smem constant byte address 0x4 - core index']
  #allocation1 [shape = 'u32[144,128]{1,0:T(1,128)}', space=vmem, size = 0x12000, scoped, tag = 'internal scratch']
  #allocation2 [shape = 'f32[1,1]{1,0:T(1,128)S(1)}', space=vmem, size = 0x200, scoped, tag = 'scoped memory for tpu_custom_call.1']
  %s0 = inlined_call_operand.smem [shape: u32[79], index: -1, kind: input, shape index: {}]
  %s1 = sld [smem:[%s0]]
  %s2 = scalar_lea.smem %s0, 1
  %s3 = sld [smem:[%s2]]
  %s4 = scalar_lea.smem %s0, 2
  %s5 = sld [smem:[%s4]]
  %s6 = scalar_lea.smem %s0, 3
  %s7 = sld [smem:[%s6]]
  %s8 = scalar_lea.smem %s0, 4
  %s9 = sld [smem:[%s8]]
  %s10 = scalar_lea.smem %s0, 5
  %s11 = sld [smem:[%s10]]
  %s12 = scalar_lea.smem %s0, 6
  %s13 = sld [smem:[%s12]]
  %s14 = scalar_lea.smem %s0, 7
  %s15 = sld [smem:[%s14]]
  %s16 = scalar_lea.smem %s0, 8
  %s17 = sld [smem:[%s16]]
  %s18 = scalar_lea.smem %s0, 9
  %s19 = sld [smem:[%s18]]
  %s20 = scalar_lea.smem %s0, 10
  %s21 = sld [smem:[%s20]]
  %s22 = scalar_lea.smem %s0, 11
  %s23 = sld [smem:[%s22]]
  %s24 = scalar_lea.smem %s0, 12
  %s25 = sld [smem:[%s24]]
  %s26 = scalar_lea.smem %s0, 13
  %s27 = sld [smem:[%s26]]
  %s28 = scalar_lea.smem %s0, 14
  %s29 = sld [smem:[%s28]]
  %s30 = scalar_lea.smem %s0, 15
  %s31 = sld [smem:[%s30]]
  %s32 = scalar_lea.smem %s0, 16
  %s33 = sld [smem:[%s32]]
  %s34 = scalar_lea.smem %s0, 17
  %s35 = sld [smem:[%s34]]
  %s36 = scalar_lea.smem %s0, 18
  %s37 = sld [smem:[%s36]]
  %s38 = scalar_lea.smem %s0, 19
  %s39 = sld [smem:[%s38]]
  %s40 = scalar_lea.smem %s0, 20
  %s41 = sld [smem:[%s40]]
  %s42 = scalar_lea.smem %s0, 21
  %s43 = sld [smem:[%s42]]
  %s44 = scalar_lea.smem %s0, 22
  %s45 = sld [smem:[%s44]]
  %s46 = scalar_lea.smem %s0, 23
  %s47 = sld [smem:[%s46]]
  %s48 = scalar_lea.smem %s0, 24
  %s49 = sld [smem:[%s48]]
  %s50 = scalar_lea.smem %s0, 25
  %s51 = sld [smem:[%s50]]
  %s52 = scalar_lea.smem %s0, 26
  %s53 = sld [smem:[%s52]]
  %s54 = scalar_lea.smem %s0, 27
  %s55 = sld [smem:[%s54]]
  %s56 = scalar_lea.smem %s0, 28
  %s57 = sld [smem:[%s56]]
  %s58 = scalar_lea.smem %s0, 29
  %s59 = sld [smem:[%s58]]
  %s60 = scalar_lea.smem %s0, 30
  %s61 = sld [smem:[%s60]]
  %s62 = scalar_lea.smem %s0, 31
  %s63 = sld [smem:[%s62]]
  %s64 = scalar_lea.smem %s0, 32
  %s65 = sld [smem:[%s64]]
  %s66 = scalar_lea.smem %s0, 33
  %s67 = sld [smem:[%s66]]
  %s68 = scalar_lea.smem %s0, 34
  %s69 = sld [smem:[%s68]]
  %s70 = scalar_lea.smem %s0, 35
  %s71 = sld [smem:[%s70]]
  %s72 = scalar_lea.smem %s0, 36
  %s73 = sld [smem:[%s72]]
  %s74 = scalar_lea.smem %s0, 37
  %s75 = sld [smem:[%s74]]
  %s76 = scalar_lea.smem %s0, 38
  %s77 = sld [smem:[%s76]]
  %s78 = scalar_lea.smem %s0, 39
  %s79 = sld [smem:[%s78]]
  %s80 = scalar_lea.smem %s0, 40
  %s81 = sld [smem:[%s80]]
  %s82 = scalar_lea.smem %s0, 41
  %s83 = sld [smem:[%s82]]
  %s84 = scalar_lea.smem %s0, 42
  %s85 = sld [smem:[%s84]]
  %s86 = scalar_lea.smem %s0, 43
  %s87 = sld [smem:[%s86]]
  %s88 = scalar_lea.smem %s0, 44
  %s89 = sld [smem:[%s88]]
  %s90 = scalar_lea.smem %s0, 45
  %s91 = sld [smem:[%s90]]
  %s92 = scalar_lea.smem %s0, 46
  %s93 = sld [smem:[%s92]]
  %s94 = scalar_lea.smem %s0, 47
  %s95 = sld [smem:[%s94]]
  %s96 = scalar_lea.smem %s0, 48
  %s97 = sld [smem:[%s96]]
  %s98 = scalar_lea.smem %s0, 49
  %s99 = sld [smem:[%s98]]
  %s100 = scalar_lea.smem %s0, 50
  %s101 = sld [smem:[%s100]]
  %s102 = scalar_lea.smem %s0, 51
  %s103 = sld [smem:[%s102]]
  %s104 = scalar_lea.smem %s0, 52
  %s105 = sld [smem:[%s104]]
  %s106 = scalar_lea.smem %s0, 53
  %s107 = sld [smem:[%s106]]
  %s108 = scalar_lea.smem %s0, 54
  %s109 = sld [smem:[%s108]]
  %s110 = scalar_lea.smem %s0, 55
  %s111 = sld [smem:[%s110]]
  %s112 = scalar_lea.smem %s0, 56
  %s113 = sld [smem:[%s112]]
  %s114 = scalar_lea.smem %s0, 57
  %s115 = sld [smem:[%s114]]
  %s116 = scalar_lea.smem %s0, 58
  %s117 = sld [smem:[%s116]]
  %s118 = scalar_lea.smem %s0, 59
  %s119 = sld [smem:[%s118]]
  %s120 = scalar_lea.smem %s0, 60
  %s121 = sld [smem:[%s120]]
  %s122 = scalar_lea.smem %s0, 61
  %s123 = sld [smem:[%s122]]
  %s124 = scalar_lea.smem %s0, 62
  %s125 = sld [smem:[%s124]]
  %s126 = scalar_lea.smem %s0, 63
  %s127 = sld [smem:[%s126]]
  %s128 = scalar_lea.smem %s0, 64
  %s129 = sld [smem:[%s128]]
  %s130 = scalar_lea.smem %s0, 65
  %s131 = sld [smem:[%s130]]
  %s132 = scalar_lea.smem %s0, 66
  %s133 = sld [smem:[%s132]]
  %s134 = scalar_lea.smem %s0, 67
  %s135 = sld [smem:[%s134]]
  %s136 = scalar_lea.smem %s0, 68
  %s137 = sld [smem:[%s136]]
  %s138 = scalar_lea.smem %s0, 69
  %s139 = sld [smem:[%s138]]
  %s140 = scalar_lea.smem %s0, 70
  %s141 = sld [smem:[%s140]]
  %s142 = scalar_lea.smem %s0, 71
  %s143 = sld [smem:[%s142]]
  %s144 = scalar_lea.smem %s0, 72
  %s145 = sld [smem:[%s144]]
  %s146 = scalar_lea.smem %s0, 73
  %s147 = sld [smem:[%s146]]
  %s148 = scalar_lea.smem %s0, 74
  %s149 = sld [smem:[%s148]]
  %s150 = scalar_lea.smem %s0, 75
  %s151 = sld [smem:[%s150]]
  %s152 = scalar_lea.smem %s0, 76
  %s153 = sld [smem:[%s152]]
  %s154 = scalar_lea.smem %s0, 77
  %s155 = sld [smem:[%s154]]
  %s156 = scalar_lea.smem %s0, 78
  %s157 = sld [smem:[%s156]]
  %158 = xla_tuple %s155, %s157
  %s159 = sld [smem:[#allocation0]]
  $region614: #{tpu_custom_call.1} parent=0
    _
  %s161 = ssub.s32 1, %s159
  %s162 = scalar_select 0, %s161, %s159
  %v163 = vstv %s5
  %164 = vst [vmem:[#allocation2] sm:$0x1] %v163
  $region1: #{tpu_custom_call.1} parent=0
    #allocation3 [shape = 'u8[1024]{0}', space=vmem, size = 0x400, scoped, tag = 'input window, operand 0, single buffered']
    #allocation4 [shape = 's32[1]{0}', space=sflag, size = 0x4, scoped, tag = 'scoped memory for tpu_custom_call.1']
    #allocation5 [shape = 's32[1]{0}', space=sflag, size = 0x4, scoped, tag = 'scoped memory for tpu_custom_call.1']
    #allocation6 [shape = 'u8[1024]{0}', space=vmem, size = 0x400, scoped, tag = 'input window, operand 1, single buffered']
    #allocation7 [shape = 's32[1]{0}', space=sflag, size = 0x4, scoped, tag = 'scoped memory for tpu_custom_call.1']
    #allocation8 [shape = 'u8[8192]{0}', space=vmem, size = 0x2000, scoped, tag = 'input window, operand 3, single buffered']
    #allocation9 [shape = 'u8[8192]{0}', space=vmem, size = 0x2000, scoped, tag = 'input window, operand 5, single buffered']
    #allocation10 [shape = 's32[1]{0}', space=sflag, size = 0x4, scoped, tag = 'scoped memory for tpu_custom_call.1']
    #allocation11 [shape = 'u8[512]{0}', space=vmem, size = 0x400, scoped, tag = 'input window, operand 6, single buffered']
    #allocation12 [shape = 'u8[8192]{0}', space=vmem, size = 0x2000, scoped, tag = 'input window, operand 7, single buffered']
    #allocation13 [shape = 's32[1]{0}', space=sflag, size = 0x4, scoped, tag = 'scoped memory for tpu_custom_call.1']
    #allocation14 [shape = 'u8[512]{0}', space=vmem, size = 0x400, scoped, tag = 'input window, operand 8, single buffered']
    #allocation15 [shape = 'u8[8192]{0}', space=vmem, size = 0x2000, scoped, tag = 'input window, operand 9, single buffered']
    #allocation16 [shape = 's32[1]{0}', space=sflag, size = 0x4, scoped, tag = 'scoped memory for tpu_custom_call.1']
    #allocation17 [shape = 'u8[512]{0}', space=vmem, size = 0x400, scoped, tag = 'input window, operand 10, single buffered']
    #allocation18 [shape = 'u8[65536]{0}', space=vmem, size = 0x10000, scoped, tag = 'input window, operand 11, single buffered']
    #allocation19 [shape = 's32[1]{0}', space=sflag, size = 0x4, scoped, tag = 'scoped memory for tpu_custom_call.1']
    #allocation20 [shape = 'u8[4096]{0}', space=vmem, size = 0x1000, scoped, tag = 'input window, operand 12, single buffered']
    #allocation21 [shape = 'u8[512]{0}', space=vmem, size = 0x400, scoped, tag = 'input window, operand 13, single buffered']
    #allocation22 [shape = 's32[1]{0}', space=sflag, size = 0x4, scoped, tag = 'scoped memory for tpu_custom_call.1']
    #allocation23 [shape = 'u8[512]{0}', space=vmem, size = 0x400, scoped, tag = 'input window, operand 14, single buffered']
    #allocation24 [shape = 'u8[8192]{0}', space=vmem, size = 0x2000, scoped, tag = 'input window, operand 15, single buffered']
    #allocation25 [shape = 's32[1]{0}', space=sflag, size = 0x4, scoped, tag = 'scoped memory for tpu_custom_call.1']
    #allocation26 [shape = 'u8[65536]{0}', space=vmem, size = 0x10000, scoped, tag = 'input window, operand 16, single buffered']
    #allocation27 [shape = 'u8[512]{0}', space=vmem, size = 0x400, scoped, tag = 'input window, operand 17, single buffered']
    #allocation28 [shape = 's32[1]{0}', space=sflag, size = 0x4, scoped, tag = 'scoped memory for tpu_custom_call.1']
    #allocation29 [shape = 'u8[65536]{0}', space=vmem, size = 0x10000, scoped, tag = 'input window, operand 18, single buffered']
    #allocation30 [shape = 'u8[512]{0}', space=vmem, size = 0x400, scoped, tag = 'input window, operand 19, single buffered']
    #allocation31 [shape = 's32[1]{0}', space=sflag, size = 0x4, scoped, tag = 'scoped memory for tpu_custom_call.1']
    #allocation32 [shape = 'u8[131072]{0}', space=vmem, size = 0x20000, scoped, tag = 'input window, operand 20, single buffered']
    #allocation33 [shape = 'u8[1024]{0}', space=vmem, size = 0x400, scoped, tag = 'input window, operand 21, single buffered']
    #allocation34 [shape = 's32[1]{0}', space=sflag, size = 0x4, scoped, tag = 'scoped memory for tpu_custom_call.1']
    #allocation35 [shape = 'u8[8192]{0}', space=vmem, size = 0x2000, scoped, tag = 'input window, operand 22, single buffered']
    #allocation36 [shape = 'u8[65536]{0}', space=vmem, size = 0x10000, scoped, tag = 'input window, operand 23, single buffered']
    #allocation37 [shape = 's32[1]{0}', space=sflag, size = 0x4, scoped, tag = 'scoped memory for tpu_custom_call.1']
    #allocation38 [shape = 'u8[512]{0}', space=vmem, size = 0x400, scoped, tag = 'input window, operand 24, single buffered']
    #allocation39 [shape = 'u8[65536]{0}', space=vmem, size = 0x10000, scoped, tag = 'input window, operand 25, single buffered']
    #allocation40 [shape = 's32[1]{0}', space=sflag, size = 0x4, scoped, tag = 'scoped memory for tpu_custom_call.1']
    #allocation41 [shape = 'u8[512]{0}', space=vmem, size = 0x400, scoped, tag = 'input window, operand 26, single buffered']
    #allocation42 [shape = 'u8[131072]{0}', space=vmem, size = 0x20000, scoped, tag = 'input window, operand 27, single buffered']
    #allocation43 [shape = 's32[1]{0}', space=sflag, size = 0x4, scoped, tag = 'scoped memory for tpu_custom_call.1']
    #allocation44 [shape = 'u8[1024]{0}', space=vmem, size = 0x400, scoped, tag = 'input window, operand 28, single buffered']
    #allocation45 [shape = 'u8[512]{0}', space=vmem, size = 0x400, scoped, tag = 'input window, operand 29, single buffered']
    #allocation46 [shape = 's32[1]{0}', space=sflag, size = 0x4, scoped, tag = 'scoped memory for tpu_custom_call.1']
    #allocation47 [shape = 'u8[512]{0}', space=vmem, size = 0x400, scoped, tag = 'input window, operand 30, single buffered']
    #allocation48 [shape = 'u8[8192]{0}', space=vmem, size = 0x2000, scoped, tag = 'input window, operand 31, single buffered']
    #allocation49 [shape = 's32[1]{0}', space=sflag, size = 0x4, scoped, tag = 'scoped memory for tpu_custom_call.1']
    #allocation50 [shape = 'u8[65536]{0}', space=vmem, size = 0x10000, scoped, tag = 'input window, operand 32, single buffered']
    #allocation51 [shape = 'u8[512]{0}', space=vmem, size = 0x400, scoped, tag = 'input window, operand 33, single buffered']
    #allocation52 [shape = 's32[1]{0}', space=sflag, size = 0x4, scoped, tag = 'scoped memory for tpu_custom_call.1']
    #allocation53 [shape = 'u8[65536]{0}', space=vmem, size = 0x10000, scoped, tag = 'input window, operand 34, single buffered']
    #allocation54 [shape = 'u8[512]{0}', space=vmem, size = 0x400, scoped, tag = 'input window, operand 35, single buffered']
    #allocation55 [shape = 's32[1]{0}', space=sflag, size = 0x4, scoped, tag = 'scoped memory for tpu_custom_call.1']
    #allocation56 [shape = 'u8[131072]{0}', space=vmem, size = 0x20000, scoped, tag = 'input window, operand 36, single buffered']
    #allocation57 [shape = 'u8[1024]{0}', space=vmem, size = 0x400, scoped, tag = 'input window, operand 37, single buffered']
    #allocation58 [shape = 's32[1]{0}', space=sflag, size = 0x4, scoped, tag = 'scoped memory for tpu_custom_call.1']
    #allocation59 [shape = 'u8[8192]{0}', space=vmem, size = 0x2000, scoped, tag = 'input window, operand 38, single buffered']
    #allocation60 [shape = 'u8[65536]{0}', space=vmem, size = 0x10000, scoped, tag = 'input window, operand 39, single buffered']
    #allocation61 [shape = 's32[1]{0}', space=sflag, size = 0x4, scoped, tag = 'scoped memory for tpu_custom_call.1']
    #allocation62 [shape = 'u8[512]{0}', space=vmem, size = 0x400, scoped, tag = 'input window, operand 40, single buffered']
    #allocation63 [shape = 'u8[65536]{0}', space=vmem, size = 0x10000, scoped, tag = 'input window, operand 41, single buffered']
    #allocation64 [shape = 's32[1]{0}', space=sflag, size = 0x4, scoped, tag = 'scoped memory for tpu_custom_call.1']
    #allocation65 [shape = 'u8[512]{0}', space=vmem, size = 0x400, scoped, tag = 'input window, operand 42, single buffered']
    #allocation66 [shape = 'u8[131072]{0}', space=vmem, size = 0x20000, scoped, tag = 'input window, operand 43, single buffered']
    #allocation67 [shape = 's32[1]{0}', space=sflag, size = 0x4, scoped, tag = 'scoped memory for tpu_custom_call.1']
    #allocation68 [shape = 'u8[1024]{0}', space=vmem, size = 0x400, scoped, tag = 'input window, operand 44, single buffered']
    #allocation69 [shape = 'u8[512]{0}', space=vmem, size = 0x400, scoped, tag = 'input window, operand 45, single buffered']
    #allocation70 [shape = 's32[1]{0}', space=sflag, size = 0x4, scoped, tag = 'scoped memory for tpu_custom_call.1']
    #allocation71 [shape = 'u8[512]{0}', space=vmem, size = 0x400, scoped, tag = 'input window, operand 46, single buffered']
    #allocation72 [shape = 'u8[8192]{0}', space=vmem, size = 0x2000, scoped, tag = 'input window, operand 47, single buffered']
    #allocation73 [shape = 's32[1]{0}', space=sflag, size = 0x4, scoped, tag = 'scoped memory for tpu_custom_call.1']
    #allocation74 [shape = 'u8[65536]{0}', space=vmem, size = 0x10000, scoped, tag = 'input window, operand 48, single buffered']
    #allocation75 [shape = 'u8[512]{0}', space=vmem, size = 0x400, scoped, tag = 'input window, operand 49, single buffered']
    #allocation76 [shape = 's32[1]{0}', space=sflag, size = 0x4, scoped, tag = 'scoped memory for tpu_custom_call.1']
    #allocation77 [shape = 'u8[65536]{0}', space=vmem, size = 0x10000, scoped, tag = 'input window, operand 50, single buffered']
    #allocation78 [shape = 'u8[512]{0}', space=vmem, size = 0x400, scoped, tag = 'input window, operand 51, single buffered']
    #allocation79 [shape = 's32[1]{0}', space=sflag, size = 0x4, scoped, tag = 'scoped memory for tpu_custom_call.1']
    #allocation80 [shape = 'u8[131072]{0}', space=vmem, size = 0x20000, scoped, tag = 'input window, operand 52, single buffered']
    #allocation81 [shape = 'u8[1024]{0}', space=vmem, size = 0x400, scoped, tag = 'input window, operand 53, single buffered']
    #allocation82 [shape = 's32[1]{0}', space=sflag, size = 0x4, scoped, tag = 'scoped memory for tpu_custom_call.1']
    #allocation83 [shape = 'u8[8192]{0}', space=vmem, size = 0x2000, scoped, tag = 'input window, operand 54, single buffered']
    #allocation84 [shape = 'u8[65536]{0}', space=vmem, size = 0x10000, scoped, tag = 'input window, operand 55, single buffered']
    #allocation85 [shape = 's32[1]{0}', space=sflag, size = 0x4, scoped, tag = 'scoped memory for tpu_custom_call.1']
    #allocation86 [shape = 'u8[512]{0}', space=vmem, size = 0x400, scoped, tag = 'input window, operand 56, single buffered']
    #allocation87 [shape = 'u8[65536]{0}', space=vmem, size = 0x10000, scoped, tag = 'input window, operand 57, single buffered']
    #allocation88 [shape = 's32[1]{0}', space=sflag, size = 0x4, scoped, tag = 'scoped memory for tpu_custom_call.1']
    #allocation89 [shape = 'u8[512]{0}', space=vmem, size = 0x400, scoped, tag = 'input window, operand 58, single buffered']
    #allocation90 [shape = 'u8[131072]{0}', space=vmem, size = 0x20000, scoped, tag = 'input window, operand 59, single buffered']
    #allocation91 [shape = 's32[1]{0}', space=sflag, size = 0x4, scoped, tag = 'scoped memory for tpu_custom_call.1']
    #allocation92 [shape = 'u8[1024]{0}', space=vmem, size = 0x400, scoped, tag = 'input window, operand 60, single buffered']
    #allocation93 [shape = 'u8[512]{0}', space=vmem, size = 0x400, scoped, tag = 'input window, operand 61, single buffered']
    #allocation94 [shape = 's32[1]{0}', space=sflag, size = 0x4, scoped, tag = 'scoped memory for tpu_custom_call.1']
    #allocation95 [shape = 'u8[512]{0}', space=vmem, size = 0x400, scoped, tag = 'input window, operand 62, single buffered']
    #allocation96 [shape = 'u8[8192]{0}', space=vmem, size = 0x2000, scoped, tag = 'input window, operand 63, single buffered']
    #allocation97 [shape = 's32[1]{0}', space=sflag, size = 0x4, scoped, tag = 'scoped memory for tpu_custom_call.1']
    #allocation98 [shape = 'u8[65536]{0}', space=vmem, size = 0x10000, scoped, tag = 'input window, operand 64, single buffered']
    #allocation99 [shape = 'u8[512]{0}', space=vmem, size = 0x400, scoped, tag = 'input window, operand 65, single buffered']
    #allocation100 [shape = 's32[1]{0}', space=sflag, size = 0x4, scoped, tag = 'scoped memory for tpu_custom_call.1']
    #allocation101 [shape = 'u8[65536]{0}', space=vmem, size = 0x10000, scoped, tag = 'input window, operand 66, single buffered']
    #allocation102 [shape = 'u8[512]{0}', space=vmem, size = 0x400, scoped, tag = 'input window, operand 67, single buffered']
    #allocation103 [shape = 's32[1]{0}', space=sflag, size = 0x4, scoped, tag = 'scoped memory for tpu_custom_call.1']
    #allocation104 [shape = 'u8[131072]{0}', space=vmem, size = 0x20000, scoped, tag = 'input window, operand 68, single buffered']
    #allocation105 [shape = 'u8[1024]{0}', space=vmem, size = 0x400, scoped, tag = 'input window, operand 69, single buffered']
    #allocation106 [shape = 's32[1]{0}', space=sflag, size = 0x4, scoped, tag = 'scoped memory for tpu_custom_call.1']
    #allocation107 [shape = 'u8[8192]{0}', space=vmem, size = 0x2000, scoped, tag = 'input window, operand 70, single buffered']
    #allocation108 [shape = 'u8[512]{0}', space=vmem, size = 0x400, scoped, tag = 'input window, operand 72, single buffered']
    #allocation109 [shape = 's32[1]{0}', space=sflag, size = 0x4, scoped, tag = 'scoped memory for tpu_custom_call.1']
    #allocation110 [shape = 'u8[65536]{0}', space=vmem, size = 0x10000, scoped, tag = 'input window, operand 73, single buffered']
    #allocation111 [shape = 'u8[131072]{0}', space=vmem, size = 0x20000, scoped, tag = 'input window, operand 75, single buffered']
    #allocation112 [shape = 's32[1]{0}', space=sflag, size = 0x4, scoped, tag = 'scoped memory for tpu_custom_call.1']
    #allocation113 [shape = 'u8[1024]{0}', space=vmem, size = 0x400, scoped, tag = 'output window, operand 0, single buffered']
    %165 = vsyncpa [#allocation4], 0
    %166 = vsyncpa [#allocation7], 0
    %167 = vsyncpa [#allocation10], 0
    %168 = vsyncpa [#allocation13], 0
    %169 = vsyncpa [#allocation16], 0
    %170 = vsyncpa [#allocation19], 0
    %171 = vsyncpa [#allocation22], 0
    %172 = vsyncpa [#allocation25], 0
    %173 = vsyncpa [#allocation28], 0
    %174 = vsyncpa [#allocation31], 0
    %175 = vsyncpa [#allocation34], 0
    %176 = vsyncpa [#allocation37], 0
    %177 = vsyncpa [#allocation40], 0
    %178 = vsyncpa [#allocation43], 0
    %179 = vsyncpa [#allocation46], 0
    %180 = vsyncpa [#allocation49], 0
    %181 = vsyncpa [#allocation52], 0
    %182 = vsyncpa [#allocation55], 0
    %183 = vsyncpa [#allocation58], 0
    %184 = vsyncpa [#allocation61], 0
    %185 = vsyncpa [#allocation64], 0
    %186 = vsyncpa [#allocation67], 0
    %187 = vsyncpa [#allocation70], 0
    %188 = vsyncpa [#allocation73], 0
    %189 = vsyncpa [#allocation76], 0
    %190 = vsyncpa [#allocation79], 0
    %191 = vsyncpa [#allocation82], 0
    %192 = vsyncpa [#allocation85], 0
    %193 = vsyncpa [#allocation88], 0
    %194 = vsyncpa [#allocation91], 0
    %195 = vsyncpa [#allocation94], 0
    %196 = vsyncpa [#allocation97], 0
    %197 = vsyncpa [#allocation100], 0
    %198 = vsyncpa [#allocation103], 0
    %199 = vsyncpa [#allocation106], 0
    %200 = vsyncpa [#allocation109], 0
    %201 = vsyncpa [#allocation112], 0
    %202 = vsyncpa [#allocation5], 0
    // Predicated region
    $region2: #{tpu_custom_call.1} parent=1 // pred_check
      _
    $region3: #{tpu_custom_call.1} parent=1 // pred_check_branch
      %204 = sbr.rel (0) target = $region5
    $region4: #{tpu_custom_call.1} parent=1 // pred_region
      %s206 = ssub.s32 32, 32
      %207 = vsyncadd [#allocation4], %s206
      %s209 = sshll.u32 [#allocation3], 4
      %s210 = int_to_ptr.vmem [resolvable:$true] %s209
      %212 = dma.hbm_to_vmem [thread:$0]  %s1, 32, %s210, [#allocation4]
    $region5: #{tpu_custom_call.1} parent=1 // pred_fallthru
      _
    // Predicated region
    $region6: #{tpu_custom_call.1} parent=1 // pred_check
      _
    $region7: #{tpu_custom_call.1} parent=1 // pred_check_branch
      %214 = sbr.rel (0) target = $region9
    $region8: #{tpu_custom_call.1} parent=1 // pred_region
      %s216 = ssub.s32 32, 32
      %217 = vsyncadd [#allocation7], %s216
      %s219 = sshll.u32 [#allocation6], 4
      %s220 = int_to_ptr.vmem [resolvable:$true] %s219
      %222 = dma.hbm_to_vmem [thread:$0]  %s3, 32, %s220, [#allocation7]
    $region9: #{tpu_custom_call.1} parent=1 // pred_fallthru
      _
    // Predicated region
    $region10: #{tpu_custom_call.1} parent=1 // pred_check
      _
    $region11: #{tpu_custom_call.1} parent=1 // pred_check_branch
      %224 = sbr.rel (0) target = $region13
    $region12: #{tpu_custom_call.1} parent=1 // pred_region
      _
    $region13: #{tpu_custom_call.1} parent=1 // pred_fallthru
      _
    // Predicated region
    $region14: #{tpu_custom_call.1} parent=1 // pred_check
      _
    $region15: #{tpu_custom_call.1} parent=1 // pred_check_branch
      %226 = sbr.rel (0) target = $region17
    $region16: #{tpu_custom_call.1} parent=1 // pred_region
      %s228 = ssub.s32 256, 256
      %229 = vsyncadd [#allocation7], %s228
      %s230 = sshll.u32 [#allocation8], 4
      %s231 = int_to_ptr.vmem [resolvable:$true] %s230
      %236 = dma.hbm_to_vmem [thread:$0]  %s7, 256, %s231, [#allocation7], 128, 128, 8
    $region17: #{tpu_custom_call.1} parent=1 // pred_fallthru
      _
    // Predicated region
    $region18: #{tpu_custom_call.1} parent=1 // pred_check
      _
    $region19: #{tpu_custom_call.1} parent=1 // pred_check_branch
      %238 = sbr.rel (0) target = $region21
    $region20: #{tpu_custom_call.1} parent=1 // pred_region
      _
    $region21: #{tpu_custom_call.1} parent=1 // pred_fallthru
      _
    // Predicated region
    $region22: #{tpu_custom_call.1} parent=1 // pred_check
      _
    $region23: #{tpu_custom_call.1} parent=1 // pred_check_branch
      %240 = sbr.rel (0) target = $region25
    $region24: #{tpu_custom_call.1} parent=1 // pred_region
      %s242 = ssub.s32 256, 256
      %243 = vsyncadd [#allocation10], %s242
      %s244 = sshll.u32 [#allocation9], 4
      %s245 = int_to_ptr.vmem [resolvable:$true] %s244
      %250 = dma.hbm_to_vmem [thread:$0]  %s11, 256, %s245, [#allocation10], 128, 128, 8
    $region25: #{tpu_custom_call.1} parent=1 // pred_fallthru
      _
    // Predicated region
    $region26: #{tpu_custom_call.1} parent=1 // pred_check
      _
    $region27: #{tpu_custom_call.1} parent=1 // pred_check_branch
      %252 = sbr.rel (0) target = $region29
    $region28: #{tpu_custom_call.1} parent=1 // pred_region
      %s254 = ssub.s32 16, 16
      %255 = vsyncadd [#allocation10], %s254
      %s257 = sshll.u32 [#allocation11], 4
      %s258 = int_to_ptr.vmem [resolvable:$true] %s257
      %260 = dma.hbm_to_vmem [thread:$0]  %s13, 16, %s258, [#allocation10]
    $region29: #{tpu_custom_call.1} parent=1 // pred_fallthru
      _
    // Predicated region
    $region30: #{tpu_custom_call.1} parent=1 // pred_check
      _
    $region31: #{tpu_custom_call.1} parent=1 // pred_check_branch
      %262 = sbr.rel (0) target = $region33
    $region32: #{tpu_custom_call.1} parent=1 // pred_region
      %s264 = ssub.s32 256, 256
      %265 = vsyncadd [#allocation13], %s264
      %s266 = sshll.u32 [#allocation12], 4
      %s267 = int_to_ptr.vmem [resolvable:$true] %s266
      %272 = dma.hbm_to_vmem [thread:$0]  %s15, 256, %s267, [#allocation13], 128, 128, 8
    $region33: #{tpu_custom_call.1} parent=1 // pred_fallthru
      _
    // Predicated region
    $region34: #{tpu_custom_call.1} parent=1 // pred_check
      _
    $region35: #{tpu_custom_call.1} parent=1 // pred_check_branch
      %274 = sbr.rel (0) target = $region37
    $region36: #{tpu_custom_call.1} parent=1 // pred_region
      %s276 = ssub.s32 16, 16
      %277 = vsyncadd [#allocation13], %s276
      %s279 = sshll.u32 [#allocation14], 4
      %s280 = int_to_ptr.vmem [resolvable:$true] %s279
      %282 = dma.hbm_to_vmem [thread:$0]  %s17, 16, %s280, [#allocation13]
    $region37: #{tpu_custom_call.1} parent=1 // pred_fallthru
      _
    // Predicated region
    $region38: #{tpu_custom_call.1} parent=1 // pred_check
      _
    $region39: #{tpu_custom_call.1} parent=1 // pred_check_branch
      %284 = sbr.rel (0) target = $region41
    $region40: #{tpu_custom_call.1} parent=1 // pred_region
      %s286 = ssub.s32 256, 256
      %287 = vsyncadd [#allocation16], %s286
      %s288 = sshll.u32 [#allocation15], 4
      %s289 = int_to_ptr.vmem [resolvable:$true] %s288
      %294 = dma.hbm_to_vmem [thread:$0]  %s19, 256, %s289, [#allocation16], 128, 128, 8
    $region41: #{tpu_custom_call.1} parent=1 // pred_fallthru
      _
    // Predicated region
    $region42: #{tpu_custom_call.1} parent=1 // pred_check
      _
    $region43: #{tpu_custom_call.1} parent=1 // pred_check_branch
      %296 = sbr.rel (0) target = $region45
    $region44: #{tpu_custom_call.1} parent=1 // pred_region
      %s298 = ssub.s32 16, 16
      %299 = vsyncadd [#allocation16], %s298
      %s301 = sshll.u32 [#allocation17], 4
      %s302 = int_to_ptr.vmem [resolvable:$true] %s301
      %304 = dma.hbm_to_vmem [thread:$0]  %s21, 16, %s302, [#allocation16]
    $region45: #{tpu_custom_call.1} parent=1 // pred_fallthru
      _
    // Predicated region
    $region46: #{tpu_custom_call.1} parent=1 // pred_check
      _
    $region47: #{tpu_custom_call.1} parent=1 // pred_check_branch
      %306 = sbr.rel (0) target = $region49
    $region48: #{tpu_custom_call.1} parent=1 // pred_region
      %s308 = ssub.s32 2048, 2048
      %309 = vsyncadd [#allocation19], %s308
      %s310 = sshll.u32 [#allocation18], 4
      %s311 = int_to_ptr.vmem [resolvable:$true] %s310
      %316 = dma.hbm_to_vmem [thread:$0]  %s23, 2048, %s311, [#allocation19], 1024, 1024, 64
    $region49: #{tpu_custom_call.1} parent=1 // pred_fallthru
      _
    // Predicated region
    $region50: #{tpu_custom_call.1} parent=1 // pred_check
      _
    $region51: #{tpu_custom_call.1} parent=1 // pred_check_branch
      %318 = sbr.rel (0) target = $region53
    $region52: #{tpu_custom_call.1} parent=1 // pred_region
      %s320 = ssub.s32 128, 128
      %321 = vsyncadd [#allocation19], %s320
      %s323 = sshll.u32 [#allocation20], 4
      %s324 = int_to_ptr.vmem [resolvable:$true] %s323
      %326 = dma.hbm_to_vmem [thread:$0]  %s25, 128, %s324, [#allocation19]
    $region53: #{tpu_custom_call.1} parent=1 // pred_fallthru
      _
    // Predicated region
    $region54: #{tpu_custom_call.1} parent=1 // pred_check
      _
    $region55: #{tpu_custom_call.1} parent=1 // pred_check_branch
      %328 = sbr.rel (0) target = $region57
    $region56: #{tpu_custom_call.1} parent=1 // pred_region
      %s330 = ssub.s32 16, 16
      %331 = vsyncadd [#allocation22], %s330
      %s333 = sshll.u32 [#allocation21], 4
      %s334 = int_to_ptr.vmem [resolvable:$true] %s333
      %336 = dma.hbm_to_vmem [thread:$0]  %s27, 16, %s334, [#allocation22]
    $region57: #{tpu_custom_call.1} parent=1 // pred_fallthru
      _
    // Predicated region
    $region58: #{tpu_custom_call.1} parent=1 // pred_check
      _
    $region59: #{tpu_custom_call.1} parent=1 // pred_check_branch
      %338 = sbr.rel (0) target = $region61
    $region60: #{tpu_custom_call.1} parent=1 // pred_region
      %s340 = ssub.s32 16, 16
      %341 = vsyncadd [#allocation22], %s340
      %s343 = sshll.u32 [#allocation23], 4
      %s344 = int_to_ptr.vmem [resolvable:$true] %s343
      %346 = dma.hbm_to_vmem [thread:$0]  %s29, 16, %s344, [#allocation22]
    $region61: #{tpu_custom_call.1} parent=1 // pred_fallthru
      _
    // Predicated region
    $region62: #{tpu_custom_call.1} parent=1 // pred_check
      _
    $region63: #{tpu_custom_call.1} parent=1 // pred_check_branch
      %348 = sbr.rel (0) target = $region65
    $region64: #{tpu_custom_call.1} parent=1 // pred_region
      %s350 = ssub.s32 256, 256
      %351 = vsyncadd [#allocation25], %s350
      %s352 = sshll.u32 [#allocation24], 4
      %s353 = int_to_ptr.vmem [resolvable:$true] %s352
      %358 = dma.hbm_to_vmem [thread:$0]  %s31, 256, %s353, [#allocation25], 128, 128, 8
    $region65: #{tpu_custom_call.1} parent=1 // pred_fallthru
      _
    // Predicated region
    $region66: #{tpu_custom_call.1} parent=1 // pred_check
      _
    $region67: #{tpu_custom_call.1} parent=1 // pred_check_branch
      %360 = sbr.rel (0) target = $region69
    $region68: #{tpu_custom_call.1} parent=1 // pred_region
      %s362 = ssub.s32 2048, 2048
      %363 = vsyncadd [#allocation25], %s362
      %s364 = sshll.u32 [#allocation26], 4
      %s365 = int_to_ptr.vmem [resolvable:$true] %s364
      %370 = dma.hbm_to_vmem [thread:$0]  %s33, 2048, %s365, [#allocation25], 128, 128, 8
    $region69: #{tpu_custom_call.1} parent=1 // pred_fallthru
      _
    // Predicated region
    $region70: #{tpu_custom_call.1} parent=1 // pred_check
      _
    $region71: #{tpu_custom_call.1} parent=1 // pred_check_branch
      %372 = sbr.rel (0) target = $region73
    $region72: #{tpu_custom_call.1} parent=1 // pred_region
      %s374 = ssub.s32 16, 16
      %375 = vsyncadd [#allocation28], %s374
      %s377 = sshll.u32 [#allocation27], 4
      %s378 = int_to_ptr.vmem [resolvable:$true] %s377
      %380 = dma.hbm_to_vmem [thread:$0]  %s35, 16, %s378, [#allocation28]
    $region73: #{tpu_custom_call.1} parent=1 // pred_fallthru
      _
    // Predicated region
    $region74: #{tpu_custom_call.1} parent=1 // pred_check
      _
    $region75: #{tpu_custom_call.1} parent=1 // pred_check_branch
      %382 = sbr.rel (0) target = $region77
    $region76: #{tpu_custom_call.1} parent=1 // pred_region
      %s384 = ssub.s32 2048, 2048
      %385 = vsyncadd [#allocation28], %s384
      %s386 = sshll.u32 [#allocation29], 4
      %s387 = int_to_ptr.vmem [resolvable:$true] %s386
      %392 = dma.hbm_to_vmem [thread:$0]  %s37, 2048, %s387, [#allocation28], 128, 128, 8
    $region77: #{tpu_custom_call.1} parent=1 // pred_fallthru
      _
    // Predicated region
    $region78: #{tpu_custom_call.1} parent=1 // pred_check
      _
    $region79: #{tpu_custom_call.1} parent=1 // pred_check_branch
      %394 = sbr.rel (0) target = $region81
    $region80: #{tpu_custom_call.1} parent=1 // pred_region
      %s396 = ssub.s32 16, 16
      %397 = vsyncadd [#allocation31], %s396
      %s399 = sshll.u32 [#allocation30], 4
      %s400 = int_to_ptr.vmem [resolvable:$true] %s399
      %402 = dma.hbm_to_vmem [thread:$0]  %s39, 16, %s400, [#allocation31]
    $region81: #{tpu_custom_call.1} parent=1 // pred_fallthru
      _
    // Predicated region
    $region82: #{tpu_custom_call.1} parent=1 // pred_check
      _
    $region83: #{tpu_custom_call.1} parent=1 // pred_check_branch
      %404 = sbr.rel (0) target = $region85
    $region84: #{tpu_custom_call.1} parent=1 // pred_region
      %s406 = ssub.s32 4096, 4096
      %407 = vsyncadd [#allocation31], %s406
      %s408 = sshll.u32 [#allocation32], 4
      %s409 = int_to_ptr.vmem [resolvable:$true] %s408
      %414 = dma.hbm_to_vmem [thread:$0]  %s41, 4096, %s409, [#allocation31], 256, 256, 16
    $region85: #{tpu_custom_call.1} parent=1 // pred_fallthru
      _
    // Predicated region
    $region86: #{tpu_custom_call.1} parent=1 // pred_check
      _
    $region87: #{tpu_custom_call.1} parent=1 // pred_check_branch
      %416 = sbr.rel (0) target = $region89
    $region88: #{tpu_custom_call.1} parent=1 // pred_region
      %s418 = ssub.s32 32, 32
      %419 = vsyncadd [#allocation34], %s418
      %s421 = sshll.u32 [#allocation33], 4
      %s422 = int_to_ptr.vmem [resolvable:$true] %s421
      %424 = dma.hbm_to_vmem [thread:$0]  %s43, 32, %s422, [#allocation34]
    $region89: #{tpu_custom_call.1} parent=1 // pred_fallthru
      _
    // Predicated region
    $region90: #{tpu_custom_call.1} parent=1 // pred_check
      _
    $region91: #{tpu_custom_call.1} parent=1 // pred_check_branch
      %426 = sbr.rel (0) target = $region93
    $region92: #{tpu_custom_call.1} parent=1 // pred_region
      %s428 = ssub.s32 256, 256
      %429 = vsyncadd [#allocation34], %s428
      %s430 = sshll.u32 [#allocation35], 4
      %s431 = int_to_ptr.vmem [resolvable:$true] %s430
      %436 = dma.hbm_to_vmem [thread:$0]  %s45, 256, %s431, [#allocation34], 128, 128, 8
    $region93: #{tpu_custom_call.1} parent=1 // pred_fallthru
      _
    // Predicated region
    $region94: #{tpu_custom_call.1} parent=1 // pred_check
      _
    $region95: #{tpu_custom_call.1} parent=1 // pred_check_branch
      %438 = sbr.rel (0) target = $region97
    $region96: #{tpu_custom_call.1} parent=1 // pred_region
      %s440 = ssub.s32 2048, 2048
      %441 = vsyncadd [#allocation37], %s440
      %s442 = sshll.u32 [#allocation36], 4
      %s443 = int_to_ptr.vmem [resolvable:$true] %s442
      %448 = dma.hbm_to_vmem [thread:$0]  %s47, 2048, %s443, [#allocation37], 128, 128, 8
    $region97: #{tpu_custom_call.1} parent=1 // pred_fallthru
      _
    // Predicated region
    $region98: #{tpu_custom_call.1} parent=1 // pred_check
      _
    $region99: #{tpu_custom_call.1} parent=1 // pred_check_branch
      %450 = sbr.rel (0) target = $region101
    $region100: #{tpu_custom_call.1} parent=1 // pred_region
      %s452 = ssub.s32 16, 16
      %453 = vsyncadd [#allocation37], %s452
      %s455 = sshll.u32 [#allocation38], 4
      %s456 = int_to_ptr.vmem [resolvable:$true] %s455
      %458 = dma.hbm_to_vmem [thread:$0]  %s49, 16, %s456, [#allocation37]
    $region101: #{tpu_custom_call.1} parent=1 // pred_fallthru
      _
    // Predicated region
    $region102: #{tpu_custom_call.1} parent=1 // pred_check
      _
    $region103: #{tpu_custom_call.1} parent=1 // pred_check_branch
      %460 = sbr.rel (0) target = $region105
    $region104: #{tpu_custom_call.1} parent=1 // pred_region
      %s462 = ssub.s32 2048, 2048
      %463 = vsyncadd [#allocation40], %s462
      %s464 = sshll.u32 [#allocation39], 4
      %s465 = int_to_ptr.vmem [resolvable:$true] %s464
      %470 = dma.hbm_to_vmem [thread:$0]  %s51, 2048, %s465, [#allocation40], 128, 128, 8
    $region105: #{tpu_custom_call.1} parent=1 // pred_fallthru
      _
    // Predicated region
    $region106: #{tpu_custom_call.1} parent=1 // pred_check
      _
    $region107: #{tpu_custom_call.1} parent=1 // pred_check_branch
      %472 = sbr.rel (0) target = $region109
    $region108: #{tpu_custom_call.1} parent=1 // pred_region
      %s474 = ssub.s32 16, 16
      %475 = vsyncadd [#allocation40], %s474
      %s477 = sshll.u32 [#allocation41], 4
      %s478 = int_to_ptr.vmem [resolvable:$true] %s477
      %480 = dma.hbm_to_vmem [thread:$0]  %s53, 16, %s478, [#allocation40]
    $region109: #{tpu_custom_call.1} parent=1 // pred_fallthru
      _
    // Predicated region
    $region110: #{tpu_custom_call.1} parent=1 // pred_check
      _
    $region111: #{tpu_custom_call.1} parent=1 // pred_check_branch
      %482 = sbr.rel (0) target = $region113
    $region112: #{tpu_custom_call.1} parent=1 // pred_region
      %s484 = ssub.s32 4096, 4096
      %485 = vsyncadd [#allocation43], %s484
      %s486 = sshll.u32 [#allocation42], 4
      %s487 = int_to_ptr.vmem [resolvable:$true] %s486
      %492 = dma.hbm_to_vmem [thread:$0]  %s55, 4096, %s487, [#allocation43], 256, 256, 16
    $region113: #{tpu_custom_call.1} parent=1 // pred_fallthru
      _
    // Predicated region
    $region114: #{tpu_custom_call.1} parent=1 // pred_check
      _
    $region115: #{tpu_custom_call.1} parent=1 // pred_check_branch
      %494 = sbr.rel (0) target = $region117
    $region116: #{tpu_custom_call.1} parent=1 // pred_region
      %s496 = ssub.s32 32, 32
      %497 = vsyncadd [#allocation43], %s496
      %s499 = sshll.u32 [#allocation44], 4
      %s500 = int_to_ptr.vmem [resolvable:$true] %s499
      %502 = dma.hbm_to_vmem [thread:$0]  %s57, 32, %s500, [#allocation43]
    $region117: #{tpu_custom_call.1} parent=1 // pred_fallthru
      _
    // Predicated region
    $region118: #{tpu_custom_call.1} parent=1 // pred_check
      _
    $region119: #{tpu_custom_call.1} parent=1 // pred_check_branch
      %504 = sbr.rel (0) target = $region121
    $region120: #{tpu_custom_call.1} parent=1 // pred_region
      %s506 = ssub.s32 16, 16
      %507 = vsyncadd [#allocation46], %s506
      %s509 = sshll.u32 [#allocation45], 4
      %s510 = int_to_ptr.vmem [resolvable:$true] %s509
      %512 = dma.hbm_to_vmem [thread:$0]  %s59, 16, %s510, [#allocation46]
    $region121: #{tpu_custom_call.1} parent=1 // pred_fallthru
      _
    // Predicated region
    $region122: #{tpu_custom_call.1} parent=1 // pred_check
      _
    $region123: #{tpu_custom_call.1} parent=1 // pred_check_branch
      %514 = sbr.rel (0) target = $region125
    $region124: #{tpu_custom_call.1} parent=1 // pred_region
      %s516 = ssub.s32 16, 16
      %517 = vsyncadd [#allocation46], %s516
      %s519 = sshll.u32 [#allocation47], 4
      %s520 = int_to_ptr.vmem [resolvable:$true] %s519
      %522 = dma.hbm_to_vmem [thread:$0]  %s61, 16, %s520, [#allocation46]
    $region125: #{tpu_custom_call.1} parent=1 // pred_fallthru
      _
    // Predicated region
    $region126: #{tpu_custom_call.1} parent=1 // pred_check
      _
    $region127: #{tpu_custom_call.1} parent=1 // pred_check_branch
      %524 = sbr.rel (0) target = $region129
    $region128: #{tpu_custom_call.1} parent=1 // pred_region
      %s526 = ssub.s32 256, 256
      %527 = vsyncadd [#allocation49], %s526
      %s528 = sshll.u32 [#allocation48], 4
      %s529 = int_to_ptr.vmem [resolvable:$true] %s528
      %534 = dma.hbm_to_vmem [thread:$0]  %s63, 256, %s529, [#allocation49], 128, 128, 8
    $region129: #{tpu_custom_call.1} parent=1 // pred_fallthru
      _
    // Predicated region
    $region130: #{tpu_custom_call.1} parent=1 // pred_check
      _
    $region131: #{tpu_custom_call.1} parent=1 // pred_check_branch
      %536 = sbr.rel (0) target = $region133
    $region132: #{tpu_custom_call.1} parent=1 // pred_region
      %s538 = ssub.s32 2048, 2048
      %539 = vsyncadd [#allocation49], %s538
      %s540 = sshll.u32 [#allocation50], 4
      %s541 = int_to_ptr.vmem [resolvable:$true] %s540
      %546 = dma.hbm_to_vmem [thread:$0]  %s65, 2048, %s541, [#allocation49], 128, 128, 8
    $region133: #{tpu_custom_call.1} parent=1 // pred_fallthru
      _
    // Predicated region
    $region134: #{tpu_custom_call.1} parent=1 // pred_check
      _
    $region135: #{tpu_custom_call.1} parent=1 // pred_check_branch
      %548 = sbr.rel (0) target = $region137
    $region136: #{tpu_custom_call.1} parent=1 // pred_region
      %s550 = ssub.s32 16, 16
      %551 = vsyncadd [#allocation52], %s550
      %s553 = sshll.u32 [#allocation51], 4
      %s554 = int_to_ptr.vmem [resolvable:$true] %s553
      %556 = dma.hbm_to_vmem [thread:$0]  %s67, 16, %s554, [#allocation52]
    $region137: #{tpu_custom_call.1} parent=1 // pred_fallthru
      _
    // Predicated region
    $region138: #{tpu_custom_call.1} parent=1 // pred_check
      _
    $region139: #{tpu_custom_call.1} parent=1 // pred_check_branch
      %558 = sbr.rel (0) target = $region141
    $region140: #{tpu_custom_call.1} parent=1 // pred_region
      %s560 = ssub.s32 2048, 2048
      %561 = vsyncadd [#allocation52], %s560
      %s562 = sshll.u32 [#allocation53], 4
      %s563 = int_to_ptr.vmem [resolvable:$true] %s562
      %568 = dma.hbm_to_vmem [thread:$0]  %s69, 2048, %s563, [#allocation52], 128, 128, 8
    $region141: #{tpu_custom_call.1} parent=1 // pred_fallthru
      _
    // Predicated region
    $region142: #{tpu_custom_call.1} parent=1 // pred_check
      _
    $region143: #{tpu_custom_call.1} parent=1 // pred_check_branch
      %570 = sbr.rel (0) target = $region145
    $region144: #{tpu_custom_call.1} parent=1 // pred_region
      %s572 = ssub.s32 16, 16
      %573 = vsyncadd [#allocation55], %s572
      %s575 = sshll.u32 [#allocation54], 4
      %s576 = int_to_ptr.vmem [resolvable:$true] %s575
      %578 = dma.hbm_to_vmem [thread:$0]  %s71, 16, %s576, [#allocation55]
    $region145: #{tpu_custom_call.1} parent=1 // pred_fallthru
      _
    // Predicated region
    $region146: #{tpu_custom_call.1} parent=1 // pred_check
      _
    $region147: #{tpu_custom_call.1} parent=1 // pred_check_branch
      %580 = sbr.rel (0) target = $region149
    $region148: #{tpu_custom_call.1} parent=1 // pred_region
      %s582 = ssub.s32 4096, 4096
      %583 = vsyncadd [#allocation55], %s582
      %s584 = sshll.u32 [#allocation56], 4
      %s585 = int_to_ptr.vmem [resolvable:$true] %s584
      %590 = dma.hbm_to_vmem [thread:$0]  %s73, 4096, %s585, [#allocation55], 256, 256, 16
    $region149: #{tpu_custom_call.1} parent=1 // pred_fallthru
      _
    // Predicated region
    $region150: #{tpu_custom_call.1} parent=1 // pred_check
      _
    $region151: #{tpu_custom_call.1} parent=1 // pred_check_branch
      %592 = sbr.rel (0) target = $region153
    $region152: #{tpu_custom_call.1} parent=1 // pred_region
      %s594 = ssub.s32 32, 32
      %595 = vsyncadd [#allocation58], %s594
      %s597 = sshll.u32 [#allocation57], 4
      %s598 = int_to_ptr.vmem [resolvable:$true] %s597
      %600 = dma.hbm_to_vmem [thread:$0]  %s75, 32, %s598, [#allocation58]
    $region153: #{tpu_custom_call.1} parent=1 // pred_fallthru
      _
    // Predicated region
    $region154: #{tpu_custom_call.1} parent=1 // pred_check
      _
    $region155: #{tpu_custom_call.1} parent=1 // pred_check_branch
      %602 = sbr.rel (0) target = $region157
    $region156: #{tpu_custom_call.1} parent=1 // pred_region
      %s604 = ssub.s32 256, 256
      %605 = vsyncadd [#allocation58], %s604
      %s606 = sshll.u32 [#allocation59], 4
      %s607 = int_to_ptr.vmem [resolvable:$true] %s606
      %612 = dma.hbm_to_vmem [thread:$0]  %s77, 256, %s607, [#allocation58], 128, 128, 8
    $region157: #{tpu_custom_call.1} parent=1 // pred_fallthru
      _
    // Predicated region
    $region158: #{tpu_custom_call.1} parent=1 // pred_check
      _
    $region159: #{tpu_custom_call.1} parent=1 // pred_check_branch
      %614 = sbr.rel (0) target = $region161
    $region160: #{tpu_custom_call.1} parent=1 // pred_region
      %s616 = ssub.s32 2048, 2048
      %617 = vsyncadd [#allocation61], %s616
      %s618 = sshll.u32 [#allocation60], 4
      %s619 = int_to_ptr.vmem [resolvable:$true] %s618
      %624 = dma.hbm_to_vmem [thread:$0]  %s79, 2048, %s619, [#allocation61], 128, 128, 8
    $region161: #{tpu_custom_call.1} parent=1 // pred_fallthru
      _
    // Predicated region
    $region162: #{tpu_custom_call.1} parent=1 // pred_check
      _
    $region163: #{tpu_custom_call.1} parent=1 // pred_check_branch
      %626 = sbr.rel (0) target = $region165
    $region164: #{tpu_custom_call.1} parent=1 // pred_region
      %s628 = ssub.s32 16, 16
      %629 = vsyncadd [#allocation61], %s628
      %s631 = sshll.u32 [#allocation62], 4
      %s632 = int_to_ptr.vmem [resolvable:$true] %s631
      %634 = dma.hbm_to_vmem [thread:$0]  %s81, 16, %s632, [#allocation61]
    $region165: #{tpu_custom_call.1} parent=1 // pred_fallthru
      _
    // Predicated region
    $region166: #{tpu_custom_call.1} parent=1 // pred_check
      _
    $region167: #{tpu_custom_call.1} parent=1 // pred_check_branch
      %636 = sbr.rel (0) target = $region169
    $region168: #{tpu_custom_call.1} parent=1 // pred_region
      %s638 = ssub.s32 2048, 2048
      %639 = vsyncadd [#allocation64], %s638
      %s640 = sshll.u32 [#allocation63], 4
      %s641 = int_to_ptr.vmem [resolvable:$true] %s640
      %646 = dma.hbm_to_vmem [thread:$0]  %s83, 2048, %s641, [#allocation64], 128, 128, 8
    $region169: #{tpu_custom_call.1} parent=1 // pred_fallthru
      _
    // Predicated region
    $region170: #{tpu_custom_call.1} parent=1 // pred_check
      _
    $region171: #{tpu_custom_call.1} parent=1 // pred_check_branch
      %648 = sbr.rel (0) target = $region173
    $region172: #{tpu_custom_call.1} parent=1 // pred_region
      %s650 = ssub.s32 16, 16
      %651 = vsyncadd [#allocation64], %s650
      %s653 = sshll.u32 [#allocation65], 4
      %s654 = int_to_ptr.vmem [resolvable:$true] %s653
      %656 = dma.hbm_to_vmem [thread:$0]  %s85, 16, %s654, [#allocation64]
    $region173: #{tpu_custom_call.1} parent=1 // pred_fallthru
      _
    // Predicated region
    $region174: #{tpu_custom_call.1} parent=1 // pred_check
      _
    $region175: #{tpu_custom_call.1} parent=1 // pred_check_branch
      %658 = sbr.rel (0) target = $region177
    $region176: #{tpu_custom_call.1} parent=1 // pred_region
      %s660 = ssub.s32 4096, 4096
      %661 = vsyncadd [#allocation67], %s660
      %s662 = sshll.u32 [#allocation66], 4
      %s663 = int_to_ptr.vmem [resolvable:$true] %s662
      %668 = dma.hbm_to_vmem [thread:$0]  %s87, 4096, %s663, [#allocation67], 256, 256, 16
    $region177: #{tpu_custom_call.1} parent=1 // pred_fallthru
      _
    // Predicated region
    $region178: #{tpu_custom_call.1} parent=1 // pred_check
      _
    $region179: #{tpu_custom_call.1} parent=1 // pred_check_branch
      %670 = sbr.rel (0) target = $region181
    $region180: #{tpu_custom_call.1} parent=1 // pred_region
      %s672 = ssub.s32 32, 32
      %673 = vsyncadd [#allocation67], %s672
      %s675 = sshll.u32 [#allocation68], 4
      %s676 = int_to_ptr.vmem [resolvable:$true] %s675
      %678 = dma.hbm_to_vmem [thread:$0]  %s89, 32, %s676, [#allocation67]
    $region181: #{tpu_custom_call.1} parent=1 // pred_fallthru
      _
    // Predicated region
    $region182: #{tpu_custom_call.1} parent=1 // pred_check
      _
    $region183: #{tpu_custom_call.1} parent=1 // pred_check_branch
      %680 = sbr.rel (0) target = $region185
    $region184: #{tpu_custom_call.1} parent=1 // pred_region
      %s682 = ssub.s32 16, 16
      %683 = vsyncadd [#allocation70], %s682
      %s685 = sshll.u32 [#allocation69], 4
      %s686 = int_to_ptr.vmem [resolvable:$true] %s685
      %688 = dma.hbm_to_vmem [thread:$0]  %s91, 16, %s686, [#allocation70]
    $region185: #{tpu_custom_call.1} parent=1 // pred_fallthru
      _
    // Predicated region
    $region186: #{tpu_custom_call.1} parent=1 // pred_check
      _
    $region187: #{tpu_custom_call.1} parent=1 // pred_check_branch
      %690 = sbr.rel (0) target = $region189
    $region188: #{tpu_custom_call.1} parent=1 // pred_region
      %s692 = ssub.s32 16, 16
      %693 = vsyncadd [#allocation70], %s692
      %s695 = sshll.u32 [#allocation71], 4
      %s696 = int_to_ptr.vmem [resolvable:$true] %s695
      %698 = dma.hbm_to_vmem [thread:$0]  %s93, 16, %s696, [#allocation70]
    $region189: #{tpu_custom_call.1} parent=1 // pred_fallthru
      _
    // Predicated region
    $region190: #{tpu_custom_call.1} parent=1 // pred_check
      _
    $region191: #{tpu_custom_call.1} parent=1 // pred_check_branch
      %700 = sbr.rel (0) target = $region193
    $region192: #{tpu_custom_call.1} parent=1 // pred_region
      %s702 = ssub.s32 256, 256
      %703 = vsyncadd [#allocation73], %s702
      %s704 = sshll.u32 [#allocation72], 4
      %s705 = int_to_ptr.vmem [resolvable:$true] %s704
      %710 = dma.hbm_to_vmem [thread:$0]  %s95, 256, %s705, [#allocation73], 128, 128, 8
    $region193: #{tpu_custom_call.1} parent=1 // pred_fallthru
      _
    // Predicated region
    $region194: #{tpu_custom_call.1} parent=1 // pred_check
      _
    $region195: #{tpu_custom_call.1} parent=1 // pred_check_branch
      %712 = sbr.rel (0) target = $region197
    $region196: #{tpu_custom_call.1} parent=1 // pred_region
      %s714 = ssub.s32 2048, 2048
      %715 = vsyncadd [#allocation73], %s714
      %s716 = sshll.u32 [#allocation74], 4
      %s717 = int_to_ptr.vmem [resolvable:$true] %s716
      %722 = dma.hbm_to_vmem [thread:$0]  %s97, 2048, %s717, [#allocation73], 128, 128, 8
    $region197: #{tpu_custom_call.1} parent=1 // pred_fallthru
      _
    // Predicated region
    $region198: #{tpu_custom_call.1} parent=1 // pred_check
      _
    $region199: #{tpu_custom_call.1} parent=1 // pred_check_branch
      %724 = sbr.rel (0) target = $region201
    $region200: #{tpu_custom_call.1} parent=1 // pred_region
      %s726 = ssub.s32 16, 16
      %727 = vsyncadd [#allocation76], %s726
      %s729 = sshll.u32 [#allocation75], 4
      %s730 = int_to_ptr.vmem [resolvable:$true] %s729
      %732 = dma.hbm_to_vmem [thread:$0]  %s99, 16, %s730, [#allocation76]
    $region201: #{tpu_custom_call.1} parent=1 // pred_fallthru
      _
    // Predicated region
    $region202: #{tpu_custom_call.1} parent=1 // pred_check
      _
    $region203: #{tpu_custom_call.1} parent=1 // pred_check_branch
      %734 = sbr.rel (0) target = $region205
    $region204: #{tpu_custom_call.1} parent=1 // pred_region
      %s736 = ssub.s32 2048, 2048
      %737 = vsyncadd [#allocation76], %s736
      %s738 = sshll.u32 [#allocation77], 4
      %s739 = int_to_ptr.vmem [resolvable:$true] %s738
      %744 = dma.hbm_to_vmem [thread:$0]  %s101, 2048, %s739, [#allocation76], 128, 128, 8
    $region205: #{tpu_custom_call.1} parent=1 // pred_fallthru
      _
    // Predicated region
    $region206: #{tpu_custom_call.1} parent=1 // pred_check
      _
    $region207: #{tpu_custom_call.1} parent=1 // pred_check_branch
      %746 = sbr.rel (0) target = $region209
    $region208: #{tpu_custom_call.1} parent=1 // pred_region
      %s748 = ssub.s32 16, 16
      %749 = vsyncadd [#allocation79], %s748
      %s751 = sshll.u32 [#allocation78], 4
      %s752 = int_to_ptr.vmem [resolvable:$true] %s751
      %754 = dma.hbm_to_vmem [thread:$0]  %s103, 16, %s752, [#allocation79]
    $region209: #{tpu_custom_call.1} parent=1 // pred_fallthru
      _
    // Predicated region
    $region210: #{tpu_custom_call.1} parent=1 // pred_check
      _
    $region211: #{tpu_custom_call.1} parent=1 // pred_check_branch
      %756 = sbr.rel (0) target = $region213
    $region212: #{tpu_custom_call.1} parent=1 // pred_region
      %s758 = ssub.s32 4096, 4096
      %759 = vsyncadd [#allocation79], %s758
      %s760 = sshll.u32 [#allocation80], 4
      %s761 = int_to_ptr.vmem [resolvable:$true] %s760
      %766 = dma.hbm_to_vmem [thread:$0]  %s105, 4096, %s761, [#allocation79], 256, 256, 16
    $region213: #{tpu_custom_call.1} parent=1 // pred_fallthru
      _
    // Predicated region
    $region214: #{tpu_custom_call.1} parent=1 // pred_check
      _
    $region215: #{tpu_custom_call.1} parent=1 // pred_check_branch
      %768 = sbr.rel (0) target = $region217
    $region216: #{tpu_custom_call.1} parent=1 // pred_region
      %s770 = ssub.s32 32, 32
      %771 = vsyncadd [#allocation82], %s770
      %s773 = sshll.u32 [#allocation81], 4
      %s774 = int_to_ptr.vmem [resolvable:$true] %s773
      %776 = dma.hbm_to_vmem [thread:$0]  %s107, 32, %s774, [#allocation82]
    $region217: #{tpu_custom_call.1} parent=1 // pred_fallthru
      _
    // Predicated region
    $region218: #{tpu_custom_call.1} parent=1 // pred_check
      _
    $region219: #{tpu_custom_call.1} parent=1 // pred_check_branch
      %778 = sbr.rel (0) target = $region221
    $region220: #{tpu_custom_call.1} parent=1 // pred_region
      %s780 = ssub.s32 256, 256
      %781 = vsyncadd [#allocation82], %s780
      %s782 = sshll.u32 [#allocation83], 4
      %s783 = int_to_ptr.vmem [resolvable:$true] %s782
      %788 = dma.hbm_to_vmem [thread:$0]  %s109, 256, %s783, [#allocation82], 128, 128, 8
    $region221: #{tpu_custom_call.1} parent=1 // pred_fallthru
      _
    // Predicated region
    $region222: #{tpu_custom_call.1} parent=1 // pred_check
      _
    $region223: #{tpu_custom_call.1} parent=1 // pred_check_branch
      %790 = sbr.rel (0) target = $region225
    $region224: #{tpu_custom_call.1} parent=1 // pred_region
      %s792 = ssub.s32 2048, 2048
      %793 = vsyncadd [#allocation85], %s792
      %s794 = sshll.u32 [#allocation84], 4
      %s795 = int_to_ptr.vmem [resolvable:$true] %s794
      %800 = dma.hbm_to_vmem [thread:$0]  %s111, 2048, %s795, [#allocation85], 128, 128, 8
    $region225: #{tpu_custom_call.1} parent=1 // pred_fallthru
      _
    // Predicated region
    $region226: #{tpu_custom_call.1} parent=1 // pred_check
      _
    $region227: #{tpu_custom_call.1} parent=1 // pred_check_branch
      %802 = sbr.rel (0) target = $region229
    $region228: #{tpu_custom_call.1} parent=1 // pred_region
      %s804 = ssub.s32 16, 16
      %805 = vsyncadd [#allocation85], %s804
      %s807 = sshll.u32 [#allocation86], 4
      %s808 = int_to_ptr.vmem [resolvable:$true] %s807
      %810 = dma.hbm_to_vmem [thread:$0]  %s113, 16, %s808, [#allocation85]
    $region229: #{tpu_custom_call.1} parent=1 // pred_fallthru
      _
    // Predicated region
    $region230: #{tpu_custom_call.1} parent=1 // pred_check
      _
    $region231: #{tpu_custom_call.1} parent=1 // pred_check_branch
      %812 = sbr.rel (0) target = $region233
    $region232: #{tpu_custom_call.1} parent=1 // pred_region
      %s814 = ssub.s32 2048, 2048
      %815 = vsyncadd [#allocation88], %s814
      %s816 = sshll.u32 [#allocation87], 4
      %s817 = int_to_ptr.vmem [resolvable:$true] %s816
      %822 = dma.hbm_to_vmem [thread:$0]  %s115, 2048, %s817, [#allocation88], 128, 128, 8
    $region233: #{tpu_custom_call.1} parent=1 // pred_fallthru
      _
    // Predicated region
    $region234: #{tpu_custom_call.1} parent=1 // pred_check
      _
    $region235: #{tpu_custom_call.1} parent=1 // pred_check_branch
      %824 = sbr.rel (0) target = $region237
    $region236: #{tpu_custom_call.1} parent=1 // pred_region
      %s826 = ssub.s32 16, 16
      %827 = vsyncadd [#allocation88], %s826
      %s829 = sshll.u32 [#allocation89], 4
      %s830 = int_to_ptr.vmem [resolvable:$true] %s829
      %832 = dma.hbm_to_vmem [thread:$0]  %s117, 16, %s830, [#allocation88]
    $region237: #{tpu_custom_call.1} parent=1 // pred_fallthru
      _
    // Predicated region
    $region238: #{tpu_custom_call.1} parent=1 // pred_check
      _
    $region239: #{tpu_custom_call.1} parent=1 // pred_check_branch
      %834 = sbr.rel (0) target = $region241
    $region240: #{tpu_custom_call.1} parent=1 // pred_region
      %s836 = ssub.s32 4096, 4096
      %837 = vsyncadd [#allocation91], %s836
      %s838 = sshll.u32 [#allocation90], 4
      %s839 = int_to_ptr.vmem [resolvable:$true] %s838
      %844 = dma.hbm_to_vmem [thread:$0]  %s119, 4096, %s839, [#allocation91], 256, 256, 16
    $region241: #{tpu_custom_call.1} parent=1 // pred_fallthru
      _
    // Predicated region
    $region242: #{tpu_custom_call.1} parent=1 // pred_check
      _
    $region243: #{tpu_custom_call.1} parent=1 // pred_check_branch
      %846 = sbr.rel (0) target = $region245
    $region244: #{tpu_custom_call.1} parent=1 // pred_region
      %s848 = ssub.s32 32, 32
      %849 = vsyncadd [#allocation91], %s848
      %s851 = sshll.u32 [#allocation92], 4
      %s852 = int_to_ptr.vmem [resolvable:$true] %s851
      %854 = dma.hbm_to_vmem [thread:$0]  %s121, 32, %s852, [#allocation91]
    $region245: #{tpu_custom_call.1} parent=1 // pred_fallthru
      _
    // Predicated region
    $region246: #{tpu_custom_call.1} parent=1 // pred_check
      _
    $region247: #{tpu_custom_call.1} parent=1 // pred_check_branch
      %856 = sbr.rel (0) target = $region249
    $region248: #{tpu_custom_call.1} parent=1 // pred_region
      %s858 = ssub.s32 16, 16
      %859 = vsyncadd [#allocation94], %s858
      %s861 = sshll.u32 [#allocation93], 4
      %s862 = int_to_ptr.vmem [resolvable:$true] %s861
      %864 = dma.hbm_to_vmem [thread:$0]  %s123, 16, %s862, [#allocation94]
    $region249: #{tpu_custom_call.1} parent=1 // pred_fallthru
      _
    // Predicated region
    $region250: #{tpu_custom_call.1} parent=1 // pred_check
      _
    $region251: #{tpu_custom_call.1} parent=1 // pred_check_branch
      %866 = sbr.rel (0) target = $region253
    $region252: #{tpu_custom_call.1} parent=1 // pred_region
      %s868 = ssub.s32 16, 16
      %869 = vsyncadd [#allocation94], %s868
      %s871 = sshll.u32 [#allocation95], 4
      %s872 = int_to_ptr.vmem [resolvable:$true] %s871
      %874 = dma.hbm_to_vmem [thread:$0]  %s125, 16, %s872, [#allocation94]
    $region253: #{tpu_custom_call.1} parent=1 // pred_fallthru
      _
    // Predicated region
    $region254: #{tpu_custom_call.1} parent=1 // pred_check
      _
    $region255: #{tpu_custom_call.1} parent=1 // pred_check_branch
      %876 = sbr.rel (0) target = $region257
    $region256: #{tpu_custom_call.1} parent=1 // pred_region
      %s878 = ssub.s32 256, 256
      %879 = vsyncadd [#allocation97], %s878
      %s880 = sshll.u32 [#allocation96], 4
      %s881 = int_to_ptr.vmem [resolvable:$true] %s880
      %886 = dma.hbm_to_vmem [thread:$0]  %s127, 256, %s881, [#allocation97], 128, 128, 8
    $region257: #{tpu_custom_call.1} parent=1 // pred_fallthru
      _
    // Predicated region
    $region258: #{tpu_custom_call.1} parent=1 // pred_check
      _
    $region259: #{tpu_custom_call.1} parent=1 // pred_check_branch
      %888 = sbr.rel (0) target = $region261
    $region260: #{tpu_custom_call.1} parent=1 // pred_region
      %s890 = ssub.s32 2048, 2048
      %891 = vsyncadd [#allocation97], %s890
      %s892 = sshll.u32 [#allocation98], 4
      %s893 = int_to_ptr.vmem [resolvable:$true] %s892
      %898 = dma.hbm_to_vmem [thread:$0]  %s129, 2048, %s893, [#allocation97], 128, 128, 8
    $region261: #{tpu_custom_call.1} parent=1 // pred_fallthru
      _
    // Predicated region
    $region262: #{tpu_custom_call.1} parent=1 // pred_check
      _
    $region263: #{tpu_custom_call.1} parent=1 // pred_check_branch
      %900 = sbr.rel (0) target = $region265
    $region264: #{tpu_custom_call.1} parent=1 // pred_region
      %s902 = ssub.s32 16, 16
      %903 = vsyncadd [#allocation100], %s902
      %s905 = sshll.u32 [#allocation99], 4
      %s906 = int_to_ptr.vmem [resolvable:$true] %s905
      %908 = dma.hbm_to_vmem [thread:$0]  %s131, 16, %s906, [#allocation100]
    $region265: #{tpu_custom_call.1} parent=1 // pred_fallthru
      _
    // Predicated region
    $region266: #{tpu_custom_call.1} parent=1 // pred_check
      _
    $region267: #{tpu_custom_call.1} parent=1 // pred_check_branch
      %910 = sbr.rel (0) target = $region269
    $region268: #{tpu_custom_call.1} parent=1 // pred_region
      %s912 = ssub.s32 2048, 2048
      %913 = vsyncadd [#allocation100], %s912
      %s914 = sshll.u32 [#allocation101], 4
      %s915 = int_to_ptr.vmem [resolvable:$true] %s914
      %920 = dma.hbm_to_vmem [thread:$0]  %s133, 2048, %s915, [#allocation100], 128, 128, 8
    $region269: #{tpu_custom_call.1} parent=1 // pred_fallthru
      _
    // Predicated region
    $region270: #{tpu_custom_call.1} parent=1 // pred_check
      _
    $region271: #{tpu_custom_call.1} parent=1 // pred_check_branch
      %922 = sbr.rel (0) target = $region273
    $region272: #{tpu_custom_call.1} parent=1 // pred_region
      %s924 = ssub.s32 16, 16
      %925 = vsyncadd [#allocation103], %s924
      %s927 = sshll.u32 [#allocation102], 4
      %s928 = int_to_ptr.vmem [resolvable:$true] %s927
      %930 = dma.hbm_to_vmem [thread:$0]  %s135, 16, %s928, [#allocation103]
    $region273: #{tpu_custom_call.1} parent=1 // pred_fallthru
      _
    // Predicated region
    $region274: #{tpu_custom_call.1} parent=1 // pred_check
      _
    $region275: #{tpu_custom_call.1} parent=1 // pred_check_branch
      %932 = sbr.rel (0) target = $region277
    $region276: #{tpu_custom_call.1} parent=1 // pred_region
      %s934 = ssub.s32 4096, 4096
      %935 = vsyncadd [#allocation103], %s934
      %s936 = sshll.u32 [#allocation104], 4
      %s937 = int_to_ptr.vmem [resolvable:$true] %s936
      %942 = dma.hbm_to_vmem [thread:$0]  %s137, 4096, %s937, [#allocation103], 256, 256, 16
    $region277: #{tpu_custom_call.1} parent=1 // pred_fallthru
      _
    // Predicated region
    $region278: #{tpu_custom_call.1} parent=1 // pred_check
      _
    $region279: #{tpu_custom_call.1} parent=1 // pred_check_branch
      %944 = sbr.rel (0) target = $region281
    $region280: #{tpu_custom_call.1} parent=1 // pred_region
      %s946 = ssub.s32 32, 32
      %947 = vsyncadd [#allocation106], %s946
      %s949 = sshll.u32 [#allocation105], 4
      %s950 = int_to_ptr.vmem [resolvable:$true] %s949
      %952 = dma.hbm_to_vmem [thread:$0]  %s139, 32, %s950, [#allocation106]
    $region281: #{tpu_custom_call.1} parent=1 // pred_fallthru
      _
    // Predicated region
    $region282: #{tpu_custom_call.1} parent=1 // pred_check
      _
    $region283: #{tpu_custom_call.1} parent=1 // pred_check_branch
      %954 = sbr.rel (0) target = $region285
    $region284: #{tpu_custom_call.1} parent=1 // pred_region
      %s956 = ssub.s32 256, 256
      %957 = vsyncadd [#allocation106], %s956
      %s958 = sshll.u32 [#allocation107], 4
      %s959 = int_to_ptr.vmem [resolvable:$true] %s958
      %964 = dma.hbm_to_vmem [thread:$0]  %s141, 256, %s959, [#allocation106], 128, 128, 8
    $region285: #{tpu_custom_call.1} parent=1 // pred_fallthru
      _
    // Predicated region
    $region286: #{tpu_custom_call.1} parent=1 // pred_check
      _
    $region287: #{tpu_custom_call.1} parent=1 // pred_check_branch
      %966 = sbr.rel (0) target = $region289
    $region288: #{tpu_custom_call.1} parent=1 // pred_region
      _
    $region289: #{tpu_custom_call.1} parent=1 // pred_fallthru
      _
    // Predicated region
    $region290: #{tpu_custom_call.1} parent=1 // pred_check
      _
    $region291: #{tpu_custom_call.1} parent=1 // pred_check_branch
      %968 = sbr.rel (0) target = $region293
    $region292: #{tpu_custom_call.1} parent=1 // pred_region
      %s970 = ssub.s32 16, 16
      %971 = vsyncadd [#allocation109], %s970
      %s973 = sshll.u32 [#allocation108], 4
      %s974 = int_to_ptr.vmem [resolvable:$true] %s973
      %976 = dma.hbm_to_vmem [thread:$0]  %s145, 16, %s974, [#allocation109]
    $region293: #{tpu_custom_call.1} parent=1 // pred_fallthru
      _
    // Predicated region
    $region294: #{tpu_custom_call.1} parent=1 // pred_check
      _
    $region295: #{tpu_custom_call.1} parent=1 // pred_check_branch
      %978 = sbr.rel (0) target = $region297
    $region296: #{tpu_custom_call.1} parent=1 // pred_region
      %s980 = ssub.s32 2048, 2048
      %981 = vsyncadd [#allocation109], %s980
      %s982 = sshll.u32 [#allocation110], 4
      %s983 = int_to_ptr.vmem [resolvable:$true] %s982
      %988 = dma.hbm_to_vmem [thread:$0]  %s147, 2048, %s983, [#allocation109], 128, 128, 8
    $region297: #{tpu_custom_call.1} parent=1 // pred_fallthru
      _
    // Predicated region
    $region298: #{tpu_custom_call.1} parent=1 // pred_check
      _
    $region299: #{tpu_custom_call.1} parent=1 // pred_check_branch
      %990 = sbr.rel (0) target = $region301
    $region300: #{tpu_custom_call.1} parent=1 // pred_region
      _
    $region301: #{tpu_custom_call.1} parent=1 // pred_fallthru
      _
    // Predicated region
    $region302: #{tpu_custom_call.1} parent=1 // pred_check
      _
    $region303: #{tpu_custom_call.1} parent=1 // pred_check_branch
      %992 = sbr.rel (0) target = $region305
    $region304: #{tpu_custom_call.1} parent=1 // pred_region
      %s994 = ssub.s32 4096, 4096
      %995 = vsyncadd [#allocation112], %s994
      %s996 = sshll.u32 [#allocation111], 4
      %s997 = int_to_ptr.vmem [resolvable:$true] %s996
      %1002 = dma.hbm_to_vmem [thread:$0]  %s151, 4096, %s997, [#allocation112], 256, 256, 16
    $region305: #{tpu_custom_call.1} parent=1 // pred_fallthru
      _
    // Predicated region
    $region306: #{tpu_custom_call.1} parent=1 // pred_check
      _
    $region307: #{tpu_custom_call.1} parent=1 // pred_check_branch
      %1004 = sbr.rel (0) target = $region309
    $region308: #{tpu_custom_call.1} parent=1 // pred_region
      _
    $region309: #{tpu_custom_call.1} parent=1 // pred_fallthru
      _
    // Predicated region
    $region310: #{tpu_custom_call.1} parent=1 // pred_check
      _
    $region311: #{tpu_custom_call.1} parent=1 // pred_check_branch
      %1006 = sbr.rel (0) target = $region313
    $region312: #{tpu_custom_call.1} parent=1 // pred_region
      %1007 = dma.done [#allocation4], 32
    $region313: #{tpu_custom_call.1} parent=1 // pred_fallthru
      _
    // Predicated region
    $region314: #{tpu_custom_call.1} parent=1 // pred_check
      _
    $region315: #{tpu_custom_call.1} parent=1 // pred_check_branch
      %1009 = sbr.rel (0) target = $region317
    $region316: #{tpu_custom_call.1} parent=1 // pred_region
      %1010 = dma.done [#allocation7], 32
    $region317: #{tpu_custom_call.1} parent=1 // pred_fallthru
      _
    // Predicated region
    $region318: #{tpu_custom_call.1} parent=1 // pred_check
      _
    $region319: #{tpu_custom_call.1} parent=1 // pred_check_branch
      %1012 = sbr.rel (0) target = $region321
    $region320: #{tpu_custom_call.1} parent=1 // pred_region
      %1013 = dma.done [#allocation7], 256
    $region321: #{tpu_custom_call.1} parent=1 // pred_fallthru
      _
    // Predicated region
    $region322: #{tpu_custom_call.1} parent=1 // pred_check
      _
    $region323: #{tpu_custom_call.1} parent=1 // pred_check_branch
      %1015 = sbr.rel (0) target = $region325
    $region324: #{tpu_custom_call.1} parent=1 // pred_region
      %1016 = dma.done [#allocation10], 256
    $region325: #{tpu_custom_call.1} parent=1 // pred_fallthru
      _
    // Predicated region
    $region326: #{tpu_custom_call.1} parent=1 // pred_check
      _
    $region327: #{tpu_custom_call.1} parent=1 // pred_check_branch
      %1018 = sbr.rel (0) target = $region329
    $region328: #{tpu_custom_call.1} parent=1 // pred_region
      %1019 = dma.done [#allocation10], 16
    $region329: #{tpu_custom_call.1} parent=1 // pred_fallthru
      _
    // Predicated region
    $region330: #{tpu_custom_call.1} parent=1 // pred_check
      _
    $region331: #{tpu_custom_call.1} parent=1 // pred_check_branch
      %1021 = sbr.rel (0) target = $region333
    $region332: #{tpu_custom_call.1} parent=1 // pred_region
      %1022 = dma.done [#allocation13], 256
    $region333: #{tpu_custom_call.1} parent=1 // pred_fallthru
      _
    // Predicated region
    $region334: #{tpu_custom_call.1} parent=1 // pred_check
      _
    $region335: #{tpu_custom_call.1} parent=1 // pred_check_branch
      %1024 = sbr.rel (0) target = $region337
    $region336: #{tpu_custom_call.1} parent=1 // pred_region
      %1025 = dma.done [#allocation13], 16
    $region337: #{tpu_custom_call.1} parent=1 // pred_fallthru
      _
    // Predicated region
    $region338: #{tpu_custom_call.1} parent=1 // pred_check
      _
    $region339: #{tpu_custom_call.1} parent=1 // pred_check_branch
      %1027 = sbr.rel (0) target = $region341
    $region340: #{tpu_custom_call.1} parent=1 // pred_region
      %1028 = dma.done [#allocation16], 256
    $region341: #{tpu_custom_call.1} parent=1 // pred_fallthru
      _
    // Predicated region
    $region342: #{tpu_custom_call.1} parent=1 // pred_check
      _
    $region343: #{tpu_custom_call.1} parent=1 // pred_check_branch
      %1030 = sbr.rel (0) target = $region345
    $region344: #{tpu_custom_call.1} parent=1 // pred_region
      %1031 = dma.done [#allocation16], 16
    $region345: #{tpu_custom_call.1} parent=1 // pred_fallthru
      _
    // Predicated region
    $region346: #{tpu_custom_call.1} parent=1 // pred_check
      _
    $region347: #{tpu_custom_call.1} parent=1 // pred_check_branch
      %1033 = sbr.rel (0) target = $region349
    $region348: #{tpu_custom_call.1} parent=1 // pred_region
      %1034 = dma.done [#allocation19], 2048
    $region349: #{tpu_custom_call.1} parent=1 // pred_fallthru
      _
    // Predicated region
    $region350: #{tpu_custom_call.1} parent=1 // pred_check
      _
    $region351: #{tpu_custom_call.1} parent=1 // pred_check_branch
      %1036 = sbr.rel (0) target = $region353
    $region352: #{tpu_custom_call.1} parent=1 // pred_region
      %1037 = dma.done [#allocation19], 128
    $region353: #{tpu_custom_call.1} parent=1 // pred_fallthru
      _
    // Predicated region
    $region354: #{tpu_custom_call.1} parent=1 // pred_check
      _
    $region355: #{tpu_custom_call.1} parent=1 // pred_check_branch
      %1039 = sbr.rel (0) target = $region357
    $region356: #{tpu_custom_call.1} parent=1 // pred_region
      %1040 = dma.done [#allocation22], 16
    $region357: #{tpu_custom_call.1} parent=1 // pred_fallthru
      _
    // Predicated region
    $region358: #{tpu_custom_call.1} parent=1 // pred_check
      _
    $region359: #{tpu_custom_call.1} parent=1 // pred_check_branch
      %1042 = sbr.rel (0) target = $region361
    $region360: #{tpu_custom_call.1} parent=1 // pred_region
      %1043 = dma.done [#allocation22], 16
    $region361: #{tpu_custom_call.1} parent=1 // pred_fallthru
      _
    // Predicated region
    $region362: #{tpu_custom_call.1} parent=1 // pred_check
      _
    $region363: #{tpu_custom_call.1} parent=1 // pred_check_branch
      %1045 = sbr.rel (0) target = $region365
    $region364: #{tpu_custom_call.1} parent=1 // pred_region
      %1046 = dma.done [#allocation25], 256
    $region365: #{tpu_custom_call.1} parent=1 // pred_fallthru
      _
    // Predicated region
    $region366: #{tpu_custom_call.1} parent=1 // pred_check
      _
    $region367: #{tpu_custom_call.1} parent=1 // pred_check_branch
      %1048 = sbr.rel (0) target = $region369
    $region368: #{tpu_custom_call.1} parent=1 // pred_region
      %1049 = dma.done [#allocation25], 2048
    $region369: #{tpu_custom_call.1} parent=1 // pred_fallthru
      _
    // Predicated region
    $region370: #{tpu_custom_call.1} parent=1 // pred_check
      _
    $region371: #{tpu_custom_call.1} parent=1 // pred_check_branch
      %1051 = sbr.rel (0) target = $region373
    $region372: #{tpu_custom_call.1} parent=1 // pred_region
      %1052 = dma.done [#allocation28], 16
    $region373: #{tpu_custom_call.1} parent=1 // pred_fallthru
      _
    // Predicated region
    $region374: #{tpu_custom_call.1} parent=1 // pred_check
      _
    $region375: #{tpu_custom_call.1} parent=1 // pred_check_branch
      %1054 = sbr.rel (0) target = $region377
    $region376: #{tpu_custom_call.1} parent=1 // pred_region
      %1055 = dma.done [#allocation28], 2048
    $region377: #{tpu_custom_call.1} parent=1 // pred_fallthru
      _
    // Predicated region
    $region378: #{tpu_custom_call.1} parent=1 // pred_check
      _
    $region379: #{tpu_custom_call.1} parent=1 // pred_check_branch
      %1057 = sbr.rel (0) target = $region381
    $region380: #{tpu_custom_call.1} parent=1 // pred_region
      %1058 = dma.done [#allocation31], 16
    $region381: #{tpu_custom_call.1} parent=1 // pred_fallthru
      _
    // Predicated region
    $region382: #{tpu_custom_call.1} parent=1 // pred_check
      _
    $region383: #{tpu_custom_call.1} parent=1 // pred_check_branch
      %1060 = sbr.rel (0) target = $region385
    $region384: #{tpu_custom_call.1} parent=1 // pred_region
      %1061 = dma.done [#allocation31], 4096
    $region385: #{tpu_custom_call.1} parent=1 // pred_fallthru
      _
    // Predicated region
    $region386: #{tpu_custom_call.1} parent=1 // pred_check
      _
    $region387: #{tpu_custom_call.1} parent=1 // pred_check_branch
      %1063 = sbr.rel (0) target = $region389
    $region388: #{tpu_custom_call.1} parent=1 // pred_region
      %1064 = dma.done [#allocation34], 32
    $region389: #{tpu_custom_call.1} parent=1 // pred_fallthru
      _
    // Predicated region
    $region390: #{tpu_custom_call.1} parent=1 // pred_check
      _
    $region391: #{tpu_custom_call.1} parent=1 // pred_check_branch
      %1066 = sbr.rel (0) target = $region393
    $region392: #{tpu_custom_call.1} parent=1 // pred_region
      %1067 = dma.done [#allocation34], 256
    $region393: #{tpu_custom_call.1} parent=1 // pred_fallthru
      _
    // Predicated region
    $region394: #{tpu_custom_call.1} parent=1 // pred_check
      _
    $region395: #{tpu_custom_call.1} parent=1 // pred_check_branch
      %1069 = sbr.rel (0) target = $region397
    $region396: #{tpu_custom_call.1} parent=1 // pred_region
      %1070 = dma.done [#allocation37], 2048
    $region397: #{tpu_custom_call.1} parent=1 // pred_fallthru
      _
    // Predicated region
    $region398: #{tpu_custom_call.1} parent=1 // pred_check
      _
    $region399: #{tpu_custom_call.1} parent=1 // pred_check_branch
      %1072 = sbr.rel (0) target = $region401
    $region400: #{tpu_custom_call.1} parent=1 // pred_region
      %1073 = dma.done [#allocation37], 16
    $region401: #{tpu_custom_call.1} parent=1 // pred_fallthru
      _
    // Predicated region
    $region402: #{tpu_custom_call.1} parent=1 // pred_check
      _
    $region403: #{tpu_custom_call.1} parent=1 // pred_check_branch
      %1075 = sbr.rel (0) target = $region405
    $region404: #{tpu_custom_call.1} parent=1 // pred_region
      %1076 = dma.done [#allocation40], 2048
    $region405: #{tpu_custom_call.1} parent=1 // pred_fallthru
      _
    // Predicated region
    $region406: #{tpu_custom_call.1} parent=1 // pred_check
      _
    $region407: #{tpu_custom_call.1} parent=1 // pred_check_branch
      %1078 = sbr.rel (0) target = $region409
    $region408: #{tpu_custom_call.1} parent=1 // pred_region
      %1079 = dma.done [#allocation40], 16
    $region409: #{tpu_custom_call.1} parent=1 // pred_fallthru
      _
    // Predicated region
    $region410: #{tpu_custom_call.1} parent=1 // pred_check
      _
    $region411: #{tpu_custom_call.1} parent=1 // pred_check_branch
      %1081 = sbr.rel (0) target = $region413
    $region412: #{tpu_custom_call.1} parent=1 // pred_region
      %1082 = dma.done [#allocation43], 4096
    $region413: #{tpu_custom_call.1} parent=1 // pred_fallthru
      _
    // Predicated region
    $region414: #{tpu_custom_call.1} parent=1 // pred_check
      _
    $region415: #{tpu_custom_call.1} parent=1 // pred_check_branch
      %1084 = sbr.rel (0) target = $region417
    $region416: #{tpu_custom_call.1} parent=1 // pred_region
      %1085 = dma.done [#allocation43], 32
    $region417: #{tpu_custom_call.1} parent=1 // pred_fallthru
      _
    // Predicated region
    $region418: #{tpu_custom_call.1} parent=1 // pred_check
      _
    $region419: #{tpu_custom_call.1} parent=1 // pred_check_branch
      %1087 = sbr.rel (0) target = $region421
    $region420: #{tpu_custom_call.1} parent=1 // pred_region
      %1088 = dma.done [#allocation46], 16
    $region421: #{tpu_custom_call.1} parent=1 // pred_fallthru
      _
    // Predicated region
    $region422: #{tpu_custom_call.1} parent=1 // pred_check
      _
    $region423: #{tpu_custom_call.1} parent=1 // pred_check_branch
      %1090 = sbr.rel (0) target = $region425
    $region424: #{tpu_custom_call.1} parent=1 // pred_region
      %1091 = dma.done [#allocation46], 16
    $region425: #{tpu_custom_call.1} parent=1 // pred_fallthru
      _
    // Predicated region
    $region426: #{tpu_custom_call.1} parent=1 // pred_check
      _
    $region427: #{tpu_custom_call.1} parent=1 // pred_check_branch
      %1093 = sbr.rel (0) target = $region429
    $region428: #{tpu_custom_call.1} parent=1 // pred_region
      %1094 = dma.done [#allocation49], 256
    $region429: #{tpu_custom_call.1} parent=1 // pred_fallthru
      _
    // Predicated region
    $region430: #{tpu_custom_call.1} parent=1 // pred_check
      _
    $region431: #{tpu_custom_call.1} parent=1 // pred_check_branch
      %1096 = sbr.rel (0) target = $region433
    $region432: #{tpu_custom_call.1} parent=1 // pred_region
      %1097 = dma.done [#allocation49], 2048
    $region433: #{tpu_custom_call.1} parent=1 // pred_fallthru
      _
    // Predicated region
    $region434: #{tpu_custom_call.1} parent=1 // pred_check
      _
    $region435: #{tpu_custom_call.1} parent=1 // pred_check_branch
      %1099 = sbr.rel (0) target = $region437
    $region436: #{tpu_custom_call.1} parent=1 // pred_region
      %1100 = dma.done [#allocation52], 16
    $region437: #{tpu_custom_call.1} parent=1 // pred_fallthru
      _
    // Predicated region
    $region438: #{tpu_custom_call.1} parent=1 // pred_check
      _
    $region439: #{tpu_custom_call.1} parent=1 // pred_check_branch
      %1102 = sbr.rel (0) target = $region441
    $region440: #{tpu_custom_call.1} parent=1 // pred_region
      %1103 = dma.done [#allocation52], 2048
    $region441: #{tpu_custom_call.1} parent=1 // pred_fallthru
      _
    // Predicated region
    $region442: #{tpu_custom_call.1} parent=1 // pred_check
      _
    $region443: #{tpu_custom_call.1} parent=1 // pred_check_branch
      %1105 = sbr.rel (0) target = $region445
    $region444: #{tpu_custom_call.1} parent=1 // pred_region
      %1106 = dma.done [#allocation55], 16
    $region445: #{tpu_custom_call.1} parent=1 // pred_fallthru
      _
    // Predicated region
    $region446: #{tpu_custom_call.1} parent=1 // pred_check
      _
    $region447: #{tpu_custom_call.1} parent=1 // pred_check_branch
      %1108 = sbr.rel (0) target = $region449
    $region448: #{tpu_custom_call.1} parent=1 // pred_region
      %1109 = dma.done [#allocation55], 4096
    $region449: #{tpu_custom_call.1} parent=1 // pred_fallthru
      _
    // Predicated region
    $region450: #{tpu_custom_call.1} parent=1 // pred_check
      _
    $region451: #{tpu_custom_call.1} parent=1 // pred_check_branch
      %1111 = sbr.rel (0) target = $region453
    $region452: #{tpu_custom_call.1} parent=1 // pred_region
      %1112 = dma.done [#allocation58], 32
    $region453: #{tpu_custom_call.1} parent=1 // pred_fallthru
      _
    // Predicated region
    $region454: #{tpu_custom_call.1} parent=1 // pred_check
      _
    $region455: #{tpu_custom_call.1} parent=1 // pred_check_branch
      %1114 = sbr.rel (0) target = $region457
    $region456: #{tpu_custom_call.1} parent=1 // pred_region
      %1115 = dma.done [#allocation58], 256
    $region457: #{tpu_custom_call.1} parent=1 // pred_fallthru
      _
    // Predicated region
    $region458: #{tpu_custom_call.1} parent=1 // pred_check
      _
    $region459: #{tpu_custom_call.1} parent=1 // pred_check_branch
      %1117 = sbr.rel (0) target = $region461
    $region460: #{tpu_custom_call.1} parent=1 // pred_region
      %1118 = dma.done [#allocation61], 2048
    $region461: #{tpu_custom_call.1} parent=1 // pred_fallthru
      _
    // Predicated region
    $region462: #{tpu_custom_call.1} parent=1 // pred_check
      _
    $region463: #{tpu_custom_call.1} parent=1 // pred_check_branch
      %1120 = sbr.rel (0) target = $region465
    $region464: #{tpu_custom_call.1} parent=1 // pred_region
      %1121 = dma.done [#allocation61], 16
    $region465: #{tpu_custom_call.1} parent=1 // pred_fallthru
      _
    // Predicated region
    $region466: #{tpu_custom_call.1} parent=1 // pred_check
      _
    $region467: #{tpu_custom_call.1} parent=1 // pred_check_branch
      %1123 = sbr.rel (0) target = $region469
    $region468: #{tpu_custom_call.1} parent=1 // pred_region
      %1124 = dma.done [#allocation64], 2048
    $region469: #{tpu_custom_call.1} parent=1 // pred_fallthru
      _
    // Predicated region
    $region470: #{tpu_custom_call.1} parent=1 // pred_check
      _
    $region471: #{tpu_custom_call.1} parent=1 // pred_check_branch
      %1126 = sbr.rel (0) target = $region473
    $region472: #{tpu_custom_call.1} parent=1 // pred_region
      %1127 = dma.done [#allocation64], 16
    $region473: #{tpu_custom_call.1} parent=1 // pred_fallthru
      _
    // Predicated region
    $region474: #{tpu_custom_call.1} parent=1 // pred_check
      _
    $region475: #{tpu_custom_call.1} parent=1 // pred_check_branch
      %1129 = sbr.rel (0) target = $region477
    $region476: #{tpu_custom_call.1} parent=1 // pred_region
      %1130 = dma.done [#allocation67], 4096
    $region477: #{tpu_custom_call.1} parent=1 // pred_fallthru
      _
    // Predicated region
    $region478: #{tpu_custom_call.1} parent=1 // pred_check
      _
    $region479: #{tpu_custom_call.1} parent=1 // pred_check_branch
      %1132 = sbr.rel (0) target = $region481
    $region480: #{tpu_custom_call.1} parent=1 // pred_region
      %1133 = dma.done [#allocation67], 32
    $region481: #{tpu_custom_call.1} parent=1 // pred_fallthru
      _
    // Predicated region
    $region482: #{tpu_custom_call.1} parent=1 // pred_check
      _
    $region483: #{tpu_custom_call.1} parent=1 // pred_check_branch
      %1135 = sbr.rel (0) target = $region485
    $region484: #{tpu_custom_call.1} parent=1 // pred_region
      %1136 = dma.done [#allocation70], 16
    $region485: #{tpu_custom_call.1} parent=1 // pred_fallthru
      _
    // Predicated region
    $region486: #{tpu_custom_call.1} parent=1 // pred_check
      _
    $region487: #{tpu_custom_call.1} parent=1 // pred_check_branch
      %1138 = sbr.rel (0) target = $region489
    $region488: #{tpu_custom_call.1} parent=1 // pred_region
      %1139 = dma.done [#allocation70], 16
    $region489: #{tpu_custom_call.1} parent=1 // pred_fallthru
      _
    // Predicated region
    $region490: #{tpu_custom_call.1} parent=1 // pred_check
      _
    $region491: #{tpu_custom_call.1} parent=1 // pred_check_branch
      %1141 = sbr.rel (0) target = $region493
    $region492: #{tpu_custom_call.1} parent=1 // pred_region
      %1142 = dma.done [#allocation73], 256
    $region493: #{tpu_custom_call.1} parent=1 // pred_fallthru
      _
    // Predicated region
    $region494: #{tpu_custom_call.1} parent=1 // pred_check
      _
    $region495: #{tpu_custom_call.1} parent=1 // pred_check_branch
      %1144 = sbr.rel (0) target = $region497
    $region496: #{tpu_custom_call.1} parent=1 // pred_region
      %1145 = dma.done [#allocation73], 2048
    $region497: #{tpu_custom_call.1} parent=1 // pred_fallthru
      _
    // Predicated region
    $region498: #{tpu_custom_call.1} parent=1 // pred_check
      _
    $region499: #{tpu_custom_call.1} parent=1 // pred_check_branch
      %1147 = sbr.rel (0) target = $region501
    $region500: #{tpu_custom_call.1} parent=1 // pred_region
      %1148 = dma.done [#allocation76], 16
    $region501: #{tpu_custom_call.1} parent=1 // pred_fallthru
      _
    // Predicated region
    $region502: #{tpu_custom_call.1} parent=1 // pred_check
      _
    $region503: #{tpu_custom_call.1} parent=1 // pred_check_branch
      %1150 = sbr.rel (0) target = $region505
    $region504: #{tpu_custom_call.1} parent=1 // pred_region
      %1151 = dma.done [#allocation76], 2048
    $region505: #{tpu_custom_call.1} parent=1 // pred_fallthru
      _
    // Predicated region
    $region506: #{tpu_custom_call.1} parent=1 // pred_check
      _
    $region507: #{tpu_custom_call.1} parent=1 // pred_check_branch
      %1153 = sbr.rel (0) target = $region509
    $region508: #{tpu_custom_call.1} parent=1 // pred_region
      %1154 = dma.done [#allocation79], 16
    $region509: #{tpu_custom_call.1} parent=1 // pred_fallthru
      _
    // Predicated region
    $region510: #{tpu_custom_call.1} parent=1 // pred_check
      _
    $region511: #{tpu_custom_call.1} parent=1 // pred_check_branch
      %1156 = sbr.rel (0) target = $region513
    $region512: #{tpu_custom_call.1} parent=1 // pred_region
      %1157 = dma.done [#allocation79], 4096
    $region513: #{tpu_custom_call.1} parent=1 // pred_fallthru
      _
    // Predicated region
    $region514: #{tpu_custom_call.1} parent=1 // pred_check
      _
    $region515: #{tpu_custom_call.1} parent=1 // pred_check_branch
      %1159 = sbr.rel (0) target = $region517
    $region516: #{tpu_custom_call.1} parent=1 // pred_region
      %1160 = dma.done [#allocation82], 32
    $region517: #{tpu_custom_call.1} parent=1 // pred_fallthru
      _
    // Predicated region
    $region518: #{tpu_custom_call.1} parent=1 // pred_check
      _
    $region519: #{tpu_custom_call.1} parent=1 // pred_check_branch
      %1162 = sbr.rel (0) target = $region521
    $region520: #{tpu_custom_call.1} parent=1 // pred_region
      %1163 = dma.done [#allocation82], 256
    $region521: #{tpu_custom_call.1} parent=1 // pred_fallthru
      _
    // Predicated region
    $region522: #{tpu_custom_call.1} parent=1 // pred_check
      _
    $region523: #{tpu_custom_call.1} parent=1 // pred_check_branch
      %1165 = sbr.rel (0) target = $region525
    $region524: #{tpu_custom_call.1} parent=1 // pred_region
      %1166 = dma.done [#allocation85], 2048
    $region525: #{tpu_custom_call.1} parent=1 // pred_fallthru
      _
    // Predicated region
    $region526: #{tpu_custom_call.1} parent=1 // pred_check
      _
    $region527: #{tpu_custom_call.1} parent=1 // pred_check_branch
      %1168 = sbr.rel (0) target = $region529
    $region528: #{tpu_custom_call.1} parent=1 // pred_region
      %1169 = dma.done [#allocation85], 16
    $region529: #{tpu_custom_call.1} parent=1 // pred_fallthru
      _
    // Predicated region
    $region530: #{tpu_custom_call.1} parent=1 // pred_check
      _
    $region531: #{tpu_custom_call.1} parent=1 // pred_check_branch
      %1171 = sbr.rel (0) target = $region533
    $region532: #{tpu_custom_call.1} parent=1 // pred_region
      %1172 = dma.done [#allocation88], 2048
    $region533: #{tpu_custom_call.1} parent=1 // pred_fallthru
      _
    // Predicated region
    $region534: #{tpu_custom_call.1} parent=1 // pred_check
      _
    $region535: #{tpu_custom_call.1} parent=1 // pred_check_branch
      %1174 = sbr.rel (0) target = $region537
    $region536: #{tpu_custom_call.1} parent=1 // pred_region
      %1175 = dma.done [#allocation88], 16
    $region537: #{tpu_custom_call.1} parent=1 // pred_fallthru
      _
    // Predicated region
    $region538: #{tpu_custom_call.1} parent=1 // pred_check
      _
    $region539: #{tpu_custom_call.1} parent=1 // pred_check_branch
      %1177 = sbr.rel (0) target = $region541
    $region540: #{tpu_custom_call.1} parent=1 // pred_region
      %1178 = dma.done [#allocation91], 4096
    $region541: #{tpu_custom_call.1} parent=1 // pred_fallthru
      _
    // Predicated region
    $region542: #{tpu_custom_call.1} parent=1 // pred_check
      _
    $region543: #{tpu_custom_call.1} parent=1 // pred_check_branch
      %1180 = sbr.rel (0) target = $region545
    $region544: #{tpu_custom_call.1} parent=1 // pred_region
      %1181 = dma.done [#allocation91], 32
    $region545: #{tpu_custom_call.1} parent=1 // pred_fallthru
      _
    // Predicated region
    $region546: #{tpu_custom_call.1} parent=1 // pred_check
      _
    $region547: #{tpu_custom_call.1} parent=1 // pred_check_branch
      %1183 = sbr.rel (0) target = $region549
    $region548: #{tpu_custom_call.1} parent=1 // pred_region
      %1184 = dma.done [#allocation94], 16
    $region549: #{tpu_custom_call.1} parent=1 // pred_fallthru
      _
    // Predicated region
    $region550: #{tpu_custom_call.1} parent=1 // pred_check
      _
    $region551: #{tpu_custom_call.1} parent=1 // pred_check_branch
      %1186 = sbr.rel (0) target = $region553
    $region552: #{tpu_custom_call.1} parent=1 // pred_region
      %1187 = dma.done [#allocation94], 16
    $region553: #{tpu_custom_call.1} parent=1 // pred_fallthru
      _
    // Predicated region
    $region554: #{tpu_custom_call.1} parent=1 // pred_check
      _
    $region555: #{tpu_custom_call.1} parent=1 // pred_check_branch
      %1189 = sbr.rel (0) target = $region557
    $region556: #{tpu_custom_call.1} parent=1 // pred_region
      %1190 = dma.done [#allocation97], 256
    $region557: #{tpu_custom_call.1} parent=1 // pred_fallthru
      _
    // Predicated region
    $region558: #{tpu_custom_call.1} parent=1 // pred_check
      _
    $region559: #{tpu_custom_call.1} parent=1 // pred_check_branch
      %1192 = sbr.rel (0) target = $region561
    $region560: #{tpu_custom_call.1} parent=1 // pred_region
      %1193 = dma.done [#allocation97], 2048
    $region561: #{tpu_custom_call.1} parent=1 // pred_fallthru
      _
    // Predicated region
    $region562: #{tpu_custom_call.1} parent=1 // pred_check
      _
    $region563: #{tpu_custom_call.1} parent=1 // pred_check_branch
      %1195 = sbr.rel (0) target = $region565
    $region564: #{tpu_custom_call.1} parent=1 // pred_region
      %1196 = dma.done [#allocation100], 16
    $region565: #{tpu_custom_call.1} parent=1 // pred_fallthru
      _
    // Predicated region
    $region566: #{tpu_custom_call.1} parent=1 // pred_check
      _
    $region567: #{tpu_custom_call.1} parent=1 // pred_check_branch
      %1198 = sbr.rel (0) target = $region569
    $region568: #{tpu_custom_call.1} parent=1 // pred_region
      %1199 = dma.done [#allocation100], 2048
    $region569: #{tpu_custom_call.1} parent=1 // pred_fallthru
      _
    // Predicated region
    $region570: #{tpu_custom_call.1} parent=1 // pred_check
      _
    $region571: #{tpu_custom_call.1} parent=1 // pred_check_branch
      %1201 = sbr.rel (0) target = $region573
    $region572: #{tpu_custom_call.1} parent=1 // pred_region
      %1202 = dma.done [#allocation103], 16
    $region573: #{tpu_custom_call.1} parent=1 // pred_fallthru
      _
    // Predicated region
    $region574: #{tpu_custom_call.1} parent=1 // pred_check
      _
    $region575: #{tpu_custom_call.1} parent=1 // pred_check_branch
      %1204 = sbr.rel (0) target = $region577
    $region576: #{tpu_custom_call.1} parent=1 // pred_region
      %1205 = dma.done [#allocation103], 4096
    $region577: #{tpu_custom_call.1} parent=1 // pred_fallthru
      _
    // Predicated region
    $region578: #{tpu_custom_call.1} parent=1 // pred_check
      _
    $region579: #{tpu_custom_call.1} parent=1 // pred_check_branch
      %1207 = sbr.rel (0) target = $region581
    $region580: #{tpu_custom_call.1} parent=1 // pred_region
      %1208 = dma.done [#allocation106], 32
    $region581: #{tpu_custom_call.1} parent=1 // pred_fallthru
      _
    // Predicated region
    $region582: #{tpu_custom_call.1} parent=1 // pred_check
      _
    $region583: #{tpu_custom_call.1} parent=1 // pred_check_branch
      %1210 = sbr.rel (0) target = $region585
    $region584: #{tpu_custom_call.1} parent=1 // pred_region
      %1211 = dma.done [#allocation106], 256
    $region585: #{tpu_custom_call.1} parent=1 // pred_fallthru
      _
    // Predicated region
    $region586: #{tpu_custom_call.1} parent=1 // pred_check
      _
    $region587: #{tpu_custom_call.1} parent=1 // pred_check_branch
      %1213 = sbr.rel (0) target = $region589
    $region588: #{tpu_custom_call.1} parent=1 // pred_region
      %1214 = dma.done [#allocation109], 16
    $region589: #{tpu_custom_call.1} parent=1 // pred_fallthru
      _
    // Predicated region
    $region590: #{tpu_custom_call.1} parent=1 // pred_check
      _
    $region591: #{tpu_custom_call.1} parent=1 // pred_check_branch
      %1216 = sbr.rel (0) target = $region593
    $region592: #{tpu_custom_call.1} parent=1 // pred_region
      %1217 = dma.done [#allocation109], 2048
    $region593: #{tpu_custom_call.1} parent=1 // pred_fallthru
      _
    // Predicated region
    $region594: #{tpu_custom_call.1} parent=1 // pred_check
      _
    $region595: #{tpu_custom_call.1} parent=1 // pred_check_branch
      %1219 = sbr.rel (0) target = $region597
    $region596: #{tpu_custom_call.1} parent=1 // pred_region
      %1220 = dma.done [#allocation112], 4096
    $region597: #{tpu_custom_call.1} parent=1 // pred_fallthru
      _
    %v1221 = vld [vmem:[#allocation3] sm:$0x3]
    %v1222 = vld [vmem:[#allocation6] sm:$0x3]
    %v1223 = vld [vmem:[#allocation8] sm:$0xff]
    %v1224 = vld [vmem:[#allocation8 + $0x8] sm:$0xff]
    %v1225 = vld [vmem:[%s9] sm:$0x1]
    %v1227 = vlaneseq
    %v1228 = vshrl.u32 %v1227, 7
    %v1229 = vsub.s32 0, %v1228
    %v1230 = vrot.slane %v1225, %v1229
    %vm1232 = vcmask 130048
    %v1234 = vsel %vm1232, %v1222, 0
    %1236 = vmatprep.subr.mxu0 0.0
    %1237 = vmatpush1.msra.mxu0 0.0
    %1238 = vmatprep.subr.mxu0 0.0
    %1239 = vmatpush1.msra.mxu0 0.0
    %1240 = vmatprep.subr.mxu0 0.0
    %1241 = vmatpush1.msra.mxu0 0.0
    %1242 = vmatprep.subr.mxu0 0.0
    %1243 = vmatpush1.msra.mxu0 0.0
    %1244 = vmatprep.subr.mxu0 0.0
    %1245 = vmatpush1.msra.mxu0 0.0
    %1246 = vmatprep.subr.mxu0 0.0
    %1247 = vmatpush1.msra.mxu0 0.0
    %1248 = vmatprep.subr.mxu0 0.0
    %1249 = vmatpush1.msra.mxu0 0.0
    %1250 = vmatprep.subr.mxu0 0.0
    %1251 = vmatpush1.msra.mxu0 0.0
    %1252 = vmatprep.subr.mxu0 0.0
    %1253 = vmatpush1.msra.mxu0 0.0
    %1254 = vmatprep.subr.mxu0 0.0
    %1255 = vmatpush1.msra.mxu0 0.0
    %1256 = vmatprep.subr.mxu0 0.0
    %1257 = vmatpush1.msra.mxu0 0.0
    %1258 = vmatprep.subr.mxu0 0.0
    %1259 = vmatpush1.msra.mxu0 0.0
    %1260 = vmatprep.subr.mxu0 0.0
    %1261 = vmatpush1.msra.mxu0 0.0
    %1262 = vmatprep.subr.mxu0 0.0
    %1263 = vmatpush1.msra.mxu0 0.0
    %1264 = vmatprep.subr.mxu0 0.0
    %1265 = vmatpush1.msra.mxu0 %v1224
    %1266 = vmatprep.subr.mxu0 0.0
    %1267 = vmatpush1.msra.mxu0 %v1223
    %1268 = vmatprep.subr.mxu0 0.0
    %1269 = vmatpush2.msra.mxu0 0.0
    %1270 = vmatprep.subr.mxu0 0.0
    %1271 = vmatpush2.msra.mxu0 0.0
    %1272 = vmatprep.subr.mxu0 0.0
    %1273 = vmatpush2.msra.mxu0 0.0
    %1274 = vmatprep.subr.mxu0 0.0
    %1275 = vmatpush2.msra.mxu0 0.0
    %1276 = vmatprep.subr.mxu0 0.0
    %1277 = vmatpush2.msra.mxu0 0.0
    %1278 = vmatprep.subr.mxu0 0.0
    %1279 = vmatpush2.msra.mxu0 0.0
    %1280 = vmatprep.subr.mxu0 0.0
    %1281 = vmatpush2.msra.mxu0 0.0
    %1282 = vmatprep.subr.mxu0 0.0
    %1283 = vmatpush2.msra.mxu0 0.0
    %1284 = vmatprep.subr.mxu0 0.0
    %1285 = vmatpush2.msra.mxu0 0.0
    %1286 = vmatprep.subr.mxu0 0.0
    %1287 = vmatpush2.msra.mxu0 0.0
    %1288 = vmatprep.subr.mxu0 0.0
    %1289 = vmatpush2.msra.mxu0 0.0
    %1290 = vmatprep.subr.mxu0 0.0
    %1291 = vmatpush2.msra.mxu0 0.0
    %1292 = vmatprep.subr.mxu0 0.0
    %1293 = vmatpush2.msra.mxu0 0.0
    %1294 = vmatprep.subr.mxu0 0.0
    %1295 = vmatpush2.msra.mxu0 0.0
    %1296 = vmatprep.subr.mxu0 0.0
    %1297 = vmatpush2.msra.mxu0 0.0
    %1298 = vmatprep.subr.mxu0 0.0
    %1299 = vmatpush2.msra.mxu0 0.0
    %1300 = vmatprep.mubr.f32.mxu0 0.0
    %1301 = vmatmul.mubr.f32.gmra.mxu0 %v1234
    %v1302 = vpop.f32.mrf.mxu0
    %v1303 = vadd.f32 %v1230, %v1302
    %v1304 = vpop.f32.mrf.mxu0
    %1305 = vdwg.mxu0
    %vm1306 = vcmp.ge.f32.partialorder %v1303, 0.0
    %v1307 = vmul.f32 %v1303, 0.01
    %v1308 = vsel %vm1306, %v1303, %v1307
    %v1309 = vld [vmem:[#allocation9] sm:$0xff]
    %v1310 = vld [vmem:[#allocation9 + $0x8] sm:$0xff]
    %v1311 = vld [vmem:[#allocation11] sm:$0x1]
    %v1313 = vlaneseq
    %v1314 = vshrl.u32 %v1313, 7
    %v1315 = vsub.s32 0, %v1314
    %v1316 = vrot.slane %v1311, %v1315
    %v1319 = vsel %vm1232, %v1308, 0
    %1321 = vmatprep.subr.mxu0 0.0
    %1322 = vmatpush1.msra.mxu0 0.0
    %1323 = vmatprep.subr.mxu0 0.0
    %1324 = vmatpush1.msra.mxu0 0.0
    %1325 = vmatprep.subr.mxu0 0.0
    %1326 = vmatpush1.msra.mxu0 0.0
    %1327 = vmatprep.subr.mxu0 0.0
    %1328 = vmatpush1.msra.mxu0 0.0
    %1329 = vmatprep.subr.mxu0 0.0
    %1330 = vmatpush1.msra.mxu0 0.0
    %1331 = vmatprep.subr.mxu0 0.0
    %1332 = vmatpush1.msra.mxu0 0.0
    %1333 = vmatprep.subr.mxu0 0.0
    %1334 = vmatpush1.msra.mxu0 0.0
    %1335 = vmatprep.subr.mxu0 0.0
    %1336 = vmatpush1.msra.mxu0 0.0
    %1337 = vmatprep.subr.mxu0 0.0
    %1338 = vmatpush1.msra.mxu0 0.0
    %1339 = vmatprep.subr.mxu0 0.0
    %1340 = vmatpush1.msra.mxu0 0.0
    %1341 = vmatprep.subr.mxu0 0.0
    %1342 = vmatpush1.msra.mxu0 0.0
    %1343 = vmatprep.subr.mxu0 0.0
    %1344 = vmatpush1.msra.mxu0 0.0
    %1345 = vmatprep.subr.mxu0 0.0
    %1346 = vmatpush1.msra.mxu0 0.0
    %1347 = vmatprep.subr.mxu0 0.0
    %1348 = vmatpush1.msra.mxu0 0.0
    %1349 = vmatprep.subr.mxu0 0.0
    %1350 = vmatpush1.msra.mxu0 %v1310
    %1351 = vmatprep.subr.mxu0 0.0
    %1352 = vmatpush1.msra.mxu0 %v1309
    %1353 = vmatprep.subr.mxu0 0.0
    %1354 = vmatpush2.msra.mxu0 0.0
    %1355 = vmatprep.subr.mxu0 0.0
    %1356 = vmatpush2.msra.mxu0 0.0
    %1357 = vmatprep.subr.mxu0 0.0
    %1358 = vmatpush2.msra.mxu0 0.0
    %1359 = vmatprep.subr.mxu0 0.0
    %1360 = vmatpush2.msra.mxu0 0.0
    %1361 = vmatprep.subr.mxu0 0.0
    %1362 = vmatpush2.msra.mxu0 0.0
    %1363 = vmatprep.subr.mxu0 0.0
    %1364 = vmatpush2.msra.mxu0 0.0
    %1365 = vmatprep.subr.mxu0 0.0
    %1366 = vmatpush2.msra.mxu0 0.0
    %1367 = vmatprep.subr.mxu0 0.0
    %1368 = vmatpush2.msra.mxu0 0.0
    %1369 = vmatprep.subr.mxu0 0.0
    %1370 = vmatpush2.msra.mxu0 0.0
    %1371 = vmatprep.subr.mxu0 0.0
    %1372 = vmatpush2.msra.mxu0 0.0
    %1373 = vmatprep.subr.mxu0 0.0
    %1374 = vmatpush2.msra.mxu0 0.0
    %1375 = vmatprep.subr.mxu0 0.0
    %1376 = vmatpush2.msra.mxu0 0.0
    %1377 = vmatprep.subr.mxu0 0.0
    %1378 = vmatpush2.msra.mxu0 0.0
    %1379 = vmatprep.subr.mxu0 0.0
    %1380 = vmatpush2.msra.mxu0 0.0
    %1381 = vmatprep.subr.mxu0 0.0
    %1382 = vmatpush2.msra.mxu0 0.0
    %1383 = vmatprep.subr.mxu0 0.0
    %1384 = vmatpush2.msra.mxu0 0.0
    %1385 = vmatprep.mubr.f32.mxu0 0.0
    %1386 = vmatmul.mubr.f32.gmra.mxu0 %v1319
    %v1387 = vpop.f32.mrf.mxu0
    %v1388 = vadd.f32 %v1316, %v1387
    %v1389 = vpop.f32.mrf.mxu0
    %1390 = vdwg.mxu0
    %vm1391 = vcmp.ge.f32.partialorder %v1388, 0.0
    %v1392 = vmul.f32 %v1388, 0.01
    %v1393 = vsel %vm1391, %v1388, %v1392
    %v1394 = vld [vmem:[#allocation12] sm:$0xff]
    %v1395 = vld [vmem:[#allocation12 + $0x8] sm:$0xff]
    %v1396 = vld [vmem:[#allocation14] sm:$0x1]
    %v1398 = vlaneseq
    %v1399 = vshrl.u32 %v1398, 7
    %v1400 = vsub.s32 0, %v1399
    %v1401 = vrot.slane %v1396, %v1400
    %v1404 = vsel %vm1232, %v1393, 0
    %1406 = vmatprep.subr.mxu0 0.0
    %1407 = vmatpush1.msra.mxu0 0.0
    %1408 = vmatprep.subr.mxu0 0.0
    %1409 = vmatpush1.msra.mxu0 0.0
    %1410 = vmatprep.subr.mxu0 0.0
    %1411 = vmatpush1.msra.mxu0 0.0
    %1412 = vmatprep.subr.mxu0 0.0
    %1413 = vmatpush1.msra.mxu0 0.0
    %1414 = vmatprep.subr.mxu0 0.0
    %1415 = vmatpush1.msra.mxu0 0.0
    %1416 = vmatprep.subr.mxu0 0.0
    %1417 = vmatpush1.msra.mxu0 0.0
    %1418 = vmatprep.subr.mxu0 0.0
    %1419 = vmatpush1.msra.mxu0 0.0
    %1420 = vmatprep.subr.mxu0 0.0
    %1421 = vmatpush1.msra.mxu0 0.0
    %1422 = vmatprep.subr.mxu0 0.0
    %1423 = vmatpush1.msra.mxu0 0.0
    %1424 = vmatprep.subr.mxu0 0.0
    %1425 = vmatpush1.msra.mxu0 0.0
    %1426 = vmatprep.subr.mxu0 0.0
    %1427 = vmatpush1.msra.mxu0 0.0
    %1428 = vmatprep.subr.mxu0 0.0
    %1429 = vmatpush1.msra.mxu0 0.0
    %1430 = vmatprep.subr.mxu0 0.0
    %1431 = vmatpush1.msra.mxu0 0.0
    %1432 = vmatprep.subr.mxu0 0.0
    %1433 = vmatpush1.msra.mxu0 0.0
    %1434 = vmatprep.subr.mxu0 0.0
    %1435 = vmatpush1.msra.mxu0 %v1395
    %1436 = vmatprep.subr.mxu0 0.0
    %1437 = vmatpush1.msra.mxu0 %v1394
    %1438 = vmatprep.subr.mxu0 0.0
    %1439 = vmatpush2.msra.mxu0 0.0
    %1440 = vmatprep.subr.mxu0 0.0
    %1441 = vmatpush2.msra.mxu0 0.0
    %1442 = vmatprep.subr.mxu0 0.0
    %1443 = vmatpush2.msra.mxu0 0.0
    %1444 = vmatprep.subr.mxu0 0.0
    %1445 = vmatpush2.msra.mxu0 0.0
    %1446 = vmatprep.subr.mxu0 0.0
    %1447 = vmatpush2.msra.mxu0 0.0
    %1448 = vmatprep.subr.mxu0 0.0
    %1449 = vmatpush2.msra.mxu0 0.0
    %1450 = vmatprep.subr.mxu0 0.0
    %1451 = vmatpush2.msra.mxu0 0.0
    %1452 = vmatprep.subr.mxu0 0.0
    %1453 = vmatpush2.msra.mxu0 0.0
    %1454 = vmatprep.subr.mxu0 0.0
    %1455 = vmatpush2.msra.mxu0 0.0
    %1456 = vmatprep.subr.mxu0 0.0
    %1457 = vmatpush2.msra.mxu0 0.0
    %1458 = vmatprep.subr.mxu0 0.0
    %1459 = vmatpush2.msra.mxu0 0.0
    %1460 = vmatprep.subr.mxu0 0.0
    %1461 = vmatpush2.msra.mxu0 0.0
    %1462 = vmatprep.subr.mxu0 0.0
    %1463 = vmatpush2.msra.mxu0 0.0
    %1464 = vmatprep.subr.mxu0 0.0
    %1465 = vmatpush2.msra.mxu0 0.0
    %1466 = vmatprep.subr.mxu0 0.0
    %1467 = vmatpush2.msra.mxu0 0.0
    %1468 = vmatprep.subr.mxu0 0.0
    %1469 = vmatpush2.msra.mxu0 0.0
    %1470 = vmatprep.mubr.f32.mxu0 0.0
    %1471 = vmatmul.mubr.f32.gmra.mxu0 %v1404
    %v1472 = vpop.f32.mrf.mxu0
    %v1473 = vadd.f32 %v1401, %v1472
    %v1474 = vpop.f32.mrf.mxu0
    %1475 = vdwg.mxu0
    %vm1476 = vcmp.ge.f32.partialorder %v1473, 0.0
    %v1477 = vmul.f32 %v1473, 0.01
    %v1478 = vsel %vm1476, %v1473, %v1477
    %v1479 = vld [vmem:[#allocation15] sm:$0xff]
    %v1480 = vld [vmem:[#allocation15 + $0x8] sm:$0xff]
    %v1481 = vld [vmem:[#allocation17] sm:$0x1]
    %v1483 = vlaneseq
    %v1484 = vshrl.u32 %v1483, 7
    %v1485 = vsub.s32 0, %v1484
    %v1486 = vrot.slane %v1481, %v1485
    %v1489 = vsel %vm1232, %v1478, 0
    %1491 = vmatprep.subr.mxu0 0.0
    %1492 = vmatpush1.msra.mxu0 0.0
    %1493 = vmatprep.subr.mxu0 0.0
    %1494 = vmatpush1.msra.mxu0 0.0
    %1495 = vmatprep.subr.mxu0 0.0
    %1496 = vmatpush1.msra.mxu0 0.0
    %1497 = vmatprep.subr.mxu0 0.0
    %1498 = vmatpush1.msra.mxu0 0.0
    %1499 = vmatprep.subr.mxu0 0.0
    %1500 = vmatpush1.msra.mxu0 0.0
    %1501 = vmatprep.subr.mxu0 0.0
    %1502 = vmatpush1.msra.mxu0 0.0
    %1503 = vmatprep.subr.mxu0 0.0
    %1504 = vmatpush1.msra.mxu0 0.0
    %1505 = vmatprep.subr.mxu0 0.0
    %1506 = vmatpush1.msra.mxu0 0.0
    %1507 = vmatprep.subr.mxu0 0.0
    %1508 = vmatpush1.msra.mxu0 0.0
    %1509 = vmatprep.subr.mxu0 0.0
    %1510 = vmatpush1.msra.mxu0 0.0
    %1511 = vmatprep.subr.mxu0 0.0
    %1512 = vmatpush1.msra.mxu0 0.0
    %1513 = vmatprep.subr.mxu0 0.0
    %1514 = vmatpush1.msra.mxu0 0.0
    %1515 = vmatprep.subr.mxu0 0.0
    %1516 = vmatpush1.msra.mxu0 0.0
    %1517 = vmatprep.subr.mxu0 0.0
    %1518 = vmatpush1.msra.mxu0 0.0
    %1519 = vmatprep.subr.mxu0 0.0
    %1520 = vmatpush1.msra.mxu0 %v1480
    %1521 = vmatprep.subr.mxu0 0.0
    %1522 = vmatpush1.msra.mxu0 %v1479
    %1523 = vmatprep.subr.mxu0 0.0
    %1524 = vmatpush2.msra.mxu0 0.0
    %1525 = vmatprep.subr.mxu0 0.0
    %1526 = vmatpush2.msra.mxu0 0.0
    %1527 = vmatprep.subr.mxu0 0.0
    %1528 = vmatpush2.msra.mxu0 0.0
    %1529 = vmatprep.subr.mxu0 0.0
    %1530 = vmatpush2.msra.mxu0 0.0
    %1531 = vmatprep.subr.mxu0 0.0
    %1532 = vmatpush2.msra.mxu0 0.0
    %1533 = vmatprep.subr.mxu0 0.0
    %1534 = vmatpush2.msra.mxu0 0.0
    %1535 = vmatprep.subr.mxu0 0.0
    %1536 = vmatpush2.msra.mxu0 0.0
    %1537 = vmatprep.subr.mxu0 0.0
    %1538 = vmatpush2.msra.mxu0 0.0
    %1539 = vmatprep.subr.mxu0 0.0
    %1540 = vmatpush2.msra.mxu0 0.0
    %1541 = vmatprep.subr.mxu0 0.0
    %1542 = vmatpush2.msra.mxu0 0.0
    %1543 = vmatprep.subr.mxu0 0.0
    %1544 = vmatpush2.msra.mxu0 0.0
    %1545 = vmatprep.subr.mxu0 0.0
    %1546 = vmatpush2.msra.mxu0 0.0
    %1547 = vmatprep.subr.mxu0 0.0
    %1548 = vmatpush2.msra.mxu0 0.0
    %1549 = vmatprep.subr.mxu0 0.0
    %1550 = vmatpush2.msra.mxu0 0.0
    %1551 = vmatprep.subr.mxu0 0.0
    %1552 = vmatpush2.msra.mxu0 0.0
    %1553 = vmatprep.subr.mxu0 0.0
    %1554 = vmatpush2.msra.mxu0 0.0
    %1555 = vmatprep.mubr.f32.mxu0 0.0
    %1556 = vmatmul.mubr.f32.gmra.mxu0 %v1489
    %v1557 = vpop.f32.mrf.mxu0
    %v1558 = vadd.f32 %v1486, %v1557
    %v1559 = vpop.f32.mrf.mxu0
    %1560 = vdwg.mxu0
    %v1561 = vld [vmem:[#allocation18] sm:$0xff]
    %v1562 = vld [vmem:[#allocation18 + $0x8] sm:$0xff]
    %v1563 = vld [vmem:[#allocation18 + $0x10] sm:$0xff]
    %v1564 = vld [vmem:[#allocation18 + $0x18] sm:$0xff]
    %v1565 = vld [vmem:[#allocation18 + $0x20] sm:$0xff]
    %v1566 = vld [vmem:[#allocation18 + $0x28] sm:$0xff]
    %v1567 = vld [vmem:[#allocation18 + $0x30] sm:$0xff]
    %v1568 = vld [vmem:[#allocation18 + $0x38] sm:$0xff]
    %v1569 = vld [vmem:[#allocation18 + $0x40] sm:$0xff]
    %v1570 = vld [vmem:[#allocation18 + $0x48] sm:$0xff]
    %v1571 = vld [vmem:[#allocation18 + $0x50] sm:$0xff]
    %v1572 = vld [vmem:[#allocation18 + $0x58] sm:$0xff]
    %v1573 = vld [vmem:[#allocation18 + $0x60] sm:$0xff]
    %v1574 = vld [vmem:[#allocation18 + $0x68] sm:$0xff]
    %v1575 = vld [vmem:[#allocation18 + $0x70] sm:$0xff]
    %v1576 = vld [vmem:[#allocation18 + $0x78] sm:$0xff]
    %v1577 = vld [vmem:[#allocation20] sm:$0xff]
    %v1579 = vlaneseq
    %v1580 = vshrl.u32 %v1579, 7
    %v1581 = vsub.s32 0, %v1580
    %v1582 = vrot.slane %v1577, %v1581
    %v1583 = vlaneseq
    %v1584 = vshrl.u32 %v1583, 7
    %v1585 = vsub.s32 1, %v1584
    %v1586 = vrot.slane %v1577, %v1585
    %v1587 = vlaneseq
    %v1588 = vshrl.u32 %v1587, 7
    %v1589 = vsub.s32 2, %v1588
    %v1590 = vrot.slane %v1577, %v1589
    %v1591 = vlaneseq
    %v1592 = vshrl.u32 %v1591, 7
    %v1593 = vsub.s32 3, %v1592
    %v1594 = vrot.slane %v1577, %v1593
    %v1595 = vlaneseq
    %v1596 = vshrl.u32 %v1595, 7
    %v1597 = vsub.s32 4, %v1596
    %v1598 = vrot.slane %v1577, %v1597
    %v1599 = vlaneseq
    %v1600 = vshrl.u32 %v1599, 7
    %v1601 = vsub.s32 5, %v1600
    %v1602 = vrot.slane %v1577, %v1601
    %v1603 = vlaneseq
    %v1604 = vshrl.u32 %v1603, 7
    %v1605 = vsub.s32 6, %v1604
    %v1606 = vrot.slane %v1577, %v1605
    %v1607 = vlaneseq
    %v1608 = vshrl.u32 %v1607, 7
    %v1609 = vsub.s32 7, %v1608
    %v1610 = vrot.slane %v1577, %v1609
    %v1620 = vsel %vm1232, %v1558, 0
    %1622 = vmatprep.subr.mxu0 0.0
    %1623 = vmatpush1.msra.mxu0 0.0
    %1624 = vmatprep.subr.mxu0 0.0
    %1625 = vmatpush1.msra.mxu0 0.0
    %1626 = vmatprep.subr.mxu0 0.0
    %1627 = vmatpush1.msra.mxu0 0.0
    %1628 = vmatprep.subr.mxu0 0.0
    %1629 = vmatpush1.msra.mxu0 0.0
    %1630 = vmatprep.subr.mxu0 0.0
    %1631 = vmatpush1.msra.mxu0 0.0
    %1632 = vmatprep.subr.mxu0 0.0
    %1633 = vmatpush1.msra.mxu0 0.0
    %1634 = vmatprep.subr.mxu0 0.0
    %1635 = vmatpush1.msra.mxu0 0.0
    %1636 = vmatprep.subr.mxu0 0.0
    %1637 = vmatpush1.msra.mxu0 0.0
    %1638 = vmatprep.subr.mxu0 0.0
    %1639 = vmatpush1.msra.mxu0 0.0
    %1640 = vmatprep.subr.mxu0 0.0
    %1641 = vmatpush1.msra.mxu0 0.0
    %1642 = vmatprep.subr.mxu0 0.0
    %1643 = vmatpush1.msra.mxu0 0.0
    %1644 = vmatprep.subr.mxu0 0.0
    %1645 = vmatpush1.msra.mxu0 0.0
    %1646 = vmatprep.subr.mxu0 0.0
    %1647 = vmatpush1.msra.mxu0 0.0
    %1648 = vmatprep.subr.mxu0 0.0
    %1649 = vmatpush1.msra.mxu0 0.0
    %1650 = vmatprep.subr.mxu0 %v1570
    %1651 = vmatpush1.msra.mxu0 %v1569
    %1652 = vmatprep.subr.mxu0 %v1562
    %1653 = vmatpush1.msra.mxu0 %v1561
    %1654 = vmatprep.subr.mxu0 0.0
    %1655 = vmatpush2.msra.mxu0 0.0
    %1656 = vmatprep.subr.mxu0 0.0
    %1657 = vmatpush2.msra.mxu0 0.0
    %1658 = vmatprep.subr.mxu0 0.0
    %1659 = vmatpush2.msra.mxu0 0.0
    %1660 = vmatprep.subr.mxu0 0.0
    %1661 = vmatpush2.msra.mxu0 0.0
    %1662 = vmatprep.subr.mxu0 0.0
    %1663 = vmatpush2.msra.mxu0 0.0
    %1664 = vmatprep.subr.mxu0 0.0
    %1665 = vmatpush2.msra.mxu0 0.0
    %1666 = vmatprep.subr.mxu0 0.0
    %1667 = vmatpush2.msra.mxu0 0.0
    %1668 = vmatprep.subr.mxu0 0.0
    %1669 = vmatpush2.msra.mxu0 0.0
    %1670 = vmatprep.subr.mxu0 0.0
    %1671 = vmatpush2.msra.mxu0 0.0
    %1672 = vmatprep.subr.mxu0 0.0
    %1673 = vmatpush2.msra.mxu0 0.0
    %1674 = vmatprep.subr.mxu0 0.0
    %1675 = vmatpush2.msra.mxu0 0.0
    %1676 = vmatprep.subr.mxu0 0.0
    %1677 = vmatpush2.msra.mxu0 0.0
    %1678 = vmatprep.subr.mxu0 0.0
    %1679 = vmatpush2.msra.mxu0 0.0
    %1680 = vmatprep.subr.mxu0 0.0
    %1681 = vmatpush2.msra.mxu0 0.0
    %1682 = vmatprep.subr.mxu0 0.0
    %1683 = vmatpush2.msra.mxu0 0.0
    %1684 = vmatprep.subr.mxu0 0.0
    %1685 = vmatpush2.msra.mxu0 0.0
    %1686 = vmatprep.mubr.f32.mxu0 0.0
    %1687 = vmatmul.mubr.f32.gmra.mxu0 %v1620
    %v1688 = vpop.f32.mrf.mxu0
    %v1689 = vadd.f32 %v1582, %v1688
    %v1690 = vpop.f32.mrf.mxu0
    %v1691 = vadd.f32 %v1586, %v1690
    %1692 = vdwg.mxu0
    %1693 = vmatprep.subr.mxu0 0.0
    %1694 = vmatpush1.msra.mxu0 0.0
    %1695 = vmatprep.subr.mxu0 0.0
    %1696 = vmatpush1.msra.mxu0 0.0
    %1697 = vmatprep.subr.mxu0 0.0
    %1698 = vmatpush1.msra.mxu0 0.0
    %1699 = vmatprep.subr.mxu0 0.0
    %1700 = vmatpush1.msra.mxu0 0.0
    %1701 = vmatprep.subr.mxu0 0.0
    %1702 = vmatpush1.msra.mxu0 0.0
    %1703 = vmatprep.subr.mxu0 0.0
    %1704 = vmatpush1.msra.mxu0 0.0
    %1705 = vmatprep.subr.mxu0 0.0
    %1706 = vmatpush1.msra.mxu0 0.0
    %1707 = vmatprep.subr.mxu0 0.0
    %1708 = vmatpush1.msra.mxu0 0.0
    %1709 = vmatprep.subr.mxu0 0.0
    %1710 = vmatpush1.msra.mxu0 0.0
    %1711 = vmatprep.subr.mxu0 0.0
    %1712 = vmatpush1.msra.mxu0 0.0
    %1713 = vmatprep.subr.mxu0 0.0
    %1714 = vmatpush1.msra.mxu0 0.0
    %1715 = vmatprep.subr.mxu0 0.0
    %1716 = vmatpush1.msra.mxu0 0.0
    %1717 = vmatprep.subr.mxu0 0.0
    %1718 = vmatpush1.msra.mxu0 0.0
    %1719 = vmatprep.subr.mxu0 0.0
    %1720 = vmatpush1.msra.mxu0 0.0
    %1721 = vmatprep.subr.mxu0 %v1572
    %1722 = vmatpush1.msra.mxu0 %v1571
    %1723 = vmatprep.subr.mxu0 %v1564
    %1724 = vmatpush1.msra.mxu0 %v1563
    %1725 = vmatprep.subr.mxu0 0.0
    %1726 = vmatpush2.msra.mxu0 0.0
    %1727 = vmatprep.subr.mxu0 0.0
    %1728 = vmatpush2.msra.mxu0 0.0
    %1729 = vmatprep.subr.mxu0 0.0
    %1730 = vmatpush2.msra.mxu0 0.0
    %1731 = vmatprep.subr.mxu0 0.0
    %1732 = vmatpush2.msra.mxu0 0.0
    %1733 = vmatprep.subr.mxu0 0.0
    %1734 = vmatpush2.msra.mxu0 0.0
    %1735 = vmatprep.subr.mxu0 0.0
    %1736 = vmatpush2.msra.mxu0 0.0
    %1737 = vmatprep.subr.mxu0 0.0
    %1738 = vmatpush2.msra.mxu0 0.0
    %1739 = vmatprep.subr.mxu0 0.0
    %1740 = vmatpush2.msra.mxu0 0.0
    %1741 = vmatprep.subr.mxu0 0.0
    %1742 = vmatpush2.msra.mxu0 0.0
    %1743 = vmatprep.subr.mxu0 0.0
    %1744 = vmatpush2.msra.mxu0 0.0
    %1745 = vmatprep.subr.mxu0 0.0
    %1746 = vmatpush2.msra.mxu0 0.0
    %1747 = vmatprep.subr.mxu0 0.0
    %1748 = vmatpush2.msra.mxu0 0.0
    %1749 = vmatprep.subr.mxu0 0.0
    %1750 = vmatpush2.msra.mxu0 0.0
    %1751 = vmatprep.subr.mxu0 0.0
    %1752 = vmatpush2.msra.mxu0 0.0
    %1753 = vmatprep.subr.mxu0 0.0
    %1754 = vmatpush2.msra.mxu0 0.0
    %1755 = vmatprep.subr.mxu0 0.0
    %1756 = vmatpush2.msra.mxu0 0.0
    %1757 = vmatprep.mubr.f32.mxu0 0.0
    %1758 = vmatmul.mubr.f32.gmra.mxu0 %v1620
    %v1759 = vpop.f32.mrf.mxu0
    %v1760 = vadd.f32 %v1590, %v1759
    %v1761 = vpop.f32.mrf.mxu0
    %v1762 = vadd.f32 %v1594, %v1761
    %1763 = vdwg.mxu0
    %1764 = vmatprep.subr.mxu0 0.0
    %1765 = vmatpush1.msra.mxu0 0.0
    %1766 = vmatprep.subr.mxu0 0.0
    %1767 = vmatpush1.msra.mxu0 0.0
    %1768 = vmatprep.subr.mxu0 0.0
    %1769 = vmatpush1.msra.mxu0 0.0
    %1770 = vmatprep.subr.mxu0 0.0
    %1771 = vmatpush1.msra.mxu0 0.0
    %1772 = vmatprep.subr.mxu0 0.0
    %1773 = vmatpush1.msra.mxu0 0.0
    %1774 = vmatprep.subr.mxu0 0.0
    %1775 = vmatpush1.msra.mxu0 0.0
    %1776 = vmatprep.subr.mxu0 0.0
    %1777 = vmatpush1.msra.mxu0 0.0
    %1778 = vmatprep.subr.mxu0 0.0
    %1779 = vmatpush1.msra.mxu0 0.0
    %1780 = vmatprep.subr.mxu0 0.0
    %1781 = vmatpush1.msra.mxu0 0.0
    %1782 = vmatprep.subr.mxu0 0.0
    %1783 = vmatpush1.msra.mxu0 0.0
    %1784 = vmatprep.subr.mxu0 0.0
    %1785 = vmatpush1.msra.mxu0 0.0
    %1786 = vmatprep.subr.mxu0 0.0
    %1787 = vmatpush1.msra.mxu0 0.0
    %1788 = vmatprep.subr.mxu0 0.0
    %1789 = vmatpush1.msra.mxu0 0.0
    %1790 = vmatprep.subr.mxu0 0.0
    %1791 = vmatpush1.msra.mxu0 0.0
    %1792 = vmatprep.subr.mxu0 %v1574
    %1793 = vmatpush1.msra.mxu0 %v1573
    %1794 = vmatprep.subr.mxu0 %v1566
    %1795 = vmatpush1.msra.mxu0 %v1565
    %1796 = vmatprep.subr.mxu0 0.0
    %1797 = vmatpush2.msra.mxu0 0.0
    %1798 = vmatprep.subr.mxu0 0.0
    %1799 = vmatpush2.msra.mxu0 0.0
    %1800 = vmatprep.subr.mxu0 0.0
    %1801 = vmatpush2.msra.mxu0 0.0
    %1802 = vmatprep.subr.mxu0 0.0
    %1803 = vmatpush2.msra.mxu0 0.0
    %1804 = vmatprep.subr.mxu0 0.0
    %1805 = vmatpush2.msra.mxu0 0.0
    %1806 = vmatprep.subr.mxu0 0.0
    %1807 = vmatpush2.msra.mxu0 0.0
    %1808 = vmatprep.subr.mxu0 0.0
    %1809 = vmatpush2.msra.mxu0 0.0
    %1810 = vmatprep.subr.mxu0 0.0
    %1811 = vmatpush2.msra.mxu0 0.0
    %1812 = vmatprep.subr.mxu0 0.0
    %1813 = vmatpush2.msra.mxu0 0.0
    %1814 = vmatprep.subr.mxu0 0.0
    %1815 = vmatpush2.msra.mxu0 0.0
    %1816 = vmatprep.subr.mxu0 0.0
    %1817 = vmatpush2.msra.mxu0 0.0
    %1818 = vmatprep.subr.mxu0 0.0
    %1819 = vmatpush2.msra.mxu0 0.0
    %1820 = vmatprep.subr.mxu0 0.0
    %1821 = vmatpush2.msra.mxu0 0.0
    %1822 = vmatprep.subr.mxu0 0.0
    %1823 = vmatpush2.msra.mxu0 0.0
    %1824 = vmatprep.subr.mxu0 0.0
    %1825 = vmatpush2.msra.mxu0 0.0
    %1826 = vmatprep.subr.mxu0 0.0
    %1827 = vmatpush2.msra.mxu0 0.0
    %1828 = vmatprep.mubr.f32.mxu0 0.0
    %1829 = vmatmul.mubr.f32.gmra.mxu0 %v1620
    %v1830 = vpop.f32.mrf.mxu0
    %v1831 = vadd.f32 %v1598, %v1830
    %v1832 = vpop.f32.mrf.mxu0
    %v1833 = vadd.f32 %v1602, %v1832
    %1834 = vdwg.mxu0
    %1835 = vmatprep.subr.mxu0 0.0
    %1836 = vmatpush1.msra.mxu0 0.0
    %1837 = vmatprep.subr.mxu0 0.0
    %1838 = vmatpush1.msra.mxu0 0.0
    %1839 = vmatprep.subr.mxu0 0.0
    %1840 = vmatpush1.msra.mxu0 0.0
    %1841 = vmatprep.subr.mxu0 0.0
    %1842 = vmatpush1.msra.mxu0 0.0
    %1843 = vmatprep.subr.mxu0 0.0
    %1844 = vmatpush1.msra.mxu0 0.0
    %1845 = vmatprep.subr.mxu0 0.0
    %1846 = vmatpush1.msra.mxu0 0.0
    %1847 = vmatprep.subr.mxu0 0.0
    %1848 = vmatpush1.msra.mxu0 0.0
    %1849 = vmatprep.subr.mxu0 0.0
    %1850 = vmatpush1.msra.mxu0 0.0
    %1851 = vmatprep.subr.mxu0 0.0
    %1852 = vmatpush1.msra.mxu0 0.0
    %1853 = vmatprep.subr.mxu0 0.0
    %1854 = vmatpush1.msra.mxu0 0.0
    %1855 = vmatprep.subr.mxu0 0.0
    %1856 = vmatpush1.msra.mxu0 0.0
    %1857 = vmatprep.subr.mxu0 0.0
    %1858 = vmatpush1.msra.mxu0 0.0
    %1859 = vmatprep.subr.mxu0 0.0
    %1860 = vmatpush1.msra.mxu0 0.0
    %1861 = vmatprep.subr.mxu0 0.0
    %1862 = vmatpush1.msra.mxu0 0.0
    %1863 = vmatprep.subr.mxu0 %v1576
    %1864 = vmatpush1.msra.mxu0 %v1575
    %1865 = vmatprep.subr.mxu0 %v1568
    %1866 = vmatpush1.msra.mxu0 %v1567
    %1867 = vmatprep.subr.mxu0 0.0
    %1868 = vmatpush2.msra.mxu0 0.0
    %1869 = vmatprep.subr.mxu0 0.0
    %1870 = vmatpush2.msra.mxu0 0.0
    %1871 = vmatprep.subr.mxu0 0.0
    %1872 = vmatpush2.msra.mxu0 0.0
    %1873 = vmatprep.subr.mxu0 0.0
    %1874 = vmatpush2.msra.mxu0 0.0
    %1875 = vmatprep.subr.mxu0 0.0
    %1876 = vmatpush2.msra.mxu0 0.0
    %1877 = vmatprep.subr.mxu0 0.0
    %1878 = vmatpush2.msra.mxu0 0.0
    %1879 = vmatprep.subr.mxu0 0.0
    %1880 = vmatpush2.msra.mxu0 0.0
    %1881 = vmatprep.subr.mxu0 0.0
    %1882 = vmatpush2.msra.mxu0 0.0
    %1883 = vmatprep.subr.mxu0 0.0
    %1884 = vmatpush2.msra.mxu0 0.0
    %1885 = vmatprep.subr.mxu0 0.0
    %1886 = vmatpush2.msra.mxu0 0.0
    %1887 = vmatprep.subr.mxu0 0.0
    %1888 = vmatpush2.msra.mxu0 0.0
    %1889 = vmatprep.subr.mxu0 0.0
    %1890 = vmatpush2.msra.mxu0 0.0
    %1891 = vmatprep.subr.mxu0 0.0
    %1892 = vmatpush2.msra.mxu0 0.0
    %1893 = vmatprep.subr.mxu0 0.0
    %1894 = vmatpush2.msra.mxu0 0.0
    %1895 = vmatprep.subr.mxu0 0.0
    %1896 = vmatpush2.msra.mxu0 0.0
    %1897 = vmatprep.subr.mxu0 0.0
    %1898 = vmatpush2.msra.mxu0 0.0
    %1899 = vmatprep.mubr.f32.mxu0 0.0
    %1900 = vmatmul.mubr.f32.gmra.mxu0 %v1620
    %v1901 = vpop.f32.mrf.mxu0
    %v1902 = vadd.f32 %v1606, %v1901
    %v1903 = vpop.f32.mrf.mxu0
    %v1904 = vadd.f32 %v1610, %v1903
    %1905 = vdwg.mxu0
    %v1906 = vld [vmem:[#allocation2] sm:$0x1]
    %v1908 = vlaneseq
    %v1909 = vshrl.u32 %v1908, 7
    %v1910 = vsub.s32 0, %v1909
    %v1911 = vrot.slane %v1906, %v1910
    %v1913 = vadd.f32 %v1911, 0.0
    %v1914 = vld [vmem:[#allocation23] sm:$0x1]
    %v1915 = vld [vmem:[#allocation21] sm:$0x1]
    %v1917 = vlaneseq
    %v1918 = vshrl.u32 %v1917, 7
    %v1919 = vsub.s32 0, %v1918
    %v1920 = vrot.slane %v1915, %v1919
    %v1922 = vadd.f32 %v1221, %v1920
    %v1924 = vlaneseq
    %v1925 = vshrl.u32 %v1924, 7
    %v1926 = vsub.s32 0, %v1925
    %v1927 = vrot.slane %v1914, %v1926
    %v1929 = vmul.f32 %v1927, %v1922
    %v1930 = vld [vmem:[#allocation24] sm:$0xff]
    %v1931 = vld [vmem:[#allocation24 + $0x8] sm:$0xff]
    %v1933 = vsel %vm1232, %v1929, 0
    %1935 = vmatprep.subr.mxu0 0.0
    %1936 = vmatpush1.msra.mxu0 0.0
    %1937 = vmatprep.subr.mxu0 0.0
    %1938 = vmatpush1.msra.mxu0 0.0
    %1939 = vmatprep.subr.mxu0 0.0
    %1940 = vmatpush1.msra.mxu0 0.0
    %1941 = vmatprep.subr.mxu0 0.0
    %1942 = vmatpush1.msra.mxu0 0.0
    %1943 = vmatprep.subr.mxu0 0.0
    %1944 = vmatpush1.msra.mxu0 0.0
    %1945 = vmatprep.subr.mxu0 0.0
    %1946 = vmatpush1.msra.mxu0 0.0
    %1947 = vmatprep.subr.mxu0 0.0
    %1948 = vmatpush1.msra.mxu0 0.0
    %1949 = vmatprep.subr.mxu0 0.0
    %1950 = vmatpush1.msra.mxu0 0.0
    %1951 = vmatprep.subr.mxu0 0.0
    %1952 = vmatpush1.msra.mxu0 0.0
    %1953 = vmatprep.subr.mxu0 0.0
    %1954 = vmatpush1.msra.mxu0 0.0
    %1955 = vmatprep.subr.mxu0 0.0
    %1956 = vmatpush1.msra.mxu0 0.0
    %1957 = vmatprep.subr.mxu0 0.0
    %1958 = vmatpush1.msra.mxu0 0.0
    %1959 = vmatprep.subr.mxu0 0.0
    %1960 = vmatpush1.msra.mxu0 0.0
    %1961 = vmatprep.subr.mxu0 0.0
    %1962 = vmatpush1.msra.mxu0 0.0
    %1963 = vmatprep.subr.mxu0 0.0
    %1964 = vmatpush1.msra.mxu0 %v1931
    %1965 = vmatprep.subr.mxu0 0.0
    %1966 = vmatpush1.msra.mxu0 %v1930
    %1967 = vmatprep.subr.mxu0 0.0
    %1968 = vmatpush2.msra.mxu0 0.0
    %1969 = vmatprep.subr.mxu0 0.0
    %1970 = vmatpush2.msra.mxu0 0.0
    %1971 = vmatprep.subr.mxu0 0.0
    %1972 = vmatpush2.msra.mxu0 0.0
    %1973 = vmatprep.subr.mxu0 0.0
    %1974 = vmatpush2.msra.mxu0 0.0
    %1975 = vmatprep.subr.mxu0 0.0
    %1976 = vmatpush2.msra.mxu0 0.0
    %1977 = vmatprep.subr.mxu0 0.0
    %1978 = vmatpush2.msra.mxu0 0.0
    %1979 = vmatprep.subr.mxu0 0.0
    %1980 = vmatpush2.msra.mxu0 0.0
    %1981 = vmatprep.subr.mxu0 0.0
    %1982 = vmatpush2.msra.mxu0 0.0
    %1983 = vmatprep.subr.mxu0 0.0
    %1984 = vmatpush2.msra.mxu0 0.0
    %1985 = vmatprep.subr.mxu0 0.0
    %1986 = vmatpush2.msra.mxu0 0.0
    %1987 = vmatprep.subr.mxu0 0.0
    %1988 = vmatpush2.msra.mxu0 0.0
    %1989 = vmatprep.subr.mxu0 0.0
    %1990 = vmatpush2.msra.mxu0 0.0
    %1991 = vmatprep.subr.mxu0 0.0
    %1992 = vmatpush2.msra.mxu0 0.0
    %1993 = vmatprep.subr.mxu0 0.0
    %1994 = vmatpush2.msra.mxu0 0.0
    %1995 = vmatprep.subr.mxu0 0.0
    %1996 = vmatpush2.msra.mxu0 0.0
    %1997 = vmatprep.subr.mxu0 0.0
    %1998 = vmatpush2.msra.mxu0 0.0
    %1999 = vmatprep.mubr.f32.mxu0 0.0
    %2000 = vmatmul.mubr.f32.gmra.mxu0 %v1933
    %v2001 = vpop.f32.mrf.mxu0
    %v2002 = vadd.f32 %v1689, %v2001
    %v2003 = vpop.f32.mrf.mxu0
    %2004 = vdwg.mxu0
    %vm2005 = vcmp.ge.f32.partialorder %v2002, 0.0
    %v2006 = vmul.f32 %v2002, 0.01
    %v2007 = vsel %vm2005, %v2002, %v2006
    %v2008 = vld [vmem:[#allocation26] sm:$0xff]
    %v2009 = vld [vmem:[#allocation26 + $0x8] sm:$0xff]
    %v2010 = vld [vmem:[#allocation26 + $0x10] sm:$0xff]
    %v2011 = vld [vmem:[#allocation26 + $0x18] sm:$0xff]
    %v2012 = vld [vmem:[#allocation26 + $0x20] sm:$0xff]
    %v2013 = vld [vmem:[#allocation26 + $0x28] sm:$0xff]
    %v2014 = vld [vmem:[#allocation26 + $0x30] sm:$0xff]
    %v2015 = vld [vmem:[#allocation26 + $0x38] sm:$0xff]
    %v2016 = vld [vmem:[#allocation26 + $0x40] sm:$0xff]
    %v2017 = vld [vmem:[#allocation26 + $0x48] sm:$0xff]
    %v2018 = vld [vmem:[#allocation26 + $0x50] sm:$0xff]
    %v2019 = vld [vmem:[#allocation26 + $0x58] sm:$0xff]
    %v2020 = vld [vmem:[#allocation26 + $0x60] sm:$0xff]
    %v2021 = vld [vmem:[#allocation26 + $0x68] sm:$0xff]
    %v2022 = vld [vmem:[#allocation26 + $0x70] sm:$0xff]
    %v2023 = vld [vmem:[#allocation26 + $0x78] sm:$0xff]
    %v2024 = vld [vmem:[#allocation27] sm:$0x1]
    %v2026 = vlaneseq
    %v2027 = vshrl.u32 %v2026, 7
    %v2028 = vsub.s32 0, %v2027
    %v2029 = vrot.slane %v2024, %v2028
    %2031 = vmatprep.subr.mxu0 0.0
    %2032 = vmatpush1.msra.mxu0 %v2023
    %2033 = vmatprep.subr.mxu0 0.0
    %2034 = vmatpush1.msra.mxu0 %v2022
    %2035 = vmatprep.subr.mxu0 0.0
    %2036 = vmatpush1.msra.mxu0 %v2021
    %2037 = vmatprep.subr.mxu0 0.0
    %2038 = vmatpush1.msra.mxu0 %v2020
    %2039 = vmatprep.subr.mxu0 0.0
    %2040 = vmatpush1.msra.mxu0 %v2019
    %2041 = vmatprep.subr.mxu0 0.0
    %2042 = vmatpush1.msra.mxu0 %v2018
    %2043 = vmatprep.subr.mxu0 0.0
    %2044 = vmatpush1.msra.mxu0 %v2017
    %2045 = vmatprep.subr.mxu0 0.0
    %2046 = vmatpush1.msra.mxu0 %v2016
    %2047 = vmatprep.subr.mxu0 0.0
    %2048 = vmatpush1.msra.mxu0 %v2015
    %2049 = vmatprep.subr.mxu0 0.0
    %2050 = vmatpush1.msra.mxu0 %v2014
    %2051 = vmatprep.subr.mxu0 0.0
    %2052 = vmatpush1.msra.mxu0 %v2013
    %2053 = vmatprep.subr.mxu0 0.0
    %2054 = vmatpush1.msra.mxu0 %v2012
    %2055 = vmatprep.subr.mxu0 0.0
    %2056 = vmatpush1.msra.mxu0 %v2011
    %2057 = vmatprep.subr.mxu0 0.0
    %2058 = vmatpush1.msra.mxu0 %v2010
    %2059 = vmatprep.subr.mxu0 0.0
    %2060 = vmatpush1.msra.mxu0 %v2009
    %2061 = vmatprep.subr.mxu0 0.0
    %2062 = vmatpush1.msra.mxu0 %v2008
    %2063 = vmatprep.subr.mxu0 0.0
    %2064 = vmatpush2.msra.mxu0 0.0
    %2065 = vmatprep.subr.mxu0 0.0
    %2066 = vmatpush2.msra.mxu0 0.0
    %2067 = vmatprep.subr.mxu0 0.0
    %2068 = vmatpush2.msra.mxu0 0.0
    %2069 = vmatprep.subr.mxu0 0.0
    %2070 = vmatpush2.msra.mxu0 0.0
    %2071 = vmatprep.subr.mxu0 0.0
    %2072 = vmatpush2.msra.mxu0 0.0
    %2073 = vmatprep.subr.mxu0 0.0
    %2074 = vmatpush2.msra.mxu0 0.0
    %2075 = vmatprep.subr.mxu0 0.0
    %2076 = vmatpush2.msra.mxu0 0.0
    %2077 = vmatprep.subr.mxu0 0.0
    %2078 = vmatpush2.msra.mxu0 0.0
    %2079 = vmatprep.subr.mxu0 0.0
    %2080 = vmatpush2.msra.mxu0 0.0
    %2081 = vmatprep.subr.mxu0 0.0
    %2082 = vmatpush2.msra.mxu0 0.0
    %2083 = vmatprep.subr.mxu0 0.0
    %2084 = vmatpush2.msra.mxu0 0.0
    %2085 = vmatprep.subr.mxu0 0.0
    %2086 = vmatpush2.msra.mxu0 0.0
    %2087 = vmatprep.subr.mxu0 0.0
    %2088 = vmatpush2.msra.mxu0 0.0
    %2089 = vmatprep.subr.mxu0 0.0
    %2090 = vmatpush2.msra.mxu0 0.0
    %2091 = vmatprep.subr.mxu0 0.0
    %2092 = vmatpush2.msra.mxu0 0.0
    %2093 = vmatprep.subr.mxu0 0.0
    %2094 = vmatpush2.msra.mxu0 0.0
    %2095 = vmatprep.mubr.f32.mxu0 0.0
    %2096 = vmatmul.mubr.f32.gmra.mxu0 %v2007
    %v2097 = vpop.f32.mrf.mxu0
    %v2098 = vadd.f32 %v2029, %v2097
    %v2099 = vpop.f32.mrf.mxu0
    %2100 = vdwg.mxu0
    %vm2101 = vcmp.ge.f32.partialorder %v2098, 0.0
    %v2102 = vmul.f32 %v2098, 0.01
    %v2103 = vsel %vm2101, %v2098, %v2102
    %v2104 = vld [vmem:[#allocation29] sm:$0xff]
    %v2105 = vld [vmem:[#allocation29 + $0x8] sm:$0xff]
    %v2106 = vld [vmem:[#allocation29 + $0x10] sm:$0xff]
    %v2107 = vld [vmem:[#allocation29 + $0x18] sm:$0xff]
    %v2108 = vld [vmem:[#allocation29 + $0x20] sm:$0xff]
    %v2109 = vld [vmem:[#allocation29 + $0x28] sm:$0xff]
    %v2110 = vld [vmem:[#allocation29 + $0x30] sm:$0xff]
    %v2111 = vld [vmem:[#allocation29 + $0x38] sm:$0xff]
    %v2112 = vld [vmem:[#allocation29 + $0x40] sm:$0xff]
    %v2113 = vld [vmem:[#allocation29 + $0x48] sm:$0xff]
    %v2114 = vld [vmem:[#allocation29 + $0x50] sm:$0xff]
    %v2115 = vld [vmem:[#allocation29 + $0x58] sm:$0xff]
    %v2116 = vld [vmem:[#allocation29 + $0x60] sm:$0xff]
    %v2117 = vld [vmem:[#allocation29 + $0x68] sm:$0xff]
    %v2118 = vld [vmem:[#allocation29 + $0x70] sm:$0xff]
    %v2119 = vld [vmem:[#allocation29 + $0x78] sm:$0xff]
    %v2120 = vld [vmem:[#allocation30] sm:$0x1]
    %v2122 = vlaneseq
    %v2123 = vshrl.u32 %v2122, 7
    %v2124 = vsub.s32 0, %v2123
    %v2125 = vrot.slane %v2120, %v2124
    %2127 = vmatprep.subr.mxu0 0.0
    %2128 = vmatpush1.msra.mxu0 %v2119
    %2129 = vmatprep.subr.mxu0 0.0
    %2130 = vmatpush1.msra.mxu0 %v2118
    %2131 = vmatprep.subr.mxu0 0.0
    %2132 = vmatpush1.msra.mxu0 %v2117
    %2133 = vmatprep.subr.mxu0 0.0
    %2134 = vmatpush1.msra.mxu0 %v2116
    %2135 = vmatprep.subr.mxu0 0.0
    %2136 = vmatpush1.msra.mxu0 %v2115
    %2137 = vmatprep.subr.mxu0 0.0
    %2138 = vmatpush1.msra.mxu0 %v2114
    %2139 = vmatprep.subr.mxu0 0.0
    %2140 = vmatpush1.msra.mxu0 %v2113
    %2141 = vmatprep.subr.mxu0 0.0
    %2142 = vmatpush1.msra.mxu0 %v2112
    %2143 = vmatprep.subr.mxu0 0.0
    %2144 = vmatpush1.msra.mxu0 %v2111
    %2145 = vmatprep.subr.mxu0 0.0
    %2146 = vmatpush1.msra.mxu0 %v2110
    %2147 = vmatprep.subr.mxu0 0.0
    %2148 = vmatpush1.msra.mxu0 %v2109
    %2149 = vmatprep.subr.mxu0 0.0
    %2150 = vmatpush1.msra.mxu0 %v2108
    %2151 = vmatprep.subr.mxu0 0.0
    %2152 = vmatpush1.msra.mxu0 %v2107
    %2153 = vmatprep.subr.mxu0 0.0
    %2154 = vmatpush1.msra.mxu0 %v2106
    %2155 = vmatprep.subr.mxu0 0.0
    %2156 = vmatpush1.msra.mxu0 %v2105
    %2157 = vmatprep.subr.mxu0 0.0
    %2158 = vmatpush1.msra.mxu0 %v2104
    %2159 = vmatprep.subr.mxu0 0.0
    %2160 = vmatpush2.msra.mxu0 0.0
    %2161 = vmatprep.subr.mxu0 0.0
    %2162 = vmatpush2.msra.mxu0 0.0
    %2163 = vmatprep.subr.mxu0 0.0
    %2164 = vmatpush2.msra.mxu0 0.0
    %2165 = vmatprep.subr.mxu0 0.0
    %2166 = vmatpush2.msra.mxu0 0.0
    %2167 = vmatprep.subr.mxu0 0.0
    %2168 = vmatpush2.msra.mxu0 0.0
    %2169 = vmatprep.subr.mxu0 0.0
    %2170 = vmatpush2.msra.mxu0 0.0
    %2171 = vmatprep.subr.mxu0 0.0
    %2172 = vmatpush2.msra.mxu0 0.0
    %2173 = vmatprep.subr.mxu0 0.0
    %2174 = vmatpush2.msra.mxu0 0.0
    %2175 = vmatprep.subr.mxu0 0.0
    %2176 = vmatpush2.msra.mxu0 0.0
    %2177 = vmatprep.subr.mxu0 0.0
    %2178 = vmatpush2.msra.mxu0 0.0
    %2179 = vmatprep.subr.mxu0 0.0
    %2180 = vmatpush2.msra.mxu0 0.0
    %2181 = vmatprep.subr.mxu0 0.0
    %2182 = vmatpush2.msra.mxu0 0.0
    %2183 = vmatprep.subr.mxu0 0.0
    %2184 = vmatpush2.msra.mxu0 0.0
    %2185 = vmatprep.subr.mxu0 0.0
    %2186 = vmatpush2.msra.mxu0 0.0
    %2187 = vmatprep.subr.mxu0 0.0
    %2188 = vmatpush2.msra.mxu0 0.0
    %2189 = vmatprep.subr.mxu0 0.0
    %2190 = vmatpush2.msra.mxu0 0.0
    %2191 = vmatprep.mubr.f32.mxu0 0.0
    %2192 = vmatmul.mubr.f32.gmra.mxu0 %v2103
    %v2193 = vpop.f32.mrf.mxu0
    %v2194 = vadd.f32 %v2125, %v2193
    %v2195 = vpop.f32.mrf.mxu0
    %2196 = vdwg.mxu0
    %vm2197 = vcmp.ge.f32.partialorder %v2194, 0.0
    %v2198 = vmul.f32 %v2194, 0.01
    %v2199 = vsel %vm2197, %v2194, %v2198
    %v2200 = vld [vmem:[#allocation32] sm:$0xff]
    %v2201 = vld [vmem:[#allocation32 + $0x8] sm:$0xff]
    %v2202 = vld [vmem:[#allocation32 + $0x10] sm:$0xff]
    %v2203 = vld [vmem:[#allocation32 + $0x18] sm:$0xff]
    %v2204 = vld [vmem:[#allocation32 + $0x20] sm:$0xff]
    %v2205 = vld [vmem:[#allocation32 + $0x28] sm:$0xff]
    %v2206 = vld [vmem:[#allocation32 + $0x30] sm:$0xff]
    %v2207 = vld [vmem:[#allocation32 + $0x38] sm:$0xff]
    %v2208 = vld [vmem:[#allocation32 + $0x40] sm:$0xff]
    %v2209 = vld [vmem:[#allocation32 + $0x48] sm:$0xff]
    %v2210 = vld [vmem:[#allocation32 + $0x50] sm:$0xff]
    %v2211 = vld [vmem:[#allocation32 + $0x58] sm:$0xff]
    %v2212 = vld [vmem:[#allocation32 + $0x60] sm:$0xff]
    %v2213 = vld [vmem:[#allocation32 + $0x68] sm:$0xff]
    %v2214 = vld [vmem:[#allocation32 + $0x70] sm:$0xff]
    %v2215 = vld [vmem:[#allocation32 + $0x78] sm:$0xff]
    %v2216 = vld [vmem:[#allocation32 + $0x80] sm:$0xff]
    %v2217 = vld [vmem:[#allocation32 + $0x88] sm:$0xff]
    %v2218 = vld [vmem:[#allocation32 + $0x90] sm:$0xff]
    %v2219 = vld [vmem:[#allocation32 + $0x98] sm:$0xff]
    %v2220 = vld [vmem:[#allocation32 + $0xa0] sm:$0xff]
    %v2221 = vld [vmem:[#allocation32 + $0xa8] sm:$0xff]
    %v2222 = vld [vmem:[#allocation32 + $0xb0] sm:$0xff]
    %v2223 = vld [vmem:[#allocation32 + $0xb8] sm:$0xff]
    %v2224 = vld [vmem:[#allocation32 + $0xc0] sm:$0xff]
    %v2225 = vld [vmem:[#allocation32 + $0xc8] sm:$0xff]
    %v2226 = vld [vmem:[#allocation32 + $0xd0] sm:$0xff]
    %v2227 = vld [vmem:[#allocation32 + $0xd8] sm:$0xff]
    %v2228 = vld [vmem:[#allocation32 + $0xe0] sm:$0xff]
    %v2229 = vld [vmem:[#allocation32 + $0xe8] sm:$0xff]
    %v2230 = vld [vmem:[#allocation32 + $0xf0] sm:$0xff]
    %v2231 = vld [vmem:[#allocation32 + $0xf8] sm:$0xff]
    %v2232 = vld [vmem:[#allocation33] sm:$0x3]
    %v2234 = vlaneseq
    %v2235 = vshrl.u32 %v2234, 7
    %v2236 = vsub.s32 0, %v2235
    %v2237 = vrot.slane %v2232, %v2236
    %v2238 = vlaneseq
    %v2239 = vshrl.u32 %v2238, 7
    %v2240 = vsub.s32 1, %v2239
    %v2241 = vrot.slane %v2232, %v2240
    %2244 = vmatprep.subr.mxu0 %v2231
    %2245 = vmatpush1.msra.mxu0 %v2230
    %2246 = vmatprep.subr.mxu0 %v2229
    %2247 = vmatpush1.msra.mxu0 %v2228
    %2248 = vmatprep.subr.mxu0 %v2227
    %2249 = vmatpush1.msra.mxu0 %v2226
    %2250 = vmatprep.subr.mxu0 %v2225
    %2251 = vmatpush1.msra.mxu0 %v2224
    %2252 = vmatprep.subr.mxu0 %v2223
    %2253 = vmatpush1.msra.mxu0 %v2222
    %2254 = vmatprep.subr.mxu0 %v2221
    %2255 = vmatpush1.msra.mxu0 %v2220
    %2256 = vmatprep.subr.mxu0 %v2219
    %2257 = vmatpush1.msra.mxu0 %v2218
    %2258 = vmatprep.subr.mxu0 %v2217
    %2259 = vmatpush1.msra.mxu0 %v2216
    %2260 = vmatprep.subr.mxu0 %v2215
    %2261 = vmatpush1.msra.mxu0 %v2214
    %2262 = vmatprep.subr.mxu0 %v2213
    %2263 = vmatpush1.msra.mxu0 %v2212
    %2264 = vmatprep.subr.mxu0 %v2211
    %2265 = vmatpush1.msra.mxu0 %v2210
    %2266 = vmatprep.subr.mxu0 %v2209
    %2267 = vmatpush1.msra.mxu0 %v2208
    %2268 = vmatprep.subr.mxu0 %v2207
    %2269 = vmatpush1.msra.mxu0 %v2206
    %2270 = vmatprep.subr.mxu0 %v2205
    %2271 = vmatpush1.msra.mxu0 %v2204
    %2272 = vmatprep.subr.mxu0 %v2203
    %2273 = vmatpush1.msra.mxu0 %v2202
    %2274 = vmatprep.subr.mxu0 %v2201
    %2275 = vmatpush1.msra.mxu0 %v2200
    %2276 = vmatprep.subr.mxu0 0.0
    %2277 = vmatpush2.msra.mxu0 0.0
    %2278 = vmatprep.subr.mxu0 0.0
    %2279 = vmatpush2.msra.mxu0 0.0
    %2280 = vmatprep.subr.mxu0 0.0
    %2281 = vmatpush2.msra.mxu0 0.0
    %2282 = vmatprep.subr.mxu0 0.0
    %2283 = vmatpush2.msra.mxu0 0.0
    %2284 = vmatprep.subr.mxu0 0.0
    %2285 = vmatpush2.msra.mxu0 0.0
    %2286 = vmatprep.subr.mxu0 0.0
    %2287 = vmatpush2.msra.mxu0 0.0
    %2288 = vmatprep.subr.mxu0 0.0
    %2289 = vmatpush2.msra.mxu0 0.0
    %2290 = vmatprep.subr.mxu0 0.0
    %2291 = vmatpush2.msra.mxu0 0.0
    %2292 = vmatprep.subr.mxu0 0.0
    %2293 = vmatpush2.msra.mxu0 0.0
    %2294 = vmatprep.subr.mxu0 0.0
    %2295 = vmatpush2.msra.mxu0 0.0
    %2296 = vmatprep.subr.mxu0 0.0
    %2297 = vmatpush2.msra.mxu0 0.0
    %2298 = vmatprep.subr.mxu0 0.0
    %2299 = vmatpush2.msra.mxu0 0.0
    %2300 = vmatprep.subr.mxu0 0.0
    %2301 = vmatpush2.msra.mxu0 0.0
    %2302 = vmatprep.subr.mxu0 0.0
    %2303 = vmatpush2.msra.mxu0 0.0
    %2304 = vmatprep.subr.mxu0 0.0
    %2305 = vmatpush2.msra.mxu0 0.0
    %2306 = vmatprep.subr.mxu0 0.0
    %2307 = vmatpush2.msra.mxu0 0.0
    %2308 = vmatprep.mubr.f32.mxu0 0.0
    %2309 = vmatmul.mubr.f32.gmra.mxu0 %v2199
    %v2310 = vpop.f32.mrf.mxu0
    %v2311 = vadd.f32 %v2237, %v2310
    %v2312 = vpop.f32.mrf.mxu0
    %v2313 = vadd.f32 %v2241, %v2312
    %2314 = vdwg.mxu0
    %v2315 = vtanh.pop %v2311
    %v2316 = vmul.f32 %v2315, 1.442695
    %v2317 = vpow.pop %v2316
    %v2318 = vmul.f32 %v1929, %v2317
    %v2319 = vadd.f32 %v2318, %v2313
    %vm2320 = vcmask 123904
    %v2321 = vsel %vm2320, %v2315, 0.0
    %2322 = vadd.xlane.f32.xlu0 %v2321
    %v2323 = vpop.xlane.xlu0 %2322
    %v2324 = vadd.f32 %v1913, %v2323
    %v2325 = vld [vmem:[#allocation35] sm:$0xff]
    %v2326 = vld [vmem:[#allocation35 + $0x8] sm:$0xff]
    %v2328 = vsel %vm1232, %v2319, 0
    %2330 = vmatprep.subr.mxu0 0.0
    %2331 = vmatpush1.msra.mxu0 0.0
    %2332 = vmatprep.subr.mxu0 0.0
    %2333 = vmatpush1.msra.mxu0 0.0
    %2334 = vmatprep.subr.mxu0 0.0
    %2335 = vmatpush1.msra.mxu0 0.0
    %2336 = vmatprep.subr.mxu0 0.0
    %2337 = vmatpush1.msra.mxu0 0.0
    %2338 = vmatprep.subr.mxu0 0.0
    %2339 = vmatpush1.msra.mxu0 0.0
    %2340 = vmatprep.subr.mxu0 0.0
    %2341 = vmatpush1.msra.mxu0 0.0
    %2342 = vmatprep.subr.mxu0 0.0
    %2343 = vmatpush1.msra.mxu0 0.0
    %2344 = vmatprep.subr.mxu0 0.0
    %2345 = vmatpush1.msra.mxu0 0.0
    %2346 = vmatprep.subr.mxu0 0.0
    %2347 = vmatpush1.msra.mxu0 0.0
    %2348 = vmatprep.subr.mxu0 0.0
    %2349 = vmatpush1.msra.mxu0 0.0
    %2350 = vmatprep.subr.mxu0 0.0
    %2351 = vmatpush1.msra.mxu0 0.0
    %2352 = vmatprep.subr.mxu0 0.0
    %2353 = vmatpush1.msra.mxu0 0.0
    %2354 = vmatprep.subr.mxu0 0.0
    %2355 = vmatpush1.msra.mxu0 0.0
    %2356 = vmatprep.subr.mxu0 0.0
    %2357 = vmatpush1.msra.mxu0 0.0
    %2358 = vmatprep.subr.mxu0 0.0
    %2359 = vmatpush1.msra.mxu0 %v2326
    %2360 = vmatprep.subr.mxu0 0.0
    %2361 = vmatpush1.msra.mxu0 %v2325
    %2362 = vmatprep.subr.mxu0 0.0
    %2363 = vmatpush2.msra.mxu0 0.0
    %2364 = vmatprep.subr.mxu0 0.0
    %2365 = vmatpush2.msra.mxu0 0.0
    %2366 = vmatprep.subr.mxu0 0.0
    %2367 = vmatpush2.msra.mxu0 0.0
    %2368 = vmatprep.subr.mxu0 0.0
    %2369 = vmatpush2.msra.mxu0 0.0
    %2370 = vmatprep.subr.mxu0 0.0
    %2371 = vmatpush2.msra.mxu0 0.0
    %2372 = vmatprep.subr.mxu0 0.0
    %2373 = vmatpush2.msra.mxu0 0.0
    %2374 = vmatprep.subr.mxu0 0.0
    %2375 = vmatpush2.msra.mxu0 0.0
    %2376 = vmatprep.subr.mxu0 0.0
    %2377 = vmatpush2.msra.mxu0 0.0
    %2378 = vmatprep.subr.mxu0 0.0
    %2379 = vmatpush2.msra.mxu0 0.0
    %2380 = vmatprep.subr.mxu0 0.0
    %2381 = vmatpush2.msra.mxu0 0.0
    %2382 = vmatprep.subr.mxu0 0.0
    %2383 = vmatpush2.msra.mxu0 0.0
    %2384 = vmatprep.subr.mxu0 0.0
    %2385 = vmatpush2.msra.mxu0 0.0
    %2386 = vmatprep.subr.mxu0 0.0
    %2387 = vmatpush2.msra.mxu0 0.0
    %2388 = vmatprep.subr.mxu0 0.0
    %2389 = vmatpush2.msra.mxu0 0.0
    %2390 = vmatprep.subr.mxu0 0.0
    %2391 = vmatpush2.msra.mxu0 0.0
    %2392 = vmatprep.subr.mxu0 0.0
    %2393 = vmatpush2.msra.mxu0 0.0
    %2394 = vmatprep.mubr.f32.mxu0 0.0
    %2395 = vmatmul.mubr.f32.gmra.mxu0 %v2328
    %v2396 = vpop.f32.mrf.mxu0
    %v2397 = vadd.f32 %v1691, %v2396
    %v2398 = vpop.f32.mrf.mxu0
    %2399 = vdwg.mxu0
    %vm2400 = vcmp.ge.f32.partialorder %v2397, 0.0
    %v2401 = vmul.f32 %v2397, 0.01
    %v2402 = vsel %vm2400, %v2397, %v2401
    %v2403 = vld [vmem:[#allocation36] sm:$0xff]
    %v2404 = vld [vmem:[#allocation36 + $0x8] sm:$0xff]
    %v2405 = vld [vmem:[#allocation36 + $0x10] sm:$0xff]
    %v2406 = vld [vmem:[#allocation36 + $0x18] sm:$0xff]
    %v2407 = vld [vmem:[#allocation36 + $0x20] sm:$0xff]
    %v2408 = vld [vmem:[#allocation36 + $0x28] sm:$0xff]
    %v2409 = vld [vmem:[#allocation36 + $0x30] sm:$0xff]
    %v2410 = vld [vmem:[#allocation36 + $0x38] sm:$0xff]
    %v2411 = vld [vmem:[#allocation36 + $0x40] sm:$0xff]
    %v2412 = vld [vmem:[#allocation36 + $0x48] sm:$0xff]
    %v2413 = vld [vmem:[#allocation36 + $0x50] sm:$0xff]
    %v2414 = vld [vmem:[#allocation36 + $0x58] sm:$0xff]
    %v2415 = vld [vmem:[#allocation36 + $0x60] sm:$0xff]
    %v2416 = vld [vmem:[#allocation36 + $0x68] sm:$0xff]
    %v2417 = vld [vmem:[#allocation36 + $0x70] sm:$0xff]
    %v2418 = vld [vmem:[#allocation36 + $0x78] sm:$0xff]
    %v2419 = vld [vmem:[#allocation38] sm:$0x1]
    %v2421 = vlaneseq
    %v2422 = vshrl.u32 %v2421, 7
    %v2423 = vsub.s32 0, %v2422
    %v2424 = vrot.slane %v2419, %v2423
    %2426 = vmatprep.subr.mxu0 0.0
    %2427 = vmatpush1.msra.mxu0 %v2418
    %2428 = vmatprep.subr.mxu0 0.0
    %2429 = vmatpush1.msra.mxu0 %v2417
    %2430 = vmatprep.subr.mxu0 0.0
    %2431 = vmatpush1.msra.mxu0 %v2416
    %2432 = vmatprep.subr.mxu0 0.0
    %2433 = vmatpush1.msra.mxu0 %v2415
    %2434 = vmatprep.subr.mxu0 0.0
    %2435 = vmatpush1.msra.mxu0 %v2414
    %2436 = vmatprep.subr.mxu0 0.0
    %2437 = vmatpush1.msra.mxu0 %v2413
    %2438 = vmatprep.subr.mxu0 0.0
    %2439 = vmatpush1.msra.mxu0 %v2412
    %2440 = vmatprep.subr.mxu0 0.0
    %2441 = vmatpush1.msra.mxu0 %v2411
    %2442 = vmatprep.subr.mxu0 0.0
    %2443 = vmatpush1.msra.mxu0 %v2410
    %2444 = vmatprep.subr.mxu0 0.0
    %2445 = vmatpush1.msra.mxu0 %v2409
    %2446 = vmatprep.subr.mxu0 0.0
    %2447 = vmatpush1.msra.mxu0 %v2408
    %2448 = vmatprep.subr.mxu0 0.0
    %2449 = vmatpush1.msra.mxu0 %v2407
    %2450 = vmatprep.subr.mxu0 0.0
    %2451 = vmatpush1.msra.mxu0 %v2406
    %2452 = vmatprep.subr.mxu0 0.0
    %2453 = vmatpush1.msra.mxu0 %v2405
    %2454 = vmatprep.subr.mxu0 0.0
    %2455 = vmatpush1.msra.mxu0 %v2404
    %2456 = vmatprep.subr.mxu0 0.0
    %2457 = vmatpush1.msra.mxu0 %v2403
    %2458 = vmatprep.subr.mxu0 0.0
    %2459 = vmatpush2.msra.mxu0 0.0
    %2460 = vmatprep.subr.mxu0 0.0
    %2461 = vmatpush2.msra.mxu0 0.0
    %2462 = vmatprep.subr.mxu0 0.0
    %2463 = vmatpush2.msra.mxu0 0.0
    %2464 = vmatprep.subr.mxu0 0.0
    %2465 = vmatpush2.msra.mxu0 0.0
    %2466 = vmatprep.subr.mxu0 0.0
    %2467 = vmatpush2.msra.mxu0 0.0
    %2468 = vmatprep.subr.mxu0 0.0
    %2469 = vmatpush2.msra.mxu0 0.0
    %2470 = vmatprep.subr.mxu0 0.0
    %2471 = vmatpush2.msra.mxu0 0.0
    %2472 = vmatprep.subr.mxu0 0.0
    %2473 = vmatpush2.msra.mxu0 0.0
    %2474 = vmatprep.subr.mxu0 0.0
    %2475 = vmatpush2.msra.mxu0 0.0
    %2476 = vmatprep.subr.mxu0 0.0
    %2477 = vmatpush2.msra.mxu0 0.0
    %2478 = vmatprep.subr.mxu0 0.0
    %2479 = vmatpush2.msra.mxu0 0.0
    %2480 = vmatprep.subr.mxu0 0.0
    %2481 = vmatpush2.msra.mxu0 0.0
    %2482 = vmatprep.subr.mxu0 0.0
    %2483 = vmatpush2.msra.mxu0 0.0
    %2484 = vmatprep.subr.mxu0 0.0
    %2485 = vmatpush2.msra.mxu0 0.0
    %2486 = vmatprep.subr.mxu0 0.0
    %2487 = vmatpush2.msra.mxu0 0.0
    %2488 = vmatprep.subr.mxu0 0.0
    %2489 = vmatpush2.msra.mxu0 0.0
    %2490 = vmatprep.mubr.f32.mxu0 0.0
    %2491 = vmatmul.mubr.f32.gmra.mxu0 %v2402
    %v2492 = vpop.f32.mrf.mxu0
    %v2493 = vadd.f32 %v2424, %v2492
    %v2494 = vpop.f32.mrf.mxu0
    %2495 = vdwg.mxu0
    %vm2496 = vcmp.ge.f32.partialorder %v2493, 0.0
    %v2497 = vmul.f32 %v2493, 0.01
    %v2498 = vsel %vm2496, %v2493, %v2497
    %v2499 = vld [vmem:[#allocation39] sm:$0xff]
    %v2500 = vld [vmem:[#allocation39 + $0x8] sm:$0xff]
    %v2501 = vld [vmem:[#allocation39 + $0x10] sm:$0xff]
    %v2502 = vld [vmem:[#allocation39 + $0x18] sm:$0xff]
    %v2503 = vld [vmem:[#allocation39 + $0x20] sm:$0xff]
    %v2504 = vld [vmem:[#allocation39 + $0x28] sm:$0xff]
    %v2505 = vld [vmem:[#allocation39 + $0x30] sm:$0xff]
    %v2506 = vld [vmem:[#allocation39 + $0x38] sm:$0xff]
    %v2507 = vld [vmem:[#allocation39 + $0x40] sm:$0xff]
    %v2508 = vld [vmem:[#allocation39 + $0x48] sm:$0xff]
    %v2509 = vld [vmem:[#allocation39 + $0x50] sm:$0xff]
    %v2510 = vld [vmem:[#allocation39 + $0x58] sm:$0xff]
    %v2511 = vld [vmem:[#allocation39 + $0x60] sm:$0xff]
    %v2512 = vld [vmem:[#allocation39 + $0x68] sm:$0xff]
    %v2513 = vld [vmem:[#allocation39 + $0x70] sm:$0xff]
    %v2514 = vld [vmem:[#allocation39 + $0x78] sm:$0xff]
    %v2515 = vld [vmem:[#allocation41] sm:$0x1]
    %v2517 = vlaneseq
    %v2518 = vshrl.u32 %v2517, 7
    %v2519 = vsub.s32 0, %v2518
    %v2520 = vrot.slane %v2515, %v2519
    %2522 = vmatprep.subr.mxu0 0.0
    %2523 = vmatpush1.msra.mxu0 %v2514
    %2524 = vmatprep.subr.mxu0 0.0
    %2525 = vmatpush1.msra.mxu0 %v2513
    %2526 = vmatprep.subr.mxu0 0.0
    %2527 = vmatpush1.msra.mxu0 %v2512
    %2528 = vmatprep.subr.mxu0 0.0
    %2529 = vmatpush1.msra.mxu0 %v2511
    %2530 = vmatprep.subr.mxu0 0.0
    %2531 = vmatpush1.msra.mxu0 %v2510
    %2532 = vmatprep.subr.mxu0 0.0
    %2533 = vmatpush1.msra.mxu0 %v2509
    %2534 = vmatprep.subr.mxu0 0.0
    %2535 = vmatpush1.msra.mxu0 %v2508
    %2536 = vmatprep.subr.mxu0 0.0
    %2537 = vmatpush1.msra.mxu0 %v2507
    %2538 = vmatprep.subr.mxu0 0.0
    %2539 = vmatpush1.msra.mxu0 %v2506
    %2540 = vmatprep.subr.mxu0 0.0
    %2541 = vmatpush1.msra.mxu0 %v2505
    %2542 = vmatprep.subr.mxu0 0.0
    %2543 = vmatpush1.msra.mxu0 %v2504
    %2544 = vmatprep.subr.mxu0 0.0
    %2545 = vmatpush1.msra.mxu0 %v2503
    %2546 = vmatprep.subr.mxu0 0.0
    %2547 = vmatpush1.msra.mxu0 %v2502
    %2548 = vmatprep.subr.mxu0 0.0
    %2549 = vmatpush1.msra.mxu0 %v2501
    %2550 = vmatprep.subr.mxu0 0.0
    %2551 = vmatpush1.msra.mxu0 %v2500
    %2552 = vmatprep.subr.mxu0 0.0
    %2553 = vmatpush1.msra.mxu0 %v2499
    %2554 = vmatprep.subr.mxu0 0.0
    %2555 = vmatpush2.msra.mxu0 0.0
    %2556 = vmatprep.subr.mxu0 0.0
    %2557 = vmatpush2.msra.mxu0 0.0
    %2558 = vmatprep.subr.mxu0 0.0
    %2559 = vmatpush2.msra.mxu0 0.0
    %2560 = vmatprep.subr.mxu0 0.0
    %2561 = vmatpush2.msra.mxu0 0.0
    %2562 = vmatprep.subr.mxu0 0.0
    %2563 = vmatpush2.msra.mxu0 0.0
    %2564 = vmatprep.subr.mxu0 0.0
    %2565 = vmatpush2.msra.mxu0 0.0
    %2566 = vmatprep.subr.mxu0 0.0
    %2567 = vmatpush2.msra.mxu0 0.0
    %2568 = vmatprep.subr.mxu0 0.0
    %2569 = vmatpush2.msra.mxu0 0.0
    %2570 = vmatprep.subr.mxu0 0.0
    %2571 = vmatpush2.msra.mxu0 0.0
    %2572 = vmatprep.subr.mxu0 0.0
    %2573 = vmatpush2.msra.mxu0 0.0
    %2574 = vmatprep.subr.mxu0 0.0
    %2575 = vmatpush2.msra.mxu0 0.0
    %2576 = vmatprep.subr.mxu0 0.0
    %2577 = vmatpush2.msra.mxu0 0.0
    %2578 = vmatprep.subr.mxu0 0.0
    %2579 = vmatpush2.msra.mxu0 0.0
    %2580 = vmatprep.subr.mxu0 0.0
    %2581 = vmatpush2.msra.mxu0 0.0
    %2582 = vmatprep.subr.mxu0 0.0
    %2583 = vmatpush2.msra.mxu0 0.0
    %2584 = vmatprep.subr.mxu0 0.0
    %2585 = vmatpush2.msra.mxu0 0.0
    %2586 = vmatprep.mubr.f32.mxu0 0.0
    %2587 = vmatmul.mubr.f32.gmra.mxu0 %v2498
    %v2588 = vpop.f32.mrf.mxu0
    %v2589 = vadd.f32 %v2520, %v2588
    %v2590 = vpop.f32.mrf.mxu0
    %2591 = vdwg.mxu0
    %vm2592 = vcmp.ge.f32.partialorder %v2589, 0.0
    %v2593 = vmul.f32 %v2589, 0.01
    %v2594 = vsel %vm2592, %v2589, %v2593
    %v2595 = vld [vmem:[#allocation42] sm:$0xff]
    %v2596 = vld [vmem:[#allocation42 + $0x8] sm:$0xff]
    %v2597 = vld [vmem:[#allocation42 + $0x10] sm:$0xff]
    %v2598 = vld [vmem:[#allocation42 + $0x18] sm:$0xff]
    %v2599 = vld [vmem:[#allocation42 + $0x20] sm:$0xff]
    %v2600 = vld [vmem:[#allocation42 + $0x28] sm:$0xff]
    %v2601 = vld [vmem:[#allocation42 + $0x30] sm:$0xff]
    %v2602 = vld [vmem:[#allocation42 + $0x38] sm:$0xff]
    %v2603 = vld [vmem:[#allocation42 + $0x40] sm:$0xff]
    %v2604 = vld [vmem:[#allocation42 + $0x48] sm:$0xff]
    %v2605 = vld [vmem:[#allocation42 + $0x50] sm:$0xff]
    %v2606 = vld [vmem:[#allocation42 + $0x58] sm:$0xff]
    %v2607 = vld [vmem:[#allocation42 + $0x60] sm:$0xff]
    %v2608 = vld [vmem:[#allocation42 + $0x68] sm:$0xff]
    %v2609 = vld [vmem:[#allocation42 + $0x70] sm:$0xff]
    %v2610 = vld [vmem:[#allocation42 + $0x78] sm:$0xff]
    %v2611 = vld [vmem:[#allocation42 + $0x80] sm:$0xff]
    %v2612 = vld [vmem:[#allocation42 + $0x88] sm:$0xff]
    %v2613 = vld [vmem:[#allocation42 + $0x90] sm:$0xff]
    %v2614 = vld [vmem:[#allocation42 + $0x98] sm:$0xff]
    %v2615 = vld [vmem:[#allocation42 + $0xa0] sm:$0xff]
    %v2616 = vld [vmem:[#allocation42 + $0xa8] sm:$0xff]
    %v2617 = vld [vmem:[#allocation42 + $0xb0] sm:$0xff]
    %v2618 = vld [vmem:[#allocation42 + $0xb8] sm:$0xff]
    %v2619 = vld [vmem:[#allocation42 + $0xc0] sm:$0xff]
    %v2620 = vld [vmem:[#allocation42 + $0xc8] sm:$0xff]
    %v2621 = vld [vmem:[#allocation42 + $0xd0] sm:$0xff]
    %v2622 = vld [vmem:[#allocation42 + $0xd8] sm:$0xff]
    %v2623 = vld [vmem:[#allocation42 + $0xe0] sm:$0xff]
    %v2624 = vld [vmem:[#allocation42 + $0xe8] sm:$0xff]
    %v2625 = vld [vmem:[#allocation42 + $0xf0] sm:$0xff]
    %v2626 = vld [vmem:[#allocation42 + $0xf8] sm:$0xff]
    %v2627 = vld [vmem:[#allocation44] sm:$0x3]
    %v2629 = vlaneseq
    %v2630 = vshrl.u32 %v2629, 7
    %v2631 = vsub.s32 0, %v2630
    %v2632 = vrot.slane %v2627, %v2631
    %v2633 = vlaneseq
    %v2634 = vshrl.u32 %v2633, 7
    %v2635 = vsub.s32 1, %v2634
    %v2636 = vrot.slane %v2627, %v2635
    %2639 = vmatprep.subr.mxu0 %v2626
    %2640 = vmatpush1.msra.mxu0 %v2625
    %2641 = vmatprep.subr.mxu0 %v2624
    %2642 = vmatpush1.msra.mxu0 %v2623
    %2643 = vmatprep.subr.mxu0 %v2622
    %2644 = vmatpush1.msra.mxu0 %v2621
    %2645 = vmatprep.subr.mxu0 %v2620
    %2646 = vmatpush1.msra.mxu0 %v2619
    %2647 = vmatprep.subr.mxu0 %v2618
    %2648 = vmatpush1.msra.mxu0 %v2617
    %2649 = vmatprep.subr.mxu0 %v2616
    %2650 = vmatpush1.msra.mxu0 %v2615
    %2651 = vmatprep.subr.mxu0 %v2614
    %2652 = vmatpush1.msra.mxu0 %v2613
    %2653 = vmatprep.subr.mxu0 %v2612
    %2654 = vmatpush1.msra.mxu0 %v2611
    %2655 = vmatprep.subr.mxu0 %v2610
    %2656 = vmatpush1.msra.mxu0 %v2609
    %2657 = vmatprep.subr.mxu0 %v2608
    %2658 = vmatpush1.msra.mxu0 %v2607
    %2659 = vmatprep.subr.mxu0 %v2606
    %2660 = vmatpush1.msra.mxu0 %v2605
    %2661 = vmatprep.subr.mxu0 %v2604
    %2662 = vmatpush1.msra.mxu0 %v2603
    %2663 = vmatprep.subr.mxu0 %v2602
    %2664 = vmatpush1.msra.mxu0 %v2601
    %2665 = vmatprep.subr.mxu0 %v2600
    %2666 = vmatpush1.msra.mxu0 %v2599
    %2667 = vmatprep.subr.mxu0 %v2598
    %2668 = vmatpush1.msra.mxu0 %v2597
    %2669 = vmatprep.subr.mxu0 %v2596
    %2670 = vmatpush1.msra.mxu0 %v2595
    %2671 = vmatprep.subr.mxu0 0.0
    %2672 = vmatpush2.msra.mxu0 0.0
    %2673 = vmatprep.subr.mxu0 0.0
    %2674 = vmatpush2.msra.mxu0 0.0
    %2675 = vmatprep.subr.mxu0 0.0
    %2676 = vmatpush2.msra.mxu0 0.0
    %2677 = vmatprep.subr.mxu0 0.0
    %2678 = vmatpush2.msra.mxu0 0.0
    %2679 = vmatprep.subr.mxu0 0.0
    %2680 = vmatpush2.msra.mxu0 0.0
    %2681 = vmatprep.subr.mxu0 0.0
    %2682 = vmatpush2.msra.mxu0 0.0
    %2683 = vmatprep.subr.mxu0 0.0
    %2684 = vmatpush2.msra.mxu0 0.0
    %2685 = vmatprep.subr.mxu0 0.0
    %2686 = vmatpush2.msra.mxu0 0.0
    %2687 = vmatprep.subr.mxu0 0.0
    %2688 = vmatpush2.msra.mxu0 0.0
    %2689 = vmatprep.subr.mxu0 0.0
    %2690 = vmatpush2.msra.mxu0 0.0
    %2691 = vmatprep.subr.mxu0 0.0
    %2692 = vmatpush2.msra.mxu0 0.0
    %2693 = vmatprep.subr.mxu0 0.0
    %2694 = vmatpush2.msra.mxu0 0.0
    %2695 = vmatprep.subr.mxu0 0.0
    %2696 = vmatpush2.msra.mxu0 0.0
    %2697 = vmatprep.subr.mxu0 0.0
    %2698 = vmatpush2.msra.mxu0 0.0
    %2699 = vmatprep.subr.mxu0 0.0
    %2700 = vmatpush2.msra.mxu0 0.0
    %2701 = vmatprep.subr.mxu0 0.0
    %2702 = vmatpush2.msra.mxu0 0.0
    %2703 = vmatprep.mubr.f32.mxu0 0.0
    %2704 = vmatmul.mubr.f32.gmra.mxu0 %v2594
    %v2705 = vpop.f32.mrf.mxu0
    %v2706 = vadd.f32 %v2632, %v2705
    %v2707 = vpop.f32.mrf.mxu0
    %v2708 = vadd.f32 %v2636, %v2707
    %2709 = vdwg.mxu0
    %v2710 = vtanh.pop %v2706
    %v2711 = vmul.f32 %v2710, 1.442695
    %v2712 = vpow.pop %v2711
    %v2713 = vmul.f32 %v2319, %v2712
    %v2714 = vadd.f32 %v2713, %v2708
    %v2715 = vsel %vm2320, %v2710, 0.0
    %2716 = vadd.xlane.f32.xlu0 %v2715
    %v2717 = vpop.xlane.xlu0 %2716
    %v2718 = vadd.f32 %v2324, %v2717
    %v2719 = vld [vmem:[#allocation47] sm:$0x1]
    %v2720 = vld [vmem:[#allocation45] sm:$0x1]
    %v2722 = vlaneseq
    %v2723 = vshrl.u32 %v2722, 7
    %v2724 = vsub.s32 0, %v2723
    %v2725 = vrot.slane %v2720, %v2724
    %v2727 = vadd.f32 %v2714, %v2725
    %v2729 = vlaneseq
    %v2730 = vshrl.u32 %v2729, 7
    %v2731 = vsub.s32 0, %v2730
    %v2732 = vrot.slane %v2719, %v2731
    %v2734 = vmul.f32 %v2732, %v2727
    %v2735 = vld [vmem:[#allocation48] sm:$0xff]
    %v2736 = vld [vmem:[#allocation48 + $0x8] sm:$0xff]
    %v2738 = vsel %vm1232, %v2734, 0
    %2740 = vmatprep.subr.mxu0 0.0
    %2741 = vmatpush1.msra.mxu0 0.0
    %2742 = vmatprep.subr.mxu0 0.0
    %2743 = vmatpush1.msra.mxu0 0.0
    %2744 = vmatprep.subr.mxu0 0.0
    %2745 = vmatpush1.msra.mxu0 0.0
    %2746 = vmatprep.subr.mxu0 0.0
    %2747 = vmatpush1.msra.mxu0 0.0
    %2748 = vmatprep.subr.mxu0 0.0
    %2749 = vmatpush1.msra.mxu0 0.0
    %2750 = vmatprep.subr.mxu0 0.0
    %2751 = vmatpush1.msra.mxu0 0.0
    %2752 = vmatprep.subr.mxu0 0.0
    %2753 = vmatpush1.msra.mxu0 0.0
    %2754 = vmatprep.subr.mxu0 0.0
    %2755 = vmatpush1.msra.mxu0 0.0
    %2756 = vmatprep.subr.mxu0 0.0
    %2757 = vmatpush1.msra.mxu0 0.0
    %2758 = vmatprep.subr.mxu0 0.0
    %2759 = vmatpush1.msra.mxu0 0.0
    %2760 = vmatprep.subr.mxu0 0.0
    %2761 = vmatpush1.msra.mxu0 0.0
    %2762 = vmatprep.subr.mxu0 0.0
    %2763 = vmatpush1.msra.mxu0 0.0
    %2764 = vmatprep.subr.mxu0 0.0
    %2765 = vmatpush1.msra.mxu0 0.0
    %2766 = vmatprep.subr.mxu0 0.0
    %2767 = vmatpush1.msra.mxu0 0.0
    %2768 = vmatprep.subr.mxu0 0.0
    %2769 = vmatpush1.msra.mxu0 %v2736
    %2770 = vmatprep.subr.mxu0 0.0
    %2771 = vmatpush1.msra.mxu0 %v2735
    %2772 = vmatprep.subr.mxu0 0.0
    %2773 = vmatpush2.msra.mxu0 0.0
    %2774 = vmatprep.subr.mxu0 0.0
    %2775 = vmatpush2.msra.mxu0 0.0
    %2776 = vmatprep.subr.mxu0 0.0
    %2777 = vmatpush2.msra.mxu0 0.0
    %2778 = vmatprep.subr.mxu0 0.0
    %2779 = vmatpush2.msra.mxu0 0.0
    %2780 = vmatprep.subr.mxu0 0.0
    %2781 = vmatpush2.msra.mxu0 0.0
    %2782 = vmatprep.subr.mxu0 0.0
    %2783 = vmatpush2.msra.mxu0 0.0
    %2784 = vmatprep.subr.mxu0 0.0
    %2785 = vmatpush2.msra.mxu0 0.0
    %2786 = vmatprep.subr.mxu0 0.0
    %2787 = vmatpush2.msra.mxu0 0.0
    %2788 = vmatprep.subr.mxu0 0.0
    %2789 = vmatpush2.msra.mxu0 0.0
    %2790 = vmatprep.subr.mxu0 0.0
    %2791 = vmatpush2.msra.mxu0 0.0
    %2792 = vmatprep.subr.mxu0 0.0
    %2793 = vmatpush2.msra.mxu0 0.0
    %2794 = vmatprep.subr.mxu0 0.0
    %2795 = vmatpush2.msra.mxu0 0.0
    %2796 = vmatprep.subr.mxu0 0.0
    %2797 = vmatpush2.msra.mxu0 0.0
    %2798 = vmatprep.subr.mxu0 0.0
    %2799 = vmatpush2.msra.mxu0 0.0
    %2800 = vmatprep.subr.mxu0 0.0
    %2801 = vmatpush2.msra.mxu0 0.0
    %2802 = vmatprep.subr.mxu0 0.0
    %2803 = vmatpush2.msra.mxu0 0.0
    %2804 = vmatprep.mubr.f32.mxu0 0.0
    %2805 = vmatmul.mubr.f32.gmra.mxu0 %v2738
    %v2806 = vpop.f32.mrf.mxu0
    %v2807 = vadd.f32 %v1760, %v2806
    %v2808 = vpop.f32.mrf.mxu0
    %2809 = vdwg.mxu0
    %vm2810 = vcmp.ge.f32.partialorder %v2807, 0.0
    %v2811 = vmul.f32 %v2807, 0.01
    %v2812 = vsel %vm2810, %v2807, %v2811
    %v2813 = vld [vmem:[#allocation50] sm:$0xff]
    %v2814 = vld [vmem:[#allocation50 + $0x8] sm:$0xff]
    %v2815 = vld [vmem:[#allocation50 + $0x10] sm:$0xff]
    %v2816 = vld [vmem:[#allocation50 + $0x18] sm:$0xff]
    %v2817 = vld [vmem:[#allocation50 + $0x20] sm:$0xff]
    %v2818 = vld [vmem:[#allocation50 + $0x28] sm:$0xff]
    %v2819 = vld [vmem:[#allocation50 + $0x30] sm:$0xff]
    %v2820 = vld [vmem:[#allocation50 + $0x38] sm:$0xff]
    %v2821 = vld [vmem:[#allocation50 + $0x40] sm:$0xff]
    %v2822 = vld [vmem:[#allocation50 + $0x48] sm:$0xff]
    %v2823 = vld [vmem:[#allocation50 + $0x50] sm:$0xff]
    %v2824 = vld [vmem:[#allocation50 + $0x58] sm:$0xff]
    %v2825 = vld [vmem:[#allocation50 + $0x60] sm:$0xff]
    %v2826 = vld [vmem:[#allocation50 + $0x68] sm:$0xff]
    %v2827 = vld [vmem:[#allocation50 + $0x70] sm:$0xff]
    %v2828 = vld [vmem:[#allocation50 + $0x78] sm:$0xff]
    %v2829 = vld [vmem:[#allocation51] sm:$0x1]
    %v2831 = vlaneseq
    %v2832 = vshrl.u32 %v2831, 7
    %v2833 = vsub.s32 0, %v2832
    %v2834 = vrot.slane %v2829, %v2833
    %2836 = vmatprep.subr.mxu0 0.0
    %2837 = vmatpush1.msra.mxu0 %v2828
    %2838 = vmatprep.subr.mxu0 0.0
    %2839 = vmatpush1.msra.mxu0 %v2827
    %2840 = vmatprep.subr.mxu0 0.0
    %2841 = vmatpush1.msra.mxu0 %v2826
    %2842 = vmatprep.subr.mxu0 0.0
    %2843 = vmatpush1.msra.mxu0 %v2825
    %2844 = vmatprep.subr.mxu0 0.0
    %2845 = vmatpush1.msra.mxu0 %v2824
    %2846 = vmatprep.subr.mxu0 0.0
    %2847 = vmatpush1.msra.mxu0 %v2823
    %2848 = vmatprep.subr.mxu0 0.0
    %2849 = vmatpush1.msra.mxu0 %v2822
    %2850 = vmatprep.subr.mxu0 0.0
    %2851 = vmatpush1.msra.mxu0 %v2821
    %2852 = vmatprep.subr.mxu0 0.0
    %2853 = vmatpush1.msra.mxu0 %v2820
    %2854 = vmatprep.subr.mxu0 0.0
    %2855 = vmatpush1.msra.mxu0 %v2819
    %2856 = vmatprep.subr.mxu0 0.0
    %2857 = vmatpush1.msra.mxu0 %v2818
    %2858 = vmatprep.subr.mxu0 0.0
    %2859 = vmatpush1.msra.mxu0 %v2817
    %2860 = vmatprep.subr.mxu0 0.0
    %2861 = vmatpush1.msra.mxu0 %v2816
    %2862 = vmatprep.subr.mxu0 0.0
    %2863 = vmatpush1.msra.mxu0 %v2815
    %2864 = vmatprep.subr.mxu0 0.0
    %2865 = vmatpush1.msra.mxu0 %v2814
    %2866 = vmatprep.subr.mxu0 0.0
    %2867 = vmatpush1.msra.mxu0 %v2813
    %2868 = vmatprep.subr.mxu0 0.0
    %2869 = vmatpush2.msra.mxu0 0.0
    %2870 = vmatprep.subr.mxu0 0.0
    %2871 = vmatpush2.msra.mxu0 0.0
    %2872 = vmatprep.subr.mxu0 0.0
    %2873 = vmatpush2.msra.mxu0 0.0
    %2874 = vmatprep.subr.mxu0 0.0
    %2875 = vmatpush2.msra.mxu0 0.0
    %2876 = vmatprep.subr.mxu0 0.0
    %2877 = vmatpush2.msra.mxu0 0.0
    %2878 = vmatprep.subr.mxu0 0.0
    %2879 = vmatpush2.msra.mxu0 0.0
    %2880 = vmatprep.subr.mxu0 0.0
    %2881 = vmatpush2.msra.mxu0 0.0
    %2882 = vmatprep.subr.mxu0 0.0
    %2883 = vmatpush2.msra.mxu0 0.0
    %2884 = vmatprep.subr.mxu0 0.0
    %2885 = vmatpush2.msra.mxu0 0.0
    %2886 = vmatprep.subr.mxu0 0.0
    %2887 = vmatpush2.msra.mxu0 0.0
    %2888 = vmatprep.subr.mxu0 0.0
    %2889 = vmatpush2.msra.mxu0 0.0
    %2890 = vmatprep.subr.mxu0 0.0
    %2891 = vmatpush2.msra.mxu0 0.0
    %2892 = vmatprep.subr.mxu0 0.0
    %2893 = vmatpush2.msra.mxu0 0.0
    %2894 = vmatprep.subr.mxu0 0.0
    %2895 = vmatpush2.msra.mxu0 0.0
    %2896 = vmatprep.subr.mxu0 0.0
    %2897 = vmatpush2.msra.mxu0 0.0
    %2898 = vmatprep.subr.mxu0 0.0
    %2899 = vmatpush2.msra.mxu0 0.0
    %2900 = vmatprep.mubr.f32.mxu0 0.0
    %2901 = vmatmul.mubr.f32.gmra.mxu0 %v2812
    %v2902 = vpop.f32.mrf.mxu0
    %v2903 = vadd.f32 %v2834, %v2902
    %v2904 = vpop.f32.mrf.mxu0
    %2905 = vdwg.mxu0
    %vm2906 = vcmp.ge.f32.partialorder %v2903, 0.0
    %v2907 = vmul.f32 %v2903, 0.01
    %v2908 = vsel %vm2906, %v2903, %v2907
    %v2909 = vld [vmem:[#allocation53] sm:$0xff]
    %v2910 = vld [vmem:[#allocation53 + $0x8] sm:$0xff]
    %v2911 = vld [vmem:[#allocation53 + $0x10] sm:$0xff]
    %v2912 = vld [vmem:[#allocation53 + $0x18] sm:$0xff]
    %v2913 = vld [vmem:[#allocation53 + $0x20] sm:$0xff]
    %v2914 = vld [vmem:[#allocation53 + $0x28] sm:$0xff]
    %v2915 = vld [vmem:[#allocation53 + $0x30] sm:$0xff]
    %v2916 = vld [vmem:[#allocation53 + $0x38] sm:$0xff]
    %v2917 = vld [vmem:[#allocation53 + $0x40] sm:$0xff]
    %v2918 = vld [vmem:[#allocation53 + $0x48] sm:$0xff]
    %v2919 = vld [vmem:[#allocation53 + $0x50] sm:$0xff]
    %v2920 = vld [vmem:[#allocation53 + $0x58] sm:$0xff]
    %v2921 = vld [vmem:[#allocation53 + $0x60] sm:$0xff]
    %v2922 = vld [vmem:[#allocation53 + $0x68] sm:$0xff]
    %v2923 = vld [vmem:[#allocation53 + $0x70] sm:$0xff]
    %v2924 = vld [vmem:[#allocation53 + $0x78] sm:$0xff]
    %v2925 = vld [vmem:[#allocation54] sm:$0x1]
    %v2927 = vlaneseq
    %v2928 = vshrl.u32 %v2927, 7
    %v2929 = vsub.s32 0, %v2928
    %v2930 = vrot.slane %v2925, %v2929
    %2932 = vmatprep.subr.mxu0 0.0
    %2933 = vmatpush1.msra.mxu0 %v2924
    %2934 = vmatprep.subr.mxu0 0.0
    %2935 = vmatpush1.msra.mxu0 %v2923
    %2936 = vmatprep.subr.mxu0 0.0
    %2937 = vmatpush1.msra.mxu0 %v2922
    %2938 = vmatprep.subr.mxu0 0.0
    %2939 = vmatpush1.msra.mxu0 %v2921
    %2940 = vmatprep.subr.mxu0 0.0
    %2941 = vmatpush1.msra.mxu0 %v2920
    %2942 = vmatprep.subr.mxu0 0.0
    %2943 = vmatpush1.msra.mxu0 %v2919
    %2944 = vmatprep.subr.mxu0 0.0
    %2945 = vmatpush1.msra.mxu0 %v2918
    %2946 = vmatprep.subr.mxu0 0.0
    %2947 = vmatpush1.msra.mxu0 %v2917
    %2948 = vmatprep.subr.mxu0 0.0
    %2949 = vmatpush1.msra.mxu0 %v2916
    %2950 = vmatprep.subr.mxu0 0.0
    %2951 = vmatpush1.msra.mxu0 %v2915
    %2952 = vmatprep.subr.mxu0 0.0
    %2953 = vmatpush1.msra.mxu0 %v2914
    %2954 = vmatprep.subr.mxu0 0.0
    %2955 = vmatpush1.msra.mxu0 %v2913
    %2956 = vmatprep.subr.mxu0 0.0
    %2957 = vmatpush1.msra.mxu0 %v2912
    %2958 = vmatprep.subr.mxu0 0.0
    %2959 = vmatpush1.msra.mxu0 %v2911
    %2960 = vmatprep.subr.mxu0 0.0
    %2961 = vmatpush1.msra.mxu0 %v2910
    %2962 = vmatprep.subr.mxu0 0.0
    %2963 = vmatpush1.msra.mxu0 %v2909
    %2964 = vmatprep.subr.mxu0 0.0
    %2965 = vmatpush2.msra.mxu0 0.0
    %2966 = vmatprep.subr.mxu0 0.0
    %2967 = vmatpush2.msra.mxu0 0.0
    %2968 = vmatprep.subr.mxu0 0.0
    %2969 = vmatpush2.msra.mxu0 0.0
    %2970 = vmatprep.subr.mxu0 0.0
    %2971 = vmatpush2.msra.mxu0 0.0
    %2972 = vmatprep.subr.mxu0 0.0
    %2973 = vmatpush2.msra.mxu0 0.0
    %2974 = vmatprep.subr.mxu0 0.0
    %2975 = vmatpush2.msra.mxu0 0.0
    %2976 = vmatprep.subr.mxu0 0.0
    %2977 = vmatpush2.msra.mxu0 0.0
    %2978 = vmatprep.subr.mxu0 0.0
    %2979 = vmatpush2.msra.mxu0 0.0
    %2980 = vmatprep.subr.mxu0 0.0
    %2981 = vmatpush2.msra.mxu0 0.0
    %2982 = vmatprep.subr.mxu0 0.0
    %2983 = vmatpush2.msra.mxu0 0.0
    %2984 = vmatprep.subr.mxu0 0.0
    %2985 = vmatpush2.msra.mxu0 0.0
    %2986 = vmatprep.subr.mxu0 0.0
    %2987 = vmatpush2.msra.mxu0 0.0
    %2988 = vmatprep.subr.mxu0 0.0
    %2989 = vmatpush2.msra.mxu0 0.0
    %2990 = vmatprep.subr.mxu0 0.0
    %2991 = vmatpush2.msra.mxu0 0.0
    %2992 = vmatprep.subr.mxu0 0.0
    %2993 = vmatpush2.msra.mxu0 0.0
    %2994 = vmatprep.subr.mxu0 0.0
    %2995 = vmatpush2.msra.mxu0 0.0
    %2996 = vmatprep.mubr.f32.mxu0 0.0
    %2997 = vmatmul.mubr.f32.gmra.mxu0 %v2908
    %v2998 = vpop.f32.mrf.mxu0
    %v2999 = vadd.f32 %v2930, %v2998
    %v3000 = vpop.f32.mrf.mxu0
    %3001 = vdwg.mxu0
    %vm3002 = vcmp.ge.f32.partialorder %v2999, 0.0
    %v3003 = vmul.f32 %v2999, 0.01
    %v3004 = vsel %vm3002, %v2999, %v3003
    %v3005 = vld [vmem:[#allocation56] sm:$0xff]
    %v3006 = vld [vmem:[#allocation56 + $0x8] sm:$0xff]
    %v3007 = vld [vmem:[#allocation56 + $0x10] sm:$0xff]
    %v3008 = vld [vmem:[#allocation56 + $0x18] sm:$0xff]
    %v3009 = vld [vmem:[#allocation56 + $0x20] sm:$0xff]
    %v3010 = vld [vmem:[#allocation56 + $0x28] sm:$0xff]
    %v3011 = vld [vmem:[#allocation56 + $0x30] sm:$0xff]
    %v3012 = vld [vmem:[#allocation56 + $0x38] sm:$0xff]
    %v3013 = vld [vmem:[#allocation56 + $0x40] sm:$0xff]
    %v3014 = vld [vmem:[#allocation56 + $0x48] sm:$0xff]
    %v3015 = vld [vmem:[#allocation56 + $0x50] sm:$0xff]
    %v3016 = vld [vmem:[#allocation56 + $0x58] sm:$0xff]
    %v3017 = vld [vmem:[#allocation56 + $0x60] sm:$0xff]
    %v3018 = vld [vmem:[#allocation56 + $0x68] sm:$0xff]
    %v3019 = vld [vmem:[#allocation56 + $0x70] sm:$0xff]
    %v3020 = vld [vmem:[#allocation56 + $0x78] sm:$0xff]
    %v3021 = vld [vmem:[#allocation56 + $0x80] sm:$0xff]
    %v3022 = vld [vmem:[#allocation56 + $0x88] sm:$0xff]
    %v3023 = vld [vmem:[#allocation56 + $0x90] sm:$0xff]
    %v3024 = vld [vmem:[#allocation56 + $0x98] sm:$0xff]
    %v3025 = vld [vmem:[#allocation56 + $0xa0] sm:$0xff]
    %v3026 = vld [vmem:[#allocation56 + $0xa8] sm:$0xff]
    %v3027 = vld [vmem:[#allocation56 + $0xb0] sm:$0xff]
    %v3028 = vld [vmem:[#allocation56 + $0xb8] sm:$0xff]
    %v3029 = vld [vmem:[#allocation56 + $0xc0] sm:$0xff]
    %v3030 = vld [vmem:[#allocation56 + $0xc8] sm:$0xff]
    %v3031 = vld [vmem:[#allocation56 + $0xd0] sm:$0xff]
    %v3032 = vld [vmem:[#allocation56 + $0xd8] sm:$0xff]
    %v3033 = vld [vmem:[#allocation56 + $0xe0] sm:$0xff]
    %v3034 = vld [vmem:[#allocation56 + $0xe8] sm:$0xff]
    %v3035 = vld [vmem:[#allocation56 + $0xf0] sm:$0xff]
    %v3036 = vld [vmem:[#allocation56 + $0xf8] sm:$0xff]
    %v3037 = vld [vmem:[#allocation57] sm:$0x3]
    %v3039 = vlaneseq
    %v3040 = vshrl.u32 %v3039, 7
    %v3041 = vsub.s32 0, %v3040
    %v3042 = vrot.slane %v3037, %v3041
    %v3043 = vlaneseq
    %v3044 = vshrl.u32 %v3043, 7
    %v3045 = vsub.s32 1, %v3044
    %v3046 = vrot.slane %v3037, %v3045
    %3049 = vmatprep.subr.mxu0 %v3036
    %3050 = vmatpush1.msra.mxu0 %v3035
    %3051 = vmatprep.subr.mxu0 %v3034
    %3052 = vmatpush1.msra.mxu0 %v3033
    %3053 = vmatprep.subr.mxu0 %v3032
    %3054 = vmatpush1.msra.mxu0 %v3031
    %3055 = vmatprep.subr.mxu0 %v3030
    %3056 = vmatpush1.msra.mxu0 %v3029
    %3057 = vmatprep.subr.mxu0 %v3028
    %3058 = vmatpush1.msra.mxu0 %v3027
    %3059 = vmatprep.subr.mxu0 %v3026
    %3060 = vmatpush1.msra.mxu0 %v3025
    %3061 = vmatprep.subr.mxu0 %v3024
    %3062 = vmatpush1.msra.mxu0 %v3023
    %3063 = vmatprep.subr.mxu0 %v3022
    %3064 = vmatpush1.msra.mxu0 %v3021
    %3065 = vmatprep.subr.mxu0 %v3020
    %3066 = vmatpush1.msra.mxu0 %v3019
    %3067 = vmatprep.subr.mxu0 %v3018
    %3068 = vmatpush1.msra.mxu0 %v3017
    %3069 = vmatprep.subr.mxu0 %v3016
    %3070 = vmatpush1.msra.mxu0 %v3015
    %3071 = vmatprep.subr.mxu0 %v3014
    %3072 = vmatpush1.msra.mxu0 %v3013
    %3073 = vmatprep.subr.mxu0 %v3012
    %3074 = vmatpush1.msra.mxu0 %v3011
    %3075 = vmatprep.subr.mxu0 %v3010
    %3076 = vmatpush1.msra.mxu0 %v3009
    %3077 = vmatprep.subr.mxu0 %v3008
    %3078 = vmatpush1.msra.mxu0 %v3007
    %3079 = vmatprep.subr.mxu0 %v3006
    %3080 = vmatpush1.msra.mxu0 %v3005
    %3081 = vmatprep.subr.mxu0 0.0
    %3082 = vmatpush2.msra.mxu0 0.0
    %3083 = vmatprep.subr.mxu0 0.0
    %3084 = vmatpush2.msra.mxu0 0.0
    %3085 = vmatprep.subr.mxu0 0.0
    %3086 = vmatpush2.msra.mxu0 0.0
    %3087 = vmatprep.subr.mxu0 0.0
    %3088 = vmatpush2.msra.mxu0 0.0
    %3089 = vmatprep.subr.mxu0 0.0
    %3090 = vmatpush2.msra.mxu0 0.0
    %3091 = vmatprep.subr.mxu0 0.0
    %3092 = vmatpush2.msra.mxu0 0.0
    %3093 = vmatprep.subr.mxu0 0.0
    %3094 = vmatpush2.msra.mxu0 0.0
    %3095 = vmatprep.subr.mxu0 0.0
    %3096 = vmatpush2.msra.mxu0 0.0
    %3097 = vmatprep.subr.mxu0 0.0
    %3098 = vmatpush2.msra.mxu0 0.0
    %3099 = vmatprep.subr.mxu0 0.0
    %3100 = vmatpush2.msra.mxu0 0.0
    %3101 = vmatprep.subr.mxu0 0.0
    %3102 = vmatpush2.msra.mxu0 0.0
    %3103 = vmatprep.subr.mxu0 0.0
    %3104 = vmatpush2.msra.mxu0 0.0
    %3105 = vmatprep.subr.mxu0 0.0
    %3106 = vmatpush2.msra.mxu0 0.0
    %3107 = vmatprep.subr.mxu0 0.0
    %3108 = vmatpush2.msra.mxu0 0.0
    %3109 = vmatprep.subr.mxu0 0.0
    %3110 = vmatpush2.msra.mxu0 0.0
    %3111 = vmatprep.subr.mxu0 0.0
    %3112 = vmatpush2.msra.mxu0 0.0
    %3113 = vmatprep.mubr.f32.mxu0 0.0
    %3114 = vmatmul.mubr.f32.gmra.mxu0 %v3004
    %v3115 = vpop.f32.mrf.mxu0
    %v3116 = vadd.f32 %v3042, %v3115
    %v3117 = vpop.f32.mrf.mxu0
    %v3118 = vadd.f32 %v3046, %v3117
    %3119 = vdwg.mxu0
    %v3120 = vtanh.pop %v3116
    %v3121 = vmul.f32 %v3120, 1.442695
    %v3122 = vpow.pop %v3121
    %v3123 = vmul.f32 %v2734, %v3122
    %v3124 = vadd.f32 %v3123, %v3118
    %v3125 = vsel %vm2320, %v3120, 0.0
    %3126 = vadd.xlane.f32.xlu0 %v3125
    %v3127 = vpop.xlane.xlu0 %3126
    %v3128 = vadd.f32 %v2718, %v3127
    %v3129 = vld [vmem:[#allocation59] sm:$0xff]
    %v3130 = vld [vmem:[#allocation59 + $0x8] sm:$0xff]
    %v3132 = vsel %vm1232, %v3124, 0
    %3134 = vmatprep.subr.mxu0 0.0
    %3135 = vmatpush1.msra.mxu0 0.0
    %3136 = vmatprep.subr.mxu0 0.0
    %3137 = vmatpush1.msra.mxu0 0.0
    %3138 = vmatprep.subr.mxu0 0.0
    %3139 = vmatpush1.msra.mxu0 0.0
    %3140 = vmatprep.subr.mxu0 0.0
    %3141 = vmatpush1.msra.mxu0 0.0
    %3142 = vmatprep.subr.mxu0 0.0
    %3143 = vmatpush1.msra.mxu0 0.0
    %3144 = vmatprep.subr.mxu0 0.0
    %3145 = vmatpush1.msra.mxu0 0.0
    %3146 = vmatprep.subr.mxu0 0.0
    %3147 = vmatpush1.msra.mxu0 0.0
    %3148 = vmatprep.subr.mxu0 0.0
    %3149 = vmatpush1.msra.mxu0 0.0
    %3150 = vmatprep.subr.mxu0 0.0
    %3151 = vmatpush1.msra.mxu0 0.0
    %3152 = vmatprep.subr.mxu0 0.0
    %3153 = vmatpush1.msra.mxu0 0.0
    %3154 = vmatprep.subr.mxu0 0.0
    %3155 = vmatpush1.msra.mxu0 0.0
    %3156 = vmatprep.subr.mxu0 0.0
    %3157 = vmatpush1.msra.mxu0 0.0
    %3158 = vmatprep.subr.mxu0 0.0
    %3159 = vmatpush1.msra.mxu0 0.0
    %3160 = vmatprep.subr.mxu0 0.0
    %3161 = vmatpush1.msra.mxu0 0.0
    %3162 = vmatprep.subr.mxu0 0.0
    %3163 = vmatpush1.msra.mxu0 %v3130
    %3164 = vmatprep.subr.mxu0 0.0
    %3165 = vmatpush1.msra.mxu0 %v3129
    %3166 = vmatprep.subr.mxu0 0.0
    %3167 = vmatpush2.msra.mxu0 0.0
    %3168 = vmatprep.subr.mxu0 0.0
    %3169 = vmatpush2.msra.mxu0 0.0
    %3170 = vmatprep.subr.mxu0 0.0
    %3171 = vmatpush2.msra.mxu0 0.0
    %3172 = vmatprep.subr.mxu0 0.0
    %3173 = vmatpush2.msra.mxu0 0.0
    %3174 = vmatprep.subr.mxu0 0.0
    %3175 = vmatpush2.msra.mxu0 0.0
    %3176 = vmatprep.subr.mxu0 0.0
    %3177 = vmatpush2.msra.mxu0 0.0
    %3178 = vmatprep.subr.mxu0 0.0
    %3179 = vmatpush2.msra.mxu0 0.0
    %3180 = vmatprep.subr.mxu0 0.0
    %3181 = vmatpush2.msra.mxu0 0.0
    %3182 = vmatprep.subr.mxu0 0.0
    %3183 = vmatpush2.msra.mxu0 0.0
    %3184 = vmatprep.subr.mxu0 0.0
    %3185 = vmatpush2.msra.mxu0 0.0
    %3186 = vmatprep.subr.mxu0 0.0
    %3187 = vmatpush2.msra.mxu0 0.0
    %3188 = vmatprep.subr.mxu0 0.0
    %3189 = vmatpush2.msra.mxu0 0.0
    %3190 = vmatprep.subr.mxu0 0.0
    %3191 = vmatpush2.msra.mxu0 0.0
    %3192 = vmatprep.subr.mxu0 0.0
    %3193 = vmatpush2.msra.mxu0 0.0
    %3194 = vmatprep.subr.mxu0 0.0
    %3195 = vmatpush2.msra.mxu0 0.0
    %3196 = vmatprep.subr.mxu0 0.0
    %3197 = vmatpush2.msra.mxu0 0.0
    %3198 = vmatprep.mubr.f32.mxu0 0.0
    %3199 = vmatmul.mubr.f32.gmra.mxu0 %v3132
    %v3200 = vpop.f32.mrf.mxu0
    %v3201 = vadd.f32 %v1762, %v3200
    %v3202 = vpop.f32.mrf.mxu0
    %3203 = vdwg.mxu0
    %vm3204 = vcmp.ge.f32.partialorder %v3201, 0.0
    %v3205 = vmul.f32 %v3201, 0.01
    %v3206 = vsel %vm3204, %v3201, %v3205
    %v3207 = vld [vmem:[#allocation60] sm:$0xff]
    %v3208 = vld [vmem:[#allocation60 + $0x8] sm:$0xff]
    %v3209 = vld [vmem:[#allocation60 + $0x10] sm:$0xff]
    %v3210 = vld [vmem:[#allocation60 + $0x18] sm:$0xff]
    %v3211 = vld [vmem:[#allocation60 + $0x20] sm:$0xff]
    %v3212 = vld [vmem:[#allocation60 + $0x28] sm:$0xff]
    %v3213 = vld [vmem:[#allocation60 + $0x30] sm:$0xff]
    %v3214 = vld [vmem:[#allocation60 + $0x38] sm:$0xff]
    %v3215 = vld [vmem:[#allocation60 + $0x40] sm:$0xff]
    %v3216 = vld [vmem:[#allocation60 + $0x48] sm:$0xff]
    %v3217 = vld [vmem:[#allocation60 + $0x50] sm:$0xff]
    %v3218 = vld [vmem:[#allocation60 + $0x58] sm:$0xff]
    %v3219 = vld [vmem:[#allocation60 + $0x60] sm:$0xff]
    %v3220 = vld [vmem:[#allocation60 + $0x68] sm:$0xff]
    %v3221 = vld [vmem:[#allocation60 + $0x70] sm:$0xff]
    %v3222 = vld [vmem:[#allocation60 + $0x78] sm:$0xff]
    %v3223 = vld [vmem:[#allocation62] sm:$0x1]
    %v3225 = vlaneseq
    %v3226 = vshrl.u32 %v3225, 7
    %v3227 = vsub.s32 0, %v3226
    %v3228 = vrot.slane %v3223, %v3227
    %3230 = vmatprep.subr.mxu0 0.0
    %3231 = vmatpush1.msra.mxu0 %v3222
    %3232 = vmatprep.subr.mxu0 0.0
    %3233 = vmatpush1.msra.mxu0 %v3221
    %3234 = vmatprep.subr.mxu0 0.0
    %3235 = vmatpush1.msra.mxu0 %v3220
    %3236 = vmatprep.subr.mxu0 0.0
    %3237 = vmatpush1.msra.mxu0 %v3219
    %3238 = vmatprep.subr.mxu0 0.0
    %3239 = vmatpush1.msra.mxu0 %v3218
    %3240 = vmatprep.subr.mxu0 0.0
    %3241 = vmatpush1.msra.mxu0 %v3217
    %3242 = vmatprep.subr.mxu0 0.0
    %3243 = vmatpush1.msra.mxu0 %v3216
    %3244 = vmatprep.subr.mxu0 0.0
    %3245 = vmatpush1.msra.mxu0 %v3215
    %3246 = vmatprep.subr.mxu0 0.0
    %3247 = vmatpush1.msra.mxu0 %v3214
    %3248 = vmatprep.subr.mxu0 0.0
    %3249 = vmatpush1.msra.mxu0 %v3213
    %3250 = vmatprep.subr.mxu0 0.0
    %3251 = vmatpush1.msra.mxu0 %v3212
    %3252 = vmatprep.subr.mxu0 0.0
    %3253 = vmatpush1.msra.mxu0 %v3211
    %3254 = vmatprep.subr.mxu0 0.0
    %3255 = vmatpush1.msra.mxu0 %v3210
    %3256 = vmatprep.subr.mxu0 0.0
    %3257 = vmatpush1.msra.mxu0 %v3209
    %3258 = vmatprep.subr.mxu0 0.0
    %3259 = vmatpush1.msra.mxu0 %v3208
    %3260 = vmatprep.subr.mxu0 0.0
    %3261 = vmatpush1.msra.mxu0 %v3207
    %3262 = vmatprep.subr.mxu0 0.0
    %3263 = vmatpush2.msra.mxu0 0.0
    %3264 = vmatprep.subr.mxu0 0.0
    %3265 = vmatpush2.msra.mxu0 0.0
    %3266 = vmatprep.subr.mxu0 0.0
    %3267 = vmatpush2.msra.mxu0 0.0
    %3268 = vmatprep.subr.mxu0 0.0
    %3269 = vmatpush2.msra.mxu0 0.0
    %3270 = vmatprep.subr.mxu0 0.0
    %3271 = vmatpush2.msra.mxu0 0.0
    %3272 = vmatprep.subr.mxu0 0.0
    %3273 = vmatpush2.msra.mxu0 0.0
    %3274 = vmatprep.subr.mxu0 0.0
    %3275 = vmatpush2.msra.mxu0 0.0
    %3276 = vmatprep.subr.mxu0 0.0
    %3277 = vmatpush2.msra.mxu0 0.0
    %3278 = vmatprep.subr.mxu0 0.0
    %3279 = vmatpush2.msra.mxu0 0.0
    %3280 = vmatprep.subr.mxu0 0.0
    %3281 = vmatpush2.msra.mxu0 0.0
    %3282 = vmatprep.subr.mxu0 0.0
    %3283 = vmatpush2.msra.mxu0 0.0
    %3284 = vmatprep.subr.mxu0 0.0
    %3285 = vmatpush2.msra.mxu0 0.0
    %3286 = vmatprep.subr.mxu0 0.0
    %3287 = vmatpush2.msra.mxu0 0.0
    %3288 = vmatprep.subr.mxu0 0.0
    %3289 = vmatpush2.msra.mxu0 0.0
    %3290 = vmatprep.subr.mxu0 0.0
    %3291 = vmatpush2.msra.mxu0 0.0
    %3292 = vmatprep.subr.mxu0 0.0
    %3293 = vmatpush2.msra.mxu0 0.0
    %3294 = vmatprep.mubr.f32.mxu0 0.0
    %3295 = vmatmul.mubr.f32.gmra.mxu0 %v3206
    %v3296 = vpop.f32.mrf.mxu0
    %v3297 = vadd.f32 %v3228, %v3296
    %v3298 = vpop.f32.mrf.mxu0
    %3299 = vdwg.mxu0
    %vm3300 = vcmp.ge.f32.partialorder %v3297, 0.0
    %v3301 = vmul.f32 %v3297, 0.01
    %v3302 = vsel %vm3300, %v3297, %v3301
    %v3303 = vld [vmem:[#allocation63] sm:$0xff]
    %v3304 = vld [vmem:[#allocation63 + $0x8] sm:$0xff]
    %v3305 = vld [vmem:[#allocation63 + $0x10] sm:$0xff]
    %v3306 = vld [vmem:[#allocation63 + $0x18] sm:$0xff]
    %v3307 = vld [vmem:[#allocation63 + $0x20] sm:$0xff]
    %v3308 = vld [vmem:[#allocation63 + $0x28] sm:$0xff]
    %v3309 = vld [vmem:[#allocation63 + $0x30] sm:$0xff]
    %v3310 = vld [vmem:[#allocation63 + $0x38] sm:$0xff]
    %v3311 = vld [vmem:[#allocation63 + $0x40] sm:$0xff]
    %v3312 = vld [vmem:[#allocation63 + $0x48] sm:$0xff]
    %v3313 = vld [vmem:[#allocation63 + $0x50] sm:$0xff]
    %v3314 = vld [vmem:[#allocation63 + $0x58] sm:$0xff]
    %v3315 = vld [vmem:[#allocation63 + $0x60] sm:$0xff]
    %v3316 = vld [vmem:[#allocation63 + $0x68] sm:$0xff]
    %v3317 = vld [vmem:[#allocation63 + $0x70] sm:$0xff]
    %v3318 = vld [vmem:[#allocation63 + $0x78] sm:$0xff]
    %v3319 = vld [vmem:[#allocation65] sm:$0x1]
    %v3321 = vlaneseq
    %v3322 = vshrl.u32 %v3321, 7
    %v3323 = vsub.s32 0, %v3322
    %v3324 = vrot.slane %v3319, %v3323
    %3326 = vmatprep.subr.mxu0 0.0
    %3327 = vmatpush1.msra.mxu0 %v3318
    %3328 = vmatprep.subr.mxu0 0.0
    %3329 = vmatpush1.msra.mxu0 %v3317
    %3330 = vmatprep.subr.mxu0 0.0
    %3331 = vmatpush1.msra.mxu0 %v3316
    %3332 = vmatprep.subr.mxu0 0.0
    %3333 = vmatpush1.msra.mxu0 %v3315
    %3334 = vmatprep.subr.mxu0 0.0
    %3335 = vmatpush1.msra.mxu0 %v3314
    %3336 = vmatprep.subr.mxu0 0.0
    %3337 = vmatpush1.msra.mxu0 %v3313
    %3338 = vmatprep.subr.mxu0 0.0
    %3339 = vmatpush1.msra.mxu0 %v3312
    %3340 = vmatprep.subr.mxu0 0.0
    %3341 = vmatpush1.msra.mxu0 %v3311
    %3342 = vmatprep.subr.mxu0 0.0
    %3343 = vmatpush1.msra.mxu0 %v3310
    %3344 = vmatprep.subr.mxu0 0.0
    %3345 = vmatpush1.msra.mxu0 %v3309
    %3346 = vmatprep.subr.mxu0 0.0
    %3347 = vmatpush1.msra.mxu0 %v3308
    %3348 = vmatprep.subr.mxu0 0.0
    %3349 = vmatpush1.msra.mxu0 %v3307
    %3350 = vmatprep.subr.mxu0 0.0
    %3351 = vmatpush1.msra.mxu0 %v3306
    %3352 = vmatprep.subr.mxu0 0.0
    %3353 = vmatpush1.msra.mxu0 %v3305
    %3354 = vmatprep.subr.mxu0 0.0
    %3355 = vmatpush1.msra.mxu0 %v3304
    %3356 = vmatprep.subr.mxu0 0.0
    %3357 = vmatpush1.msra.mxu0 %v3303
    %3358 = vmatprep.subr.mxu0 0.0
    %3359 = vmatpush2.msra.mxu0 0.0
    %3360 = vmatprep.subr.mxu0 0.0
    %3361 = vmatpush2.msra.mxu0 0.0
    %3362 = vmatprep.subr.mxu0 0.0
    %3363 = vmatpush2.msra.mxu0 0.0
    %3364 = vmatprep.subr.mxu0 0.0
    %3365 = vmatpush2.msra.mxu0 0.0
    %3366 = vmatprep.subr.mxu0 0.0
    %3367 = vmatpush2.msra.mxu0 0.0
    %3368 = vmatprep.subr.mxu0 0.0
    %3369 = vmatpush2.msra.mxu0 0.0
    %3370 = vmatprep.subr.mxu0 0.0
    %3371 = vmatpush2.msra.mxu0 0.0
    %3372 = vmatprep.subr.mxu0 0.0
    %3373 = vmatpush2.msra.mxu0 0.0
    %3374 = vmatprep.subr.mxu0 0.0
    %3375 = vmatpush2.msra.mxu0 0.0
    %3376 = vmatprep.subr.mxu0 0.0
    %3377 = vmatpush2.msra.mxu0 0.0
    %3378 = vmatprep.subr.mxu0 0.0
    %3379 = vmatpush2.msra.mxu0 0.0
    %3380 = vmatprep.subr.mxu0 0.0
    %3381 = vmatpush2.msra.mxu0 0.0
    %3382 = vmatprep.subr.mxu0 0.0
    %3383 = vmatpush2.msra.mxu0 0.0
    %3384 = vmatprep.subr.mxu0 0.0
    %3385 = vmatpush2.msra.mxu0 0.0
    %3386 = vmatprep.subr.mxu0 0.0
    %3387 = vmatpush2.msra.mxu0 0.0
    %3388 = vmatprep.subr.mxu0 0.0
    %3389 = vmatpush2.msra.mxu0 0.0
    %3390 = vmatprep.mubr.f32.mxu0 0.0
    %3391 = vmatmul.mubr.f32.gmra.mxu0 %v3302
    %v3392 = vpop.f32.mrf.mxu0
    %v3393 = vadd.f32 %v3324, %v3392
    %v3394 = vpop.f32.mrf.mxu0
    %3395 = vdwg.mxu0
    %vm3396 = vcmp.ge.f32.partialorder %v3393, 0.0
    %v3397 = vmul.f32 %v3393, 0.01
    %v3398 = vsel %vm3396, %v3393, %v3397
    %v3399 = vld [vmem:[#allocation66] sm:$0xff]
    %v3400 = vld [vmem:[#allocation66 + $0x8] sm:$0xff]
    %v3401 = vld [vmem:[#allocation66 + $0x10] sm:$0xff]
    %v3402 = vld [vmem:[#allocation66 + $0x18] sm:$0xff]
    %v3403 = vld [vmem:[#allocation66 + $0x20] sm:$0xff]
    %v3404 = vld [vmem:[#allocation66 + $0x28] sm:$0xff]
    %v3405 = vld [vmem:[#allocation66 + $0x30] sm:$0xff]
    %v3406 = vld [vmem:[#allocation66 + $0x38] sm:$0xff]
    %v3407 = vld [vmem:[#allocation66 + $0x40] sm:$0xff]
    %v3408 = vld [vmem:[#allocation66 + $0x48] sm:$0xff]
    %v3409 = vld [vmem:[#allocation66 + $0x50] sm:$0xff]
    %v3410 = vld [vmem:[#allocation66 + $0x58] sm:$0xff]
    %v3411 = vld [vmem:[#allocation66 + $0x60] sm:$0xff]
    %v3412 = vld [vmem:[#allocation66 + $0x68] sm:$0xff]
    %v3413 = vld [vmem:[#allocation66 + $0x70] sm:$0xff]
    %v3414 = vld [vmem:[#allocation66 + $0x78] sm:$0xff]
    %v3415 = vld [vmem:[#allocation66 + $0x80] sm:$0xff]
    %v3416 = vld [vmem:[#allocation66 + $0x88] sm:$0xff]
    %v3417 = vld [vmem:[#allocation66 + $0x90] sm:$0xff]
    %v3418 = vld [vmem:[#allocation66 + $0x98] sm:$0xff]
    %v3419 = vld [vmem:[#allocation66 + $0xa0] sm:$0xff]
    %v3420 = vld [vmem:[#allocation66 + $0xa8] sm:$0xff]
    %v3421 = vld [vmem:[#allocation66 + $0xb0] sm:$0xff]
    %v3422 = vld [vmem:[#allocation66 + $0xb8] sm:$0xff]
    %v3423 = vld [vmem:[#allocation66 + $0xc0] sm:$0xff]
    %v3424 = vld [vmem:[#allocation66 + $0xc8] sm:$0xff]
    %v3425 = vld [vmem:[#allocation66 + $0xd0] sm:$0xff]
    %v3426 = vld [vmem:[#allocation66 + $0xd8] sm:$0xff]
    %v3427 = vld [vmem:[#allocation66 + $0xe0] sm:$0xff]
    %v3428 = vld [vmem:[#allocation66 + $0xe8] sm:$0xff]
    %v3429 = vld [vmem:[#allocation66 + $0xf0] sm:$0xff]
    %v3430 = vld [vmem:[#allocation66 + $0xf8] sm:$0xff]
    %v3431 = vld [vmem:[#allocation68] sm:$0x3]
    %v3433 = vlaneseq
    %v3434 = vshrl.u32 %v3433, 7
    %v3435 = vsub.s32 0, %v3434
    %v3436 = vrot.slane %v3431, %v3435
    %v3437 = vlaneseq
    %v3438 = vshrl.u32 %v3437, 7
    %v3439 = vsub.s32 1, %v3438
    %v3440 = vrot.slane %v3431, %v3439
    %3443 = vmatprep.subr.mxu0 %v3430
    %3444 = vmatpush1.msra.mxu0 %v3429
    %3445 = vmatprep.subr.mxu0 %v3428
    %3446 = vmatpush1.msra.mxu0 %v3427
    %3447 = vmatprep.subr.mxu0 %v3426
    %3448 = vmatpush1.msra.mxu0 %v3425
    %3449 = vmatprep.subr.mxu0 %v3424
    %3450 = vmatpush1.msra.mxu0 %v3423
    %3451 = vmatprep.subr.mxu0 %v3422
    %3452 = vmatpush1.msra.mxu0 %v3421
    %3453 = vmatprep.subr.mxu0 %v3420
    %3454 = vmatpush1.msra.mxu0 %v3419
    %3455 = vmatprep.subr.mxu0 %v3418
    %3456 = vmatpush1.msra.mxu0 %v3417
    %3457 = vmatprep.subr.mxu0 %v3416
    %3458 = vmatpush1.msra.mxu0 %v3415
    %3459 = vmatprep.subr.mxu0 %v3414
    %3460 = vmatpush1.msra.mxu0 %v3413
    %3461 = vmatprep.subr.mxu0 %v3412
    %3462 = vmatpush1.msra.mxu0 %v3411
    %3463 = vmatprep.subr.mxu0 %v3410
    %3464 = vmatpush1.msra.mxu0 %v3409
    %3465 = vmatprep.subr.mxu0 %v3408
    %3466 = vmatpush1.msra.mxu0 %v3407
    %3467 = vmatprep.subr.mxu0 %v3406
    %3468 = vmatpush1.msra.mxu0 %v3405
    %3469 = vmatprep.subr.mxu0 %v3404
    %3470 = vmatpush1.msra.mxu0 %v3403
    %3471 = vmatprep.subr.mxu0 %v3402
    %3472 = vmatpush1.msra.mxu0 %v3401
    %3473 = vmatprep.subr.mxu0 %v3400
    %3474 = vmatpush1.msra.mxu0 %v3399
    %3475 = vmatprep.subr.mxu0 0.0
    %3476 = vmatpush2.msra.mxu0 0.0
    %3477 = vmatprep.subr.mxu0 0.0
    %3478 = vmatpush2.msra.mxu0 0.0
    %3479 = vmatprep.subr.mxu0 0.0
    %3480 = vmatpush2.msra.mxu0 0.0
    %3481 = vmatprep.subr.mxu0 0.0
    %3482 = vmatpush2.msra.mxu0 0.0
    %3483 = vmatprep.subr.mxu0 0.0
    %3484 = vmatpush2.msra.mxu0 0.0
    %3485 = vmatprep.subr.mxu0 0.0
    %3486 = vmatpush2.msra.mxu0 0.0
    %3487 = vmatprep.subr.mxu0 0.0
    %3488 = vmatpush2.msra.mxu0 0.0
    %3489 = vmatprep.subr.mxu0 0.0
    %3490 = vmatpush2.msra.mxu0 0.0
    %3491 = vmatprep.subr.mxu0 0.0
    %3492 = vmatpush2.msra.mxu0 0.0
    %3493 = vmatprep.subr.mxu0 0.0
    %3494 = vmatpush2.msra.mxu0 0.0
    %3495 = vmatprep.subr.mxu0 0.0
    %3496 = vmatpush2.msra.mxu0 0.0
    %3497 = vmatprep.subr.mxu0 0.0
    %3498 = vmatpush2.msra.mxu0 0.0
    %3499 = vmatprep.subr.mxu0 0.0
    %3500 = vmatpush2.msra.mxu0 0.0
    %3501 = vmatprep.subr.mxu0 0.0
    %3502 = vmatpush2.msra.mxu0 0.0
    %3503 = vmatprep.subr.mxu0 0.0
    %3504 = vmatpush2.msra.mxu0 0.0
    %3505 = vmatprep.subr.mxu0 0.0
    %3506 = vmatpush2.msra.mxu0 0.0
    %3507 = vmatprep.mubr.f32.mxu0 0.0
    %3508 = vmatmul.mubr.f32.gmra.mxu0 %v3398
    %v3509 = vpop.f32.mrf.mxu0
    %v3510 = vadd.f32 %v3436, %v3509
    %v3511 = vpop.f32.mrf.mxu0
    %v3512 = vadd.f32 %v3440, %v3511
    %3513 = vdwg.mxu0
    %v3514 = vtanh.pop %v3510
    %v3515 = vmul.f32 %v3514, 1.442695
    %v3516 = vpow.pop %v3515
    %v3517 = vmul.f32 %v3124, %v3516
    %v3518 = vadd.f32 %v3517, %v3512
    %v3519 = vsel %vm2320, %v3514, 0.0
    %3520 = vadd.xlane.f32.xlu0 %v3519
    %v3521 = vpop.xlane.xlu0 %3520
    %v3522 = vadd.f32 %v3128, %v3521
    %v3523 = vld [vmem:[#allocation71] sm:$0x1]
    %v3524 = vld [vmem:[#allocation69] sm:$0x1]
    %v3526 = vlaneseq
    %v3527 = vshrl.u32 %v3526, 7
    %v3528 = vsub.s32 0, %v3527
    %v3529 = vrot.slane %v3524, %v3528
    %v3531 = vadd.f32 %v3518, %v3529
    %v3533 = vlaneseq
    %v3534 = vshrl.u32 %v3533, 7
    %v3535 = vsub.s32 0, %v3534
    %v3536 = vrot.slane %v3523, %v3535
    %v3538 = vmul.f32 %v3536, %v3531
    %v3539 = vld [vmem:[#allocation72] sm:$0xff]
    %v3540 = vld [vmem:[#allocation72 + $0x8] sm:$0xff]
    %v3542 = vsel %vm1232, %v3538, 0
    %3544 = vmatprep.subr.mxu0 0.0
    %3545 = vmatpush1.msra.mxu0 0.0
    %3546 = vmatprep.subr.mxu0 0.0
    %3547 = vmatpush1.msra.mxu0 0.0
    %3548 = vmatprep.subr.mxu0 0.0
    %3549 = vmatpush1.msra.mxu0 0.0
    %3550 = vmatprep.subr.mxu0 0.0
    %3551 = vmatpush1.msra.mxu0 0.0
    %3552 = vmatprep.subr.mxu0 0.0
    %3553 = vmatpush1.msra.mxu0 0.0
    %3554 = vmatprep.subr.mxu0 0.0
    %3555 = vmatpush1.msra.mxu0 0.0
    %3556 = vmatprep.subr.mxu0 0.0
    %3557 = vmatpush1.msra.mxu0 0.0
    %3558 = vmatprep.subr.mxu0 0.0
    %3559 = vmatpush1.msra.mxu0 0.0
    %3560 = vmatprep.subr.mxu0 0.0
    %3561 = vmatpush1.msra.mxu0 0.0
    %3562 = vmatprep.subr.mxu0 0.0
    %3563 = vmatpush1.msra.mxu0 0.0
    %3564 = vmatprep.subr.mxu0 0.0
    %3565 = vmatpush1.msra.mxu0 0.0
    %3566 = vmatprep.subr.mxu0 0.0
    %3567 = vmatpush1.msra.mxu0 0.0
    %3568 = vmatprep.subr.mxu0 0.0
    %3569 = vmatpush1.msra.mxu0 0.0
    %3570 = vmatprep.subr.mxu0 0.0
    %3571 = vmatpush1.msra.mxu0 0.0
    %3572 = vmatprep.subr.mxu0 0.0
    %3573 = vmatpush1.msra.mxu0 %v3540
    %3574 = vmatprep.subr.mxu0 0.0
    %3575 = vmatpush1.msra.mxu0 %v3539
    %3576 = vmatprep.subr.mxu0 0.0
    %3577 = vmatpush2.msra.mxu0 0.0
    %3578 = vmatprep.subr.mxu0 0.0
    %3579 = vmatpush2.msra.mxu0 0.0
    %3580 = vmatprep.subr.mxu0 0.0
    %3581 = vmatpush2.msra.mxu0 0.0
    %3582 = vmatprep.subr.mxu0 0.0
    %3583 = vmatpush2.msra.mxu0 0.0
    %3584 = vmatprep.subr.mxu0 0.0
    %3585 = vmatpush2.msra.mxu0 0.0
    %3586 = vmatprep.subr.mxu0 0.0
    %3587 = vmatpush2.msra.mxu0 0.0
    %3588 = vmatprep.subr.mxu0 0.0
    %3589 = vmatpush2.msra.mxu0 0.0
    %3590 = vmatprep.subr.mxu0 0.0
    %3591 = vmatpush2.msra.mxu0 0.0
    %3592 = vmatprep.subr.mxu0 0.0
    %3593 = vmatpush2.msra.mxu0 0.0
    %3594 = vmatprep.subr.mxu0 0.0
    %3595 = vmatpush2.msra.mxu0 0.0
    %3596 = vmatprep.subr.mxu0 0.0
    %3597 = vmatpush2.msra.mxu0 0.0
    %3598 = vmatprep.subr.mxu0 0.0
    %3599 = vmatpush2.msra.mxu0 0.0
    %3600 = vmatprep.subr.mxu0 0.0
    %3601 = vmatpush2.msra.mxu0 0.0
    %3602 = vmatprep.subr.mxu0 0.0
    %3603 = vmatpush2.msra.mxu0 0.0
    %3604 = vmatprep.subr.mxu0 0.0
    %3605 = vmatpush2.msra.mxu0 0.0
    %3606 = vmatprep.subr.mxu0 0.0
    %3607 = vmatpush2.msra.mxu0 0.0
    %3608 = vmatprep.mubr.f32.mxu0 0.0
    %3609 = vmatmul.mubr.f32.gmra.mxu0 %v3542
    %v3610 = vpop.f32.mrf.mxu0
    %v3611 = vadd.f32 %v1831, %v3610
    %v3612 = vpop.f32.mrf.mxu0
    %3613 = vdwg.mxu0
    %vm3614 = vcmp.ge.f32.partialorder %v3611, 0.0
    %v3615 = vmul.f32 %v3611, 0.01
    %v3616 = vsel %vm3614, %v3611, %v3615
    %v3617 = vld [vmem:[#allocation74] sm:$0xff]
    %v3618 = vld [vmem:[#allocation74 + $0x8] sm:$0xff]
    %v3619 = vld [vmem:[#allocation74 + $0x10] sm:$0xff]
    %v3620 = vld [vmem:[#allocation74 + $0x18] sm:$0xff]
    %v3621 = vld [vmem:[#allocation74 + $0x20] sm:$0xff]
    %v3622 = vld [vmem:[#allocation74 + $0x28] sm:$0xff]
    %v3623 = vld [vmem:[#allocation74 + $0x30] sm:$0xff]
    %v3624 = vld [vmem:[#allocation74 + $0x38] sm:$0xff]
    %v3625 = vld [vmem:[#allocation74 + $0x40] sm:$0xff]
    %v3626 = vld [vmem:[#allocation74 + $0x48] sm:$0xff]
    %v3627 = vld [vmem:[#allocation74 + $0x50] sm:$0xff]
    %v3628 = vld [vmem:[#allocation74 + $0x58] sm:$0xff]
    %v3629 = vld [vmem:[#allocation74 + $0x60] sm:$0xff]
    %v3630 = vld [vmem:[#allocation74 + $0x68] sm:$0xff]
    %v3631 = vld [vmem:[#allocation74 + $0x70] sm:$0xff]
    %v3632 = vld [vmem:[#allocation74 + $0x78] sm:$0xff]
    %v3633 = vld [vmem:[#allocation75] sm:$0x1]
    %v3635 = vlaneseq
    %v3636 = vshrl.u32 %v3635, 7
    %v3637 = vsub.s32 0, %v3636
    %v3638 = vrot.slane %v3633, %v3637
    %3640 = vmatprep.subr.mxu0 0.0
    %3641 = vmatpush1.msra.mxu0 %v3632
    %3642 = vmatprep.subr.mxu0 0.0
    %3643 = vmatpush1.msra.mxu0 %v3631
    %3644 = vmatprep.subr.mxu0 0.0
    %3645 = vmatpush1.msra.mxu0 %v3630
    %3646 = vmatprep.subr.mxu0 0.0
    %3647 = vmatpush1.msra.mxu0 %v3629
    %3648 = vmatprep.subr.mxu0 0.0
    %3649 = vmatpush1.msra.mxu0 %v3628
    %3650 = vmatprep.subr.mxu0 0.0
    %3651 = vmatpush1.msra.mxu0 %v3627
    %3652 = vmatprep.subr.mxu0 0.0
    %3653 = vmatpush1.msra.mxu0 %v3626
    %3654 = vmatprep.subr.mxu0 0.0
    %3655 = vmatpush1.msra.mxu0 %v3625
    %3656 = vmatprep.subr.mxu0 0.0
    %3657 = vmatpush1.msra.mxu0 %v3624
    %3658 = vmatprep.subr.mxu0 0.0
    %3659 = vmatpush1.msra.mxu0 %v3623
    %3660 = vmatprep.subr.mxu0 0.0
    %3661 = vmatpush1.msra.mxu0 %v3622
    %3662 = vmatprep.subr.mxu0 0.0
    %3663 = vmatpush1.msra.mxu0 %v3621
    %3664 = vmatprep.subr.mxu0 0.0
    %3665 = vmatpush1.msra.mxu0 %v3620
    %3666 = vmatprep.subr.mxu0 0.0
    %3667 = vmatpush1.msra.mxu0 %v3619
    %3668 = vmatprep.subr.mxu0 0.0
    %3669 = vmatpush1.msra.mxu0 %v3618
    %3670 = vmatprep.subr.mxu0 0.0
    %3671 = vmatpush1.msra.mxu0 %v3617
    %3672 = vmatprep.subr.mxu0 0.0
    %3673 = vmatpush2.msra.mxu0 0.0
    %3674 = vmatprep.subr.mxu0 0.0
    %3675 = vmatpush2.msra.mxu0 0.0
    %3676 = vmatprep.subr.mxu0 0.0
    %3677 = vmatpush2.msra.mxu0 0.0
    %3678 = vmatprep.subr.mxu0 0.0
    %3679 = vmatpush2.msra.mxu0 0.0
    %3680 = vmatprep.subr.mxu0 0.0
    %3681 = vmatpush2.msra.mxu0 0.0
    %3682 = vmatprep.subr.mxu0 0.0
    %3683 = vmatpush2.msra.mxu0 0.0
    %3684 = vmatprep.subr.mxu0 0.0
    %3685 = vmatpush2.msra.mxu0 0.0
    %3686 = vmatprep.subr.mxu0 0.0
    %3687 = vmatpush2.msra.mxu0 0.0
    %3688 = vmatprep.subr.mxu0 0.0
    %3689 = vmatpush2.msra.mxu0 0.0
    %3690 = vmatprep.subr.mxu0 0.0
    %3691 = vmatpush2.msra.mxu0 0.0
    %3692 = vmatprep.subr.mxu0 0.0
    %3693 = vmatpush2.msra.mxu0 0.0
    %3694 = vmatprep.subr.mxu0 0.0
    %3695 = vmatpush2.msra.mxu0 0.0
    %3696 = vmatprep.subr.mxu0 0.0
    %3697 = vmatpush2.msra.mxu0 0.0
    %3698 = vmatprep.subr.mxu0 0.0
    %3699 = vmatpush2.msra.mxu0 0.0
    %3700 = vmatprep.subr.mxu0 0.0
    %3701 = vmatpush2.msra.mxu0 0.0
    %3702 = vmatprep.subr.mxu0 0.0
    %3703 = vmatpush2.msra.mxu0 0.0
    %3704 = vmatprep.mubr.f32.mxu0 0.0
    %3705 = vmatmul.mubr.f32.gmra.mxu0 %v3616
    %v3706 = vpop.f32.mrf.mxu0
    %v3707 = vadd.f32 %v3638, %v3706
    %v3708 = vpop.f32.mrf.mxu0
    %3709 = vdwg.mxu0
    %vm3710 = vcmp.ge.f32.partialorder %v3707, 0.0
    %v3711 = vmul.f32 %v3707, 0.01
    %v3712 = vsel %vm3710, %v3707, %v3711
    %v3713 = vld [vmem:[#allocation77] sm:$0xff]
    %v3714 = vld [vmem:[#allocation77 + $0x8] sm:$0xff]
    %v3715 = vld [vmem:[#allocation77 + $0x10] sm:$0xff]
    %v3716 = vld [vmem:[#allocation77 + $0x18] sm:$0xff]
    %v3717 = vld [vmem:[#allocation77 + $0x20] sm:$0xff]
    %v3718 = vld [vmem:[#allocation77 + $0x28] sm:$0xff]
    %v3719 = vld [vmem:[#allocation77 + $0x30] sm:$0xff]
    %v3720 = vld [vmem:[#allocation77 + $0x38] sm:$0xff]
    %v3721 = vld [vmem:[#allocation77 + $0x40] sm:$0xff]
    %v3722 = vld [vmem:[#allocation77 + $0x48] sm:$0xff]
    %v3723 = vld [vmem:[#allocation77 + $0x50] sm:$0xff]
    %v3724 = vld [vmem:[#allocation77 + $0x58] sm:$0xff]
    %v3725 = vld [vmem:[#allocation77 + $0x60] sm:$0xff]
    %v3726 = vld [vmem:[#allocation77 + $0x68] sm:$0xff]
    %v3727 = vld [vmem:[#allocation77 + $0x70] sm:$0xff]
    %v3728 = vld [vmem:[#allocation77 + $0x78] sm:$0xff]
    %v3729 = vld [vmem:[#allocation78] sm:$0x1]
    %v3731 = vlaneseq
    %v3732 = vshrl.u32 %v3731, 7
    %v3733 = vsub.s32 0, %v3732
    %v3734 = vrot.slane %v3729, %v3733
    %3736 = vmatprep.subr.mxu0 0.0
    %3737 = vmatpush1.msra.mxu0 %v3728
    %3738 = vmatprep.subr.mxu0 0.0
    %3739 = vmatpush1.msra.mxu0 %v3727
    %3740 = vmatprep.subr.mxu0 0.0
    %3741 = vmatpush1.msra.mxu0 %v3726
    %3742 = vmatprep.subr.mxu0 0.0
    %3743 = vmatpush1.msra.mxu0 %v3725
    %3744 = vmatprep.subr.mxu0 0.0
    %3745 = vmatpush1.msra.mxu0 %v3724
    %3746 = vmatprep.subr.mxu0 0.0
    %3747 = vmatpush1.msra.mxu0 %v3723
    %3748 = vmatprep.subr.mxu0 0.0
    %3749 = vmatpush1.msra.mxu0 %v3722
    %3750 = vmatprep.subr.mxu0 0.0
    %3751 = vmatpush1.msra.mxu0 %v3721
    %3752 = vmatprep.subr.mxu0 0.0
    %3753 = vmatpush1.msra.mxu0 %v3720
    %3754 = vmatprep.subr.mxu0 0.0
    %3755 = vmatpush1.msra.mxu0 %v3719
    %3756 = vmatprep.subr.mxu0 0.0
    %3757 = vmatpush1.msra.mxu0 %v3718
    %3758 = vmatprep.subr.mxu0 0.0
    %3759 = vmatpush1.msra.mxu0 %v3717
    %3760 = vmatprep.subr.mxu0 0.0
    %3761 = vmatpush1.msra.mxu0 %v3716
    %3762 = vmatprep.subr.mxu0 0.0
    %3763 = vmatpush1.msra.mxu0 %v3715
    %3764 = vmatprep.subr.mxu0 0.0
    %3765 = vmatpush1.msra.mxu0 %v3714
    %3766 = vmatprep.subr.mxu0 0.0
    %3767 = vmatpush1.msra.mxu0 %v3713
    %3768 = vmatprep.subr.mxu0 0.0
    %3769 = vmatpush2.msra.mxu0 0.0
    %3770 = vmatprep.subr.mxu0 0.0
    %3771 = vmatpush2.msra.mxu0 0.0
    %3772 = vmatprep.subr.mxu0 0.0
    %3773 = vmatpush2.msra.mxu0 0.0
    %3774 = vmatprep.subr.mxu0 0.0
    %3775 = vmatpush2.msra.mxu0 0.0
    %3776 = vmatprep.subr.mxu0 0.0
    %3777 = vmatpush2.msra.mxu0 0.0
    %3778 = vmatprep.subr.mxu0 0.0
    %3779 = vmatpush2.msra.mxu0 0.0
    %3780 = vmatprep.subr.mxu0 0.0
    %3781 = vmatpush2.msra.mxu0 0.0
    %3782 = vmatprep.subr.mxu0 0.0
    %3783 = vmatpush2.msra.mxu0 0.0
    %3784 = vmatprep.subr.mxu0 0.0
    %3785 = vmatpush2.msra.mxu0 0.0
    %3786 = vmatprep.subr.mxu0 0.0
    %3787 = vmatpush2.msra.mxu0 0.0
    %3788 = vmatprep.subr.mxu0 0.0
    %3789 = vmatpush2.msra.mxu0 0.0
    %3790 = vmatprep.subr.mxu0 0.0
    %3791 = vmatpush2.msra.mxu0 0.0
    %3792 = vmatprep.subr.mxu0 0.0
    %3793 = vmatpush2.msra.mxu0 0.0
    %3794 = vmatprep.subr.mxu0 0.0
    %3795 = vmatpush2.msra.mxu0 0.0
    %3796 = vmatprep.subr.mxu0 0.0
    %3797 = vmatpush2.msra.mxu0 0.0
    %3798 = vmatprep.subr.mxu0 0.0
    %3799 = vmatpush2.msra.mxu0 0.0
    %3800 = vmatprep.mubr.f32.mxu0 0.0
    %3801 = vmatmul.mubr.f32.gmra.mxu0 %v3712
    %v3802 = vpop.f32.mrf.mxu0
    %v3803 = vadd.f32 %v3734, %v3802
    %v3804 = vpop.f32.mrf.mxu0
    %3805 = vdwg.mxu0
    %vm3806 = vcmp.ge.f32.partialorder %v3803, 0.0
    %v3807 = vmul.f32 %v3803, 0.01
    %v3808 = vsel %vm3806, %v3803, %v3807
    %v3809 = vld [vmem:[#allocation80] sm:$0xff]
    %v3810 = vld [vmem:[#allocation80 + $0x8] sm:$0xff]
    %v3811 = vld [vmem:[#allocation80 + $0x10] sm:$0xff]
    %v3812 = vld [vmem:[#allocation80 + $0x18] sm:$0xff]
    %v3813 = vld [vmem:[#allocation80 + $0x20] sm:$0xff]
    %v3814 = vld [vmem:[#allocation80 + $0x28] sm:$0xff]
    %v3815 = vld [vmem:[#allocation80 + $0x30] sm:$0xff]
    %v3816 = vld [vmem:[#allocation80 + $0x38] sm:$0xff]
    %v3817 = vld [vmem:[#allocation80 + $0x40] sm:$0xff]
    %v3818 = vld [vmem:[#allocation80 + $0x48] sm:$0xff]
    %v3819 = vld [vmem:[#allocation80 + $0x50] sm:$0xff]
    %v3820 = vld [vmem:[#allocation80 + $0x58] sm:$0xff]
    %v3821 = vld [vmem:[#allocation80 + $0x60] sm:$0xff]
    %v3822 = vld [vmem:[#allocation80 + $0x68] sm:$0xff]
    %v3823 = vld [vmem:[#allocation80 + $0x70] sm:$0xff]
    %v3824 = vld [vmem:[#allocation80 + $0x78] sm:$0xff]
    %v3825 = vld [vmem:[#allocation80 + $0x80] sm:$0xff]
    %v3826 = vld [vmem:[#allocation80 + $0x88] sm:$0xff]
    %v3827 = vld [vmem:[#allocation80 + $0x90] sm:$0xff]
    %v3828 = vld [vmem:[#allocation80 + $0x98] sm:$0xff]
    %v3829 = vld [vmem:[#allocation80 + $0xa0] sm:$0xff]
    %v3830 = vld [vmem:[#allocation80 + $0xa8] sm:$0xff]
    %v3831 = vld [vmem:[#allocation80 + $0xb0] sm:$0xff]
    %v3832 = vld [vmem:[#allocation80 + $0xb8] sm:$0xff]
    %v3833 = vld [vmem:[#allocation80 + $0xc0] sm:$0xff]
    %v3834 = vld [vmem:[#allocation80 + $0xc8] sm:$0xff]
    %v3835 = vld [vmem:[#allocation80 + $0xd0] sm:$0xff]
    %v3836 = vld [vmem:[#allocation80 + $0xd8] sm:$0xff]
    %v3837 = vld [vmem:[#allocation80 + $0xe0] sm:$0xff]
    %v3838 = vld [vmem:[#allocation80 + $0xe8] sm:$0xff]
    %v3839 = vld [vmem:[#allocation80 + $0xf0] sm:$0xff]
    %v3840 = vld [vmem:[#allocation80 + $0xf8] sm:$0xff]
    %v3841 = vld [vmem:[#allocation81] sm:$0x3]
    %v3843 = vlaneseq
    %v3844 = vshrl.u32 %v3843, 7
    %v3845 = vsub.s32 0, %v3844
    %v3846 = vrot.slane %v3841, %v3845
    %v3847 = vlaneseq
    %v3848 = vshrl.u32 %v3847, 7
    %v3849 = vsub.s32 1, %v3848
    %v3850 = vrot.slane %v3841, %v3849
    %3853 = vmatprep.subr.mxu0 %v3840
    %3854 = vmatpush1.msra.mxu0 %v3839
    %3855 = vmatprep.subr.mxu0 %v3838
    %3856 = vmatpush1.msra.mxu0 %v3837
    %3857 = vmatprep.subr.mxu0 %v3836
    %3858 = vmatpush1.msra.mxu0 %v3835
    %3859 = vmatprep.subr.mxu0 %v3834
    %3860 = vmatpush1.msra.mxu0 %v3833
    %3861 = vmatprep.subr.mxu0 %v3832
    %3862 = vmatpush1.msra.mxu0 %v3831
    %3863 = vmatprep.subr.mxu0 %v3830
    %3864 = vmatpush1.msra.mxu0 %v3829
    %3865 = vmatprep.subr.mxu0 %v3828
    %3866 = vmatpush1.msra.mxu0 %v3827
    %3867 = vmatprep.subr.mxu0 %v3826
    %3868 = vmatpush1.msra.mxu0 %v3825
    %3869 = vmatprep.subr.mxu0 %v3824
    %3870 = vmatpush1.msra.mxu0 %v3823
    %3871 = vmatprep.subr.mxu0 %v3822
    %3872 = vmatpush1.msra.mxu0 %v3821
    %3873 = vmatprep.subr.mxu0 %v3820
    %3874 = vmatpush1.msra.mxu0 %v3819
    %3875 = vmatprep.subr.mxu0 %v3818
    %3876 = vmatpush1.msra.mxu0 %v3817
    %3877 = vmatprep.subr.mxu0 %v3816
    %3878 = vmatpush1.msra.mxu0 %v3815
    %3879 = vmatprep.subr.mxu0 %v3814
    %3880 = vmatpush1.msra.mxu0 %v3813
    %3881 = vmatprep.subr.mxu0 %v3812
    %3882 = vmatpush1.msra.mxu0 %v3811
    %3883 = vmatprep.subr.mxu0 %v3810
    %3884 = vmatpush1.msra.mxu0 %v3809
    %3885 = vmatprep.subr.mxu0 0.0
    %3886 = vmatpush2.msra.mxu0 0.0
    %3887 = vmatprep.subr.mxu0 0.0
    %3888 = vmatpush2.msra.mxu0 0.0
    %3889 = vmatprep.subr.mxu0 0.0
    %3890 = vmatpush2.msra.mxu0 0.0
    %3891 = vmatprep.subr.mxu0 0.0
    %3892 = vmatpush2.msra.mxu0 0.0
    %3893 = vmatprep.subr.mxu0 0.0
    %3894 = vmatpush2.msra.mxu0 0.0
    %3895 = vmatprep.subr.mxu0 0.0
    %3896 = vmatpush2.msra.mxu0 0.0
    %3897 = vmatprep.subr.mxu0 0.0
    %3898 = vmatpush2.msra.mxu0 0.0
    %3899 = vmatprep.subr.mxu0 0.0
    %3900 = vmatpush2.msra.mxu0 0.0
    %3901 = vmatprep.subr.mxu0 0.0
    %3902 = vmatpush2.msra.mxu0 0.0
    %3903 = vmatprep.subr.mxu0 0.0
    %3904 = vmatpush2.msra.mxu0 0.0
    %3905 = vmatprep.subr.mxu0 0.0
    %3906 = vmatpush2.msra.mxu0 0.0
    %3907 = vmatprep.subr.mxu0 0.0
    %3908 = vmatpush2.msra.mxu0 0.0
    %3909 = vmatprep.subr.mxu0 0.0
    %3910 = vmatpush2.msra.mxu0 0.0
    %3911 = vmatprep.subr.mxu0 0.0
    %3912 = vmatpush2.msra.mxu0 0.0
    %3913 = vmatprep.subr.mxu0 0.0
    %3914 = vmatpush2.msra.mxu0 0.0
    %3915 = vmatprep.subr.mxu0 0.0
    %3916 = vmatpush2.msra.mxu0 0.0
    %3917 = vmatprep.mubr.f32.mxu0 0.0
    %3918 = vmatmul.mubr.f32.gmra.mxu0 %v3808
    %v3919 = vpop.f32.mrf.mxu0
    %v3920 = vadd.f32 %v3846, %v3919
    %v3921 = vpop.f32.mrf.mxu0
    %v3922 = vadd.f32 %v3850, %v3921
    %3923 = vdwg.mxu0
    %v3924 = vtanh.pop %v3920
    %v3925 = vmul.f32 %v3924, 1.442695
    %v3926 = vpow.pop %v3925
    %v3927 = vmul.f32 %v3538, %v3926
    %v3928 = vadd.f32 %v3927, %v3922
    %v3929 = vsel %vm2320, %v3924, 0.0
    %3930 = vadd.xlane.f32.xlu0 %v3929
    %v3931 = vpop.xlane.xlu0 %3930
    %v3932 = vadd.f32 %v3522, %v3931
    %v3933 = vld [vmem:[#allocation83] sm:$0xff]
    %v3934 = vld [vmem:[#allocation83 + $0x8] sm:$0xff]
    %v3936 = vsel %vm1232, %v3928, 0
    %3938 = vmatprep.subr.mxu0 0.0
    %3939 = vmatpush1.msra.mxu0 0.0
    %3940 = vmatprep.subr.mxu0 0.0
    %3941 = vmatpush1.msra.mxu0 0.0
    %3942 = vmatprep.subr.mxu0 0.0
    %3943 = vmatpush1.msra.mxu0 0.0
    %3944 = vmatprep.subr.mxu0 0.0
    %3945 = vmatpush1.msra.mxu0 0.0
    %3946 = vmatprep.subr.mxu0 0.0
    %3947 = vmatpush1.msra.mxu0 0.0
    %3948 = vmatprep.subr.mxu0 0.0
    %3949 = vmatpush1.msra.mxu0 0.0
    %3950 = vmatprep.subr.mxu0 0.0
    %3951 = vmatpush1.msra.mxu0 0.0
    %3952 = vmatprep.subr.mxu0 0.0
    %3953 = vmatpush1.msra.mxu0 0.0
    %3954 = vmatprep.subr.mxu0 0.0
    %3955 = vmatpush1.msra.mxu0 0.0
    %3956 = vmatprep.subr.mxu0 0.0
    %3957 = vmatpush1.msra.mxu0 0.0
    %3958 = vmatprep.subr.mxu0 0.0
    %3959 = vmatpush1.msra.mxu0 0.0
    %3960 = vmatprep.subr.mxu0 0.0
    %3961 = vmatpush1.msra.mxu0 0.0
    %3962 = vmatprep.subr.mxu0 0.0
    %3963 = vmatpush1.msra.mxu0 0.0
    %3964 = vmatprep.subr.mxu0 0.0
    %3965 = vmatpush1.msra.mxu0 0.0
    %3966 = vmatprep.subr.mxu0 0.0
    %3967 = vmatpush1.msra.mxu0 %v3934
    %3968 = vmatprep.subr.mxu0 0.0
    %3969 = vmatpush1.msra.mxu0 %v3933
    %3970 = vmatprep.subr.mxu0 0.0
    %3971 = vmatpush2.msra.mxu0 0.0
    %3972 = vmatprep.subr.mxu0 0.0
    %3973 = vmatpush2.msra.mxu0 0.0
    %3974 = vmatprep.subr.mxu0 0.0
    %3975 = vmatpush2.msra.mxu0 0.0
    %3976 = vmatprep.subr.mxu0 0.0
    %3977 = vmatpush2.msra.mxu0 0.0
    %3978 = vmatprep.subr.mxu0 0.0
    %3979 = vmatpush2.msra.mxu0 0.0
    %3980 = vmatprep.subr.mxu0 0.0
    %3981 = vmatpush2.msra.mxu0 0.0
    %3982 = vmatprep.subr.mxu0 0.0
    %3983 = vmatpush2.msra.mxu0 0.0
    %3984 = vmatprep.subr.mxu0 0.0
    %3985 = vmatpush2.msra.mxu0 0.0
    %3986 = vmatprep.subr.mxu0 0.0
    %3987 = vmatpush2.msra.mxu0 0.0
    %3988 = vmatprep.subr.mxu0 0.0
    %3989 = vmatpush2.msra.mxu0 0.0
    %3990 = vmatprep.subr.mxu0 0.0
    %3991 = vmatpush2.msra.mxu0 0.0
    %3992 = vmatprep.subr.mxu0 0.0
    %3993 = vmatpush2.msra.mxu0 0.0
    %3994 = vmatprep.subr.mxu0 0.0
    %3995 = vmatpush2.msra.mxu0 0.0
    %3996 = vmatprep.subr.mxu0 0.0
    %3997 = vmatpush2.msra.mxu0 0.0
    %3998 = vmatprep.subr.mxu0 0.0
    %3999 = vmatpush2.msra.mxu0 0.0
    %4000 = vmatprep.subr.mxu0 0.0
    %4001 = vmatpush2.msra.mxu0 0.0
    %4002 = vmatprep.mubr.f32.mxu0 0.0
    %4003 = vmatmul.mubr.f32.gmra.mxu0 %v3936
    %v4004 = vpop.f32.mrf.mxu0
    %v4005 = vadd.f32 %v1833, %v4004
    %v4006 = vpop.f32.mrf.mxu0
    %4007 = vdwg.mxu0
    %vm4008 = vcmp.ge.f32.partialorder %v4005, 0.0
    %v4009 = vmul.f32 %v4005, 0.01
    %v4010 = vsel %vm4008, %v4005, %v4009
    %v4011 = vld [vmem:[#allocation84] sm:$0xff]
    %v4012 = vld [vmem:[#allocation84 + $0x8] sm:$0xff]
    %v4013 = vld [vmem:[#allocation84 + $0x10] sm:$0xff]
    %v4014 = vld [vmem:[#allocation84 + $0x18] sm:$0xff]
    %v4015 = vld [vmem:[#allocation84 + $0x20] sm:$0xff]
    %v4016 = vld [vmem:[#allocation84 + $0x28] sm:$0xff]
    %v4017 = vld [vmem:[#allocation84 + $0x30] sm:$0xff]
    %v4018 = vld [vmem:[#allocation84 + $0x38] sm:$0xff]
    %v4019 = vld [vmem:[#allocation84 + $0x40] sm:$0xff]
    %v4020 = vld [vmem:[#allocation84 + $0x48] sm:$0xff]
    %v4021 = vld [vmem:[#allocation84 + $0x50] sm:$0xff]
    %v4022 = vld [vmem:[#allocation84 + $0x58] sm:$0xff]
    %v4023 = vld [vmem:[#allocation84 + $0x60] sm:$0xff]
    %v4024 = vld [vmem:[#allocation84 + $0x68] sm:$0xff]
    %v4025 = vld [vmem:[#allocation84 + $0x70] sm:$0xff]
    %v4026 = vld [vmem:[#allocation84 + $0x78] sm:$0xff]
    %v4027 = vld [vmem:[#allocation86] sm:$0x1]
    %v4029 = vlaneseq
    %v4030 = vshrl.u32 %v4029, 7
    %v4031 = vsub.s32 0, %v4030
    %v4032 = vrot.slane %v4027, %v4031
    %4034 = vmatprep.subr.mxu0 0.0
    %4035 = vmatpush1.msra.mxu0 %v4026
    %4036 = vmatprep.subr.mxu0 0.0
    %4037 = vmatpush1.msra.mxu0 %v4025
    %4038 = vmatprep.subr.mxu0 0.0
    %4039 = vmatpush1.msra.mxu0 %v4024
    %4040 = vmatprep.subr.mxu0 0.0
    %4041 = vmatpush1.msra.mxu0 %v4023
    %4042 = vmatprep.subr.mxu0 0.0
    %4043 = vmatpush1.msra.mxu0 %v4022
    %4044 = vmatprep.subr.mxu0 0.0
    %4045 = vmatpush1.msra.mxu0 %v4021
    %4046 = vmatprep.subr.mxu0 0.0
    %4047 = vmatpush1.msra.mxu0 %v4020
    %4048 = vmatprep.subr.mxu0 0.0
    %4049 = vmatpush1.msra.mxu0 %v4019
    %4050 = vmatprep.subr.mxu0 0.0
    %4051 = vmatpush1.msra.mxu0 %v4018
    %4052 = vmatprep.subr.mxu0 0.0
    %4053 = vmatpush1.msra.mxu0 %v4017
    %4054 = vmatprep.subr.mxu0 0.0
    %4055 = vmatpush1.msra.mxu0 %v4016
    %4056 = vmatprep.subr.mxu0 0.0
    %4057 = vmatpush1.msra.mxu0 %v4015
    %4058 = vmatprep.subr.mxu0 0.0
    %4059 = vmatpush1.msra.mxu0 %v4014
    %4060 = vmatprep.subr.mxu0 0.0
    %4061 = vmatpush1.msra.mxu0 %v4013
    %4062 = vmatprep.subr.mxu0 0.0
    %4063 = vmatpush1.msra.mxu0 %v4012
    %4064 = vmatprep.subr.mxu0 0.0
    %4065 = vmatpush1.msra.mxu0 %v4011
    %4066 = vmatprep.subr.mxu0 0.0
    %4067 = vmatpush2.msra.mxu0 0.0
    %4068 = vmatprep.subr.mxu0 0.0
    %4069 = vmatpush2.msra.mxu0 0.0
    %4070 = vmatprep.subr.mxu0 0.0
    %4071 = vmatpush2.msra.mxu0 0.0
    %4072 = vmatprep.subr.mxu0 0.0
    %4073 = vmatpush2.msra.mxu0 0.0
    %4074 = vmatprep.subr.mxu0 0.0
    %4075 = vmatpush2.msra.mxu0 0.0
    %4076 = vmatprep.subr.mxu0 0.0
    %4077 = vmatpush2.msra.mxu0 0.0
    %4078 = vmatprep.subr.mxu0 0.0
    %4079 = vmatpush2.msra.mxu0 0.0
    %4080 = vmatprep.subr.mxu0 0.0
    %4081 = vmatpush2.msra.mxu0 0.0
    %4082 = vmatprep.subr.mxu0 0.0
    %4083 = vmatpush2.msra.mxu0 0.0
    %4084 = vmatprep.subr.mxu0 0.0
    %4085 = vmatpush2.msra.mxu0 0.0
    %4086 = vmatprep.subr.mxu0 0.0
    %4087 = vmatpush2.msra.mxu0 0.0
    %4088 = vmatprep.subr.mxu0 0.0
    %4089 = vmatpush2.msra.mxu0 0.0
    %4090 = vmatprep.subr.mxu0 0.0
    %4091 = vmatpush2.msra.mxu0 0.0
    %4092 = vmatprep.subr.mxu0 0.0
    %4093 = vmatpush2.msra.mxu0 0.0
    %4094 = vmatprep.subr.mxu0 0.0
    %4095 = vmatpush2.msra.mxu0 0.0
    %4096 = vmatprep.subr.mxu0 0.0
    %4097 = vmatpush2.msra.mxu0 0.0
    %4098 = vmatprep.mubr.f32.mxu0 0.0
    %4099 = vmatmul.mubr.f32.gmra.mxu0 %v4010
    %v4100 = vpop.f32.mrf.mxu0
    %v4101 = vadd.f32 %v4032, %v4100
    %v4102 = vpop.f32.mrf.mxu0
    %4103 = vdwg.mxu0
    %vm4104 = vcmp.ge.f32.partialorder %v4101, 0.0
    %v4105 = vmul.f32 %v4101, 0.01
    %v4106 = vsel %vm4104, %v4101, %v4105
    %v4107 = vld [vmem:[#allocation87] sm:$0xff]
    %v4108 = vld [vmem:[#allocation87 + $0x8] sm:$0xff]
    %v4109 = vld [vmem:[#allocation87 + $0x10] sm:$0xff]
    %v4110 = vld [vmem:[#allocation87 + $0x18] sm:$0xff]
    %v4111 = vld [vmem:[#allocation87 + $0x20] sm:$0xff]
    %v4112 = vld [vmem:[#allocation87 + $0x28] sm:$0xff]
    %v4113 = vld [vmem:[#allocation87 + $0x30] sm:$0xff]
    %v4114 = vld [vmem:[#allocation87 + $0x38] sm:$0xff]
    %v4115 = vld [vmem:[#allocation87 + $0x40] sm:$0xff]
    %v4116 = vld [vmem:[#allocation87 + $0x48] sm:$0xff]
    %v4117 = vld [vmem:[#allocation87 + $0x50] sm:$0xff]
    %v4118 = vld [vmem:[#allocation87 + $0x58] sm:$0xff]
    %v4119 = vld [vmem:[#allocation87 + $0x60] sm:$0xff]
    %v4120 = vld [vmem:[#allocation87 + $0x68] sm:$0xff]
    %v4121 = vld [vmem:[#allocation87 + $0x70] sm:$0xff]
    %v4122 = vld [vmem:[#allocation87 + $0x78] sm:$0xff]
    %v4123 = vld [vmem:[#allocation89] sm:$0x1]
    %v4125 = vlaneseq
    %v4126 = vshrl.u32 %v4125, 7
    %v4127 = vsub.s32 0, %v4126
    %v4128 = vrot.slane %v4123, %v4127
    %4130 = vmatprep.subr.mxu0 0.0
    %4131 = vmatpush1.msra.mxu0 %v4122
    %4132 = vmatprep.subr.mxu0 0.0
    %4133 = vmatpush1.msra.mxu0 %v4121
    %4134 = vmatprep.subr.mxu0 0.0
    %4135 = vmatpush1.msra.mxu0 %v4120
    %4136 = vmatprep.subr.mxu0 0.0
    %4137 = vmatpush1.msra.mxu0 %v4119
    %4138 = vmatprep.subr.mxu0 0.0
    %4139 = vmatpush1.msra.mxu0 %v4118
    %4140 = vmatprep.subr.mxu0 0.0
    %4141 = vmatpush1.msra.mxu0 %v4117
    %4142 = vmatprep.subr.mxu0 0.0
    %4143 = vmatpush1.msra.mxu0 %v4116
    %4144 = vmatprep.subr.mxu0 0.0
    %4145 = vmatpush1.msra.mxu0 %v4115
    %4146 = vmatprep.subr.mxu0 0.0
    %4147 = vmatpush1.msra.mxu0 %v4114
    %4148 = vmatprep.subr.mxu0 0.0
    %4149 = vmatpush1.msra.mxu0 %v4113
    %4150 = vmatprep.subr.mxu0 0.0
    %4151 = vmatpush1.msra.mxu0 %v4112
    %4152 = vmatprep.subr.mxu0 0.0
    %4153 = vmatpush1.msra.mxu0 %v4111
    %4154 = vmatprep.subr.mxu0 0.0
    %4155 = vmatpush1.msra.mxu0 %v4110
    %4156 = vmatprep.subr.mxu0 0.0
    %4157 = vmatpush1.msra.mxu0 %v4109
    %4158 = vmatprep.subr.mxu0 0.0
    %4159 = vmatpush1.msra.mxu0 %v4108
    %4160 = vmatprep.subr.mxu0 0.0
    %4161 = vmatpush1.msra.mxu0 %v4107
    %4162 = vmatprep.subr.mxu0 0.0
    %4163 = vmatpush2.msra.mxu0 0.0
    %4164 = vmatprep.subr.mxu0 0.0
    %4165 = vmatpush2.msra.mxu0 0.0
    %4166 = vmatprep.subr.mxu0 0.0
    %4167 = vmatpush2.msra.mxu0 0.0
    %4168 = vmatprep.subr.mxu0 0.0
    %4169 = vmatpush2.msra.mxu0 0.0
    %4170 = vmatprep.subr.mxu0 0.0
    %4171 = vmatpush2.msra.mxu0 0.0
    %4172 = vmatprep.subr.mxu0 0.0
    %4173 = vmatpush2.msra.mxu0 0.0
    %4174 = vmatprep.subr.mxu0 0.0
    %4175 = vmatpush2.msra.mxu0 0.0
    %4176 = vmatprep.subr.mxu0 0.0
    %4177 = vmatpush2.msra.mxu0 0.0
    %4178 = vmatprep.subr.mxu0 0.0
    %4179 = vmatpush2.msra.mxu0 0.0
    %4180 = vmatprep.subr.mxu0 0.0
    %4181 = vmatpush2.msra.mxu0 0.0
    %4182 = vmatprep.subr.mxu0 0.0
    %4183 = vmatpush2.msra.mxu0 0.0
    %4184 = vmatprep.subr.mxu0 0.0
    %4185 = vmatpush2.msra.mxu0 0.0
    %4186 = vmatprep.subr.mxu0 0.0
    %4187 = vmatpush2.msra.mxu0 0.0
    %4188 = vmatprep.subr.mxu0 0.0
    %4189 = vmatpush2.msra.mxu0 0.0
    %4190 = vmatprep.subr.mxu0 0.0
    %4191 = vmatpush2.msra.mxu0 0.0
    %4192 = vmatprep.subr.mxu0 0.0
    %4193 = vmatpush2.msra.mxu0 0.0
    %4194 = vmatprep.mubr.f32.mxu0 0.0
    %4195 = vmatmul.mubr.f32.gmra.mxu0 %v4106
    %v4196 = vpop.f32.mrf.mxu0
    %v4197 = vadd.f32 %v4128, %v4196
    %v4198 = vpop.f32.mrf.mxu0
    %4199 = vdwg.mxu0
    %vm4200 = vcmp.ge.f32.partialorder %v4197, 0.0
    %v4201 = vmul.f32 %v4197, 0.01
    %v4202 = vsel %vm4200, %v4197, %v4201
    %v4203 = vld [vmem:[#allocation90] sm:$0xff]
    %v4204 = vld [vmem:[#allocation90 + $0x8] sm:$0xff]
    %v4205 = vld [vmem:[#allocation90 + $0x10] sm:$0xff]
    %v4206 = vld [vmem:[#allocation90 + $0x18] sm:$0xff]
    %v4207 = vld [vmem:[#allocation90 + $0x20] sm:$0xff]
    %v4208 = vld [vmem:[#allocation90 + $0x28] sm:$0xff]
    %v4209 = vld [vmem:[#allocation90 + $0x30] sm:$0xff]
    %v4210 = vld [vmem:[#allocation90 + $0x38] sm:$0xff]
    %v4211 = vld [vmem:[#allocation90 + $0x40] sm:$0xff]
    %v4212 = vld [vmem:[#allocation90 + $0x48] sm:$0xff]
    %v4213 = vld [vmem:[#allocation90 + $0x50] sm:$0xff]
    %v4214 = vld [vmem:[#allocation90 + $0x58] sm:$0xff]
    %v4215 = vld [vmem:[#allocation90 + $0x60] sm:$0xff]
    %v4216 = vld [vmem:[#allocation90 + $0x68] sm:$0xff]
    %v4217 = vld [vmem:[#allocation90 + $0x70] sm:$0xff]
    %v4218 = vld [vmem:[#allocation90 + $0x78] sm:$0xff]
    %v4219 = vld [vmem:[#allocation90 + $0x80] sm:$0xff]
    %v4220 = vld [vmem:[#allocation90 + $0x88] sm:$0xff]
    %v4221 = vld [vmem:[#allocation90 + $0x90] sm:$0xff]
    %v4222 = vld [vmem:[#allocation90 + $0x98] sm:$0xff]
    %v4223 = vld [vmem:[#allocation90 + $0xa0] sm:$0xff]
    %v4224 = vld [vmem:[#allocation90 + $0xa8] sm:$0xff]
    %v4225 = vld [vmem:[#allocation90 + $0xb0] sm:$0xff]
    %v4226 = vld [vmem:[#allocation90 + $0xb8] sm:$0xff]
    %v4227 = vld [vmem:[#allocation90 + $0xc0] sm:$0xff]
    %v4228 = vld [vmem:[#allocation90 + $0xc8] sm:$0xff]
    %v4229 = vld [vmem:[#allocation90 + $0xd0] sm:$0xff]
    %v4230 = vld [vmem:[#allocation90 + $0xd8] sm:$0xff]
    %v4231 = vld [vmem:[#allocation90 + $0xe0] sm:$0xff]
    %v4232 = vld [vmem:[#allocation90 + $0xe8] sm:$0xff]
    %v4233 = vld [vmem:[#allocation90 + $0xf0] sm:$0xff]
    %v4234 = vld [vmem:[#allocation90 + $0xf8] sm:$0xff]
    %v4235 = vld [vmem:[#allocation92] sm:$0x3]
    %v4237 = vlaneseq
    %v4238 = vshrl.u32 %v4237, 7
    %v4239 = vsub.s32 0, %v4238
    %v4240 = vrot.slane %v4235, %v4239
    %v4241 = vlaneseq
    %v4242 = vshrl.u32 %v4241, 7
    %v4243 = vsub.s32 1, %v4242
    %v4244 = vrot.slane %v4235, %v4243
    %4247 = vmatprep.subr.mxu0 %v4234
    %4248 = vmatpush1.msra.mxu0 %v4233
    %4249 = vmatprep.subr.mxu0 %v4232
    %4250 = vmatpush1.msra.mxu0 %v4231
    %4251 = vmatprep.subr.mxu0 %v4230
    %4252 = vmatpush1.msra.mxu0 %v4229
    %4253 = vmatprep.subr.mxu0 %v4228
    %4254 = vmatpush1.msra.mxu0 %v4227
    %4255 = vmatprep.subr.mxu0 %v4226
    %4256 = vmatpush1.msra.mxu0 %v4225
    %4257 = vmatprep.subr.mxu0 %v4224
    %4258 = vmatpush1.msra.mxu0 %v4223
    %4259 = vmatprep.subr.mxu0 %v4222
    %4260 = vmatpush1.msra.mxu0 %v4221
    %4261 = vmatprep.subr.mxu0 %v4220
    %4262 = vmatpush1.msra.mxu0 %v4219
    %4263 = vmatprep.subr.mxu0 %v4218
    %4264 = vmatpush1.msra.mxu0 %v4217
    %4265 = vmatprep.subr.mxu0 %v4216
    %4266 = vmatpush1.msra.mxu0 %v4215
    %4267 = vmatprep.subr.mxu0 %v4214
    %4268 = vmatpush1.msra.mxu0 %v4213
    %4269 = vmatprep.subr.mxu0 %v4212
    %4270 = vmatpush1.msra.mxu0 %v4211
    %4271 = vmatprep.subr.mxu0 %v4210
    %4272 = vmatpush1.msra.mxu0 %v4209
    %4273 = vmatprep.subr.mxu0 %v4208
    %4274 = vmatpush1.msra.mxu0 %v4207
    %4275 = vmatprep.subr.mxu0 %v4206
    %4276 = vmatpush1.msra.mxu0 %v4205
    %4277 = vmatprep.subr.mxu0 %v4204
    %4278 = vmatpush1.msra.mxu0 %v4203
    %4279 = vmatprep.subr.mxu0 0.0
    %4280 = vmatpush2.msra.mxu0 0.0
    %4281 = vmatprep.subr.mxu0 0.0
    %4282 = vmatpush2.msra.mxu0 0.0
    %4283 = vmatprep.subr.mxu0 0.0
    %4284 = vmatpush2.msra.mxu0 0.0
    %4285 = vmatprep.subr.mxu0 0.0
    %4286 = vmatpush2.msra.mxu0 0.0
    %4287 = vmatprep.subr.mxu0 0.0
    %4288 = vmatpush2.msra.mxu0 0.0
    %4289 = vmatprep.subr.mxu0 0.0
    %4290 = vmatpush2.msra.mxu0 0.0
    %4291 = vmatprep.subr.mxu0 0.0
    %4292 = vmatpush2.msra.mxu0 0.0
    %4293 = vmatprep.subr.mxu0 0.0
    %4294 = vmatpush2.msra.mxu0 0.0
    %4295 = vmatprep.subr.mxu0 0.0
    %4296 = vmatpush2.msra.mxu0 0.0
    %4297 = vmatprep.subr.mxu0 0.0
    %4298 = vmatpush2.msra.mxu0 0.0
    %4299 = vmatprep.subr.mxu0 0.0
    %4300 = vmatpush2.msra.mxu0 0.0
    %4301 = vmatprep.subr.mxu0 0.0
    %4302 = vmatpush2.msra.mxu0 0.0
    %4303 = vmatprep.subr.mxu0 0.0
    %4304 = vmatpush2.msra.mxu0 0.0
    %4305 = vmatprep.subr.mxu0 0.0
    %4306 = vmatpush2.msra.mxu0 0.0
    %4307 = vmatprep.subr.mxu0 0.0
    %4308 = vmatpush2.msra.mxu0 0.0
    %4309 = vmatprep.subr.mxu0 0.0
    %4310 = vmatpush2.msra.mxu0 0.0
    %4311 = vmatprep.mubr.f32.mxu0 0.0
    %4312 = vmatmul.mubr.f32.gmra.mxu0 %v4202
    %v4313 = vpop.f32.mrf.mxu0
    %v4314 = vadd.f32 %v4240, %v4313
    %v4315 = vpop.f32.mrf.mxu0
    %v4316 = vadd.f32 %v4244, %v4315
    %4317 = vdwg.mxu0
    %v4318 = vtanh.pop %v4314
    %v4319 = vmul.f32 %v4318, 1.442695
    %v4320 = vpow.pop %v4319
    %v4321 = vmul.f32 %v3928, %v4320
    %v4322 = vadd.f32 %v4321, %v4316
    %v4323 = vsel %vm2320, %v4318, 0.0
    %4324 = vadd.xlane.f32.xlu0 %v4323
    %v4325 = vpop.xlane.xlu0 %4324
    %v4326 = vadd.f32 %v3932, %v4325
    %v4327 = vld [vmem:[#allocation95] sm:$0x1]
    %v4328 = vld [vmem:[#allocation93] sm:$0x1]
    %v4330 = vlaneseq
    %v4331 = vshrl.u32 %v4330, 7
    %v4332 = vsub.s32 0, %v4331
    %v4333 = vrot.slane %v4328, %v4332
    %v4335 = vadd.f32 %v4322, %v4333
    %v4337 = vlaneseq
    %v4338 = vshrl.u32 %v4337, 7
    %v4339 = vsub.s32 0, %v4338
    %v4340 = vrot.slane %v4327, %v4339
    %v4342 = vmul.f32 %v4340, %v4335
    %v4343 = vld [vmem:[#allocation96] sm:$0xff]
    %v4344 = vld [vmem:[#allocation96 + $0x8] sm:$0xff]
    %v4346 = vsel %vm1232, %v4342, 0
    %4348 = vmatprep.subr.mxu0 0.0
    %4349 = vmatpush1.msra.mxu0 0.0
    %4350 = vmatprep.subr.mxu0 0.0
    %4351 = vmatpush1.msra.mxu0 0.0
    %4352 = vmatprep.subr.mxu0 0.0
    %4353 = vmatpush1.msra.mxu0 0.0
    %4354 = vmatprep.subr.mxu0 0.0
    %4355 = vmatpush1.msra.mxu0 0.0
    %4356 = vmatprep.subr.mxu0 0.0
    %4357 = vmatpush1.msra.mxu0 0.0
    %4358 = vmatprep.subr.mxu0 0.0
    %4359 = vmatpush1.msra.mxu0 0.0
    %4360 = vmatprep.subr.mxu0 0.0
    %4361 = vmatpush1.msra.mxu0 0.0
    %4362 = vmatprep.subr.mxu0 0.0
    %4363 = vmatpush1.msra.mxu0 0.0
    %4364 = vmatprep.subr.mxu0 0.0
    %4365 = vmatpush1.msra.mxu0 0.0
    %4366 = vmatprep.subr.mxu0 0.0
    %4367 = vmatpush1.msra.mxu0 0.0
    %4368 = vmatprep.subr.mxu0 0.0
    %4369 = vmatpush1.msra.mxu0 0.0
    %4370 = vmatprep.subr.mxu0 0.0
    %4371 = vmatpush1.msra.mxu0 0.0
    %4372 = vmatprep.subr.mxu0 0.0
    %4373 = vmatpush1.msra.mxu0 0.0
    %4374 = vmatprep.subr.mxu0 0.0
    %4375 = vmatpush1.msra.mxu0 0.0
    %4376 = vmatprep.subr.mxu0 0.0
    %4377 = vmatpush1.msra.mxu0 %v4344
    %4378 = vmatprep.subr.mxu0 0.0
    %4379 = vmatpush1.msra.mxu0 %v4343
    %4380 = vmatprep.subr.mxu0 0.0
    %4381 = vmatpush2.msra.mxu0 0.0
    %4382 = vmatprep.subr.mxu0 0.0
    %4383 = vmatpush2.msra.mxu0 0.0
    %4384 = vmatprep.subr.mxu0 0.0
    %4385 = vmatpush2.msra.mxu0 0.0
    %4386 = vmatprep.subr.mxu0 0.0
    %4387 = vmatpush2.msra.mxu0 0.0
    %4388 = vmatprep.subr.mxu0 0.0
    %4389 = vmatpush2.msra.mxu0 0.0
    %4390 = vmatprep.subr.mxu0 0.0
    %4391 = vmatpush2.msra.mxu0 0.0
    %4392 = vmatprep.subr.mxu0 0.0
    %4393 = vmatpush2.msra.mxu0 0.0
    %4394 = vmatprep.subr.mxu0 0.0
    %4395 = vmatpush2.msra.mxu0 0.0
    %4396 = vmatprep.subr.mxu0 0.0
    %4397 = vmatpush2.msra.mxu0 0.0
    %4398 = vmatprep.subr.mxu0 0.0
    %4399 = vmatpush2.msra.mxu0 0.0
    %4400 = vmatprep.subr.mxu0 0.0
    %4401 = vmatpush2.msra.mxu0 0.0
    %4402 = vmatprep.subr.mxu0 0.0
    %4403 = vmatpush2.msra.mxu0 0.0
    %4404 = vmatprep.subr.mxu0 0.0
    %4405 = vmatpush2.msra.mxu0 0.0
    %4406 = vmatprep.subr.mxu0 0.0
    %4407 = vmatpush2.msra.mxu0 0.0
    %4408 = vmatprep.subr.mxu0 0.0
    %4409 = vmatpush2.msra.mxu0 0.0
    %4410 = vmatprep.subr.mxu0 0.0
    %4411 = vmatpush2.msra.mxu0 0.0
    %4412 = vmatprep.mubr.f32.mxu0 0.0
    %4413 = vmatmul.mubr.f32.gmra.mxu0 %v4346
    %v4414 = vpop.f32.mrf.mxu0
    %v4415 = vadd.f32 %v1902, %v4414
    %v4416 = vpop.f32.mrf.mxu0
    %4417 = vdwg.mxu0
    %vm4418 = vcmp.ge.f32.partialorder %v4415, 0.0
    %v4419 = vmul.f32 %v4415, 0.01
    %v4420 = vsel %vm4418, %v4415, %v4419
    %v4421 = vld [vmem:[#allocation98] sm:$0xff]
    %v4422 = vld [vmem:[#allocation98 + $0x8] sm:$0xff]
    %v4423 = vld [vmem:[#allocation98 + $0x10] sm:$0xff]
    %v4424 = vld [vmem:[#allocation98 + $0x18] sm:$0xff]
    %v4425 = vld [vmem:[#allocation98 + $0x20] sm:$0xff]
    %v4426 = vld [vmem:[#allocation98 + $0x28] sm:$0xff]
    %v4427 = vld [vmem:[#allocation98 + $0x30] sm:$0xff]
    %v4428 = vld [vmem:[#allocation98 + $0x38] sm:$0xff]
    %v4429 = vld [vmem:[#allocation98 + $0x40] sm:$0xff]
    %v4430 = vld [vmem:[#allocation98 + $0x48] sm:$0xff]
    %v4431 = vld [vmem:[#allocation98 + $0x50] sm:$0xff]
    %v4432 = vld [vmem:[#allocation98 + $0x58] sm:$0xff]
    %v4433 = vld [vmem:[#allocation98 + $0x60] sm:$0xff]
    %v4434 = vld [vmem:[#allocation98 + $0x68] sm:$0xff]
    %v4435 = vld [vmem:[#allocation98 + $0x70] sm:$0xff]
    %v4436 = vld [vmem:[#allocation98 + $0x78] sm:$0xff]
    %v4437 = vld [vmem:[#allocation99] sm:$0x1]
    %v4439 = vlaneseq
    %v4440 = vshrl.u32 %v4439, 7
    %v4441 = vsub.s32 0, %v4440
    %v4442 = vrot.slane %v4437, %v4441
    %4444 = vmatprep.subr.mxu0 0.0
    %4445 = vmatpush1.msra.mxu0 %v4436
    %4446 = vmatprep.subr.mxu0 0.0
    %4447 = vmatpush1.msra.mxu0 %v4435
    %4448 = vmatprep.subr.mxu0 0.0
    %4449 = vmatpush1.msra.mxu0 %v4434
    %4450 = vmatprep.subr.mxu0 0.0
    %4451 = vmatpush1.msra.mxu0 %v4433
    %4452 = vmatprep.subr.mxu0 0.0
    %4453 = vmatpush1.msra.mxu0 %v4432
    %4454 = vmatprep.subr.mxu0 0.0
    %4455 = vmatpush1.msra.mxu0 %v4431
    %4456 = vmatprep.subr.mxu0 0.0
    %4457 = vmatpush1.msra.mxu0 %v4430
    %4458 = vmatprep.subr.mxu0 0.0
    %4459 = vmatpush1.msra.mxu0 %v4429
    %4460 = vmatprep.subr.mxu0 0.0
    %4461 = vmatpush1.msra.mxu0 %v4428
    %4462 = vmatprep.subr.mxu0 0.0
    %4463 = vmatpush1.msra.mxu0 %v4427
    %4464 = vmatprep.subr.mxu0 0.0
    %4465 = vmatpush1.msra.mxu0 %v4426
    %4466 = vmatprep.subr.mxu0 0.0
    %4467 = vmatpush1.msra.mxu0 %v4425
    %4468 = vmatprep.subr.mxu0 0.0
    %4469 = vmatpush1.msra.mxu0 %v4424
    %4470 = vmatprep.subr.mxu0 0.0
    %4471 = vmatpush1.msra.mxu0 %v4423
    %4472 = vmatprep.subr.mxu0 0.0
    %4473 = vmatpush1.msra.mxu0 %v4422
    %4474 = vmatprep.subr.mxu0 0.0
    %4475 = vmatpush1.msra.mxu0 %v4421
    %4476 = vmatprep.subr.mxu0 0.0
    %4477 = vmatpush2.msra.mxu0 0.0
    %4478 = vmatprep.subr.mxu0 0.0
    %4479 = vmatpush2.msra.mxu0 0.0
    %4480 = vmatprep.subr.mxu0 0.0
    %4481 = vmatpush2.msra.mxu0 0.0
    %4482 = vmatprep.subr.mxu0 0.0
    %4483 = vmatpush2.msra.mxu0 0.0
    %4484 = vmatprep.subr.mxu0 0.0
    %4485 = vmatpush2.msra.mxu0 0.0
    %4486 = vmatprep.subr.mxu0 0.0
    %4487 = vmatpush2.msra.mxu0 0.0
    %4488 = vmatprep.subr.mxu0 0.0
    %4489 = vmatpush2.msra.mxu0 0.0
    %4490 = vmatprep.subr.mxu0 0.0
    %4491 = vmatpush2.msra.mxu0 0.0
    %4492 = vmatprep.subr.mxu0 0.0
    %4493 = vmatpush2.msra.mxu0 0.0
    %4494 = vmatprep.subr.mxu0 0.0
    %4495 = vmatpush2.msra.mxu0 0.0
    %4496 = vmatprep.subr.mxu0 0.0
    %4497 = vmatpush2.msra.mxu0 0.0
    %4498 = vmatprep.subr.mxu0 0.0
    %4499 = vmatpush2.msra.mxu0 0.0
    %4500 = vmatprep.subr.mxu0 0.0
    %4501 = vmatpush2.msra.mxu0 0.0
    %4502 = vmatprep.subr.mxu0 0.0
    %4503 = vmatpush2.msra.mxu0 0.0
    %4504 = vmatprep.subr.mxu0 0.0
    %4505 = vmatpush2.msra.mxu0 0.0
    %4506 = vmatprep.subr.mxu0 0.0
    %4507 = vmatpush2.msra.mxu0 0.0
    %4508 = vmatprep.mubr.f32.mxu0 0.0
    %4509 = vmatmul.mubr.f32.gmra.mxu0 %v4420
    %v4510 = vpop.f32.mrf.mxu0
    %v4511 = vadd.f32 %v4442, %v4510
    %v4512 = vpop.f32.mrf.mxu0
    %4513 = vdwg.mxu0
    %vm4514 = vcmp.ge.f32.partialorder %v4511, 0.0
    %v4515 = vmul.f32 %v4511, 0.01
    %v4516 = vsel %vm4514, %v4511, %v4515
    %v4517 = vld [vmem:[#allocation101] sm:$0xff]
    %v4518 = vld [vmem:[#allocation101 + $0x8] sm:$0xff]
    %v4519 = vld [vmem:[#allocation101 + $0x10] sm:$0xff]
    %v4520 = vld [vmem:[#allocation101 + $0x18] sm:$0xff]
    %v4521 = vld [vmem:[#allocation101 + $0x20] sm:$0xff]
    %v4522 = vld [vmem:[#allocation101 + $0x28] sm:$0xff]
    %v4523 = vld [vmem:[#allocation101 + $0x30] sm:$0xff]
    %v4524 = vld [vmem:[#allocation101 + $0x38] sm:$0xff]
    %v4525 = vld [vmem:[#allocation101 + $0x40] sm:$0xff]
    %v4526 = vld [vmem:[#allocation101 + $0x48] sm:$0xff]
    %v4527 = vld [vmem:[#allocation101 + $0x50] sm:$0xff]
    %v4528 = vld [vmem:[#allocation101 + $0x58] sm:$0xff]
    %v4529 = vld [vmem:[#allocation101 + $0x60] sm:$0xff]
    %v4530 = vld [vmem:[#allocation101 + $0x68] sm:$0xff]
    %v4531 = vld [vmem:[#allocation101 + $0x70] sm:$0xff]
    %v4532 = vld [vmem:[#allocation101 + $0x78] sm:$0xff]
    %v4533 = vld [vmem:[#allocation102] sm:$0x1]
    %v4535 = vlaneseq
    %v4536 = vshrl.u32 %v4535, 7
    %v4537 = vsub.s32 0, %v4536
    %v4538 = vrot.slane %v4533, %v4537
    %4540 = vmatprep.subr.mxu0 0.0
    %4541 = vmatpush1.msra.mxu0 %v4532
    %4542 = vmatprep.subr.mxu0 0.0
    %4543 = vmatpush1.msra.mxu0 %v4531
    %4544 = vmatprep.subr.mxu0 0.0
    %4545 = vmatpush1.msra.mxu0 %v4530
    %4546 = vmatprep.subr.mxu0 0.0
    %4547 = vmatpush1.msra.mxu0 %v4529
    %4548 = vmatprep.subr.mxu0 0.0
    %4549 = vmatpush1.msra.mxu0 %v4528
    %4550 = vmatprep.subr.mxu0 0.0
    %4551 = vmatpush1.msra.mxu0 %v4527
    %4552 = vmatprep.subr.mxu0 0.0
    %4553 = vmatpush1.msra.mxu0 %v4526
    %4554 = vmatprep.subr.mxu0 0.0
    %4555 = vmatpush1.msra.mxu0 %v4525
    %4556 = vmatprep.subr.mxu0 0.0
    %4557 = vmatpush1.msra.mxu0 %v4524
    %4558 = vmatprep.subr.mxu0 0.0
    %4559 = vmatpush1.msra.mxu0 %v4523
    %4560 = vmatprep.subr.mxu0 0.0
    %4561 = vmatpush1.msra.mxu0 %v4522
    %4562 = vmatprep.subr.mxu0 0.0
    %4563 = vmatpush1.msra.mxu0 %v4521
    %4564 = vmatprep.subr.mxu0 0.0
    %4565 = vmatpush1.msra.mxu0 %v4520
    %4566 = vmatprep.subr.mxu0 0.0
    %4567 = vmatpush1.msra.mxu0 %v4519
    %4568 = vmatprep.subr.mxu0 0.0
    %4569 = vmatpush1.msra.mxu0 %v4518
    %4570 = vmatprep.subr.mxu0 0.0
    %4571 = vmatpush1.msra.mxu0 %v4517
    %4572 = vmatprep.subr.mxu0 0.0
    %4573 = vmatpush2.msra.mxu0 0.0
    %4574 = vmatprep.subr.mxu0 0.0
    %4575 = vmatpush2.msra.mxu0 0.0
    %4576 = vmatprep.subr.mxu0 0.0
    %4577 = vmatpush2.msra.mxu0 0.0
    %4578 = vmatprep.subr.mxu0 0.0
    %4579 = vmatpush2.msra.mxu0 0.0
    %4580 = vmatprep.subr.mxu0 0.0
    %4581 = vmatpush2.msra.mxu0 0.0
    %4582 = vmatprep.subr.mxu0 0.0
    %4583 = vmatpush2.msra.mxu0 0.0
    %4584 = vmatprep.subr.mxu0 0.0
    %4585 = vmatpush2.msra.mxu0 0.0
    %4586 = vmatprep.subr.mxu0 0.0
    %4587 = vmatpush2.msra.mxu0 0.0
    %4588 = vmatprep.subr.mxu0 0.0
    %4589 = vmatpush2.msra.mxu0 0.0
    %4590 = vmatprep.subr.mxu0 0.0
    %4591 = vmatpush2.msra.mxu0 0.0
    %4592 = vmatprep.subr.mxu0 0.0
    %4593 = vmatpush2.msra.mxu0 0.0
    %4594 = vmatprep.subr.mxu0 0.0
    %4595 = vmatpush2.msra.mxu0 0.0
    %4596 = vmatprep.subr.mxu0 0.0
    %4597 = vmatpush2.msra.mxu0 0.0
    %4598 = vmatprep.subr.mxu0 0.0
    %4599 = vmatpush2.msra.mxu0 0.0
    %4600 = vmatprep.subr.mxu0 0.0
    %4601 = vmatpush2.msra.mxu0 0.0
    %4602 = vmatprep.subr.mxu0 0.0
    %4603 = vmatpush2.msra.mxu0 0.0
    %4604 = vmatprep.mubr.f32.mxu0 0.0
    %4605 = vmatmul.mubr.f32.gmra.mxu0 %v4516
    %v4606 = vpop.f32.mrf.mxu0
    %v4607 = vadd.f32 %v4538, %v4606
    %v4608 = vpop.f32.mrf.mxu0
    %4609 = vdwg.mxu0
    %vm4610 = vcmp.ge.f32.partialorder %v4607, 0.0
    %v4611 = vmul.f32 %v4607, 0.01
    %v4612 = vsel %vm4610, %v4607, %v4611
    %v4613 = vld [vmem:[#allocation104] sm:$0xff]
    %v4614 = vld [vmem:[#allocation104 + $0x8] sm:$0xff]
    %v4615 = vld [vmem:[#allocation104 + $0x10] sm:$0xff]
    %v4616 = vld [vmem:[#allocation104 + $0x18] sm:$0xff]
    %v4617 = vld [vmem:[#allocation104 + $0x20] sm:$0xff]
    %v4618 = vld [vmem:[#allocation104 + $0x28] sm:$0xff]
    %v4619 = vld [vmem:[#allocation104 + $0x30] sm:$0xff]
    %v4620 = vld [vmem:[#allocation104 + $0x38] sm:$0xff]
    %v4621 = vld [vmem:[#allocation104 + $0x40] sm:$0xff]
    %v4622 = vld [vmem:[#allocation104 + $0x48] sm:$0xff]
    %v4623 = vld [vmem:[#allocation104 + $0x50] sm:$0xff]
    %v4624 = vld [vmem:[#allocation104 + $0x58] sm:$0xff]
    %v4625 = vld [vmem:[#allocation104 + $0x60] sm:$0xff]
    %v4626 = vld [vmem:[#allocation104 + $0x68] sm:$0xff]
    %v4627 = vld [vmem:[#allocation104 + $0x70] sm:$0xff]
    %v4628 = vld [vmem:[#allocation104 + $0x78] sm:$0xff]
    %v4629 = vld [vmem:[#allocation104 + $0x80] sm:$0xff]
    %v4630 = vld [vmem:[#allocation104 + $0x88] sm:$0xff]
    %v4631 = vld [vmem:[#allocation104 + $0x90] sm:$0xff]
    %v4632 = vld [vmem:[#allocation104 + $0x98] sm:$0xff]
    %v4633 = vld [vmem:[#allocation104 + $0xa0] sm:$0xff]
    %v4634 = vld [vmem:[#allocation104 + $0xa8] sm:$0xff]
    %v4635 = vld [vmem:[#allocation104 + $0xb0] sm:$0xff]
    %v4636 = vld [vmem:[#allocation104 + $0xb8] sm:$0xff]
    %v4637 = vld [vmem:[#allocation104 + $0xc0] sm:$0xff]
    %v4638 = vld [vmem:[#allocation104 + $0xc8] sm:$0xff]
    %v4639 = vld [vmem:[#allocation104 + $0xd0] sm:$0xff]
    %v4640 = vld [vmem:[#allocation104 + $0xd8] sm:$0xff]
    %v4641 = vld [vmem:[#allocation104 + $0xe0] sm:$0xff]
    %v4642 = vld [vmem:[#allocation104 + $0xe8] sm:$0xff]
    %v4643 = vld [vmem:[#allocation104 + $0xf0] sm:$0xff]
    %v4644 = vld [vmem:[#allocation104 + $0xf8] sm:$0xff]
    %v4645 = vld [vmem:[#allocation105] sm:$0x3]
    %v4647 = vlaneseq
    %v4648 = vshrl.u32 %v4647, 7
    %v4649 = vsub.s32 0, %v4648
    %v4650 = vrot.slane %v4645, %v4649
    %v4651 = vlaneseq
    %v4652 = vshrl.u32 %v4651, 7
    %v4653 = vsub.s32 1, %v4652
    %v4654 = vrot.slane %v4645, %v4653
    %4657 = vmatprep.subr.mxu0 %v4644
    %4658 = vmatpush1.msra.mxu0 %v4643
    %4659 = vmatprep.subr.mxu0 %v4642
    %4660 = vmatpush1.msra.mxu0 %v4641
    %4661 = vmatprep.subr.mxu0 %v4640
    %4662 = vmatpush1.msra.mxu0 %v4639
    %4663 = vmatprep.subr.mxu0 %v4638
    %4664 = vmatpush1.msra.mxu0 %v4637
    %4665 = vmatprep.subr.mxu0 %v4636
    %4666 = vmatpush1.msra.mxu0 %v4635
    %4667 = vmatprep.subr.mxu0 %v4634
    %4668 = vmatpush1.msra.mxu0 %v4633
    %4669 = vmatprep.subr.mxu0 %v4632
    %4670 = vmatpush1.msra.mxu0 %v4631
    %4671 = vmatprep.subr.mxu0 %v4630
    %4672 = vmatpush1.msra.mxu0 %v4629
    %4673 = vmatprep.subr.mxu0 %v4628
    %4674 = vmatpush1.msra.mxu0 %v4627
    %4675 = vmatprep.subr.mxu0 %v4626
    %4676 = vmatpush1.msra.mxu0 %v4625
    %4677 = vmatprep.subr.mxu0 %v4624
    %4678 = vmatpush1.msra.mxu0 %v4623
    %4679 = vmatprep.subr.mxu0 %v4622
    %4680 = vmatpush1.msra.mxu0 %v4621
    %4681 = vmatprep.subr.mxu0 %v4620
    %4682 = vmatpush1.msra.mxu0 %v4619
    %4683 = vmatprep.subr.mxu0 %v4618
    %4684 = vmatpush1.msra.mxu0 %v4617
    %4685 = vmatprep.subr.mxu0 %v4616
    %4686 = vmatpush1.msra.mxu0 %v4615
    %4687 = vmatprep.subr.mxu0 %v4614
    %4688 = vmatpush1.msra.mxu0 %v4613
    %4689 = vmatprep.subr.mxu0 0.0
    %4690 = vmatpush2.msra.mxu0 0.0
    %4691 = vmatprep.subr.mxu0 0.0
    %4692 = vmatpush2.msra.mxu0 0.0
    %4693 = vmatprep.subr.mxu0 0.0
    %4694 = vmatpush2.msra.mxu0 0.0
    %4695 = vmatprep.subr.mxu0 0.0
    %4696 = vmatpush2.msra.mxu0 0.0
    %4697 = vmatprep.subr.mxu0 0.0
    %4698 = vmatpush2.msra.mxu0 0.0
    %4699 = vmatprep.subr.mxu0 0.0
    %4700 = vmatpush2.msra.mxu0 0.0
    %4701 = vmatprep.subr.mxu0 0.0
    %4702 = vmatpush2.msra.mxu0 0.0
    %4703 = vmatprep.subr.mxu0 0.0
    %4704 = vmatpush2.msra.mxu0 0.0
    %4705 = vmatprep.subr.mxu0 0.0
    %4706 = vmatpush2.msra.mxu0 0.0
    %4707 = vmatprep.subr.mxu0 0.0
    %4708 = vmatpush2.msra.mxu0 0.0
    %4709 = vmatprep.subr.mxu0 0.0
    %4710 = vmatpush2.msra.mxu0 0.0
    %4711 = vmatprep.subr.mxu0 0.0
    %4712 = vmatpush2.msra.mxu0 0.0
    %4713 = vmatprep.subr.mxu0 0.0
    %4714 = vmatpush2.msra.mxu0 0.0
    %4715 = vmatprep.subr.mxu0 0.0
    %4716 = vmatpush2.msra.mxu0 0.0
    %4717 = vmatprep.subr.mxu0 0.0
    %4718 = vmatpush2.msra.mxu0 0.0
    %4719 = vmatprep.subr.mxu0 0.0
    %4720 = vmatpush2.msra.mxu0 0.0
    %4721 = vmatprep.mubr.f32.mxu0 0.0
    %4722 = vmatmul.mubr.f32.gmra.mxu0 %v4612
    %v4723 = vpop.f32.mrf.mxu0
    %v4724 = vadd.f32 %v4650, %v4723
    %v4725 = vpop.f32.mrf.mxu0
    %v4726 = vadd.f32 %v4654, %v4725
    %4727 = vdwg.mxu0
    %v4728 = vtanh.pop %v4724
    %v4729 = vmul.f32 %v4728, 1.442695
    %v4730 = vpow.pop %v4729
    %v4731 = vmul.f32 %v4342, %v4730
    %v4732 = vadd.f32 %v4731, %v4726
    %v4733 = vsel %vm2320, %v4728, 0.0
    %4734 = vadd.xlane.f32.xlu0 %v4733
    %v4735 = vpop.xlane.xlu0 %4734
    %v4736 = vadd.f32 %v4326, %v4735
    %v4737 = vld [vmem:[#allocation107] sm:$0xff]
    %v4738 = vld [vmem:[#allocation107 + $0x8] sm:$0xff]
    %v4740 = vsel %vm1232, %v4732, 0
    %4742 = vmatprep.subr.mxu0 0.0
    %4743 = vmatpush1.msra.mxu0 0.0
    %4744 = vmatprep.subr.mxu0 0.0
    %4745 = vmatpush1.msra.mxu0 0.0
    %4746 = vmatprep.subr.mxu0 0.0
    %4747 = vmatpush1.msra.mxu0 0.0
    %4748 = vmatprep.subr.mxu0 0.0
    %4749 = vmatpush1.msra.mxu0 0.0
    %4750 = vmatprep.subr.mxu0 0.0
    %4751 = vmatpush1.msra.mxu0 0.0
    %4752 = vmatprep.subr.mxu0 0.0
    %4753 = vmatpush1.msra.mxu0 0.0
    %4754 = vmatprep.subr.mxu0 0.0
    %4755 = vmatpush1.msra.mxu0 0.0
    %4756 = vmatprep.subr.mxu0 0.0
    %4757 = vmatpush1.msra.mxu0 0.0
    %4758 = vmatprep.subr.mxu0 0.0
    %4759 = vmatpush1.msra.mxu0 0.0
    %4760 = vmatprep.subr.mxu0 0.0
    %4761 = vmatpush1.msra.mxu0 0.0
    %4762 = vmatprep.subr.mxu0 0.0
    %4763 = vmatpush1.msra.mxu0 0.0
    %4764 = vmatprep.subr.mxu0 0.0
    %4765 = vmatpush1.msra.mxu0 0.0
    %4766 = vmatprep.subr.mxu0 0.0
    %4767 = vmatpush1.msra.mxu0 0.0
    %4768 = vmatprep.subr.mxu0 0.0
    %4769 = vmatpush1.msra.mxu0 0.0
    %4770 = vmatprep.subr.mxu0 0.0
    %4771 = vmatpush1.msra.mxu0 %v4738
    %4772 = vmatprep.subr.mxu0 0.0
    %4773 = vmatpush1.msra.mxu0 %v4737
    %4774 = vmatprep.subr.mxu0 0.0
    %4775 = vmatpush2.msra.mxu0 0.0
    %4776 = vmatprep.subr.mxu0 0.0
    %4777 = vmatpush2.msra.mxu0 0.0
    %4778 = vmatprep.subr.mxu0 0.0
    %4779 = vmatpush2.msra.mxu0 0.0
    %4780 = vmatprep.subr.mxu0 0.0
    %4781 = vmatpush2.msra.mxu0 0.0
    %4782 = vmatprep.subr.mxu0 0.0
    %4783 = vmatpush2.msra.mxu0 0.0
    %4784 = vmatprep.subr.mxu0 0.0
    %4785 = vmatpush2.msra.mxu0 0.0
    %4786 = vmatprep.subr.mxu0 0.0
    %4787 = vmatpush2.msra.mxu0 0.0
    %4788 = vmatprep.subr.mxu0 0.0
    %4789 = vmatpush2.msra.mxu0 0.0
    %4790 = vmatprep.subr.mxu0 0.0
    %4791 = vmatpush2.msra.mxu0 0.0
    %4792 = vmatprep.subr.mxu0 0.0
    %4793 = vmatpush2.msra.mxu0 0.0
    %4794 = vmatprep.subr.mxu0 0.0
    %4795 = vmatpush2.msra.mxu0 0.0
    %4796 = vmatprep.subr.mxu0 0.0
    %4797 = vmatpush2.msra.mxu0 0.0
    %4798 = vmatprep.subr.mxu0 0.0
    %4799 = vmatpush2.msra.mxu0 0.0
    %4800 = vmatprep.subr.mxu0 0.0
    %4801 = vmatpush2.msra.mxu0 0.0
    %4802 = vmatprep.subr.mxu0 0.0
    %4803 = vmatpush2.msra.mxu0 0.0
    %4804 = vmatprep.subr.mxu0 0.0
    %4805 = vmatpush2.msra.mxu0 0.0
    %4806 = vmatprep.mubr.f32.mxu0 0.0
    %4807 = vmatmul.mubr.f32.gmra.mxu0 %v4740
    %v4808 = vpop.f32.mrf.mxu0
    %v4809 = vadd.f32 %v1904, %v4808
    %v4810 = vpop.f32.mrf.mxu0
    %4811 = vdwg.mxu0
    %vm4812 = vcmp.ge.f32.partialorder %v4809, 0.0
    %v4813 = vmul.f32 %v4809, 0.01
    %v4814 = vsel %vm4812, %v4809, %v4813
    %v4815 = vld [vmem:[%s143] sm:$0xff]
    %v4816 = vld [vmem:[%s143 + $0x8] sm:$0xff]
    %v4817 = vld [vmem:[%s143 + $0x10] sm:$0xff]
    %v4818 = vld [vmem:[%s143 + $0x18] sm:$0xff]
    %v4819 = vld [vmem:[%s143 + $0x20] sm:$0xff]
    %v4820 = vld [vmem:[%s143 + $0x28] sm:$0xff]
    %v4821 = vld [vmem:[%s143 + $0x30] sm:$0xff]
    %v4822 = vld [vmem:[%s143 + $0x38] sm:$0xff]
    %v4823 = vld [vmem:[%s143 + $0x40] sm:$0xff]
    %v4824 = vld [vmem:[%s143 + $0x48] sm:$0xff]
    %v4825 = vld [vmem:[%s143 + $0x50] sm:$0xff]
    %v4826 = vld [vmem:[%s143 + $0x58] sm:$0xff]
    %v4827 = vld [vmem:[%s143 + $0x60] sm:$0xff]
    %v4828 = vld [vmem:[%s143 + $0x68] sm:$0xff]
    %v4829 = vld [vmem:[%s143 + $0x70] sm:$0xff]
    %v4830 = vld [vmem:[%s143 + $0x78] sm:$0xff]
    %v4831 = vld [vmem:[#allocation108] sm:$0x1]
    %v4833 = vlaneseq
    %v4834 = vshrl.u32 %v4833, 7
    %v4835 = vsub.s32 0, %v4834
    %v4836 = vrot.slane %v4831, %v4835
    %4838 = vmatprep.subr.mxu0 0.0
    %4839 = vmatpush1.msra.mxu0 %v4830
    %4840 = vmatprep.subr.mxu0 0.0
    %4841 = vmatpush1.msra.mxu0 %v4829
    %4842 = vmatprep.subr.mxu0 0.0
    %4843 = vmatpush1.msra.mxu0 %v4828
    %4844 = vmatprep.subr.mxu0 0.0
    %4845 = vmatpush1.msra.mxu0 %v4827
    %4846 = vmatprep.subr.mxu0 0.0
    %4847 = vmatpush1.msra.mxu0 %v4826
    %4848 = vmatprep.subr.mxu0 0.0
    %4849 = vmatpush1.msra.mxu0 %v4825
    %4850 = vmatprep.subr.mxu0 0.0
    %4851 = vmatpush1.msra.mxu0 %v4824
    %4852 = vmatprep.subr.mxu0 0.0
    %4853 = vmatpush1.msra.mxu0 %v4823
    %4854 = vmatprep.subr.mxu0 0.0
    %4855 = vmatpush1.msra.mxu0 %v4822
    %4856 = vmatprep.subr.mxu0 0.0
    %4857 = vmatpush1.msra.mxu0 %v4821
    %4858 = vmatprep.subr.mxu0 0.0
    %4859 = vmatpush1.msra.mxu0 %v4820
    %4860 = vmatprep.subr.mxu0 0.0
    %4861 = vmatpush1.msra.mxu0 %v4819
    %4862 = vmatprep.subr.mxu0 0.0
    %4863 = vmatpush1.msra.mxu0 %v4818
    %4864 = vmatprep.subr.mxu0 0.0
    %4865 = vmatpush1.msra.mxu0 %v4817
    %4866 = vmatprep.subr.mxu0 0.0
    %4867 = vmatpush1.msra.mxu0 %v4816
    %4868 = vmatprep.subr.mxu0 0.0
    %4869 = vmatpush1.msra.mxu0 %v4815
    %4870 = vmatprep.subr.mxu0 0.0
    %4871 = vmatpush2.msra.mxu0 0.0
    %4872 = vmatprep.subr.mxu0 0.0
    %4873 = vmatpush2.msra.mxu0 0.0
    %4874 = vmatprep.subr.mxu0 0.0
    %4875 = vmatpush2.msra.mxu0 0.0
    %4876 = vmatprep.subr.mxu0 0.0
    %4877 = vmatpush2.msra.mxu0 0.0
    %4878 = vmatprep.subr.mxu0 0.0
    %4879 = vmatpush2.msra.mxu0 0.0
    %4880 = vmatprep.subr.mxu0 0.0
    %4881 = vmatpush2.msra.mxu0 0.0
    %4882 = vmatprep.subr.mxu0 0.0
    %4883 = vmatpush2.msra.mxu0 0.0
    %4884 = vmatprep.subr.mxu0 0.0
    %4885 = vmatpush2.msra.mxu0 0.0
    %4886 = vmatprep.subr.mxu0 0.0
    %4887 = vmatpush2.msra.mxu0 0.0
    %4888 = vmatprep.subr.mxu0 0.0
    %4889 = vmatpush2.msra.mxu0 0.0
    %4890 = vmatprep.subr.mxu0 0.0
    %4891 = vmatpush2.msra.mxu0 0.0
    %4892 = vmatprep.subr.mxu0 0.0
    %4893 = vmatpush2.msra.mxu0 0.0
    %4894 = vmatprep.subr.mxu0 0.0
    %4895 = vmatpush2.msra.mxu0 0.0
    %4896 = vmatprep.subr.mxu0 0.0
    %4897 = vmatpush2.msra.mxu0 0.0
    %4898 = vmatprep.subr.mxu0 0.0
    %4899 = vmatpush2.msra.mxu0 0.0
    %4900 = vmatprep.subr.mxu0 0.0
    %4901 = vmatpush2.msra.mxu0 0.0
    %4902 = vmatprep.mubr.f32.mxu0 0.0
    %4903 = vmatmul.mubr.f32.gmra.mxu0 %v4814
    %v4904 = vpop.f32.mrf.mxu0
    %v4905 = vadd.f32 %v4836, %v4904
    %v4906 = vpop.f32.mrf.mxu0
    %4907 = vdwg.mxu0
    %vm4908 = vcmp.ge.f32.partialorder %v4905, 0.0
    %v4909 = vmul.f32 %v4905, 0.01
    %v4910 = vsel %vm4908, %v4905, %v4909
    %v4911 = vld [vmem:[#allocation110] sm:$0xff]
    %v4912 = vld [vmem:[#allocation110 + $0x8] sm:$0xff]
    %v4913 = vld [vmem:[#allocation110 + $0x10] sm:$0xff]
    %v4914 = vld [vmem:[#allocation110 + $0x18] sm:$0xff]
    %v4915 = vld [vmem:[#allocation110 + $0x20] sm:$0xff]
    %v4916 = vld [vmem:[#allocation110 + $0x28] sm:$0xff]
    %v4917 = vld [vmem:[#allocation110 + $0x30] sm:$0xff]
    %v4918 = vld [vmem:[#allocation110 + $0x38] sm:$0xff]
    %v4919 = vld [vmem:[#allocation110 + $0x40] sm:$0xff]
    %v4920 = vld [vmem:[#allocation110 + $0x48] sm:$0xff]
    %v4921 = vld [vmem:[#allocation110 + $0x50] sm:$0xff]
    %v4922 = vld [vmem:[#allocation110 + $0x58] sm:$0xff]
    %v4923 = vld [vmem:[#allocation110 + $0x60] sm:$0xff]
    %v4924 = vld [vmem:[#allocation110 + $0x68] sm:$0xff]
    %v4925 = vld [vmem:[#allocation110 + $0x70] sm:$0xff]
    %v4926 = vld [vmem:[#allocation110 + $0x78] sm:$0xff]
    %v4927 = vld [vmem:[%s149] sm:$0x1]
    %v4929 = vlaneseq
    %v4930 = vshrl.u32 %v4929, 7
    %v4931 = vsub.s32 0, %v4930
    %v4932 = vrot.slane %v4927, %v4931
    %4934 = vmatprep.subr.mxu0 0.0
    %4935 = vmatpush1.msra.mxu0 %v4926
    %4936 = vmatprep.subr.mxu0 0.0
    %4937 = vmatpush1.msra.mxu0 %v4925
    %4938 = vmatprep.subr.mxu0 0.0
    %4939 = vmatpush1.msra.mxu0 %v4924
    %4940 = vmatprep.subr.mxu0 0.0
    %4941 = vmatpush1.msra.mxu0 %v4923
    %4942 = vmatprep.subr.mxu0 0.0
    %4943 = vmatpush1.msra.mxu0 %v4922
    %4944 = vmatprep.subr.mxu0 0.0
    %4945 = vmatpush1.msra.mxu0 %v4921
    %4946 = vmatprep.subr.mxu0 0.0
    %4947 = vmatpush1.msra.mxu0 %v4920
    %4948 = vmatprep.subr.mxu0 0.0
    %4949 = vmatpush1.msra.mxu0 %v4919
    %4950 = vmatprep.subr.mxu0 0.0
    %4951 = vmatpush1.msra.mxu0 %v4918
    %4952 = vmatprep.subr.mxu0 0.0
    %4953 = vmatpush1.msra.mxu0 %v4917
    %4954 = vmatprep.subr.mxu0 0.0
    %4955 = vmatpush1.msra.mxu0 %v4916
    %4956 = vmatprep.subr.mxu0 0.0
    %4957 = vmatpush1.msra.mxu0 %v4915
    %4958 = vmatprep.subr.mxu0 0.0
    %4959 = vmatpush1.msra.mxu0 %v4914
    %4960 = vmatprep.subr.mxu0 0.0
    %4961 = vmatpush1.msra.mxu0 %v4913
    %4962 = vmatprep.subr.mxu0 0.0
    %4963 = vmatpush1.msra.mxu0 %v4912
    %4964 = vmatprep.subr.mxu0 0.0
    %4965 = vmatpush1.msra.mxu0 %v4911
    %4966 = vmatprep.subr.mxu0 0.0
    %4967 = vmatpush2.msra.mxu0 0.0
    %4968 = vmatprep.subr.mxu0 0.0
    %4969 = vmatpush2.msra.mxu0 0.0
    %4970 = vmatprep.subr.mxu0 0.0
    %4971 = vmatpush2.msra.mxu0 0.0
    %4972 = vmatprep.subr.mxu0 0.0
    %4973 = vmatpush2.msra.mxu0 0.0
    %4974 = vmatprep.subr.mxu0 0.0
    %4975 = vmatpush2.msra.mxu0 0.0
    %4976 = vmatprep.subr.mxu0 0.0
    %4977 = vmatpush2.msra.mxu0 0.0
    %4978 = vmatprep.subr.mxu0 0.0
    %4979 = vmatpush2.msra.mxu0 0.0
    %4980 = vmatprep.subr.mxu0 0.0
    %4981 = vmatpush2.msra.mxu0 0.0
    %4982 = vmatprep.subr.mxu0 0.0
    %4983 = vmatpush2.msra.mxu0 0.0
    %4984 = vmatprep.subr.mxu0 0.0
    %4985 = vmatpush2.msra.mxu0 0.0
    %4986 = vmatprep.subr.mxu0 0.0
    %4987 = vmatpush2.msra.mxu0 0.0
    %4988 = vmatprep.subr.mxu0 0.0
    %4989 = vmatpush2.msra.mxu0 0.0
    %4990 = vmatprep.subr.mxu0 0.0
    %4991 = vmatpush2.msra.mxu0 0.0
    %4992 = vmatprep.subr.mxu0 0.0
    %4993 = vmatpush2.msra.mxu0 0.0
    %4994 = vmatprep.subr.mxu0 0.0
    %4995 = vmatpush2.msra.mxu0 0.0
    %4996 = vmatprep.subr.mxu0 0.0
    %4997 = vmatpush2.msra.mxu0 0.0
    %4998 = vmatprep.mubr.f32.mxu0 0.0
    %4999 = vmatmul.mubr.f32.gmra.mxu0 %v4910
    %v5000 = vpop.f32.mrf.mxu0
    %v5001 = vadd.f32 %v4932, %v5000
    %v5002 = vpop.f32.mrf.mxu0
    %5003 = vdwg.mxu0
    %vm5004 = vcmp.ge.f32.partialorder %v5001, 0.0
    %v5005 = vmul.f32 %v5001, 0.01
    %v5006 = vsel %vm5004, %v5001, %v5005
    %v5007 = vld [vmem:[#allocation111] sm:$0xff]
    %v5008 = vld [vmem:[#allocation111 + $0x8] sm:$0xff]
    %v5009 = vld [vmem:[#allocation111 + $0x10] sm:$0xff]
    %v5010 = vld [vmem:[#allocation111 + $0x18] sm:$0xff]
    %v5011 = vld [vmem:[#allocation111 + $0x20] sm:$0xff]
    %v5012 = vld [vmem:[#allocation111 + $0x28] sm:$0xff]
    %v5013 = vld [vmem:[#allocation111 + $0x30] sm:$0xff]
    %v5014 = vld [vmem:[#allocation111 + $0x38] sm:$0xff]
    %v5015 = vld [vmem:[#allocation111 + $0x40] sm:$0xff]
    %v5016 = vld [vmem:[#allocation111 + $0x48] sm:$0xff]
    %v5017 = vld [vmem:[#allocation111 + $0x50] sm:$0xff]
    %v5018 = vld [vmem:[#allocation111 + $0x58] sm:$0xff]
    %v5019 = vld [vmem:[#allocation111 + $0x60] sm:$0xff]
    %v5020 = vld [vmem:[#allocation111 + $0x68] sm:$0xff]
    %v5021 = vld [vmem:[#allocation111 + $0x70] sm:$0xff]
    %v5022 = vld [vmem:[#allocation111 + $0x78] sm:$0xff]
    %v5023 = vld [vmem:[#allocation111 + $0x80] sm:$0xff]
    %v5024 = vld [vmem:[#allocation111 + $0x88] sm:$0xff]
    %v5025 = vld [vmem:[#allocation111 + $0x90] sm:$0xff]
    %v5026 = vld [vmem:[#allocation111 + $0x98] sm:$0xff]
    %v5027 = vld [vmem:[#allocation111 + $0xa0] sm:$0xff]
    %v5028 = vld [vmem:[#allocation111 + $0xa8] sm:$0xff]
    %v5029 = vld [vmem:[#allocation111 + $0xb0] sm:$0xff]
    %v5030 = vld [vmem:[#allocation111 + $0xb8] sm:$0xff]
    %v5031 = vld [vmem:[#allocation111 + $0xc0] sm:$0xff]
    %v5032 = vld [vmem:[#allocation111 + $0xc8] sm:$0xff]
    %v5033 = vld [vmem:[#allocation111 + $0xd0] sm:$0xff]
    %v5034 = vld [vmem:[#allocation111 + $0xd8] sm:$0xff]
    %v5035 = vld [vmem:[#allocation111 + $0xe0] sm:$0xff]
    %v5036 = vld [vmem:[#allocation111 + $0xe8] sm:$0xff]
    %v5037 = vld [vmem:[#allocation111 + $0xf0] sm:$0xff]
    %v5038 = vld [vmem:[#allocation111 + $0xf8] sm:$0xff]
    %v5039 = vld [vmem:[%s153] sm:$0x3]
    %v5041 = vlaneseq
    %v5042 = vshrl.u32 %v5041, 7
    %v5043 = vsub.s32 0, %v5042
    %v5044 = vrot.slane %v5039, %v5043
    %v5045 = vlaneseq
    %v5046 = vshrl.u32 %v5045, 7
    %v5047 = vsub.s32 1, %v5046
    %v5048 = vrot.slane %v5039, %v5047
    %5051 = vmatprep.subr.mxu0 %v5038
    %5052 = vmatpush1.msra.mxu0 %v5037
    %5053 = vmatprep.subr.mxu0 %v5036
    %5054 = vmatpush1.msra.mxu0 %v5035
    %5055 = vmatprep.subr.mxu0 %v5034
    %5056 = vmatpush1.msra.mxu0 %v5033
    %5057 = vmatprep.subr.mxu0 %v5032
    %5058 = vmatpush1.msra.mxu0 %v5031
    %5059 = vmatprep.subr.mxu0 %v5030
    %5060 = vmatpush1.msra.mxu0 %v5029
    %5061 = vmatprep.subr.mxu0 %v5028
    %5062 = vmatpush1.msra.mxu0 %v5027
    %5063 = vmatprep.subr.mxu0 %v5026
    %5064 = vmatpush1.msra.mxu0 %v5025
    %5065 = vmatprep.subr.mxu0 %v5024
    %5066 = vmatpush1.msra.mxu0 %v5023
    %5067 = vmatprep.subr.mxu0 %v5022
    %5068 = vmatpush1.msra.mxu0 %v5021
    %5069 = vmatprep.subr.mxu0 %v5020
    %5070 = vmatpush1.msra.mxu0 %v5019
    %5071 = vmatprep.subr.mxu0 %v5018
    %5072 = vmatpush1.msra.mxu0 %v5017
    %5073 = vmatprep.subr.mxu0 %v5016
    %5074 = vmatpush1.msra.mxu0 %v5015
    %5075 = vmatprep.subr.mxu0 %v5014
    %5076 = vmatpush1.msra.mxu0 %v5013
    %5077 = vmatprep.subr.mxu0 %v5012
    %5078 = vmatpush1.msra.mxu0 %v5011
    %5079 = vmatprep.subr.mxu0 %v5010
    %5080 = vmatpush1.msra.mxu0 %v5009
    %5081 = vmatprep.subr.mxu0 %v5008
    %5082 = vmatpush1.msra.mxu0 %v5007
    %5083 = vmatprep.subr.mxu0 0.0
    %5084 = vmatpush2.msra.mxu0 0.0
    %5085 = vmatprep.subr.mxu0 0.0
    %5086 = vmatpush2.msra.mxu0 0.0
    %5087 = vmatprep.subr.mxu0 0.0
    %5088 = vmatpush2.msra.mxu0 0.0
    %5089 = vmatprep.subr.mxu0 0.0
    %5090 = vmatpush2.msra.mxu0 0.0
    %5091 = vmatprep.subr.mxu0 0.0
    %5092 = vmatpush2.msra.mxu0 0.0
    %5093 = vmatprep.subr.mxu0 0.0
    %5094 = vmatpush2.msra.mxu0 0.0
    %5095 = vmatprep.subr.mxu0 0.0
    %5096 = vmatpush2.msra.mxu0 0.0
    %5097 = vmatprep.subr.mxu0 0.0
    %5098 = vmatpush2.msra.mxu0 0.0
    %5099 = vmatprep.subr.mxu0 0.0
    %5100 = vmatpush2.msra.mxu0 0.0
    %5101 = vmatprep.subr.mxu0 0.0
    %5102 = vmatpush2.msra.mxu0 0.0
    %5103 = vmatprep.subr.mxu0 0.0
    %5104 = vmatpush2.msra.mxu0 0.0
    %5105 = vmatprep.subr.mxu0 0.0
    %5106 = vmatpush2.msra.mxu0 0.0
    %5107 = vmatprep.subr.mxu0 0.0
    %5108 = vmatpush2.msra.mxu0 0.0
    %5109 = vmatprep.subr.mxu0 0.0
    %5110 = vmatpush2.msra.mxu0 0.0
    %5111 = vmatprep.subr.mxu0 0.0
    %5112 = vmatpush2.msra.mxu0 0.0
    %5113 = vmatprep.subr.mxu0 0.0
    %5114 = vmatpush2.msra.mxu0 0.0
    %5115 = vmatprep.mubr.f32.mxu0 0.0
    %5116 = vmatmul.mubr.f32.gmra.mxu0 %v5006
    %v5117 = vpop.f32.mrf.mxu0
    %v5118 = vadd.f32 %v5044, %v5117
    %v5119 = vpop.f32.mrf.mxu0
    %v5120 = vadd.f32 %v5048, %v5119
    %5121 = vdwg.mxu0
    %v5122 = vtanh.pop %v5118
    %v5123 = vmul.f32 %v5122, 1.442695
    %v5124 = vpow.pop %v5123
    %v5125 = vmul.f32 %v4732, %v5124
    %v5126 = vadd.f32 %v5125, %v5120
    %v5127 = vsel %vm2320, %v5122, 0.0
    %5128 = vadd.xlane.f32.xlu0 %v5127
    %v5129 = vpop.xlane.xlu0 %5128
    %v5130 = vadd.f32 %v4736, %v5129
    %5131 = vst.msk [vmem:[#allocation113] sm:$0x3] %vm2320, %v5126
    %vm5132 = vcmask 1024
    %5133 = vst.msk [vmem:[%s157] sm:$0x3] %vm5132, %v5130
    // Predicated region
    $region598: #{tpu_custom_call.1} parent=1 // pred_check
      _
    $region599: #{tpu_custom_call.1} parent=1 // pred_check_branch
      %5135 = sbr.rel (0) target = $region601
    $region600: #{tpu_custom_call.1} parent=1 // pred_region
      %s5137 = ssub.s32 32, 32
      %5138 = vsyncadd [#allocation5], %s5137
      %s5140 = sshll.u32 [#allocation113], 4
      %s5141 = int_to_ptr.vmem [resolvable:$true] %s5140
      %5143 = dma.vmem_to_hbm [thread:$0]  %s5141, 32, %s155, [#allocation5]
    $region601: #{tpu_custom_call.1} parent=1 // pred_fallthru
      _
    // Predicated region
    $region602: #{tpu_custom_call.1} parent=1 // pred_check
      _
    $region603: #{tpu_custom_call.1} parent=1 // pred_check_branch
      %5145 = sbr.rel (0) target = $region605
    $region604: #{tpu_custom_call.1} parent=1 // pred_region
      _
    $region605: #{tpu_custom_call.1} parent=1 // pred_fallthru
      _
    // Predicated region
    $region606: #{tpu_custom_call.1} parent=1 // pred_check
      _
    $region607: #{tpu_custom_call.1} parent=1 // pred_check_branch
      %5147 = sbr.rel (0) target = $region609
    $region608: #{tpu_custom_call.1} parent=1 // pred_region
      %5148 = dma.done [#allocation5], 32
    $region609: #{tpu_custom_call.1} parent=1 // pred_fallthru
      _
    // Predicated region
    $region610: #{tpu_custom_call.1} parent=1 // pred_check
      _
    $region611: #{tpu_custom_call.1} parent=1 // pred_check_branch
      %5150 = sbr.rel (0) target = $region613
    $region612: #{tpu_custom_call.1} parent=1 // pred_region
      _
    $region613: #{tpu_custom_call.1} parent=1 // pred_fallthru
      _
    %5151 = vsyncpa [#allocation4], 1
    %5152 = vsyncpa [#allocation7], 1
    %5153 = vsyncpa [#allocation10], 1
    %5154 = vsyncpa [#allocation13], 1
    %5155 = vsyncpa [#allocation16], 1
    %5156 = vsyncpa [#allocation19], 1
    %5157 = vsyncpa [#allocation22], 1
    %5158 = vsyncpa [#allocation25], 1
    %5159 = vsyncpa [#allocation28], 1
    %5160 = vsyncpa [#allocation31], 1
    %5161 = vsyncpa [#allocation34], 1
    %5162 = vsyncpa [#allocation37], 1
    %5163 = vsyncpa [#allocation40], 1
    %5164 = vsyncpa [#allocation43], 1
    %5165 = vsyncpa [#allocation46], 1
    %5166 = vsyncpa [#allocation49], 1
    %5167 = vsyncpa [#allocation52], 1
    %5168 = vsyncpa [#allocation55], 1
    %5169 = vsyncpa [#allocation58], 1
    %5170 = vsyncpa [#allocation61], 1
    %5171 = vsyncpa [#allocation64], 1
    %5172 = vsyncpa [#allocation67], 1
    %5173 = vsyncpa [#allocation70], 1
    %5174 = vsyncpa [#allocation73], 1
    %5175 = vsyncpa [#allocation76], 1
    %5176 = vsyncpa [#allocation79], 1
    %5177 = vsyncpa [#allocation82], 1
    %5178 = vsyncpa [#allocation85], 1
    %5179 = vsyncpa [#allocation88], 1
    %5180 = vsyncpa [#allocation91], 1
    %5181 = vsyncpa [#allocation94], 1
    %5182 = vsyncpa [#allocation97], 1
    %5183 = vsyncpa [#allocation100], 1
    %5184 = vsyncpa [#allocation103], 1
    %5185 = vsyncpa [#allocation106], 1
    %5186 = vsyncpa [#allocation109], 1
    %5187 = vsyncpa [#allocation112], 1
    %5188 = vsyncpa [#allocation5], 1

</llo_original>
